<compile_context>
chip_gen: v7x
topology: tpu7x:2x2x1
jax: 0.10.0
libtpu: 0.0.40
codegen_flags: <defaults>
</compile_context>

<pallas_src>
import jax
import jax.numpy as jnp
from jax.experimental import pallas as pl
from jax.experimental.pallas import tpu as pltpu

EPS = 1e-5
LANE = 128
BF16 = jnp.bfloat16
F32 = jnp.float32


def _round_up(x, m):
    return ((x + m - 1) // m) * m


def _pick_row_tile(m, target=512):
    """Largest multiple-of-8 divisor of m <= target; prefer an even grid (v7x)."""
    cands = [t for t in range(8, min(target, m) + 1, 8) if m % t == 0]
    if not cands:
        return m
    even = [t for t in cands if (m // t) % 2 == 0]
    return max(even) if even else max(cands)


def _bn_scale_shift(stats, gamma, beta, count):
    """Combine per-tile (sum, sumsq) partials into BN (scale, shift) in f32."""
    total = jnp.sum(stats, axis=0)                              # (2, C)
    mean = total[0] / count
    var = jnp.maximum(total[1] / count - mean * mean, 0.0)      # clamp cancellation
    scale = gamma * jax.lax.rsqrt(var + EPS)
    shift = beta - mean * scale
    return scale.reshape(1, -1), shift.reshape(1, -1)


def residual_unit_pallas(x_nhwc, params):
    N, H, W, Cin = x_nhwc.shape
    width = params["w1"].shape[1]
    Cout = params["w3"].shape[1]

    Ci = _round_up(Cin, 8)        # contracting dim: sublane-align only (no 32x inflation)
    Cw = _round_up(width, LANE)   # lane-dense hidden width
    Co = _round_up(Cout, LANE)    # lane-dense output width
    Wp = _round_up(W + 2, 8)      # sublane-aligned padded row width for the 3x3 pass
    M = N * H * W
    TM = _pick_row_tile(M)
    n_tiles = M // TM
    count = jnp.float32(M)

    # ---- pack weights: pad channel axes, fuse conv1+downsample, cast bf16 ----
    x2d = jnp.pad(x_nhwc, ((0, 0), (0, 0), (0, 0), (0, Ci - Cin))).reshape(M, Ci)
    w1 = jnp.pad(params["w1"], ((0, Ci - Cin), (0, Cw - width)))
    wd = jnp.pad(params["wd"], ((0, Ci - Cin), (0, Co - Cout)))
    w1d = jnp.concatenate([w1, wd], axis=1).astype(BF16)          # (Ci, Cw+Co)
    w2 = jnp.pad(params["w2"],
                 ((0, 0), (0, 0), (0, Cw - width), (0, Cw - width))
                 ).reshape(9, Cw, Cw).astype(BF16)
    w3 = jnp.pad(params["w3"], ((0, Cw - width), (0, Co - Cout))).astype(BF16)

    def pad_gb(g, b, C):
        g = g.reshape(-1)
        b = b.reshape(-1)
        # gamma padded with 0 -> padded channels are forced to exactly 0 after BN
        return jnp.pad(g, (0, C - g.shape[0])), jnp.pad(b, (0, C - b.shape[0]))

    g1, b1 = pad_gb(params["g1"], params["b1"], Cw)
    g2, b2 = pad_gb(params["g2"], params["b2"], Cw)
    g3, b3 = pad_gb(params["g3"], params["b3"], Co)
    gd, bd = pad_gb(params["gd"], params["bd"], Co)

    cparams = pltpu.CompilerParams(
        dimension_semantics=("parallel",),
        vmem_limit_bytes=32 * 1024 * 1024)
    # TODO(synk): on v7x (64 MiB VMEM) re-budget block sizes for real model
    # widths and single-buffer the constant weight operands.

    def row_spec(C):
        return pl.BlockSpec((TM, C), lambda i: (i, 0))

    def img_spec(C):
        return pl.BlockSpec((1, H, W, C), lambda n: (n, 0, 0, 0))

    def const_spec(shape):
        return pl.BlockSpec(shape, lambda i: (0,) * len(shape))

    def stat_spec(C):
        return pl.BlockSpec((1, 2, C), lambda i: (i, 0, 0))

    # ------------------------------------------------------------------
    # Pass 1: fused conv1 (1x1) + downsample conv (1x1) over row tiles.
    # ------------------------------------------------------------------
    def pass1_kernel(x_ref, w_ref, c1_ref, cd_ref, s1_ref, sd_ref):
        y = jnp.dot(x_ref[...].astype(BF16), w_ref[...],
                    preferred_element_type=F32)                   # (TM, Cw+Co) f32
        c1 = y[:, :Cw]
        cd = y[:, Cw:]
        c1_ref[...] = c1.astype(BF16)
        cd_ref[...] = cd.astype(BF16)
        s1_ref[0:1, 0:1, :] = jnp.sum(c1, axis=0, keepdims=True)[None]
        s1_ref[0:1, 1:2, :] = jnp.sum(c1 * c1, axis=0, keepdims=True)[None]
        sd_ref[0:1, 0:1, :] = jnp.sum(cd, axis=0, keepdims=True)[None]
        sd_ref[0:1, 1:2, :] = jnp.sum(cd * cd, axis=0, keepdims=True)[None]

    c1, cd, s1, sd = pl.pallas_call(
        pass1_kernel,
        grid=(n_tiles,),
        in_specs=[row_spec(Ci), const_spec((Ci, Cw + Co))],
        out_specs=[row_spec(Cw), row_spec(Co), stat_spec(Cw), stat_spec(Co)],
        out_shape=[jax.ShapeDtypeStruct((M, Cw), BF16),
                   jax.ShapeDtypeStruct((M, Co), BF16),
                   jax.ShapeDtypeStruct((n_tiles, 2, Cw), F32),
                   jax.ShapeDtypeStruct((n_tiles, 2, Co), F32)],
        compiler_params=cparams,
        cost_estimate=pl.CostEstimate(
            flops=2 * M * Ci * (Cw + Co), transcendentals=0,
            bytes_accessed=4 * M * Ci + 2 * Ci * (Cw + Co) + 2 * M * (Cw + Co)),
    )(x2d, w1d)

    scale1, shift1 = _bn_scale_shift(s1, g1, b1, count)
    scaled, shiftd = _bn_scale_shift(sd, gd, bd, count)

    # ------------------------------------------------------------------
    # Pass 2: bn1 + relu + 3x3 conv via flat halo scratch and 9 contiguous taps.
    # ------------------------------------------------------------------
    def pass2_kernel(c1_ref, sc_ref, sh_ref, w2_ref, c2_ref, s2_ref, pad_ref):
        # Re-zero only the halo rows (interior slab is fully rewritten below;
        # column halo is carried inside that slab).  Safe under megacore.
        pad_ref[pl.ds(0, Wp), :] = jnp.zeros((Wp, Cw), BF16)
        pad_ref[pl.ds((H + 1) * Wp, 2 * Wp), :] = jnp.zeros((2 * Wp, Cw), BF16)

        sc = sc_ref[...].reshape(1, 1, 1, Cw)
        sh = sh_ref[...].reshape(1, 1, 1, Cw)
        a1 = jnp.maximum(c1_ref[...].astype(F32) * sc + sh, 0.0)[0]    # (H, W, Cw)
        a1p = jnp.concatenate(
            [jnp.zeros((H, 1, Cw), F32), a1,
             jnp.zeros((H, Wp - W - 1, Cw), F32)], axis=1)             # (H, Wp, Cw)
        pad_ref[pl.ds(Wp, H * Wp), :] = a1p.reshape(H * Wp, Cw).astype(BF16)

        acc = jnp.zeros((H * Wp, Cw), F32)
        for k in range(9):
            dy, dx = divmod(k, 3)
            tap = pad_ref[pl.ds(dy * Wp + dx, H * Wp), :]              # contiguous view
            acc = acc + jnp.dot(tap, w2_ref[k], preferred_element_type=F32)

        c2 = acc.reshape(H, Wp, Cw)[:, :W, :]                          # drop junk halo cols
        c2_ref[...] = c2.reshape(1, H, W, Cw).astype(BF16)
        c2f = c2.reshape(H * W, Cw)
        s2_ref[0:1, 0:1, :] = jnp.sum(c2f, axis=0, keepdims=True)[None]
        s2_ref[0:1, 1:2, :] = jnp.sum(c2f * c2f, axis=0, keepdims=True)[None]

    c2, s2 = pl.pallas_call(
        pass2_kernel,
        grid=(N,),
        in_specs=[img_spec(Cw), const_spec((1, Cw)), const_spec((1, Cw)),
                  const_spec((9, Cw, Cw))],
        out_specs=[img_spec(Cw), stat_spec(Cw)],
        out_shape=[jax.ShapeDtypeStruct((N, H, W, Cw), BF16),
                   jax.ShapeDtypeStruct((N, 2, Cw), F32)],
        scratch_shapes=[pltpu.VMEM(((H + 3) * Wp, Cw), BF16)],
        compiler_params=cparams,
        cost_estimate=pl.CostEstimate(
            flops=2 * N * H * Wp * 9 * Cw * Cw, transcendentals=0,
            bytes_accessed=2 * M * Cw + 2 * 9 * Cw * Cw + 2 * M * Cw),
    )(c1.reshape(N, H, W, Cw), scale1, shift1, w2)

    scale2, shift2 = _bn_scale_shift(s2, g2, b2, count)

    # ------------------------------------------------------------------
    # Pass 3: bn2 + relu + conv3 (1x1) over row tiles, fused stats.
    # ------------------------------------------------------------------
    def pass3_kernel(c2_ref, sc_ref, sh_ref, w3_ref, c3_ref, s3_ref):
        a2 = jnp.maximum(c2_ref[...].astype(F32) * sc_ref[...] + sh_ref[...], 0.0)
        c3 = jnp.dot(a2.astype(BF16), w3_ref[...], preferred_element_type=F32)
        c3_ref[...] = c3.astype(BF16)
        s3_ref[0:1, 0:1, :] = jnp.sum(c3, axis=0, keepdims=True)[None]
        s3_ref[0:1, 1:2, :] = jnp.sum(c3 * c3, axis=0, keepdims=True)[None]

    c3, s3 = pl.pallas_call(
        pass3_kernel,
        grid=(n_tiles,),
        in_specs=[row_spec(Cw), const_spec((1, Cw)), const_spec((1, Cw)),
                  const_spec((Cw, Co))],
        out_specs=[row_spec(Co), stat_spec(Co)],
        out_shape=[jax.ShapeDtypeStruct((M, Co), BF16),
                   jax.ShapeDtypeStruct((n_tiles, 2, Co), F32)],
        compiler_params=cparams,
        cost_estimate=pl.CostEstimate(
            flops=2 * M * Cw * Co, transcendentals=0,
            bytes_accessed=2 * M * Cw + 2 * Cw * Co + 2 * M * Co),
    )(c2.reshape(M, Cw), scale2, shift2, w3)

    scale3, shift3 = _bn_scale_shift(s3, g3, b3, count)

    # ------------------------------------------------------------------
    # Pass 4: bn3(main) + bn(downsample) + residual add + relu (lane-dense).
    # ------------------------------------------------------------------
    def pass4_kernel(c3_ref, cd_ref, sc3_ref, sh3_ref, scd_ref, shd_ref, o_ref):
        out = (c3_ref[...].astype(F32) * sc3_ref[...] + sh3_ref[...]
               + cd_ref[...].astype(F32) * scd_ref[...] + shd_ref[...])
        o_ref[...] = jnp.maximum(out, 0.0)

    out2d = pl.pallas_call(
        pass4_kernel,
        grid=(n_tiles,),
        in_specs=[row_spec(Co), row_spec(Co),
                  const_spec((1, Co)), const_spec((1, Co)),
                  const_spec((1, Co)), const_spec((1, Co))],
        out_specs=row_spec(Co),
        out_shape=jax.ShapeDtypeStruct((M, Co), F32),
        compiler_params=cparams,
        cost_estimate=pl.CostEstimate(
            flops=6 * M * Co, transcendentals=0,
            bytes_accessed=2 * M * Co + 2 * M * Co + 4 * M * Co),
    )(c3, cd, scale3, shift3, scaled, shiftd)

    # Drop zero-padded channels (keep padded layout instead when stacking blocks).
    return out2d.reshape(N, H, W, Co)[..., :Cout]


# ---------------------------------------------------------------------------
# Pure-JAX reference (PyTorch train-mode BN semantics) + params + demo
# ---------------------------------------------------------------------------

def residual_unit_reference(x_nhwc, params):
    def bn(x, g, b):
        m = jnp.mean(x, axis=(0, 1, 2))
        v = jnp.mean((x - m) ** 2, axis=(0, 1, 2))    # biased variance
        return (x - m) * jax.lax.rsqrt(v + EPS) * g + b

    h = jnp.einsum("nhwc,cd->nhwd", x_nhwc, params["w1"])
    h = jax.nn.relu(bn(h, params["g1"], params["b1"]))
    h = jax.lax.conv_general_dilated(
        h, params["w2"], window_strides=(1, 1), padding="SAME",
        dimension_numbers=("NHWC", "HWIO", "NHWC"))
    h = jax.nn.relu(bn(h, params["g2"], params["b2"]))
    out = bn(jnp.einsum("nhwc,cd->nhwd", h, params["w3"]),
             params["g3"], params["b3"])
    ds = bn(jnp.einsum("nhwc,cd->nhwd", x_nhwc, params["wd"]),
            params["gd"], params["bd"])
    return jax.nn.relu(out + ds)


def make_params(key, in_channels, out_channels):
    width = out_channels // 4
    k1, k2, k3, k4 = jax.random.split(key, 4)
    f32 = jnp.float32
    return {
        # conv weights (kernel layout: ..., in, out)
        "w1": 0.1 * jax.random.normal(k1, (in_channels, width), f32),
        "w2": 0.1 * jax.random.normal(k2, (3, 3, width, width), f32),
        "w3": 0.1 * jax.random.normal(k3, (width, out_channels), f32),
        "wd": 0.1 * jax.random.normal(k4, (in_channels, out_channels), f32),
        # BatchNorm affine params (PyTorch defaults: gamma=1, beta=0)
        "g1": jnp.ones((width,), f32), "b1": jnp.zeros((width,), f32),
        "g2": jnp.ones((width,), f32), "b2": jnp.zeros((width,), f32),
        "g3": jnp.ones((out_channels,), f32),
        "b3": jnp.zeros((out_channels,), f32),
        "gd": jnp.ones((out_channels,), f32),
        "bd": jnp.zeros((out_channels,), f32),
    }


if __name__ == "__main__":
    in_channels, out_channels = 4, 8
    N, H, W = 2, 16, 16

    key = jax.random.PRNGKey(0)
    kx, kp = jax.random.split(key)

    # Input in PyTorch NCHW convention, transposed to the kernel's NHWC.
    x_nchw = jax.random.normal(kx, (N, in_channels, H, W), jnp.float32)
    x_nhwc = jnp.transpose(x_nchw, (0, 2, 3, 1))
    params = make_params(kp, in_channels, out_channels)

    fwd = jax.jit(residual_unit_pallas)
    out_nhwc = jax.block_until_ready(fwd(x_nhwc, params))
    out_nchw = jnp.transpose(out_nhwc, (0, 3, 1, 2))   # back to PyTorch layout

    ref_nhwc = residual_unit_reference(x_nhwc, params)
    assert out_nchw.shape == (N, out_channels, H, W)
    err = float(jnp.max(jnp.abs(out_nhwc - ref_nhwc)))
    # bf16 activations / MXU operands compared against an all-f32 reference.
    assert err < 8e-2, err
    print("KERNEL_OK")
</pallas_src>

<mosaic_0001>
module attributes {stable_mosaic.version = 11 : i64} {
  func.func @pass1_kernel(%arg0: i32, %arg1: memref<256x8xf32, #tpu.memory_space<vmem>>, %arg2: memref<8x256xbf16, #tpu.memory_space<vmem>>, %arg3: memref<256x128xbf16, #tpu.memory_space<vmem>>, %arg4: memref<256x128xbf16, #tpu.memory_space<vmem>>, %arg5: memref<1x2x128xf32, #tpu.memory_space<vmem>>, %arg6: memref<1x2x128xf32, #tpu.memory_space<vmem>>) attributes {dimension_semantics = [#tpu.dimension_semantics<parallel>], iteration_bounds = array<i64: 2>, scalar_prefetch = 0 : i64, scratch_operands = 0 : i64, tpu.core_type = #tpu.core_type<tc>, window_params = [{transform_indices = @transform_0, window_bounds = array<i64: 256, 8>}, {pipeline_mode = #tpu.pipeline_mode<synchronous>, transform_indices = @transform_1, window_bounds = array<i64: 8, 256>}, {transform_indices = @transform_2, window_bounds = array<i64: 256, 128>}, {transform_indices = @transform_3, window_bounds = array<i64: 256, 128>}, {transform_indices = @transform_4, window_bounds = array<i64: 1, 2, 128>}, {transform_indices = @transform_5, window_bounds = array<i64: 1, 2, 128>}]} {
    %c0 = arith.constant 0 : index
    %c0_0 = arith.constant 0 : index
    %0 = vector.load %arg1[%c0, %c0_0] : memref<256x8xf32, #tpu.memory_space<vmem>>, vector<256x8xf32>
    %1 = arith.truncf %0 : vector<256x8xf32> to vector<256x8xbf16>
    %c0_1 = arith.constant 0 : index
    %c0_2 = arith.constant 0 : index
    %2 = vector.load %arg2[%c0_1, %c0_2] : memref<8x256xbf16, #tpu.memory_space<vmem>>, vector<8x256xbf16>
    %cst = arith.constant dense<0.000000e+00> : vector<256x256xf32>
    %3 = tpu.matmul %1, %2, %cst {dimension_numbers = #tpu.dot_dimension_numbers<[1], [0], [0], [1], [0, 0, 1, 1], [], []>} : vector<256x8xbf16>, vector<8x256xbf16>, vector<256x256xf32> -> vector<256x256xf32>
    %4 = vector.extract_strided_slice %3 {offsets = [0, 0], sizes = [256, 128], strides = [1, 1]} : vector<256x256xf32> to vector<256x128xf32>
    %5 = vector.extract_strided_slice %3 {offsets = [0, 128], sizes = [256, 128], strides = [1, 1]} : vector<256x256xf32> to vector<256x128xf32>
    %6 = arith.truncf %4 : vector<256x128xf32> to vector<256x128xbf16>
    %c0_3 = arith.constant 0 : index
    %c0_4 = arith.constant 0 : index
    %7 = vector.load %arg3[%c0_3, %c0_4] : memref<256x128xbf16, #tpu.memory_space<vmem>>, vector<256x128xbf16>
    tpu.vector_store %arg3[%c0_3, %c0_4], %6 {strides = array<i32>} : memref<256x128xbf16, #tpu.memory_space<vmem>>, vector<256x128xbf16>,
    %8 = arith.truncf %5 : vector<256x128xf32> to vector<256x128xbf16>
    %c0_5 = arith.constant 0 : index
    %c0_6 = arith.constant 0 : index
    %9 = vector.load %arg4[%c0_5, %c0_6] : memref<256x128xbf16, #tpu.memory_space<vmem>>, vector<256x128xbf16>
    tpu.vector_store %arg4[%c0_5, %c0_6], %8 {strides = array<i32>} : memref<256x128xbf16, #tpu.memory_space<vmem>>, vector<256x128xbf16>,
    %cst_7 = arith.constant dense<0.000000e+00> : vector<128xf32>
    %10 = vector.multi_reduction <add>, %4, %cst_7 [0] : vector<256x128xf32> to vector<128xf32>
    %11 = vector.shape_cast %10 : vector<128xf32> to vector<1x128xf32>
    %12 = vector.shape_cast %11 : vector<1x128xf32> to vector<1x1x128xf32>
    %c0_8 = arith.constant 0 : index
    %c0_9 = arith.constant 0 : index
    %c0_10 = arith.constant 0 : index
    %13 = vector.load %arg5[%c0_8, %c0_9, %c0_10] : memref<1x2x128xf32, #tpu.memory_space<vmem>>, vector<1x1x128xf32>
    tpu.vector_store %arg5[%c0_8, %c0_9, %c0_10], %12 {strides = array<i32>} : memref<1x2x128xf32, #tpu.memory_space<vmem>>, vector<1x1x128xf32>,
    %14 = arith.mulf %4, %4 : vector<256x128xf32>
    %cst_11 = arith.constant dense<0.000000e+00> : vector<128xf32>
    %15 = vector.multi_reduction <add>, %14, %cst_11 [0] : vector<256x128xf32> to vector<128xf32>
    %16 = vector.shape_cast %15 : vector<128xf32> to vector<1x128xf32>
    %17 = vector.shape_cast %16 : vector<1x128xf32> to vector<1x1x128xf32>
    %c0_12 = arith.constant 0 : index
    %c1 = arith.constant 1 : index
    %c0_13 = arith.constant 0 : index
    %18 = vector.load %arg5[%c0_12, %c1, %c0_13] : memref<1x2x128xf32, #tpu.memory_space<vmem>>, vector<1x1x128xf32>
    tpu.vector_store %arg5[%c0_12, %c1, %c0_13], %17 {strides = array<i32>} : memref<1x2x128xf32, #tpu.memory_space<vmem>>, vector<1x1x128xf32>,
    %cst_14 = arith.constant dense<0.000000e+00> : vector<128xf32>
    %19 = vector.multi_reduction <add>, %5, %cst_14 [0] : vector<256x128xf32> to vector<128xf32>
    %20 = vector.shape_cast %19 : vector<128xf32> to vector<1x128xf32>
    %21 = vector.shape_cast %20 : vector<1x128xf32> to vector<1x1x128xf32>
    %c0_15 = arith.constant 0 : index
    %c0_16 = arith.constant 0 : index
    %c0_17 = arith.constant 0 : index
    %22 = vector.load %arg6[%c0_15, %c0_16, %c0_17] : memref<1x2x128xf32, #tpu.memory_space<vmem>>, vector<1x1x128xf32>
    tpu.vector_store %arg6[%c0_15, %c0_16, %c0_17], %21 {strides = array<i32>} : memref<1x2x128xf32, #tpu.memory_space<vmem>>, vector<1x1x128xf32>,
    %23 = arith.mulf %5, %5 : vector<256x128xf32>
    %cst_18 = arith.constant dense<0.000000e+00> : vector<128xf32>
    %24 = vector.multi_reduction <add>, %23, %cst_18 [0] : vector<256x128xf32> to vector<128xf32>
    %25 = vector.shape_cast %24 : vector<128xf32> to vector<1x128xf32>
    %26 = vector.shape_cast %25 : vector<1x128xf32> to vector<1x1x128xf32>
    %c0_19 = arith.constant 0 : index
    %c1_20 = arith.constant 1 : index
    %c0_21 = arith.constant 0 : index
    %27 = vector.load %arg6[%c0_19, %c1_20, %c0_21] : memref<1x2x128xf32, #tpu.memory_space<vmem>>, vector<1x1x128xf32>
    tpu.vector_store %arg6[%c0_19, %c1_20, %c0_21], %26 {strides = array<i32>} : memref<1x2x128xf32, #tpu.memory_space<vmem>>, vector<1x1x128xf32>,
    return
  }
  func.func @transform_0(%arg0: i32) -> (i32, i32) {
    %c0_i32 = arith.constant 0 : i32
    %c0_i32_0 = arith.constant 0 : i32
    return %arg0, %c0_i32 : i32, i32
  }
  func.func @transform_1(%arg0: i32) -> (i32, i32) {
    %c0_i32 = arith.constant 0 : i32
    %c0_i32_0 = arith.constant 0 : i32
    %c0_i32_1 = arith.constant 0 : i32
    return %c0_i32, %c0_i32_0 : i32, i32
  }
  func.func @transform_2(%arg0: i32) -> (i32, i32) {
    %c0_i32 = arith.constant 0 : i32
    %c0_i32_0 = arith.constant 0 : i32
    return %arg0, %c0_i32 : i32, i32
  }
  func.func @transform_3(%arg0: i32) -> (i32, i32) {
    %c0_i32 = arith.constant 0 : i32
    %c0_i32_0 = arith.constant 0 : i32
    return %arg0, %c0_i32 : i32, i32
  }
  func.func @transform_4(%arg0: i32) -> (i32, i32, i32) {
    %c0_i32 = arith.constant 0 : i32
    %c0_i32_0 = arith.constant 0 : i32
    %c0_i32_1 = arith.constant 0 : i32
    return %arg0, %c0_i32, %c0_i32_0 : i32, i32, i32
  }
  func.func @transform_5(%arg0: i32) -> (i32, i32, i32) {
    %c0_i32 = arith.constant 0 : i32
    %c0_i32_0 = arith.constant 0 : i32
    %c0_i32_1 = arith.constant 0 : i32
    return %arg0, %c0_i32, %c0_i32_0 : i32, i32, i32
  }
}

module attributes {stable_mosaic.version = 11 : i64} {
  func.func @pass2_kernel(%arg0: i32, %arg1: memref<1x16x16x128xbf16, #tpu.memory_space<vmem>>, %arg2: memref<1x128xf32, #tpu.memory_space<vmem>>, %arg3: memref<1x128xf32, #tpu.memory_space<vmem>>, %arg4: memref<9x128x128xbf16, #tpu.memory_space<vmem>>, %arg5: memref<1x16x16x128xbf16, #tpu.memory_space<vmem>>, %arg6: memref<1x2x128xf32, #tpu.memory_space<vmem>>, %arg7: memref<456x128xbf16, #tpu.memory_space<vmem>>) attributes {dimension_semantics = [#tpu.dimension_semantics<parallel>], iteration_bounds = array<i64: 2>, scalar_prefetch = 0 : i64, scratch_operands = 1 : i64, tpu.core_type = #tpu.core_type<tc>, window_params = [{transform_indices = @transform_0, window_bounds = array<i64: 1, 16, 16, 128>}, {pipeline_mode = #tpu.pipeline_mode<synchronous>, transform_indices = @transform_1, window_bounds = array<i64: 1, 128>}, {pipeline_mode = #tpu.pipeline_mode<synchronous>, transform_indices = @transform_2, window_bounds = array<i64: 1, 128>}, {pipeline_mode = #tpu.pipeline_mode<synchronous>, transform_indices = @transform_3, window_bounds = array<i64: 9, 128, 128>}, {transform_indices = @transform_4, window_bounds = array<i64: 1, 16, 16, 128>}, {transform_indices = @transform_5, window_bounds = array<i64: 1, 2, 128>}]} {
    %cst = arith.constant 0.000000e+00 : bf16
    %0 = vector.broadcast %cst : bf16 to vector<24x128xbf16>
    %c0 = arith.constant 0 : index
    %c0_0 = arith.constant 0 : index
    %1 = vector.load %arg7[%c0, %c0_0] : memref<456x128xbf16, #tpu.memory_space<vmem>>, vector<24x128xbf16>
    tpu.vector_store %arg7[%c0, %c0_0], %0 {strides = array<i32>} : memref<456x128xbf16, #tpu.memory_space<vmem>>, vector<24x128xbf16>,
    %cst_1 = arith.constant 0.000000e+00 : bf16
    %2 = vector.broadcast %cst_1 : bf16 to vector<48x128xbf16>
    %c408 = arith.constant 408 : index
    %c0_2 = arith.constant 0 : index
    %3 = vector.load %arg7[%c408, %c0_2] : memref<456x128xbf16, #tpu.memory_space<vmem>>, vector<48x128xbf16>
    tpu.vector_store %arg7[%c408, %c0_2], %2 {strides = array<i32>} : memref<456x128xbf16, #tpu.memory_space<vmem>>, vector<48x128xbf16>,
    %c0_3 = arith.constant 0 : index
    %c0_4 = arith.constant 0 : index
    %4 = vector.load %arg2[%c0_3, %c0_4] : memref<1x128xf32, #tpu.memory_space<vmem>>, vector<1x128xf32>
    %5 = vector.shape_cast %4 : vector<1x128xf32> to vector<1x1x1x128xf32>
    %c0_5 = arith.constant 0 : index
    %c0_6 = arith.constant 0 : index
    %6 = vector.load %arg3[%c0_5, %c0_6] : memref<1x128xf32, #tpu.memory_space<vmem>>, vector<1x128xf32>
    %7 = vector.shape_cast %6 : vector<1x128xf32> to vector<1x1x1x128xf32>
    %c0_7 = arith.constant 0 : index
    %c0_8 = arith.constant 0 : index
    %c0_9 = arith.constant 0 : index
    %c0_10 = arith.constant 0 : index
    %8 = vector.load %arg1[%c0_7, %c0_8, %c0_9, %c0_10] : memref<1x16x16x128xbf16, #tpu.memory_space<vmem>>, vector<1x16x16x128xbf16>
    %9 = arith.extf %8 : vector<1x16x16x128xbf16> to vector<1x16x16x128xf32>
    %10 = vector.broadcast %5 : vector<1x1x1x128xf32> to vector<1x16x16x128xf32>
    %11 = arith.mulf %9, %10 : vector<1x16x16x128xf32>
    %12 = vector.broadcast %7 : vector<1x1x1x128xf32> to vector<1x16x16x128xf32>
    %13 = arith.addf %11, %12 : vector<1x16x16x128xf32>
    %cst_11 = arith.constant 0.000000e+00 : f32
    %14 = vector.broadcast %cst_11 : f32 to vector<1x16x16x128xf32>
    %15 = arith.maximumf %13, %14 : vector<1x16x16x128xf32>
    %16 = vector.shape_cast %15 : vector<1x16x16x128xf32> to vector<16x16x128xf32>
    %cst_12 = arith.constant 0.000000e+00 : f32
    %17 = vector.broadcast %cst_12 : f32 to vector<16x1x128xf32>
    %cst_13 = arith.constant 0.000000e+00 : f32
    %18 = vector.broadcast %cst_13 : f32 to vector<16x7x128xf32>
    %19 = tpu.concatenate %17, %16, %18 in 1 : vector<16x1x128xf32>, vector<16x16x128xf32>, vector<16x7x128xf32> -> vector<16x24x128xf32>
    %20 = vector.shape_cast %19 : vector<16x24x128xf32> to vector<384x128xf32>
    %21 = arith.truncf %20 : vector<384x128xf32> to vector<384x128xbf16>
    %c24 = arith.constant 24 : index
    %c0_14 = arith.constant 0 : index
    %22 = vector.load %arg7[%c24, %c0_14] : memref<456x128xbf16, #tpu.memory_space<vmem>>, vector<384x128xbf16>
    tpu.vector_store %arg7[%c24, %c0_14], %21 {strides = array<i32>} : memref<456x128xbf16, #tpu.memory_space<vmem>>, vector<384x128xbf16>,
    %cst_15 = arith.constant 0.000000e+00 : f32
    %23 = vector.broadcast %cst_15 : f32 to vector<384x128xf32>
    %c0_16 = arith.constant 0 : index
    %c0_17 = arith.constant 0 : index
    %24 = vector.load %arg7[%c0_16, %c0_17] : memref<456x128xbf16, #tpu.memory_space<vmem>>, vector<384x128xbf16>
    %c0_18 = arith.constant 0 : index
    %c0_19 = arith.constant 0 : index
    %c0_20 = arith.constant 0 : index
    %25 = vector.load %arg4[%c0_18, %c0_19, %c0_20] : memref<9x128x128xbf16, #tpu.memory_space<vmem>>, vector<1x128x128xbf16>
    %26 = vector.shape_cast %25 : vector<1x128x128xbf16> to vector<128x128xbf16>
    %cst_21 = arith.constant dense<0.000000e+00> : vector<384x128xf32>
    %27 = tpu.matmul %24, %26, %cst_21 {dimension_numbers = #tpu.dot_dimension_numbers<[1], [0], [0], [1], [0, 0, 1, 1], [], []>} : vector<384x128xbf16>, vector<128x128xbf16>, vector<384x128xf32> -> vector<384x128xf32>
    %28 = arith.addf %23, %27 : vector<384x128xf32>
    %c1 = arith.constant 1 : index
    %c0_22 = arith.constant 0 : index
    %29 = vector.load %arg7[%c1, %c0_22] : memref<456x128xbf16, #tpu.memory_space<vmem>>, vector<384x128xbf16>
    %c1_23 = arith.constant 1 : index
    %c0_24 = arith.constant 0 : index
    %c0_25 = arith.constant 0 : index
    %30 = vector.load %arg4[%c1_23, %c0_24, %c0_25] : memref<9x128x128xbf16, #tpu.memory_space<vmem>>, vector<1x128x128xbf16>
    %31 = vector.shape_cast %30 : vector<1x128x128xbf16> to vector<128x128xbf16>
    %cst_26 = arith.constant dense<0.000000e+00> : vector<384x128xf32>
    %32 = tpu.matmul %29, %31, %cst_26 {dimension_numbers = #tpu.dot_dimension_numbers<[1], [0], [0], [1], [0, 0, 1, 1], [], []>} : vector<384x128xbf16>, vector<128x128xbf16>, vector<384x128xf32> -> vector<384x128xf32>
    %33 = arith.addf %28, %32 : vector<384x128xf32>
    %c2 = arith.constant 2 : index
    %c0_27 = arith.constant 0 : index
    %34 = vector.load %arg7[%c2, %c0_27] : memref<456x128xbf16, #tpu.memory_space<vmem>>, vector<384x128xbf16>
    %c2_28 = arith.constant 2 : index
    %c0_29 = arith.constant 0 : index
    %c0_30 = arith.constant 0 : index
    %35 = vector.load %arg4[%c2_28, %c0_29, %c0_30] : memref<9x128x128xbf16, #tpu.memory_space<vmem>>, vector<1x128x128xbf16>
    %36 = vector.shape_cast %35 : vector<1x128x128xbf16> to vector<128x128xbf16>
    %cst_31 = arith.constant dense<0.000000e+00> : vector<384x128xf32>
    %37 = tpu.matmul %34, %36, %cst_31 {dimension_numbers = #tpu.dot_dimension_numbers<[1], [0], [0], [1], [0, 0, 1, 1], [], []>} : vector<384x128xbf16>, vector<128x128xbf16>, vector<384x128xf32> -> vector<384x128xf32>
    %38 = arith.addf %33, %37 : vector<384x128xf32>
    %c24_32 = arith.constant 24 : index
    %c0_33 = arith.constant 0 : index
    %39 = vector.load %arg7[%c24_32, %c0_33] : memref<456x128xbf16, #tpu.memory_space<vmem>>, vector<384x128xbf16>
    %c3 = arith.constant 3 : index
    %c0_34 = arith.constant 0 : index
    %c0_35 = arith.constant 0 : index
    %40 = vector.load %arg4[%c3, %c0_34, %c0_35] : memref<9x128x128xbf16, #tpu.memory_space<vmem>>, vector<1x128x128xbf16>
    %41 = vector.shape_cast %40 : vector<1x128x128xbf16> to vector<128x128xbf16>
    %cst_36 = arith.constant dense<0.000000e+00> : vector<384x128xf32>
    %42 = tpu.matmul %39, %41, %cst_36 {dimension_numbers = #tpu.dot_dimension_numbers<[1], [0], [0], [1], [0, 0, 1, 1], [], []>} : vector<384x128xbf16>, vector<128x128xbf16>, vector<384x128xf32> -> vector<384x128xf32>
    %43 = arith.addf %38, %42 : vector<384x128xf32>
    %c25 = arith.constant 25 : index
    %c0_37 = arith.constant 0 : index
    %44 = vector.load %arg7[%c25, %c0_37] : memref<456x128xbf16, #tpu.memory_space<vmem>>, vector<384x128xbf16>
    %c4 = arith.constant 4 : index
    %c0_38 = arith.constant 0 : index
    %c0_39 = arith.constant 0 : index
    %45 = vector.load %arg4[%c4, %c0_38, %c0_39] : memref<9x128x128xbf16, #tpu.memory_space<vmem>>, vector<1x128x128xbf16>
    %46 = vector.shape_cast %45 : vector<1x128x128xbf16> to vector<128x128xbf16>
    %cst_40 = arith.constant dense<0.000000e+00> : vector<384x128xf32>
    %47 = tpu.matmul %44, %46, %cst_40 {dimension_numbers = #tpu.dot_dimension_numbers<[1], [0], [0], [1], [0, 0, 1, 1], [], []>} : vector<384x128xbf16>, vector<128x128xbf16>, vector<384x128xf32> -> vector<384x128xf32>
    %48 = arith.addf %43, %47 : vector<384x128xf32>
    %c26 = arith.constant 26 : index
    %c0_41 = arith.constant 0 : index
    %49 = vector.load %arg7[%c26, %c0_41] : memref<456x128xbf16, #tpu.memory_space<vmem>>, vector<384x128xbf16>
    %c5 = arith.constant 5 : index
    %c0_42 = arith.constant 0 : index
    %c0_43 = arith.constant 0 : index
    %50 = vector.load %arg4[%c5, %c0_42, %c0_43] : memref<9x128x128xbf16, #tpu.memory_space<vmem>>, vector<1x128x128xbf16>
    %51 = vector.shape_cast %50 : vector<1x128x128xbf16> to vector<128x128xbf16>
    %cst_44 = arith.constant dense<0.000000e+00> : vector<384x128xf32>
    %52 = tpu.matmul %49, %51, %cst_44 {dimension_numbers = #tpu.dot_dimension_numbers<[1], [0], [0], [1], [0, 0, 1, 1], [], []>} : vector<384x128xbf16>, vector<128x128xbf16>, vector<384x128xf32> -> vector<384x128xf32>
    %53 = arith.addf %48, %52 : vector<384x128xf32>
    %c48 = arith.constant 48 : index
    %c0_45 = arith.constant 0 : index
    %54 = vector.load %arg7[%c48, %c0_45] : memref<456x128xbf16, #tpu.memory_space<vmem>>, vector<384x128xbf16>
    %c6 = arith.constant 6 : index
    %c0_46 = arith.constant 0 : index
    %c0_47 = arith.constant 0 : index
    %55 = vector.load %arg4[%c6, %c0_46, %c0_47] : memref<9x128x128xbf16, #tpu.memory_space<vmem>>, vector<1x128x128xbf16>
    %56 = vector.shape_cast %55 : vector<1x128x128xbf16> to vector<128x128xbf16>
    %cst_48 = arith.constant dense<0.000000e+00> : vector<384x128xf32>
    %57 = tpu.matmul %54, %56, %cst_48 {dimension_numbers = #tpu.dot_dimension_numbers<[1], [0], [0], [1], [0, 0, 1, 1], [], []>} : vector<384x128xbf16>, vector<128x128xbf16>, vector<384x128xf32> -> vector<384x128xf32>
    %58 = arith.addf %53, %57 : vector<384x128xf32>
    %c49 = arith.constant 49 : index
    %c0_49 = arith.constant 0 : index
    %59 = vector.load %arg7[%c49, %c0_49] : memref<456x128xbf16, #tpu.memory_space<vmem>>, vector<384x128xbf16>
    %c7 = arith.constant 7 : index
    %c0_50 = arith.constant 0 : index
    %c0_51 = arith.constant 0 : index
    %60 = vector.load %arg4[%c7, %c0_50, %c0_51] : memref<9x128x128xbf16, #tpu.memory_space<vmem>>, vector<1x128x128xbf16>
    %61 = vector.shape_cast %60 : vector<1x128x128xbf16> to vector<128x128xbf16>
    %cst_52 = arith.constant dense<0.000000e+00> : vector<384x128xf32>
    %62 = tpu.matmul %59, %61, %cst_52 {dimension_numbers = #tpu.dot_dimension_numbers<[1], [0], [0], [1], [0, 0, 1, 1], [], []>} : vector<384x128xbf16>, vector<128x128xbf16>, vector<384x128xf32> -> vector<384x128xf32>
    %63 = arith.addf %58, %62 : vector<384x128xf32>
    %c50 = arith.constant 50 : index
    %c0_53 = arith.constant 0 : index
    %64 = vector.load %arg7[%c50, %c0_53] : memref<456x128xbf16, #tpu.memory_space<vmem>>, vector<384x128xbf16>
    %c8 = arith.constant 8 : index
    %c0_54 = arith.constant 0 : index
    %c0_55 = arith.constant 0 : index
    %65 = vector.load %arg4[%c8, %c0_54, %c0_55] : memref<9x128x128xbf16, #tpu.memory_space<vmem>>, vector<1x128x128xbf16>
    %66 = vector.shape_cast %65 : vector<1x128x128xbf16> to vector<128x128xbf16>
    %cst_56 = arith.constant dense<0.000000e+00> : vector<384x128xf32>
    %67 = tpu.matmul %64, %66, %cst_56 {dimension_numbers = #tpu.dot_dimension_numbers<[1], [0], [0], [1], [0, 0, 1, 1], [], []>} : vector<384x128xbf16>, vector<128x128xbf16>, vector<384x128xf32> -> vector<384x128xf32>
    %68 = arith.addf %63, %67 : vector<384x128xf32>
    %69 = vector.shape_cast %68 : vector<384x128xf32> to vector<16x24x128xf32>
    %70 = vector.extract_strided_slice %69 {offsets = [0, 0, 0], sizes = [16, 16, 128], strides = [1, 1, 1]} : vector<16x24x128xf32> to vector<16x16x128xf32>
    %71 = vector.shape_cast %70 : vector<16x16x128xf32> to vector<1x16x16x128xf32>
    %72 = arith.truncf %71 : vector<1x16x16x128xf32> to vector<1x16x16x128xbf16>
    %c0_57 = arith.constant 0 : index
    %c0_58 = arith.constant 0 : index
    %c0_59 = arith.constant 0 : index
    %c0_60 = arith.constant 0 : index
    %73 = vector.load %arg5[%c0_57, %c0_58, %c0_59, %c0_60] : memref<1x16x16x128xbf16, #tpu.memory_space<vmem>>, vector<1x16x16x128xbf16>
    tpu.vector_store %arg5[%c0_57, %c0_58, %c0_59, %c0_60], %72 {strides = array<i32>} : memref<1x16x16x128xbf16, #tpu.memory_space<vmem>>, vector<1x16x16x128xbf16>,
    %74 = vector.shape_cast %70 : vector<16x16x128xf32> to vector<256x128xf32>
    %cst_61 = arith.constant dense<0.000000e+00> : vector<128xf32>
    %75 = vector.multi_reduction <add>, %74, %cst_61 [0] : vector<256x128xf32> to vector<128xf32>
    %76 = vector.shape_cast %75 : vector<128xf32> to vector<1x128xf32>
    %77 = vector.shape_cast %76 : vector<1x128xf32> to vector<1x1x128xf32>
    %c0_62 = arith.constant 0 : index
    %c0_63 = arith.constant 0 : index
    %c0_64 = arith.constant 0 : index
    %78 = vector.load %arg6[%c0_62, %c0_63, %c0_64] : memref<1x2x128xf32, #tpu.memory_space<vmem>>, vector<1x1x128xf32>
    tpu.vector_store %arg6[%c0_62, %c0_63, %c0_64], %77 {strides = array<i32>} : memref<1x2x128xf32, #tpu.memory_space<vmem>>, vector<1x1x128xf32>,
    %79 = arith.mulf %74, %74 : vector<256x128xf32>
    %cst_65 = arith.constant dense<0.000000e+00> : vector<128xf32>
    %80 = vector.multi_reduction <add>, %79, %cst_65 [0] : vector<256x128xf32> to vector<128xf32>
    %81 = vector.shape_cast %80 : vector<128xf32> to vector<1x128xf32>
    %82 = vector.shape_cast %81 : vector<1x128xf32> to vector<1x1x128xf32>
    %c0_66 = arith.constant 0 : index
    %c1_67 = arith.constant 1 : index
    %c0_68 = arith.constant 0 : index
    %83 = vector.load %arg6[%c0_66, %c1_67, %c0_68] : memref<1x2x128xf32, #tpu.memory_space<vmem>>, vector<1x1x128xf32>
    tpu.vector_store %arg6[%c0_66, %c1_67, %c0_68], %82 {strides = array<i32>} : memref<1x2x128xf32, #tpu.memory_space<vmem>>, vector<1x1x128xf32>,
    return
  }
  func.func @transform_0(%arg0: i32) -> (i32, i32, i32, i32) {
    %c0_i32 = arith.constant 0 : i32
    %c0_i32_0 = arith.constant 0 : i32
    %c0_i32_1 = arith.constant 0 : i32
    %c0_i32_2 = arith.constant 0 : i32
    return %arg0, %c0_i32, %c0_i32_0, %c0_i32_1 : i32, i32, i32, i32
  }
  func.func @transform_1(%arg0: i32) -> (i32, i32) {
    %c0_i32 = arith.constant 0 : i32
    %c0_i32_0 = arith.constant 0 : i32
    %c0_i32_1 = arith.constant 0 : i32
    return %c0_i32, %c0_i32_0 : i32, i32
  }
  func.func @transform_2(%arg0: i32) -> (i32, i32) {
    %c0_i32 = arith.constant 0 : i32
    %c0_i32_0 = arith.constant 0 : i32
    %c0_i32_1 = arith.constant 0 : i32
    return %c0_i32, %c0_i32_0 : i32, i32
  }
  func.func @transform_3(%arg0: i32) -> (i32, i32, i32) {
    %c0_i32 = arith.constant 0 : i32
    %c0_i32_0 = arith.constant 0 : i32
    %c0_i32_1 = arith.constant 0 : i32
    %c0_i32_2 = arith.constant 0 : i32
    return %c0_i32, %c0_i32_0, %c0_i32_1 : i32, i32, i32
  }
  func.func @transform_4(%arg0: i32) -> (i32, i32, i32, i32) {
    %c0_i32 = arith.constant 0 : i32
    %c0_i32_0 = arith.constant 0 : i32
    %c0_i32_1 = arith.constant 0 : i32
    %c0_i32_2 = arith.constant 0 : i32
    return %arg0, %c0_i32, %c0_i32_0, %c0_i32_1 : i32, i32, i32, i32
  }
  func.func @transform_5(%arg0: i32) -> (i32, i32, i32) {
    %c0_i32 = arith.constant 0 : i32
    %c0_i32_0 = arith.constant 0 : i32
    %c0_i32_1 = arith.constant 0 : i32
    return %arg0, %c0_i32, %c0_i32_0 : i32, i32, i32
  }
}

module attributes {stable_mosaic.version = 11 : i64} {
  func.func @pass3_kernel(%arg0: i32, %arg1: memref<256x128xbf16, #tpu.memory_space<vmem>>, %arg2: memref<1x128xf32, #tpu.memory_space<vmem>>, %arg3: memref<1x128xf32, #tpu.memory_space<vmem>>, %arg4: memref<128x128xbf16, #tpu.memory_space<vmem>>, %arg5: memref<256x128xbf16, #tpu.memory_space<vmem>>, %arg6: memref<1x2x128xf32, #tpu.memory_space<vmem>>) attributes {dimension_semantics = [#tpu.dimension_semantics<parallel>], iteration_bounds = array<i64: 2>, scalar_prefetch = 0 : i64, scratch_operands = 0 : i64, tpu.core_type = #tpu.core_type<tc>, window_params = [{transform_indices = @transform_0, window_bounds = array<i64: 256, 128>}, {pipeline_mode = #tpu.pipeline_mode<synchronous>, transform_indices = @transform_1, window_bounds = array<i64: 1, 128>}, {pipeline_mode = #tpu.pipeline_mode<synchronous>, transform_indices = @transform_2, window_bounds = array<i64: 1, 128>}, {pipeline_mode = #tpu.pipeline_mode<synchronous>, transform_indices = @transform_3, window_bounds = array<i64: 128, 128>}, {transform_indices = @transform_4, window_bounds = array<i64: 256, 128>}, {transform_indices = @transform_5, window_bounds = array<i64: 1, 2, 128>}]} {
    %c0 = arith.constant 0 : index
    %c0_0 = arith.constant 0 : index
    %0 = vector.load %arg1[%c0, %c0_0] : memref<256x128xbf16, #tpu.memory_space<vmem>>, vector<256x128xbf16>
    %1 = arith.extf %0 : vector<256x128xbf16> to vector<256x128xf32>
    %c0_1 = arith.constant 0 : index
    %c0_2 = arith.constant 0 : index
    %2 = vector.load %arg2[%c0_1, %c0_2] : memref<1x128xf32, #tpu.memory_space<vmem>>, vector<1x128xf32>
    %3 = vector.broadcast %2 : vector<1x128xf32> to vector<256x128xf32>
    %4 = arith.mulf %1, %3 : vector<256x128xf32>
    %c0_3 = arith.constant 0 : index
    %c0_4 = arith.constant 0 : index
    %5 = vector.load %arg3[%c0_3, %c0_4] : memref<1x128xf32, #tpu.memory_space<vmem>>, vector<1x128xf32>
    %6 = vector.broadcast %5 : vector<1x128xf32> to vector<256x128xf32>
    %7 = arith.addf %4, %6 : vector<256x128xf32>
    %cst = arith.constant 0.000000e+00 : f32
    %8 = vector.broadcast %cst : f32 to vector<256x128xf32>
    %9 = arith.maximumf %7, %8 : vector<256x128xf32>
    %10 = arith.truncf %9 : vector<256x128xf32> to vector<256x128xbf16>
    %c0_5 = arith.constant 0 : index
    %c0_6 = arith.constant 0 : index
    %11 = vector.load %arg4[%c0_5, %c0_6] : memref<128x128xbf16, #tpu.memory_space<vmem>>, vector<128x128xbf16>
    %cst_7 = arith.constant dense<0.000000e+00> : vector<256x128xf32>
    %12 = tpu.matmul %10, %11, %cst_7 {dimension_numbers = #tpu.dot_dimension_numbers<[1], [0], [0], [1], [0, 0, 1, 1], [], []>} : vector<256x128xbf16>, vector<128x128xbf16>, vector<256x128xf32> -> vector<256x128xf32>
    %13 = arith.truncf %12 : vector<256x128xf32> to vector<256x128xbf16>
    %c0_8 = arith.constant 0 : index
    %c0_9 = arith.constant 0 : index
    %14 = vector.load %arg5[%c0_8, %c0_9] : memref<256x128xbf16, #tpu.memory_space<vmem>>, vector<256x128xbf16>
    tpu.vector_store %arg5[%c0_8, %c0_9], %13 {strides = array<i32>} : memref<256x128xbf16, #tpu.memory_space<vmem>>, vector<256x128xbf16>,
    %cst_10 = arith.constant dense<0.000000e+00> : vector<128xf32>
    %15 = vector.multi_reduction <add>, %12, %cst_10 [0] : vector<256x128xf32> to vector<128xf32>
    %16 = vector.shape_cast %15 : vector<128xf32> to vector<1x128xf32>
    %17 = vector.shape_cast %16 : vector<1x128xf32> to vector<1x1x128xf32>
    %c0_11 = arith.constant 0 : index
    %c0_12 = arith.constant 0 : index
    %c0_13 = arith.constant 0 : index
    %18 = vector.load %arg6[%c0_11, %c0_12, %c0_13] : memref<1x2x128xf32, #tpu.memory_space<vmem>>, vector<1x1x128xf32>
    tpu.vector_store %arg6[%c0_11, %c0_12, %c0_13], %17 {strides = array<i32>} : memref<1x2x128xf32, #tpu.memory_space<vmem>>, vector<1x1x128xf32>,
    %19 = arith.mulf %12, %12 : vector<256x128xf32>
    %cst_14 = arith.constant dense<0.000000e+00> : vector<128xf32>
    %20 = vector.multi_reduction <add>, %19, %cst_14 [0] : vector<256x128xf32> to vector<128xf32>
    %21 = vector.shape_cast %20 : vector<128xf32> to vector<1x128xf32>
    %22 = vector.shape_cast %21 : vector<1x128xf32> to vector<1x1x128xf32>
    %c0_15 = arith.constant 0 : index
    %c1 = arith.constant 1 : index
    %c0_16 = arith.constant 0 : index
    %23 = vector.load %arg6[%c0_15, %c1, %c0_16] : memref<1x2x128xf32, #tpu.memory_space<vmem>>, vector<1x1x128xf32>
    tpu.vector_store %arg6[%c0_15, %c1, %c0_16], %22 {strides = array<i32>} : memref<1x2x128xf32, #tpu.memory_space<vmem>>, vector<1x1x128xf32>,
    return
  }
  func.func @transform_0(%arg0: i32) -> (i32, i32) {
    %c0_i32 = arith.constant 0 : i32
    %c0_i32_0 = arith.constant 0 : i32
    return %arg0, %c0_i32 : i32, i32
  }
  func.func @transform_1(%arg0: i32) -> (i32, i32) {
    %c0_i32 = arith.constant 0 : i32
    %c0_i32_0 = arith.constant 0 : i32
    %c0_i32_1 = arith.constant 0 : i32
    return %c0_i32, %c0_i32_0 : i32, i32
  }
  func.func @transform_2(%arg0: i32) -> (i32, i32) {
    %c0_i32 = arith.constant 0 : i32
    %c0_i32_0 = arith.constant 0 : i32
    %c0_i32_1 = arith.constant 0 : i32
    return %c0_i32, %c0_i32_0 : i32, i32
  }
  func.func @transform_3(%arg0: i32) -> (i32, i32) {
    %c0_i32 = arith.constant 0 : i32
    %c0_i32_0 = arith.constant 0 : i32
    %c0_i32_1 = arith.constant 0 : i32
    return %c0_i32, %c0_i32_0 : i32, i32
  }
  func.func @transform_4(%arg0: i32) -> (i32, i32) {
    %c0_i32 = arith.constant 0 : i32
    %c0_i32_0 = arith.constant 0 : i32
    return %arg0, %c0_i32 : i32, i32
  }
  func.func @transform_5(%arg0: i32) -> (i32, i32, i32) {
    %c0_i32 = arith.constant 0 : i32
    %c0_i32_0 = arith.constant 0 : i32
    %c0_i32_1 = arith.constant 0 : i32
    return %arg0, %c0_i32, %c0_i32_0 : i32, i32, i32
  }
}

module attributes {stable_mosaic.version = 11 : i64} {
  func.func @pass4_kernel(%arg0: i32, %arg1: memref<256x128xbf16, #tpu.memory_space<vmem>>, %arg2: memref<256x128xbf16, #tpu.memory_space<vmem>>, %arg3: memref<1x128xf32, #tpu.memory_space<vmem>>, %arg4: memref<1x128xf32, #tpu.memory_space<vmem>>, %arg5: memref<1x128xf32, #tpu.memory_space<vmem>>, %arg6: memref<1x128xf32, #tpu.memory_space<vmem>>, %arg7: memref<256x128xf32, #tpu.memory_space<vmem>>) attributes {dimension_semantics = [#tpu.dimension_semantics<parallel>], iteration_bounds = array<i64: 2>, scalar_prefetch = 0 : i64, scratch_operands = 0 : i64, tpu.core_type = #tpu.core_type<tc>, window_params = [{transform_indices = @transform_0, window_bounds = array<i64: 256, 128>}, {transform_indices = @transform_1, window_bounds = array<i64: 256, 128>}, {pipeline_mode = #tpu.pipeline_mode<synchronous>, transform_indices = @transform_2, window_bounds = array<i64: 1, 128>}, {pipeline_mode = #tpu.pipeline_mode<synchronous>, transform_indices = @transform_3, window_bounds = array<i64: 1, 128>}, {pipeline_mode = #tpu.pipeline_mode<synchronous>, transform_indices = @transform_4, window_bounds = array<i64: 1, 128>}, {pipeline_mode = #tpu.pipeline_mode<synchronous>, transform_indices = @transform_5, window_bounds = array<i64: 1, 128>}, {transform_indices = @transform_6, window_bounds = array<i64: 256, 128>}]} {
    %c0 = arith.constant 0 : index
    %c0_0 = arith.constant 0 : index
    %0 = vector.load %arg1[%c0, %c0_0] : memref<256x128xbf16, #tpu.memory_space<vmem>>, vector<256x128xbf16>
    %1 = arith.extf %0 : vector<256x128xbf16> to vector<256x128xf32>
    %c0_1 = arith.constant 0 : index
    %c0_2 = arith.constant 0 : index
    %2 = vector.load %arg3[%c0_1, %c0_2] : memref<1x128xf32, #tpu.memory_space<vmem>>, vector<1x128xf32>
    %3 = vector.broadcast %2 : vector<1x128xf32> to vector<256x128xf32>
    %4 = arith.mulf %1, %3 : vector<256x128xf32>
    %c0_3 = arith.constant 0 : index
    %c0_4 = arith.constant 0 : index
    %5 = vector.load %arg4[%c0_3, %c0_4] : memref<1x128xf32, #tpu.memory_space<vmem>>, vector<1x128xf32>
    %6 = vector.broadcast %5 : vector<1x128xf32> to vector<256x128xf32>
    %7 = arith.addf %4, %6 : vector<256x128xf32>
    %c0_5 = arith.constant 0 : index
    %c0_6 = arith.constant 0 : index
    %8 = vector.load %arg2[%c0_5, %c0_6] : memref<256x128xbf16, #tpu.memory_space<vmem>>, vector<256x128xbf16>
    %9 = arith.extf %8 : vector<256x128xbf16> to vector<256x128xf32>
    %c0_7 = arith.constant 0 : index
    %c0_8 = arith.constant 0 : index
    %10 = vector.load %arg5[%c0_7, %c0_8] : memref<1x128xf32, #tpu.memory_space<vmem>>, vector<1x128xf32>
    %11 = vector.broadcast %10 : vector<1x128xf32> to vector<256x128xf32>
    %12 = arith.mulf %9, %11 : vector<256x128xf32>
    %13 = arith.addf %7, %12 : vector<256x128xf32>
    %c0_9 = arith.constant 0 : index
    %c0_10 = arith.constant 0 : index
    %14 = vector.load %arg6[%c0_9, %c0_10] : memref<1x128xf32, #tpu.memory_space<vmem>>, vector<1x128xf32>
    %15 = vector.broadcast %14 : vector<1x128xf32> to vector<256x128xf32>
    %16 = arith.addf %13, %15 : vector<256x128xf32>
    %cst = arith.constant 0.000000e+00 : f32
    %17 = vector.broadcast %cst : f32 to vector<256x128xf32>
    %18 = arith.maximumf %16, %17 : vector<256x128xf32>
    %c0_11 = arith.constant 0 : index
    %c0_12 = arith.constant 0 : index
    %19 = vector.load %arg7[%c0_11, %c0_12] : memref<256x128xf32, #tpu.memory_space<vmem>>, vector<256x128xf32>
    tpu.vector_store %arg7[%c0_11, %c0_12], %18 {strides = array<i32>} : memref<256x128xf32, #tpu.memory_space<vmem>>, vector<256x128xf32>,
    return
  }
  func.func @transform_0(%arg0: i32) -> (i32, i32) {
    %c0_i32 = arith.constant 0 : i32
    %c0_i32_0 = arith.constant 0 : i32
    return %arg0, %c0_i32 : i32, i32
  }
  func.func @transform_1(%arg0: i32) -> (i32, i32) {
    %c0_i32 = arith.constant 0 : i32
    %c0_i32_0 = arith.constant 0 : i32
    return %arg0, %c0_i32 : i32, i32
  }
  func.func @transform_2(%arg0: i32) -> (i32, i32) {
    %c0_i32 = arith.constant 0 : i32
    %c0_i32_0 = arith.constant 0 : i32
    %c0_i32_1 = arith.constant 0 : i32
    return %c0_i32, %c0_i32_0 : i32, i32
  }
  func.func @transform_3(%arg0: i32) -> (i32, i32) {
    %c0_i32 = arith.constant 0 : i32
    %c0_i32_0 = arith.constant 0 : i32
    %c0_i32_1 = arith.constant 0 : i32
    return %c0_i32, %c0_i32_0 : i32, i32
  }
  func.func @transform_4(%arg0: i32) -> (i32, i32) {
    %c0_i32 = arith.constant 0 : i32
    %c0_i32_0 = arith.constant 0 : i32
    %c0_i32_1 = arith.constant 0 : i32
    return %c0_i32, %c0_i32_0 : i32, i32
  }
  func.func @transform_5(%arg0: i32) -> (i32, i32) {
    %c0_i32 = arith.constant 0 : i32
    %c0_i32_0 = arith.constant 0 : i32
    %c0_i32_1 = arith.constant 0 : i32
    return %c0_i32, %c0_i32_0 : i32, i32
  }
  func.func @transform_6(%arg0: i32) -> (i32, i32) {
    %c0_i32 = arith.constant 0 : i32
    %c0_i32_0 = arith.constant 0 : i32
    return %arg0, %c0_i32 : i32, i32
  }
}

</mosaic_0001>

<llo_original>
// kernel: residual_unit_pallas.7
$region0: #{residual_unit_pallas.7}
  #allocation0 [shape = 'u32[]', space=smem, size = 0x4, offset = 0x4, fixed_abs, tag = 'smem constant byte address 0x4 - core index']
  #allocation1 [shape = 'u32[144,128]{1,0:T(1,128)}', space=vmem, size = 0x12000, scoped, tag = 'internal scratch']
  %s0 = inlined_call_operand.vmem [shape: bf16[512,128], index: 0, kind: input, shape index: {}]
  %s1 = inlined_call_operand.vmem [shape: bf16[512,128], index: 1, kind: input, shape index: {}]
  %s2 = inlined_call_operand.vmem [shape: f32[1,128], index: 2, kind: input, shape index: {}]
  %s3 = inlined_call_operand.vmem [shape: f32[1,128], index: 3, kind: input, shape index: {}]
  %s4 = inlined_call_operand.vmem [shape: f32[1,128], index: 4, kind: input, shape index: {}]
  %s5 = inlined_call_operand.vmem [shape: f32[1,128], index: 5, kind: input, shape index: {}]
  %s6 = inlined_call_operand.vmem [shape: f32[512,128], index: 6, kind: output, shape index: {}]
  %s7 = sld [smem:[#allocation0]]
  $region57: #{residual_unit_pallas.7} parent=0
    _
  %s9 = ssub.s32 1, %s7
  %s10 = scalar_select 0, %s9, %s7
  loop: start=0, step=1, limit=4
  $region2: #{residual_unit_pallas.7} parent=0 // loop_pre_header
    _
  $region3: #{residual_unit_pallas.7} parent=0 // loop_header
    %s12 = sphi 0, %s16
    %p13 = scmp.ge.s32.totalorder %s12, 4
    %s22 = sphi 0, %s24
    %s25 = sphi 0, %s22
    %s26 = sphi 0, %s25
    %s42 = sphi 0, %s26
    %s48 = sphi 0, %s50
    %s51 = sphi 0, %s48
    %s52 = sphi 0, %s51
    %s68 = sphi 0, %s52
    %s72 = sphi 0, %s72
    %s74 = sphi 0, %s72
    %s75 = sphi 0, %s74
    %s89 = sphi 0, %s75
    %s93 = sphi 0, %s93
    %s95 = sphi 0, %s93
    %s96 = sphi 0, %s95
    %s110 = sphi 0, %s96
    %s114 = sphi 0, %s114
    %s116 = sphi 0, %s114
    %s117 = sphi 0, %s116
    %s131 = sphi 0, %s117
    %s135 = sphi 0, %s135
    %s137 = sphi 0, %s135
    %s138 = sphi 0, %s137
    %s152 = sphi 0, %s138
    %s158 = sphi 0, %s160
    %s161 = sphi 0, %s158
    %s162 = sphi 0, %s161
    %s178 = sphi 0, %s162
  $region4: #{residual_unit_pallas.7} parent=0 // loop_header_branch
    %15 = sbr.rel (%p13) target = $region8
  $region5: #{residual_unit_pallas.7} parent=0 // loop_body
    %s17 = ssub.s32 %s12, 1
    %s18 = ssub.s32 %s12, 2
    %s19 = sadd.s32 %s12, 1
    %s20 = ssub.s32 %s12, %s19
    %p21 = scmp.eq.s32.totalorder %s20, 0
    %s23 = sadd.s32 %s22, 1
    %s24 = scalar_select %p21, %s22, %s23
    %p27 = pneg %p21
    %p28 = scmp.eq.s32.totalorder %s12, 1
    %p29 = por %p27, %p28
    %p30 = scmp.ne.s32.totalorder %s22, %s25
    %p31 = scmp.eq.s32.totalorder %s12, 0
    %p32 = por %p30, %p31
    %p33 = scmp.ne.s32.totalorder %s22, %s25
    %p34 = scmp.eq.s32.totalorder %s17, 1
    %p35 = por %p33, %p34
    %p36 = scmp.ne.s32.totalorder %s25, %s26
    %p37 = scmp.eq.s32.totalorder %s17, 0
    %p38 = por %p36, %p37
    %p39 = scmp.ne.s32.totalorder %s25, %s26
    %p40 = scmp.eq.s32.totalorder %s18, 1
    %p41 = por %p39, %p40
    %p43 = scmp.ne.s32.totalorder %s26, %s42
    %p44 = scmp.eq.s32.totalorder %s18, 0
    %p45 = por %p43, %p44
    %s46 = ssub.s32 %s12, %s19
    %p47 = scmp.eq.s32.totalorder %s46, 0
    %s49 = sadd.s32 %s48, 1
    %s50 = scalar_select %p47, %s48, %s49
    %p53 = pneg %p47
    %p54 = scmp.eq.s32.totalorder %s12, 1
    %p55 = por %p53, %p54
    %p56 = scmp.ne.s32.totalorder %s48, %s51
    %p57 = scmp.eq.s32.totalorder %s12, 0
    %p58 = por %p56, %p57
    %p59 = scmp.ne.s32.totalorder %s48, %s51
    %p60 = scmp.eq.s32.totalorder %s17, 1
    %p61 = por %p59, %p60
    %p62 = scmp.ne.s32.totalorder %s51, %s52
    %p63 = scmp.eq.s32.totalorder %s17, 0
    %p64 = por %p62, %p63
    %p65 = scmp.ne.s32.totalorder %s51, %s52
    %p66 = scmp.eq.s32.totalorder %s18, 1
    %p67 = por %p65, %p66
    %p69 = scmp.ne.s32.totalorder %s52, %s68
    %p70 = scmp.eq.s32.totalorder %s18, 0
    %p71 = por %p69, %p70
    %s73 = sadd.s32 %s72, 1
    %p76 = scmp.eq.s32.totalorder %s12, 1
    %p77 = scmp.ne.s32.totalorder %s72, %s74
    %p78 = scmp.eq.s32.totalorder %s12, 0
    %p79 = por %p77, %p78
    %p80 = scmp.ne.s32.totalorder %s72, %s74
    %p81 = scmp.eq.s32.totalorder %s17, 1
    %p82 = por %p80, %p81
    %p83 = scmp.ne.s32.totalorder %s74, %s75
    %p84 = scmp.eq.s32.totalorder %s17, 0
    %p85 = por %p83, %p84
    %p86 = scmp.ne.s32.totalorder %s74, %s75
    %p87 = scmp.eq.s32.totalorder %s18, 1
    %p88 = por %p86, %p87
    %p90 = scmp.ne.s32.totalorder %s75, %s89
    %p91 = scmp.eq.s32.totalorder %s18, 0
    %p92 = por %p90, %p91
    %s94 = sadd.s32 %s93, 1
    %p97 = scmp.eq.s32.totalorder %s12, 1
    %p98 = scmp.ne.s32.totalorder %s93, %s95
    %p99 = scmp.eq.s32.totalorder %s12, 0
    %p100 = por %p98, %p99
    %p101 = scmp.ne.s32.totalorder %s93, %s95
    %p102 = scmp.eq.s32.totalorder %s17, 1
    %p103 = por %p101, %p102
    %p104 = scmp.ne.s32.totalorder %s95, %s96
    %p105 = scmp.eq.s32.totalorder %s17, 0
    %p106 = por %p104, %p105
    %p107 = scmp.ne.s32.totalorder %s95, %s96
    %p108 = scmp.eq.s32.totalorder %s18, 1
    %p109 = por %p107, %p108
    %p111 = scmp.ne.s32.totalorder %s96, %s110
    %p112 = scmp.eq.s32.totalorder %s18, 0
    %p113 = por %p111, %p112
    %s115 = sadd.s32 %s114, 1
    %p118 = scmp.eq.s32.totalorder %s12, 1
    %p119 = scmp.ne.s32.totalorder %s114, %s116
    %p120 = scmp.eq.s32.totalorder %s12, 0
    %p121 = por %p119, %p120
    %p122 = scmp.ne.s32.totalorder %s114, %s116
    %p123 = scmp.eq.s32.totalorder %s17, 1
    %p124 = por %p122, %p123
    %p125 = scmp.ne.s32.totalorder %s116, %s117
    %p126 = scmp.eq.s32.totalorder %s17, 0
    %p127 = por %p125, %p126
    %p128 = scmp.ne.s32.totalorder %s116, %s117
    %p129 = scmp.eq.s32.totalorder %s18, 1
    %p130 = por %p128, %p129
    %p132 = scmp.ne.s32.totalorder %s117, %s131
    %p133 = scmp.eq.s32.totalorder %s18, 0
    %p134 = por %p132, %p133
    %s136 = sadd.s32 %s135, 1
    %p139 = scmp.eq.s32.totalorder %s12, 1
    %p140 = scmp.ne.s32.totalorder %s135, %s137
    %p141 = scmp.eq.s32.totalorder %s12, 0
    %p142 = por %p140, %p141
    %p143 = scmp.ne.s32.totalorder %s135, %s137
    %p144 = scmp.eq.s32.totalorder %s17, 1
    %p145 = por %p143, %p144
    %p146 = scmp.ne.s32.totalorder %s137, %s138
    %p147 = scmp.eq.s32.totalorder %s17, 0
    %p148 = por %p146, %p147
    %p149 = scmp.ne.s32.totalorder %s137, %s138
    %p150 = scmp.eq.s32.totalorder %s18, 1
    %p151 = por %p149, %p150
    %p153 = scmp.ne.s32.totalorder %s138, %s152
    %p154 = scmp.eq.s32.totalorder %s18, 0
    %p155 = por %p153, %p154
    %s156 = ssub.s32 %s12, %s19
    %p157 = scmp.eq.s32.totalorder %s156, 0
    %s159 = sadd.s32 %s158, 1
    %s160 = scalar_select %p157, %s158, %s159
    %p163 = pneg %p157
    %p164 = scmp.eq.s32.totalorder %s12, 1
    %p165 = por %p163, %p164
    %p166 = scmp.ne.s32.totalorder %s158, %s161
    %p167 = scmp.eq.s32.totalorder %s12, 0
    %p168 = por %p166, %p167
    %p169 = scmp.ne.s32.totalorder %s158, %s161
    %p170 = scmp.eq.s32.totalorder %s17, 1
    %p171 = por %p169, %p170
    %p172 = scmp.ne.s32.totalorder %s161, %s162
    %p173 = scmp.eq.s32.totalorder %s17, 0
    %p174 = por %p172, %p173
    %p175 = scmp.ne.s32.totalorder %s161, %s162
    %p176 = scmp.eq.s32.totalorder %s18, 1
    %p177 = por %p175, %p176
    %p179 = scmp.ne.s32.totalorder %s162, %s178
    %p180 = scmp.eq.s32.totalorder %s18, 0
    %p181 = por %p179, %p180
    %p182 = scmp.le.s32.totalorder 1, %s12
    %p183 = scmp.lt.s32.totalorder %s12, 3
    %p184 = pnand %p182, %p183
    %p185 = pneg %p184
    // Predicated region
    $region9: #{residual_unit_pallas.7} parent=5 // pred_check
      _
    $region10: #{residual_unit_pallas.7} parent=5 // pred_check_branch
      %187 = sbr.rel (%p184) target = $region12
    $region11: #{residual_unit_pallas.7} parent=5 // pred_region
      %s188 = ssub.s32 %s12, 1
      // Predicated region
      $region13: #{residual_unit_pallas.7} parent=11 // pred_check
        %p189 = pneg %p85
      $region14: #{residual_unit_pallas.7} parent=11 // pred_check_branch
        %191 = sbr.rel (%p189) target = $region16
      $region15: #{residual_unit_pallas.7} parent=11 // pred_region
        _
      $region16: #{residual_unit_pallas.7} parent=11 // pred_fallthru
        _
      // Predicated region
      $region17: #{residual_unit_pallas.7} parent=11 // pred_check
        %p192 = pneg %p106
      $region18: #{residual_unit_pallas.7} parent=11 // pred_check_branch
        %194 = sbr.rel (%p192) target = $region20
      $region19: #{residual_unit_pallas.7} parent=11 // pred_region
        _
      $region20: #{residual_unit_pallas.7} parent=11 // pred_fallthru
        _
      // Predicated region
      $region21: #{residual_unit_pallas.7} parent=11 // pred_check
        %p195 = pneg %p127
      $region22: #{residual_unit_pallas.7} parent=11 // pred_check_branch
        %197 = sbr.rel (%p195) target = $region24
      $region23: #{residual_unit_pallas.7} parent=11 // pred_region
        _
      $region24: #{residual_unit_pallas.7} parent=11 // pred_fallthru
        _
      // Predicated region
      $region25: #{residual_unit_pallas.7} parent=11 // pred_check
        %p198 = pneg %p148
      $region26: #{residual_unit_pallas.7} parent=11 // pred_check_branch
        %200 = sbr.rel (%p198) target = $region28
      $region27: #{residual_unit_pallas.7} parent=11 // pred_region
        _
      $region28: #{residual_unit_pallas.7} parent=11 // pred_fallthru
        _
    $region12: #{residual_unit_pallas.7} parent=5 // pred_fallthru
      _
    %p201 = scmp.lt.s32.totalorder %s12, 2
    // Predicated region
    $region29: #{residual_unit_pallas.7} parent=5 // pred_check
      %p202 = pneg %p201
    $region30: #{residual_unit_pallas.7} parent=5 // pred_check_branch
      %204 = sbr.rel (%p202) target = $region32
    $region31: #{residual_unit_pallas.7} parent=5 // pred_region
      // Predicated region
      $region33: #{residual_unit_pallas.7} parent=31 // pred_check
        %p205 = pneg %p32
      $region34: #{residual_unit_pallas.7} parent=31 // pred_check_branch
        %207 = sbr.rel (%p205) target = $region36
      $region35: #{residual_unit_pallas.7} parent=31 // pred_region
        %s208 = smul.u32 32, %s12
        %p209 = scmp.lt.s32.totalorder %s208, 63
        %s210 = scalar_select %p209, %s208, 63
        %s211 = smul.addr %s210, 4
        %s212 = scalar_lea.vmem %s0, %s211
        %s213 = smul.u32 32, %s12
      $region36: #{residual_unit_pallas.7} parent=31 // pred_fallthru
        _
      // Predicated region
      $region37: #{residual_unit_pallas.7} parent=31 // pred_check
        %p214 = pneg %p58
      $region38: #{residual_unit_pallas.7} parent=31 // pred_check_branch
        %216 = sbr.rel (%p214) target = $region40
      $region39: #{residual_unit_pallas.7} parent=31 // pred_region
        %s217 = smul.u32 32, %s12
        %p218 = scmp.lt.s32.totalorder %s217, 63
        %s219 = scalar_select %p218, %s217, 63
        %s220 = smul.addr %s219, 4
        %s221 = scalar_lea.vmem %s1, %s220
        %s222 = smul.u32 32, %s12
      $region40: #{residual_unit_pallas.7} parent=31 // pred_fallthru
        _
    $region32: #{residual_unit_pallas.7} parent=5 // pred_fallthru
      _
    %p223 = scmp.le.s32.totalorder 1, %s12
    %p224 = scmp.lt.s32.totalorder %s12, 3
    %p225 = pnand %p223, %p224
    %p226 = pneg %p225
    // Predicated region
    $region41: #{residual_unit_pallas.7} parent=5 // pred_check
      _
    $region42: #{residual_unit_pallas.7} parent=5 // pred_check_branch
      %228 = sbr.rel (%p225) target = $region44
    $region43: #{residual_unit_pallas.7} parent=5 // pred_region
      %s229 = ssub.s32 %s12, 1
      %s230 = smul.u32 32, %s17
      %p231 = scmp.lt.s32.totalorder %s230, 63
      %s232 = scalar_select %p231, %s230, 63
      %s233 = smul.addr %s232, 4
      %s234 = scalar_lea.vmem %s0, %s233
      %p235 = pneg %p38
      %p236 = pneg %p35
      %s237 = smul.u32 32, %s17
      %p238 = scmp.lt.s32.totalorder %s237, 63
      %s239 = scalar_select %p238, %s237, 63
      %s240 = smul.addr %s239, 4
      %s241 = scalar_lea.vmem %s1, %s240
      %p242 = pneg %p64
      %p243 = pneg %p61
      %p244 = pneg %p85
      %p245 = pneg %p82
      %p246 = pneg %p106
      %p247 = pneg %p103
      %p248 = pneg %p127
      %p249 = pneg %p124
      %p250 = pneg %p148
      %p251 = pneg %p145
      %p252 = pneg %p174
      %p253 = pneg %p171
      %s254 = smul.u32 32, %s17
      %p255 = scmp.lt.s32.totalorder %s254, 63
      %s256 = scalar_select %p255, %s254, 63
      %s257 = smul.addr %s256, 8
      %s258 = scalar_lea.vmem %s6, %s257
      %s259 = smul.u32 32, %s17
      %p260 = scmp.lt.s32.totalorder %s259, 63
      %s261 = scalar_select %p260, %s259, 63
      %s262 = smul.addr %s261, 4
      %s263 = scalar_lea.vmem %s0, %s262
      %s264 = smul.u32 32, %s17
      %s265 = smul.u32 32, %s17
      %p266 = scmp.lt.s32.totalorder %s265, 63
      %s267 = scalar_select %p266, %s265, 63
      %s268 = smul.addr %s267, 4
      %s269 = scalar_lea.vmem %s1, %s268
      %s270 = smul.u32 32, %s17
      %s271 = smul.u32 32, %s17
      %p272 = scmp.lt.s32.totalorder %s271, 63
      %s273 = scalar_select %p272, %s271, 63
      %s274 = smul.addr %s273, 8
      %s275 = scalar_lea.vmem %s6, %s274
      %s276 = smul.u32 32, %s17
      %v277 = vld [vmem:[%s263] sm:$0xf]
      %v278 = vld [vmem:[%s263 + $0x4] sm:$0xf]
      %v279 = vld [vmem:[%s263 + $0x8] sm:$0xf]
      %v280 = vld [vmem:[%s263 + $0xc] sm:$0xf]
      %v281 = vld [vmem:[%s263 + $0x10] sm:$0xf]
      %v282 = vld [vmem:[%s263 + $0x14] sm:$0xf]
      %v283 = vld [vmem:[%s263 + $0x18] sm:$0xf]
      %v284 = vld [vmem:[%s263 + $0x1c] sm:$0xf]
      %v285 = vld [vmem:[%s263 + $0x20] sm:$0xf]
      %v286 = vld [vmem:[%s263 + $0x24] sm:$0xf]
      %v287 = vld [vmem:[%s263 + $0x28] sm:$0xf]
      %v288 = vld [vmem:[%s263 + $0x2c] sm:$0xf]
      %v289 = vld [vmem:[%s263 + $0x30] sm:$0xf]
      %v290 = vld [vmem:[%s263 + $0x34] sm:$0xf]
      %v291 = vld [vmem:[%s263 + $0x38] sm:$0xf]
      %v292 = vld [vmem:[%s263 + $0x3c] sm:$0xf]
      %v293 = vld [vmem:[%s263 + $0x40] sm:$0xf]
      %v294 = vld [vmem:[%s263 + $0x44] sm:$0xf]
      %v295 = vld [vmem:[%s263 + $0x48] sm:$0xf]
      %v296 = vld [vmem:[%s263 + $0x4c] sm:$0xf]
      %v297 = vld [vmem:[%s263 + $0x50] sm:$0xf]
      %v298 = vld [vmem:[%s263 + $0x54] sm:$0xf]
      %v299 = vld [vmem:[%s263 + $0x58] sm:$0xf]
      %v300 = vld [vmem:[%s263 + $0x5c] sm:$0xf]
      %v301 = vld [vmem:[%s263 + $0x60] sm:$0xf]
      %v302 = vld [vmem:[%s263 + $0x64] sm:$0xf]
      %v303 = vld [vmem:[%s263 + $0x68] sm:$0xf]
      %v304 = vld [vmem:[%s263 + $0x6c] sm:$0xf]
      %v305 = vld [vmem:[%s263 + $0x70] sm:$0xf]
      %v306 = vld [vmem:[%s263 + $0x74] sm:$0xf]
      %v307 = vld [vmem:[%s263 + $0x78] sm:$0xf]
      %v308 = vld [vmem:[%s263 + $0x7c] sm:$0xf]
      %v309 = vunpack.c.l.bf16 %v277
      %v310 = vunpack.c.l.bf16 %v278
      %v311 = vunpack.c.l.bf16 %v279
      %v312 = vunpack.c.l.bf16 %v280
      %v313 = vunpack.c.l.bf16 %v281
      %v314 = vunpack.c.l.bf16 %v282
      %v315 = vunpack.c.l.bf16 %v283
      %v316 = vunpack.c.l.bf16 %v284
      %v317 = vunpack.c.l.bf16 %v285
      %v318 = vunpack.c.l.bf16 %v286
      %v319 = vunpack.c.l.bf16 %v287
      %v320 = vunpack.c.l.bf16 %v288
      %v321 = vunpack.c.l.bf16 %v289
      %v322 = vunpack.c.l.bf16 %v290
      %v323 = vunpack.c.l.bf16 %v291
      %v324 = vunpack.c.l.bf16 %v292
      %v325 = vunpack.c.l.bf16 %v293
      %v326 = vunpack.c.l.bf16 %v294
      %v327 = vunpack.c.l.bf16 %v295
      %v328 = vunpack.c.l.bf16 %v296
      %v329 = vunpack.c.l.bf16 %v297
      %v330 = vunpack.c.l.bf16 %v298
      %v331 = vunpack.c.l.bf16 %v299
      %v332 = vunpack.c.l.bf16 %v300
      %v333 = vunpack.c.l.bf16 %v301
      %v334 = vunpack.c.l.bf16 %v302
      %v335 = vunpack.c.l.bf16 %v303
      %v336 = vunpack.c.l.bf16 %v304
      %v337 = vunpack.c.l.bf16 %v305
      %v338 = vunpack.c.l.bf16 %v306
      %v339 = vunpack.c.l.bf16 %v307
      %v340 = vunpack.c.l.bf16 %v308
      %v341 = vld [vmem:[%s2] sm:$0x1]
      %v343 = vlaneseq
      %v344 = vshrl.u32 %v343, 7
      %v345 = vsub.s32 0, %v344
      %v346 = vrot.slane %v341, %v345
      %v348 = vmul.f32 %v309, %v346
      %v349 = vmul.f32 %v310, %v346
      %v350 = vmul.f32 %v311, %v346
      %v351 = vmul.f32 %v312, %v346
      %v352 = vmul.f32 %v313, %v346
      %v353 = vmul.f32 %v314, %v346
      %v354 = vmul.f32 %v315, %v346
      %v355 = vmul.f32 %v316, %v346
      %v356 = vmul.f32 %v317, %v346
      %v357 = vmul.f32 %v318, %v346
      %v358 = vmul.f32 %v319, %v346
      %v359 = vmul.f32 %v320, %v346
      %v360 = vmul.f32 %v321, %v346
      %v361 = vmul.f32 %v322, %v346
      %v362 = vmul.f32 %v323, %v346
      %v363 = vmul.f32 %v324, %v346
      %v364 = vmul.f32 %v325, %v346
      %v365 = vmul.f32 %v326, %v346
      %v366 = vmul.f32 %v327, %v346
      %v367 = vmul.f32 %v328, %v346
      %v368 = vmul.f32 %v329, %v346
      %v369 = vmul.f32 %v330, %v346
      %v370 = vmul.f32 %v331, %v346
      %v371 = vmul.f32 %v332, %v346
      %v372 = vmul.f32 %v333, %v346
      %v373 = vmul.f32 %v334, %v346
      %v374 = vmul.f32 %v335, %v346
      %v375 = vmul.f32 %v336, %v346
      %v376 = vmul.f32 %v337, %v346
      %v377 = vmul.f32 %v338, %v346
      %v378 = vmul.f32 %v339, %v346
      %v379 = vmul.f32 %v340, %v346
      %v380 = vld [vmem:[%s3] sm:$0x1]
      %v382 = vlaneseq
      %v383 = vshrl.u32 %v382, 7
      %v384 = vsub.s32 0, %v383
      %v385 = vrot.slane %v380, %v384
      %v387 = vadd.f32 %v348, %v385
      %v388 = vadd.f32 %v349, %v385
      %v389 = vadd.f32 %v350, %v385
      %v390 = vadd.f32 %v351, %v385
      %v391 = vadd.f32 %v352, %v385
      %v392 = vadd.f32 %v353, %v385
      %v393 = vadd.f32 %v354, %v385
      %v394 = vadd.f32 %v355, %v385
      %v395 = vadd.f32 %v356, %v385
      %v396 = vadd.f32 %v357, %v385
      %v397 = vadd.f32 %v358, %v385
      %v398 = vadd.f32 %v359, %v385
      %v399 = vadd.f32 %v360, %v385
      %v400 = vadd.f32 %v361, %v385
      %v401 = vadd.f32 %v362, %v385
      %v402 = vadd.f32 %v363, %v385
      %v403 = vadd.f32 %v364, %v385
      %v404 = vadd.f32 %v365, %v385
      %v405 = vadd.f32 %v366, %v385
      %v406 = vadd.f32 %v367, %v385
      %v407 = vadd.f32 %v368, %v385
      %v408 = vadd.f32 %v369, %v385
      %v409 = vadd.f32 %v370, %v385
      %v410 = vadd.f32 %v371, %v385
      %v411 = vadd.f32 %v372, %v385
      %v412 = vadd.f32 %v373, %v385
      %v413 = vadd.f32 %v374, %v385
      %v414 = vadd.f32 %v375, %v385
      %v415 = vadd.f32 %v376, %v385
      %v416 = vadd.f32 %v377, %v385
      %v417 = vadd.f32 %v378, %v385
      %v418 = vadd.f32 %v379, %v385
      %v419 = vld [vmem:[%s269] sm:$0xf]
      %v420 = vld [vmem:[%s269 + $0x4] sm:$0xf]
      %v421 = vld [vmem:[%s269 + $0x8] sm:$0xf]
      %v422 = vld [vmem:[%s269 + $0xc] sm:$0xf]
      %v423 = vld [vmem:[%s269 + $0x10] sm:$0xf]
      %v424 = vld [vmem:[%s269 + $0x14] sm:$0xf]
      %v425 = vld [vmem:[%s269 + $0x18] sm:$0xf]
      %v426 = vld [vmem:[%s269 + $0x1c] sm:$0xf]
      %v427 = vld [vmem:[%s269 + $0x20] sm:$0xf]
      %v428 = vld [vmem:[%s269 + $0x24] sm:$0xf]
      %v429 = vld [vmem:[%s269 + $0x28] sm:$0xf]
      %v430 = vld [vmem:[%s269 + $0x2c] sm:$0xf]
      %v431 = vld [vmem:[%s269 + $0x30] sm:$0xf]
      %v432 = vld [vmem:[%s269 + $0x34] sm:$0xf]
      %v433 = vld [vmem:[%s269 + $0x38] sm:$0xf]
      %v434 = vld [vmem:[%s269 + $0x3c] sm:$0xf]
      %v435 = vld [vmem:[%s269 + $0x40] sm:$0xf]
      %v436 = vld [vmem:[%s269 + $0x44] sm:$0xf]
      %v437 = vld [vmem:[%s269 + $0x48] sm:$0xf]
      %v438 = vld [vmem:[%s269 + $0x4c] sm:$0xf]
      %v439 = vld [vmem:[%s269 + $0x50] sm:$0xf]
      %v440 = vld [vmem:[%s269 + $0x54] sm:$0xf]
      %v441 = vld [vmem:[%s269 + $0x58] sm:$0xf]
      %v442 = vld [vmem:[%s269 + $0x5c] sm:$0xf]
      %v443 = vld [vmem:[%s269 + $0x60] sm:$0xf]
      %v444 = vld [vmem:[%s269 + $0x64] sm:$0xf]
      %v445 = vld [vmem:[%s269 + $0x68] sm:$0xf]
      %v446 = vld [vmem:[%s269 + $0x6c] sm:$0xf]
      %v447 = vld [vmem:[%s269 + $0x70] sm:$0xf]
      %v448 = vld [vmem:[%s269 + $0x74] sm:$0xf]
      %v449 = vld [vmem:[%s269 + $0x78] sm:$0xf]
      %v450 = vld [vmem:[%s269 + $0x7c] sm:$0xf]
      %v451 = vunpack.c.l.bf16 %v419
      %v452 = vunpack.c.l.bf16 %v420
      %v453 = vunpack.c.l.bf16 %v421
      %v454 = vunpack.c.l.bf16 %v422
      %v455 = vunpack.c.l.bf16 %v423
      %v456 = vunpack.c.l.bf16 %v424
      %v457 = vunpack.c.l.bf16 %v425
      %v458 = vunpack.c.l.bf16 %v426
      %v459 = vunpack.c.l.bf16 %v427
      %v460 = vunpack.c.l.bf16 %v428
      %v461 = vunpack.c.l.bf16 %v429
      %v462 = vunpack.c.l.bf16 %v430
      %v463 = vunpack.c.l.bf16 %v431
      %v464 = vunpack.c.l.bf16 %v432
      %v465 = vunpack.c.l.bf16 %v433
      %v466 = vunpack.c.l.bf16 %v434
      %v467 = vunpack.c.l.bf16 %v435
      %v468 = vunpack.c.l.bf16 %v436
      %v469 = vunpack.c.l.bf16 %v437
      %v470 = vunpack.c.l.bf16 %v438
      %v471 = vunpack.c.l.bf16 %v439
      %v472 = vunpack.c.l.bf16 %v440
      %v473 = vunpack.c.l.bf16 %v441
      %v474 = vunpack.c.l.bf16 %v442
      %v475 = vunpack.c.l.bf16 %v443
      %v476 = vunpack.c.l.bf16 %v444
      %v477 = vunpack.c.l.bf16 %v445
      %v478 = vunpack.c.l.bf16 %v446
      %v479 = vunpack.c.l.bf16 %v447
      %v480 = vunpack.c.l.bf16 %v448
      %v481 = vunpack.c.l.bf16 %v449
      %v482 = vunpack.c.l.bf16 %v450
      %v483 = vld [vmem:[%s4] sm:$0x1]
      %v485 = vlaneseq
      %v486 = vshrl.u32 %v485, 7
      %v487 = vsub.s32 0, %v486
      %v488 = vrot.slane %v483, %v487
      %v490 = vmul.f32 %v451, %v488
      %v491 = vmul.f32 %v452, %v488
      %v492 = vmul.f32 %v453, %v488
      %v493 = vmul.f32 %v454, %v488
      %v494 = vmul.f32 %v455, %v488
      %v495 = vmul.f32 %v456, %v488
      %v496 = vmul.f32 %v457, %v488
      %v497 = vmul.f32 %v458, %v488
      %v498 = vmul.f32 %v459, %v488
      %v499 = vmul.f32 %v460, %v488
      %v500 = vmul.f32 %v461, %v488
      %v501 = vmul.f32 %v462, %v488
      %v502 = vmul.f32 %v463, %v488
      %v503 = vmul.f32 %v464, %v488
      %v504 = vmul.f32 %v465, %v488
      %v505 = vmul.f32 %v466, %v488
      %v506 = vmul.f32 %v467, %v488
      %v507 = vmul.f32 %v468, %v488
      %v508 = vmul.f32 %v469, %v488
      %v509 = vmul.f32 %v470, %v488
      %v510 = vmul.f32 %v471, %v488
      %v511 = vmul.f32 %v472, %v488
      %v512 = vmul.f32 %v473, %v488
      %v513 = vmul.f32 %v474, %v488
      %v514 = vmul.f32 %v475, %v488
      %v515 = vmul.f32 %v476, %v488
      %v516 = vmul.f32 %v477, %v488
      %v517 = vmul.f32 %v478, %v488
      %v518 = vmul.f32 %v479, %v488
      %v519 = vmul.f32 %v480, %v488
      %v520 = vmul.f32 %v481, %v488
      %v521 = vmul.f32 %v482, %v488
      %v522 = vadd.f32 %v387, %v490
      %v523 = vadd.f32 %v388, %v491
      %v524 = vadd.f32 %v389, %v492
      %v525 = vadd.f32 %v390, %v493
      %v526 = vadd.f32 %v391, %v494
      %v527 = vadd.f32 %v392, %v495
      %v528 = vadd.f32 %v393, %v496
      %v529 = vadd.f32 %v394, %v497
      %v530 = vadd.f32 %v395, %v498
      %v531 = vadd.f32 %v396, %v499
      %v532 = vadd.f32 %v397, %v500
      %v533 = vadd.f32 %v398, %v501
      %v534 = vadd.f32 %v399, %v502
      %v535 = vadd.f32 %v400, %v503
      %v536 = vadd.f32 %v401, %v504
      %v537 = vadd.f32 %v402, %v505
      %v538 = vadd.f32 %v403, %v506
      %v539 = vadd.f32 %v404, %v507
      %v540 = vadd.f32 %v405, %v508
      %v541 = vadd.f32 %v406, %v509
      %v542 = vadd.f32 %v407, %v510
      %v543 = vadd.f32 %v408, %v511
      %v544 = vadd.f32 %v409, %v512
      %v545 = vadd.f32 %v410, %v513
      %v546 = vadd.f32 %v411, %v514
      %v547 = vadd.f32 %v412, %v515
      %v548 = vadd.f32 %v413, %v516
      %v549 = vadd.f32 %v414, %v517
      %v550 = vadd.f32 %v415, %v518
      %v551 = vadd.f32 %v416, %v519
      %v552 = vadd.f32 %v417, %v520
      %v553 = vadd.f32 %v418, %v521
      %v554 = vld [vmem:[%s5] sm:$0x1]
      %v556 = vlaneseq
      %v557 = vshrl.u32 %v556, 7
      %v558 = vsub.s32 0, %v557
      %v559 = vrot.slane %v554, %v558
      %v561 = vadd.f32 %v522, %v559
      %v562 = vadd.f32 %v523, %v559
      %v563 = vadd.f32 %v524, %v559
      %v564 = vadd.f32 %v525, %v559
      %v565 = vadd.f32 %v526, %v559
      %v566 = vadd.f32 %v527, %v559
      %v567 = vadd.f32 %v528, %v559
      %v568 = vadd.f32 %v529, %v559
      %v569 = vadd.f32 %v530, %v559
      %v570 = vadd.f32 %v531, %v559
      %v571 = vadd.f32 %v532, %v559
      %v572 = vadd.f32 %v533, %v559
      %v573 = vadd.f32 %v534, %v559
      %v574 = vadd.f32 %v535, %v559
      %v575 = vadd.f32 %v536, %v559
      %v576 = vadd.f32 %v537, %v559
      %v577 = vadd.f32 %v538, %v559
      %v578 = vadd.f32 %v539, %v559
      %v579 = vadd.f32 %v540, %v559
      %v580 = vadd.f32 %v541, %v559
      %v581 = vadd.f32 %v542, %v559
      %v582 = vadd.f32 %v543, %v559
      %v583 = vadd.f32 %v544, %v559
      %v584 = vadd.f32 %v545, %v559
      %v585 = vadd.f32 %v546, %v559
      %v586 = vadd.f32 %v547, %v559
      %v587 = vadd.f32 %v548, %v559
      %v588 = vadd.f32 %v549, %v559
      %v589 = vadd.f32 %v550, %v559
      %v590 = vadd.f32 %v551, %v559
      %v591 = vadd.f32 %v552, %v559
      %v592 = vadd.f32 %v553, %v559
      %v593 = vmax.f32 %v561, 0.0
      %v594 = vmax.f32 %v562, 0.0
      %v595 = vmax.f32 %v563, 0.0
      %v596 = vmax.f32 %v564, 0.0
      %v597 = vmax.f32 %v565, 0.0
      %v598 = vmax.f32 %v566, 0.0
      %v599 = vmax.f32 %v567, 0.0
      %v600 = vmax.f32 %v568, 0.0
      %v601 = vmax.f32 %v569, 0.0
      %v602 = vmax.f32 %v570, 0.0
      %v603 = vmax.f32 %v571, 0.0
      %v604 = vmax.f32 %v572, 0.0
      %v605 = vmax.f32 %v573, 0.0
      %v606 = vmax.f32 %v574, 0.0
      %v607 = vmax.f32 %v575, 0.0
      %v608 = vmax.f32 %v576, 0.0
      %v609 = vmax.f32 %v577, 0.0
      %v610 = vmax.f32 %v578, 0.0
      %v611 = vmax.f32 %v579, 0.0
      %v612 = vmax.f32 %v580, 0.0
      %v613 = vmax.f32 %v581, 0.0
      %v614 = vmax.f32 %v582, 0.0
      %v615 = vmax.f32 %v583, 0.0
      %v616 = vmax.f32 %v584, 0.0
      %v617 = vmax.f32 %v585, 0.0
      %v618 = vmax.f32 %v586, 0.0
      %v619 = vmax.f32 %v587, 0.0
      %v620 = vmax.f32 %v588, 0.0
      %v621 = vmax.f32 %v589, 0.0
      %v622 = vmax.f32 %v590, 0.0
      %v623 = vmax.f32 %v591, 0.0
      %v624 = vmax.f32 %v592, 0.0
      %625 = vst [vmem:[%s275] sm:$0xff] %v593
      %626 = vst [vmem:[%s275 + $0x8] sm:$0xff] %v594
      %627 = vst [vmem:[%s275 + $0x10] sm:$0xff] %v595
      %628 = vst [vmem:[%s275 + $0x18] sm:$0xff] %v596
      %629 = vst [vmem:[%s275 + $0x20] sm:$0xff] %v597
      %630 = vst [vmem:[%s275 + $0x28] sm:$0xff] %v598
      %631 = vst [vmem:[%s275 + $0x30] sm:$0xff] %v599
      %632 = vst [vmem:[%s275 + $0x38] sm:$0xff] %v600
      %633 = vst [vmem:[%s275 + $0x40] sm:$0xff] %v601
      %634 = vst [vmem:[%s275 + $0x48] sm:$0xff] %v602
      %635 = vst [vmem:[%s275 + $0x50] sm:$0xff] %v603
      %636 = vst [vmem:[%s275 + $0x58] sm:$0xff] %v604
      %637 = vst [vmem:[%s275 + $0x60] sm:$0xff] %v605
      %638 = vst [vmem:[%s275 + $0x68] sm:$0xff] %v606
      %639 = vst [vmem:[%s275 + $0x70] sm:$0xff] %v607
      %640 = vst [vmem:[%s275 + $0x78] sm:$0xff] %v608
      %641 = vst [vmem:[%s275 + $0x80] sm:$0xff] %v609
      %642 = vst [vmem:[%s275 + $0x88] sm:$0xff] %v610
      %643 = vst [vmem:[%s275 + $0x90] sm:$0xff] %v611
      %644 = vst [vmem:[%s275 + $0x98] sm:$0xff] %v612
      %645 = vst [vmem:[%s275 + $0xa0] sm:$0xff] %v613
      %646 = vst [vmem:[%s275 + $0xa8] sm:$0xff] %v614
      %647 = vst [vmem:[%s275 + $0xb0] sm:$0xff] %v615
      %648 = vst [vmem:[%s275 + $0xb8] sm:$0xff] %v616
      %649 = vst [vmem:[%s275 + $0xc0] sm:$0xff] %v617
      %650 = vst [vmem:[%s275 + $0xc8] sm:$0xff] %v618
      %651 = vst [vmem:[%s275 + $0xd0] sm:$0xff] %v619
      %652 = vst [vmem:[%s275 + $0xd8] sm:$0xff] %v620
      %653 = vst [vmem:[%s275 + $0xe0] sm:$0xff] %v621
      %654 = vst [vmem:[%s275 + $0xe8] sm:$0xff] %v622
      %655 = vst [vmem:[%s275 + $0xf0] sm:$0xff] %v623
      %656 = vst [vmem:[%s275 + $0xf8] sm:$0xff] %v624
      %s657 = smul.u32 32, %s17
      %p658 = scmp.lt.s32.totalorder %s657, 63
      %s659 = scalar_select %p658, %s657, 63
      %s660 = smul.addr %s659, 8
      %s661 = scalar_lea.vmem %s6, %s660
      // Predicated region
      $region45: #{residual_unit_pallas.7} parent=43 // pred_check
        %p662 = pneg %p171
      $region46: #{residual_unit_pallas.7} parent=43 // pred_check_branch
        %664 = sbr.rel (%p662) target = $region48
      $region47: #{residual_unit_pallas.7} parent=43 // pred_region
        %s665 = smul.u32 32, %s17
      $region48: #{residual_unit_pallas.7} parent=43 // pred_fallthru
        _
    $region44: #{residual_unit_pallas.7} parent=5 // pred_fallthru
      _
    %p666 = scmp.le.s32.totalorder 2, %s12
    // Predicated region
    $region49: #{residual_unit_pallas.7} parent=5 // pred_check
      %p667 = pneg %p666
    $region50: #{residual_unit_pallas.7} parent=5 // pred_check_branch
      %669 = sbr.rel (%p667) target = $region52
    $region51: #{residual_unit_pallas.7} parent=5 // pred_region
      %s670 = ssub.s32 %s12, 2
      // Predicated region
      $region53: #{residual_unit_pallas.7} parent=51 // pred_check
        %p671 = pneg %p177
      $region54: #{residual_unit_pallas.7} parent=51 // pred_check_branch
        %673 = sbr.rel (%p671) target = $region56
      $region55: #{residual_unit_pallas.7} parent=51 // pred_region
        %s674 = smul.u32 32, %s18
        %p675 = scmp.lt.s32.totalorder %s674, 63
        %s676 = scalar_select %p675, %s674, 63
        %s677 = smul.addr %s676, 8
        %s678 = scalar_lea.vmem %s6, %s677
      $region56: #{residual_unit_pallas.7} parent=51 // pred_fallthru
        _
    $region52: #{residual_unit_pallas.7} parent=5 // pred_fallthru
      _
  $region6: #{residual_unit_pallas.7} parent=0 // loop_footer
    %s16 = sadd.s32 1, %s12
  $region7: #{residual_unit_pallas.7} parent=0 // loop_footer_branch
    %11 = sbr.rel target = $region3
  $region8: #{residual_unit_pallas.7} parent=0 // loop_exit
    _

// kernel: residual_unit_pallas.6
$region0: #{residual_unit_pallas.6}
  #allocation0 [shape = 'u32[]', space=smem, size = 0x4, offset = 0x4, fixed_abs, tag = 'smem constant byte address 0x4 - core index']
  #allocation1 [shape = 'u32[144,128]{1,0:T(1,128)}', space=vmem, size = 0x12000, scoped, tag = 'internal scratch']
  %s0 = inlined_call_operand.vmem [shape: bf16[512,128], index: 0, kind: input, shape index: {}]
  %s1 = inlined_call_operand.vmem [shape: f32[1,128], index: 1, kind: input, shape index: {}]
  %s2 = inlined_call_operand.vmem [shape: f32[1,128], index: 2, kind: input, shape index: {}]
  %s3 = inlined_call_operand.vmem [shape: bf16[128,128], index: 3, kind: input, shape index: {}]
  %s4 = inlined_call_operand.vmem [shape: bf16[512,128], index: 4, kind: output, shape index: {0}]
  %s5 = inlined_call_operand.vmem [shape: f32[2,2,128], index: 5, kind: output, shape index: {1}]
  %6 = xla_tuple %s4, %s5
  %s7 = sld [smem:[#allocation0]]
  $region57: #{residual_unit_pallas.6} parent=0
    _
  %s9 = ssub.s32 1, %s7
  %s10 = scalar_select 0, %s9, %s7
  loop: start=0, step=1, limit=4
  $region2: #{residual_unit_pallas.6} parent=0 // loop_pre_header
    _
  $region3: #{residual_unit_pallas.6} parent=0 // loop_header
    %s12 = sphi 0, %s16
    %p13 = scmp.ge.s32.totalorder %s12, 4
    %s22 = sphi 0, %s24
    %s25 = sphi 0, %s22
    %s26 = sphi 0, %s25
    %s42 = sphi 0, %s26
    %s46 = sphi 0, %s46
    %s48 = sphi 0, %s46
    %s49 = sphi 0, %s48
    %s63 = sphi 0, %s49
    %s67 = sphi 0, %s67
    %s69 = sphi 0, %s67
    %s70 = sphi 0, %s69
    %s84 = sphi 0, %s70
    %s88 = sphi 0, %s88
    %s90 = sphi 0, %s88
    %s91 = sphi 0, %s90
    %s105 = sphi 0, %s91
    %s111 = sphi 0, %s113
    %s114 = sphi 0, %s111
    %s115 = sphi 0, %s114
    %s131 = sphi 0, %s115
    %s137 = sphi 0, %s139
    %s140 = sphi 0, %s137
    %s141 = sphi 0, %s140
    %s157 = sphi 0, %s141
  $region4: #{residual_unit_pallas.6} parent=0 // loop_header_branch
    %15 = sbr.rel (%p13) target = $region8
  $region5: #{residual_unit_pallas.6} parent=0 // loop_body
    %s17 = ssub.s32 %s12, 1
    %s18 = ssub.s32 %s12, 2
    %s19 = sadd.s32 %s12, 1
    %s20 = ssub.s32 %s12, %s19
    %p21 = scmp.eq.s32.totalorder %s20, 0
    %s23 = sadd.s32 %s22, 1
    %s24 = scalar_select %p21, %s22, %s23
    %p27 = pneg %p21
    %p28 = scmp.eq.s32.totalorder %s12, 1
    %p29 = por %p27, %p28
    %p30 = scmp.ne.s32.totalorder %s22, %s25
    %p31 = scmp.eq.s32.totalorder %s12, 0
    %p32 = por %p30, %p31
    %p33 = scmp.ne.s32.totalorder %s22, %s25
    %p34 = scmp.eq.s32.totalorder %s17, 1
    %p35 = por %p33, %p34
    %p36 = scmp.ne.s32.totalorder %s25, %s26
    %p37 = scmp.eq.s32.totalorder %s17, 0
    %p38 = por %p36, %p37
    %p39 = scmp.ne.s32.totalorder %s25, %s26
    %p40 = scmp.eq.s32.totalorder %s18, 1
    %p41 = por %p39, %p40
    %p43 = scmp.ne.s32.totalorder %s26, %s42
    %p44 = scmp.eq.s32.totalorder %s18, 0
    %p45 = por %p43, %p44
    %s47 = sadd.s32 %s46, 1
    %p50 = scmp.eq.s32.totalorder %s12, 1
    %p51 = scmp.ne.s32.totalorder %s46, %s48
    %p52 = scmp.eq.s32.totalorder %s12, 0
    %p53 = por %p51, %p52
    %p54 = scmp.ne.s32.totalorder %s46, %s48
    %p55 = scmp.eq.s32.totalorder %s17, 1
    %p56 = por %p54, %p55
    %p57 = scmp.ne.s32.totalorder %s48, %s49
    %p58 = scmp.eq.s32.totalorder %s17, 0
    %p59 = por %p57, %p58
    %p60 = scmp.ne.s32.totalorder %s48, %s49
    %p61 = scmp.eq.s32.totalorder %s18, 1
    %p62 = por %p60, %p61
    %p64 = scmp.ne.s32.totalorder %s49, %s63
    %p65 = scmp.eq.s32.totalorder %s18, 0
    %p66 = por %p64, %p65
    %s68 = sadd.s32 %s67, 1
    %p71 = scmp.eq.s32.totalorder %s12, 1
    %p72 = scmp.ne.s32.totalorder %s67, %s69
    %p73 = scmp.eq.s32.totalorder %s12, 0
    %p74 = por %p72, %p73
    %p75 = scmp.ne.s32.totalorder %s67, %s69
    %p76 = scmp.eq.s32.totalorder %s17, 1
    %p77 = por %p75, %p76
    %p78 = scmp.ne.s32.totalorder %s69, %s70
    %p79 = scmp.eq.s32.totalorder %s17, 0
    %p80 = por %p78, %p79
    %p81 = scmp.ne.s32.totalorder %s69, %s70
    %p82 = scmp.eq.s32.totalorder %s18, 1
    %p83 = por %p81, %p82
    %p85 = scmp.ne.s32.totalorder %s70, %s84
    %p86 = scmp.eq.s32.totalorder %s18, 0
    %p87 = por %p85, %p86
    %s89 = sadd.s32 %s88, 1
    %p92 = scmp.eq.s32.totalorder %s12, 1
    %p93 = scmp.ne.s32.totalorder %s88, %s90
    %p94 = scmp.eq.s32.totalorder %s12, 0
    %p95 = por %p93, %p94
    %p96 = scmp.ne.s32.totalorder %s88, %s90
    %p97 = scmp.eq.s32.totalorder %s17, 1
    %p98 = por %p96, %p97
    %p99 = scmp.ne.s32.totalorder %s90, %s91
    %p100 = scmp.eq.s32.totalorder %s17, 0
    %p101 = por %p99, %p100
    %p102 = scmp.ne.s32.totalorder %s90, %s91
    %p103 = scmp.eq.s32.totalorder %s18, 1
    %p104 = por %p102, %p103
    %p106 = scmp.ne.s32.totalorder %s91, %s105
    %p107 = scmp.eq.s32.totalorder %s18, 0
    %p108 = por %p106, %p107
    %s109 = ssub.s32 %s12, %s19
    %p110 = scmp.eq.s32.totalorder %s109, 0
    %s112 = sadd.s32 %s111, 1
    %s113 = scalar_select %p110, %s111, %s112
    %p116 = pneg %p110
    %p117 = scmp.eq.s32.totalorder %s12, 1
    %p118 = por %p116, %p117
    %p119 = scmp.ne.s32.totalorder %s111, %s114
    %p120 = scmp.eq.s32.totalorder %s12, 0
    %p121 = por %p119, %p120
    %p122 = scmp.ne.s32.totalorder %s111, %s114
    %p123 = scmp.eq.s32.totalorder %s17, 1
    %p124 = por %p122, %p123
    %p125 = scmp.ne.s32.totalorder %s114, %s115
    %p126 = scmp.eq.s32.totalorder %s17, 0
    %p127 = por %p125, %p126
    %p128 = scmp.ne.s32.totalorder %s114, %s115
    %p129 = scmp.eq.s32.totalorder %s18, 1
    %p130 = por %p128, %p129
    %p132 = scmp.ne.s32.totalorder %s115, %s131
    %p133 = scmp.eq.s32.totalorder %s18, 0
    %p134 = por %p132, %p133
    %s135 = ssub.s32 %s12, %s19
    %p136 = scmp.eq.s32.totalorder %s135, 0
    %s138 = sadd.s32 %s137, 1
    %s139 = scalar_select %p136, %s137, %s138
    %p142 = pneg %p136
    %p143 = scmp.eq.s32.totalorder %s12, 1
    %p144 = por %p142, %p143
    %p145 = scmp.ne.s32.totalorder %s137, %s140
    %p146 = scmp.eq.s32.totalorder %s12, 0
    %p147 = por %p145, %p146
    %p148 = scmp.ne.s32.totalorder %s137, %s140
    %p149 = scmp.eq.s32.totalorder %s17, 1
    %p150 = por %p148, %p149
    %p151 = scmp.ne.s32.totalorder %s140, %s141
    %p152 = scmp.eq.s32.totalorder %s17, 0
    %p153 = por %p151, %p152
    %p154 = scmp.ne.s32.totalorder %s140, %s141
    %p155 = scmp.eq.s32.totalorder %s18, 1
    %p156 = por %p154, %p155
    %p158 = scmp.ne.s32.totalorder %s141, %s157
    %p159 = scmp.eq.s32.totalorder %s18, 0
    %p160 = por %p158, %p159
    %p161 = scmp.le.s32.totalorder 1, %s12
    %p162 = scmp.lt.s32.totalorder %s12, 3
    %p163 = pnand %p161, %p162
    %p164 = pneg %p163
    // Predicated region
    $region9: #{residual_unit_pallas.6} parent=5 // pred_check
      _
    $region10: #{residual_unit_pallas.6} parent=5 // pred_check_branch
      %166 = sbr.rel (%p163) target = $region12
    $region11: #{residual_unit_pallas.6} parent=5 // pred_region
      %s167 = ssub.s32 %s12, 1
      // Predicated region
      $region13: #{residual_unit_pallas.6} parent=11 // pred_check
        %p168 = pneg %p59
      $region14: #{residual_unit_pallas.6} parent=11 // pred_check_branch
        %170 = sbr.rel (%p168) target = $region16
      $region15: #{residual_unit_pallas.6} parent=11 // pred_region
        _
      $region16: #{residual_unit_pallas.6} parent=11 // pred_fallthru
        _
      // Predicated region
      $region17: #{residual_unit_pallas.6} parent=11 // pred_check
        %p171 = pneg %p80
      $region18: #{residual_unit_pallas.6} parent=11 // pred_check_branch
        %173 = sbr.rel (%p171) target = $region20
      $region19: #{residual_unit_pallas.6} parent=11 // pred_region
        _
      $region20: #{residual_unit_pallas.6} parent=11 // pred_fallthru
        _
      // Predicated region
      $region21: #{residual_unit_pallas.6} parent=11 // pred_check
        %p174 = pneg %p101
      $region22: #{residual_unit_pallas.6} parent=11 // pred_check_branch
        %176 = sbr.rel (%p174) target = $region24
      $region23: #{residual_unit_pallas.6} parent=11 // pred_region
        _
      $region24: #{residual_unit_pallas.6} parent=11 // pred_fallthru
        _
    $region12: #{residual_unit_pallas.6} parent=5 // pred_fallthru
      _
    %p177 = scmp.lt.s32.totalorder %s12, 2
    // Predicated region
    $region25: #{residual_unit_pallas.6} parent=5 // pred_check
      %p178 = pneg %p177
    $region26: #{residual_unit_pallas.6} parent=5 // pred_check_branch
      %180 = sbr.rel (%p178) target = $region28
    $region27: #{residual_unit_pallas.6} parent=5 // pred_region
      // Predicated region
      $region29: #{residual_unit_pallas.6} parent=27 // pred_check
        %p181 = pneg %p32
      $region30: #{residual_unit_pallas.6} parent=27 // pred_check_branch
        %183 = sbr.rel (%p181) target = $region32
      $region31: #{residual_unit_pallas.6} parent=27 // pred_region
        %s184 = smul.u32 32, %s12
        %p185 = scmp.lt.s32.totalorder %s184, 63
        %s186 = scalar_select %p185, %s184, 63
        %s187 = smul.addr %s186, 4
        %s188 = scalar_lea.vmem %s0, %s187
        %s189 = smul.u32 32, %s12
      $region32: #{residual_unit_pallas.6} parent=27 // pred_fallthru
        _
    $region28: #{residual_unit_pallas.6} parent=5 // pred_fallthru
      _
    %p190 = scmp.le.s32.totalorder 1, %s12
    %p191 = scmp.lt.s32.totalorder %s12, 3
    %p192 = pnand %p190, %p191
    %p193 = pneg %p192
    // Predicated region
    $region33: #{residual_unit_pallas.6} parent=5 // pred_check
      _
    $region34: #{residual_unit_pallas.6} parent=5 // pred_check_branch
      %195 = sbr.rel (%p192) target = $region36
    $region35: #{residual_unit_pallas.6} parent=5 // pred_region
      %s196 = ssub.s32 %s12, 1
      %s197 = smul.u32 32, %s17
      %p198 = scmp.lt.s32.totalorder %s197, 63
      %s199 = scalar_select %p198, %s197, 63
      %s200 = smul.addr %s199, 4
      %s201 = scalar_lea.vmem %s0, %s200
      %p202 = pneg %p38
      %p203 = pneg %p35
      %p204 = pneg %p59
      %p205 = pneg %p56
      %p206 = pneg %p80
      %p207 = pneg %p77
      %p208 = pneg %p101
      %p209 = pneg %p98
      %p210 = pneg %p127
      %p211 = pneg %p124
      %s212 = smul.u32 32, %s17
      %p213 = scmp.lt.s32.totalorder %s212, 63
      %s214 = scalar_select %p213, %s212, 63
      %s215 = smul.addr %s214, 4
      %s216 = scalar_lea.vmem %s4, %s215
      %p217 = pneg %p153
      %p218 = pneg %p150
      %p219 = scmp.lt.s32.totalorder %s17, 1
      %s220 = scalar_select %p219, %s17, 1
      %s221 = smul.addr %s220, 2
      %s222 = scalar_lea.vmem %s5, %s221
      %s223 = smul.u32 32, %s17
      %p224 = scmp.lt.s32.totalorder %s223, 63
      %s225 = scalar_select %p224, %s223, 63
      %s226 = smul.addr %s225, 4
      %s227 = scalar_lea.vmem %s0, %s226
      %s228 = smul.u32 32, %s17
      %s229 = smul.u32 32, %s17
      %p230 = scmp.lt.s32.totalorder %s229, 63
      %s231 = scalar_select %p230, %s229, 63
      %s232 = smul.addr %s231, 4
      %s233 = scalar_lea.vmem %s4, %s232
      %s234 = smul.u32 32, %s17
      %p235 = scmp.lt.s32.totalorder %s17, 1
      %s236 = scalar_select %p235, %s17, 1
      %s237 = smul.addr %s236, 2
      %s238 = scalar_lea.vmem %s5, %s237
      %v240 = vld [vmem:[%s227] sm:$0xf]
      %v241 = vld [vmem:[%s227 + $0x4] sm:$0xf]
      %v242 = vld [vmem:[%s227 + $0x8] sm:$0xf]
      %v243 = vld [vmem:[%s227 + $0xc] sm:$0xf]
      %v244 = vld [vmem:[%s227 + $0x10] sm:$0xf]
      %v245 = vld [vmem:[%s227 + $0x14] sm:$0xf]
      %v246 = vld [vmem:[%s227 + $0x18] sm:$0xf]
      %v247 = vld [vmem:[%s227 + $0x1c] sm:$0xf]
      %v248 = vld [vmem:[%s227 + $0x20] sm:$0xf]
      %v249 = vld [vmem:[%s227 + $0x24] sm:$0xf]
      %v250 = vld [vmem:[%s227 + $0x28] sm:$0xf]
      %v251 = vld [vmem:[%s227 + $0x2c] sm:$0xf]
      %v252 = vld [vmem:[%s227 + $0x30] sm:$0xf]
      %v253 = vld [vmem:[%s227 + $0x34] sm:$0xf]
      %v254 = vld [vmem:[%s227 + $0x38] sm:$0xf]
      %v255 = vld [vmem:[%s227 + $0x3c] sm:$0xf]
      %v256 = vld [vmem:[%s227 + $0x40] sm:$0xf]
      %v257 = vld [vmem:[%s227 + $0x44] sm:$0xf]
      %v258 = vld [vmem:[%s227 + $0x48] sm:$0xf]
      %v259 = vld [vmem:[%s227 + $0x4c] sm:$0xf]
      %v260 = vld [vmem:[%s227 + $0x50] sm:$0xf]
      %v261 = vld [vmem:[%s227 + $0x54] sm:$0xf]
      %v262 = vld [vmem:[%s227 + $0x58] sm:$0xf]
      %v263 = vld [vmem:[%s227 + $0x5c] sm:$0xf]
      %v264 = vld [vmem:[%s227 + $0x60] sm:$0xf]
      %v265 = vld [vmem:[%s227 + $0x64] sm:$0xf]
      %v266 = vld [vmem:[%s227 + $0x68] sm:$0xf]
      %v267 = vld [vmem:[%s227 + $0x6c] sm:$0xf]
      %v268 = vld [vmem:[%s227 + $0x70] sm:$0xf]
      %v269 = vld [vmem:[%s227 + $0x74] sm:$0xf]
      %v270 = vld [vmem:[%s227 + $0x78] sm:$0xf]
      %v271 = vld [vmem:[%s227 + $0x7c] sm:$0xf]
      %v272 = vunpack.c.l.bf16 %v240
      %v273 = vunpack.c.l.bf16 %v241
      %v274 = vunpack.c.l.bf16 %v242
      %v275 = vunpack.c.l.bf16 %v243
      %v276 = vunpack.c.l.bf16 %v244
      %v277 = vunpack.c.l.bf16 %v245
      %v278 = vunpack.c.l.bf16 %v246
      %v279 = vunpack.c.l.bf16 %v247
      %v280 = vunpack.c.l.bf16 %v248
      %v281 = vunpack.c.l.bf16 %v249
      %v282 = vunpack.c.l.bf16 %v250
      %v283 = vunpack.c.l.bf16 %v251
      %v284 = vunpack.c.l.bf16 %v252
      %v285 = vunpack.c.l.bf16 %v253
      %v286 = vunpack.c.l.bf16 %v254
      %v287 = vunpack.c.l.bf16 %v255
      %v288 = vunpack.c.l.bf16 %v256
      %v289 = vunpack.c.l.bf16 %v257
      %v290 = vunpack.c.l.bf16 %v258
      %v291 = vunpack.c.l.bf16 %v259
      %v292 = vunpack.c.l.bf16 %v260
      %v293 = vunpack.c.l.bf16 %v261
      %v294 = vunpack.c.l.bf16 %v262
      %v295 = vunpack.c.l.bf16 %v263
      %v296 = vunpack.c.l.bf16 %v264
      %v297 = vunpack.c.l.bf16 %v265
      %v298 = vunpack.c.l.bf16 %v266
      %v299 = vunpack.c.l.bf16 %v267
      %v300 = vunpack.c.l.bf16 %v268
      %v301 = vunpack.c.l.bf16 %v269
      %v302 = vunpack.c.l.bf16 %v270
      %v303 = vunpack.c.l.bf16 %v271
      %v304 = vld [vmem:[%s1] sm:$0x1]
      %v306 = vlaneseq
      %v307 = vshrl.u32 %v306, 7
      %v308 = vsub.s32 0, %v307
      %v309 = vrot.slane %v304, %v308
      %v311 = vmul.f32 %v272, %v309
      %v312 = vmul.f32 %v273, %v309
      %v313 = vmul.f32 %v274, %v309
      %v314 = vmul.f32 %v275, %v309
      %v315 = vmul.f32 %v276, %v309
      %v316 = vmul.f32 %v277, %v309
      %v317 = vmul.f32 %v278, %v309
      %v318 = vmul.f32 %v279, %v309
      %v319 = vmul.f32 %v280, %v309
      %v320 = vmul.f32 %v281, %v309
      %v321 = vmul.f32 %v282, %v309
      %v322 = vmul.f32 %v283, %v309
      %v323 = vmul.f32 %v284, %v309
      %v324 = vmul.f32 %v285, %v309
      %v325 = vmul.f32 %v286, %v309
      %v326 = vmul.f32 %v287, %v309
      %v327 = vmul.f32 %v288, %v309
      %v328 = vmul.f32 %v289, %v309
      %v329 = vmul.f32 %v290, %v309
      %v330 = vmul.f32 %v291, %v309
      %v331 = vmul.f32 %v292, %v309
      %v332 = vmul.f32 %v293, %v309
      %v333 = vmul.f32 %v294, %v309
      %v334 = vmul.f32 %v295, %v309
      %v335 = vmul.f32 %v296, %v309
      %v336 = vmul.f32 %v297, %v309
      %v337 = vmul.f32 %v298, %v309
      %v338 = vmul.f32 %v299, %v309
      %v339 = vmul.f32 %v300, %v309
      %v340 = vmul.f32 %v301, %v309
      %v341 = vmul.f32 %v302, %v309
      %v342 = vmul.f32 %v303, %v309
      %v343 = vld [vmem:[%s2] sm:$0x1]
      %v345 = vlaneseq
      %v346 = vshrl.u32 %v345, 7
      %v347 = vsub.s32 0, %v346
      %v348 = vrot.slane %v343, %v347
      %v350 = vadd.f32 %v311, %v348
      %v351 = vadd.f32 %v312, %v348
      %v352 = vadd.f32 %v313, %v348
      %v353 = vadd.f32 %v314, %v348
      %v354 = vadd.f32 %v315, %v348
      %v355 = vadd.f32 %v316, %v348
      %v356 = vadd.f32 %v317, %v348
      %v357 = vadd.f32 %v318, %v348
      %v358 = vadd.f32 %v319, %v348
      %v359 = vadd.f32 %v320, %v348
      %v360 = vadd.f32 %v321, %v348
      %v361 = vadd.f32 %v322, %v348
      %v362 = vadd.f32 %v323, %v348
      %v363 = vadd.f32 %v324, %v348
      %v364 = vadd.f32 %v325, %v348
      %v365 = vadd.f32 %v326, %v348
      %v366 = vadd.f32 %v327, %v348
      %v367 = vadd.f32 %v328, %v348
      %v368 = vadd.f32 %v329, %v348
      %v369 = vadd.f32 %v330, %v348
      %v370 = vadd.f32 %v331, %v348
      %v371 = vadd.f32 %v332, %v348
      %v372 = vadd.f32 %v333, %v348
      %v373 = vadd.f32 %v334, %v348
      %v374 = vadd.f32 %v335, %v348
      %v375 = vadd.f32 %v336, %v348
      %v376 = vadd.f32 %v337, %v348
      %v377 = vadd.f32 %v338, %v348
      %v378 = vadd.f32 %v339, %v348
      %v379 = vadd.f32 %v340, %v348
      %v380 = vadd.f32 %v341, %v348
      %v381 = vadd.f32 %v342, %v348
      %v382 = vmax.f32 %v350, 0.0
      %v383 = vmax.f32 %v351, 0.0
      %v384 = vmax.f32 %v352, 0.0
      %v385 = vmax.f32 %v353, 0.0
      %v386 = vmax.f32 %v354, 0.0
      %v387 = vmax.f32 %v355, 0.0
      %v388 = vmax.f32 %v356, 0.0
      %v389 = vmax.f32 %v357, 0.0
      %v390 = vmax.f32 %v358, 0.0
      %v391 = vmax.f32 %v359, 0.0
      %v392 = vmax.f32 %v360, 0.0
      %v393 = vmax.f32 %v361, 0.0
      %v394 = vmax.f32 %v362, 0.0
      %v395 = vmax.f32 %v363, 0.0
      %v396 = vmax.f32 %v364, 0.0
      %v397 = vmax.f32 %v365, 0.0
      %v398 = vmax.f32 %v366, 0.0
      %v399 = vmax.f32 %v367, 0.0
      %v400 = vmax.f32 %v368, 0.0
      %v401 = vmax.f32 %v369, 0.0
      %v402 = vmax.f32 %v370, 0.0
      %v403 = vmax.f32 %v371, 0.0
      %v404 = vmax.f32 %v372, 0.0
      %v405 = vmax.f32 %v373, 0.0
      %v406 = vmax.f32 %v374, 0.0
      %v407 = vmax.f32 %v375, 0.0
      %v408 = vmax.f32 %v376, 0.0
      %v409 = vmax.f32 %v377, 0.0
      %v410 = vmax.f32 %v378, 0.0
      %v411 = vmax.f32 %v379, 0.0
      %v412 = vmax.f32 %v380, 0.0
      %v413 = vmax.f32 %v381, 0.0
      %v414 = vpack.c.bf16 %v383, %v382
      %v415 = vpack.c.bf16 %v385, %v384
      %v416 = vpack.c.bf16 %v387, %v386
      %v417 = vpack.c.bf16 %v389, %v388
      %v418 = vpack.c.bf16 %v391, %v390
      %v419 = vpack.c.bf16 %v393, %v392
      %v420 = vpack.c.bf16 %v395, %v394
      %v421 = vpack.c.bf16 %v397, %v396
      %v422 = vpack.c.bf16 %v399, %v398
      %v423 = vpack.c.bf16 %v401, %v400
      %v424 = vpack.c.bf16 %v403, %v402
      %v425 = vpack.c.bf16 %v405, %v404
      %v426 = vpack.c.bf16 %v407, %v406
      %v427 = vpack.c.bf16 %v409, %v408
      %v428 = vpack.c.bf16 %v411, %v410
      %v429 = vpack.c.bf16 %v413, %v412
      %v430 = vld [vmem:[%s3] sm:$0xf]
      %v431 = vld [vmem:[%s3 + $0x4] sm:$0xf]
      %v432 = vld [vmem:[%s3 + $0x8] sm:$0xf]
      %v433 = vld [vmem:[%s3 + $0xc] sm:$0xf]
      %v434 = vld [vmem:[%s3 + $0x10] sm:$0xf]
      %v435 = vld [vmem:[%s3 + $0x14] sm:$0xf]
      %v436 = vld [vmem:[%s3 + $0x18] sm:$0xf]
      %v437 = vld [vmem:[%s3 + $0x1c] sm:$0xf]
      %v438 = vld [vmem:[%s3 + $0x20] sm:$0xf]
      %v439 = vld [vmem:[%s3 + $0x24] sm:$0xf]
      %v440 = vld [vmem:[%s3 + $0x28] sm:$0xf]
      %v441 = vld [vmem:[%s3 + $0x2c] sm:$0xf]
      %v442 = vld [vmem:[%s3 + $0x30] sm:$0xf]
      %v443 = vld [vmem:[%s3 + $0x34] sm:$0xf]
      %v444 = vld [vmem:[%s3 + $0x38] sm:$0xf]
      %v445 = vld [vmem:[%s3 + $0x3c] sm:$0xf]
      %v462 = vunpack.c.l.b16 %v430
      %v463 = vunpack.c.l.b16 %v431
      %v464 = vunpack.c.l.b16 %v432
      %v465 = vunpack.c.l.b16 %v433
      %v466 = vunpack.c.l.b16 %v434
      %v467 = vunpack.c.l.b16 %v435
      %v468 = vunpack.c.l.b16 %v436
      %v469 = vunpack.c.l.b16 %v437
      %v470 = vunpack.c.l.b16 %v438
      %v471 = vunpack.c.l.b16 %v439
      %v472 = vunpack.c.l.b16 %v440
      %v473 = vunpack.c.l.b16 %v441
      %v474 = vunpack.c.l.b16 %v442
      %v475 = vunpack.c.l.b16 %v443
      %v476 = vunpack.c.l.b16 %v444
      %v477 = vunpack.c.l.b16 %v445
      %v478 = vpack.c.b16 %v463, %v462
      %v479 = vpack.c.b16 %v465, %v464
      %v480 = vpack.c.b16 %v467, %v466
      %v481 = vpack.c.b16 %v469, %v468
      %v482 = vpack.c.b16 %v471, %v470
      %v483 = vpack.c.b16 %v473, %v472
      %v484 = vpack.c.b16 %v475, %v474
      %v485 = vpack.c.b16 %v477, %v476
      %494 = vmatprep.subr.bf16.mxu0 0
      %495 = vmatpush1.bf16.msra.mxu0 %v478
      %496 = vmatprep.subr.bf16.mxu0 0
      %497 = vmatpush1.bf16.msra.mxu0 %v479
      %498 = vmatprep.subr.bf16.mxu0 0
      %499 = vmatpush1.bf16.msra.mxu0 %v480
      %500 = vmatprep.subr.bf16.mxu0 0
      %501 = vmatpush1.bf16.msra.mxu0 %v481
      %502 = vmatprep.subr.bf16.mxu0 0
      %503 = vmatpush1.bf16.msra.mxu0 %v482
      %504 = vmatprep.subr.bf16.mxu0 0
      %505 = vmatpush1.bf16.msra.mxu0 %v483
      %506 = vmatprep.subr.bf16.mxu0 0
      %507 = vmatpush1.bf16.msra.mxu0 %v484
      %508 = vmatprep.subr.bf16.mxu0 0
      %509 = vmatpush1.bf16.msra.mxu0 %v485
      %510 = vmatprep.subr.bf16.mxu0 0
      %511 = vmatpush1.bf16.msra.mxu0 0
      %512 = vmatprep.subr.bf16.mxu0 0
      %513 = vmatpush1.bf16.msra.mxu0 0
      %514 = vmatprep.subr.bf16.mxu0 0
      %515 = vmatpush1.bf16.msra.mxu0 0
      %516 = vmatprep.subr.bf16.mxu0 0
      %517 = vmatpush1.bf16.msra.mxu0 0
      %518 = vmatprep.subr.bf16.mxu0 0
      %519 = vmatpush1.bf16.msra.mxu0 0
      %520 = vmatprep.subr.bf16.mxu0 0
      %521 = vmatpush1.bf16.msra.mxu0 0
      %522 = vmatprep.subr.bf16.mxu0 0
      %523 = vmatpush1.bf16.msra.mxu0 0
      %524 = vmatprep.subr.bf16.mxu0 0
      %525 = vmatpush1.bf16.msra.mxu0 0
      %526 = vmatprep.mubr.bf16.mxu0 0
      %527 = vmatmul.mubr.bf16.gmra.mrb[0].mxu0 %v414
      %v528 = vpop.f32.mrb[0].mxu0
      %v529 = vadd.f32 0.0, %v528
      %v530 = vpop.f32.mrb[0].mxu0
      %v531 = vpop.f32.mrb[0].mxu0
      %v532 = vadd.f32 0.0, %v531
      %v533 = vpop.f32.mrb[0].mxu0
      %534 = vmatprep.mubr.bf16.mxu0 0
      %535 = vmatmul.mubr.bf16.gmra.mrb[0].mxu0 %v415
      %v536 = vpop.f32.mrb[0].mxu0
      %v537 = vadd.f32 0.0, %v536
      %v538 = vpop.f32.mrb[0].mxu0
      %v539 = vpop.f32.mrb[0].mxu0
      %v540 = vadd.f32 0.0, %v539
      %v541 = vpop.f32.mrb[0].mxu0
      %542 = vmatprep.mubr.bf16.mxu0 0
      %543 = vmatmul.mubr.bf16.gmra.mrb[0].mxu0 %v416
      %v544 = vpop.f32.mrb[0].mxu0
      %v545 = vadd.f32 0.0, %v544
      %v546 = vpop.f32.mrb[0].mxu0
      %v547 = vpop.f32.mrb[0].mxu0
      %v548 = vadd.f32 0.0, %v547
      %v549 = vpop.f32.mrb[0].mxu0
      %550 = vmatprep.mubr.bf16.mxu0 0
      %551 = vmatmul.mubr.bf16.gmra.mrb[0].mxu0 %v417
      %v552 = vpop.f32.mrb[0].mxu0
      %v553 = vadd.f32 0.0, %v552
      %v554 = vpop.f32.mrb[0].mxu0
      %v555 = vpop.f32.mrb[0].mxu0
      %v556 = vadd.f32 0.0, %v555
      %v557 = vpop.f32.mrb[0].mxu0
      %558 = vmatprep.mubr.bf16.mxu0 0
      %559 = vmatmul.mubr.bf16.gmra.mrb[0].mxu0 %v418
      %v560 = vpop.f32.mrb[0].mxu0
      %v561 = vadd.f32 0.0, %v560
      %v562 = vpop.f32.mrb[0].mxu0
      %v563 = vpop.f32.mrb[0].mxu0
      %v564 = vadd.f32 0.0, %v563
      %v565 = vpop.f32.mrb[0].mxu0
      %566 = vmatprep.mubr.bf16.mxu0 0
      %567 = vmatmul.mubr.bf16.gmra.mrb[0].mxu0 %v419
      %v568 = vpop.f32.mrb[0].mxu0
      %v569 = vadd.f32 0.0, %v568
      %v570 = vpop.f32.mrb[0].mxu0
      %v571 = vpop.f32.mrb[0].mxu0
      %v572 = vadd.f32 0.0, %v571
      %v573 = vpop.f32.mrb[0].mxu0
      %574 = vmatprep.mubr.bf16.mxu0 0
      %575 = vmatmul.mubr.bf16.gmra.mrb[0].mxu0 %v420
      %v576 = vpop.f32.mrb[0].mxu0
      %v577 = vadd.f32 0.0, %v576
      %v578 = vpop.f32.mrb[0].mxu0
      %v579 = vpop.f32.mrb[0].mxu0
      %v580 = vadd.f32 0.0, %v579
      %v581 = vpop.f32.mrb[0].mxu0
      %582 = vmatprep.mubr.bf16.mxu0 0
      %583 = vmatmul.mubr.bf16.gmra.mrb[0].mxu0 %v421
      %v584 = vpop.f32.mrb[0].mxu0
      %v585 = vadd.f32 0.0, %v584
      %v586 = vpop.f32.mrb[0].mxu0
      %v587 = vpop.f32.mrb[0].mxu0
      %v588 = vadd.f32 0.0, %v587
      %v589 = vpop.f32.mrb[0].mxu0
      %590 = vmatprep.mubr.bf16.mxu0 0
      %591 = vmatmul.mubr.bf16.gmra.mrb[0].mxu0 %v422
      %v592 = vpop.f32.mrb[0].mxu0
      %v593 = vadd.f32 0.0, %v592
      %v594 = vpop.f32.mrb[0].mxu0
      %v595 = vpop.f32.mrb[0].mxu0
      %v596 = vadd.f32 0.0, %v595
      %v597 = vpop.f32.mrb[0].mxu0
      %598 = vmatprep.mubr.bf16.mxu0 0
      %599 = vmatmul.mubr.bf16.gmra.mrb[0].mxu0 %v423
      %v600 = vpop.f32.mrb[0].mxu0
      %v601 = vadd.f32 0.0, %v600
      %v602 = vpop.f32.mrb[0].mxu0
      %v603 = vpop.f32.mrb[0].mxu0
      %v604 = vadd.f32 0.0, %v603
      %v605 = vpop.f32.mrb[0].mxu0
      %606 = vmatprep.mubr.bf16.mxu0 0
      %607 = vmatmul.mubr.bf16.gmra.mrb[0].mxu0 %v424
      %v608 = vpop.f32.mrb[0].mxu0
      %v609 = vadd.f32 0.0, %v608
      %v610 = vpop.f32.mrb[0].mxu0
      %v611 = vpop.f32.mrb[0].mxu0
      %v612 = vadd.f32 0.0, %v611
      %v613 = vpop.f32.mrb[0].mxu0
      %614 = vmatprep.mubr.bf16.mxu0 0
      %615 = vmatmul.mubr.bf16.gmra.mrb[0].mxu0 %v425
      %v616 = vpop.f32.mrb[0].mxu0
      %v617 = vadd.f32 0.0, %v616
      %v618 = vpop.f32.mrb[0].mxu0
      %v619 = vpop.f32.mrb[0].mxu0
      %v620 = vadd.f32 0.0, %v619
      %v621 = vpop.f32.mrb[0].mxu0
      %622 = vmatprep.mubr.bf16.mxu0 0
      %623 = vmatmul.mubr.bf16.gmra.mrb[0].mxu0 %v426
      %v624 = vpop.f32.mrb[0].mxu0
      %v625 = vadd.f32 0.0, %v624
      %v626 = vpop.f32.mrb[0].mxu0
      %v627 = vpop.f32.mrb[0].mxu0
      %v628 = vadd.f32 0.0, %v627
      %v629 = vpop.f32.mrb[0].mxu0
      %630 = vmatprep.mubr.bf16.mxu0 0
      %631 = vmatmul.mubr.bf16.gmra.mrb[0].mxu0 %v427
      %v632 = vpop.f32.mrb[0].mxu0
      %v633 = vadd.f32 0.0, %v632
      %v634 = vpop.f32.mrb[0].mxu0
      %v635 = vpop.f32.mrb[0].mxu0
      %v636 = vadd.f32 0.0, %v635
      %v637 = vpop.f32.mrb[0].mxu0
      %638 = vmatprep.mubr.bf16.mxu0 0
      %639 = vmatmul.mubr.bf16.gmra.mrb[0].mxu0 %v428
      %v640 = vpop.f32.mrb[0].mxu0
      %v641 = vadd.f32 0.0, %v640
      %v642 = vpop.f32.mrb[0].mxu0
      %v643 = vpop.f32.mrb[0].mxu0
      %v644 = vadd.f32 0.0, %v643
      %v645 = vpop.f32.mrb[0].mxu0
      %646 = vmatprep.mubr.bf16.mxu0 0
      %647 = vmatmul.mubr.bf16.gmra.mrb[0].mxu0 %v429
      %v648 = vpop.f32.mrb[0].mxu0
      %v649 = vadd.f32 0.0, %v648
      %v650 = vpop.f32.mrb[0].mxu0
      %v651 = vpop.f32.mrb[0].mxu0
      %v652 = vadd.f32 0.0, %v651
      %v653 = vpop.f32.mrb[0].mxu0
      %654 = vdwg.mxu0
      %v655 = vpack.c.bf16 %v532, %v529
      %v656 = vpack.c.bf16 %v540, %v537
      %v657 = vpack.c.bf16 %v548, %v545
      %v658 = vpack.c.bf16 %v556, %v553
      %v659 = vpack.c.bf16 %v564, %v561
      %v660 = vpack.c.bf16 %v572, %v569
      %v661 = vpack.c.bf16 %v580, %v577
      %v662 = vpack.c.bf16 %v588, %v585
      %v663 = vpack.c.bf16 %v596, %v593
      %v664 = vpack.c.bf16 %v604, %v601
      %v665 = vpack.c.bf16 %v612, %v609
      %v666 = vpack.c.bf16 %v620, %v617
      %v667 = vpack.c.bf16 %v628, %v625
      %v668 = vpack.c.bf16 %v636, %v633
      %v669 = vpack.c.bf16 %v644, %v641
      %v670 = vpack.c.bf16 %v652, %v649
      %v687 = vunpack.c.l.b16 %v655
      %v688 = vunpack.c.h.b16 %v655
      %v689 = vunpack.c.l.b16 %v656
      %v690 = vunpack.c.h.b16 %v656
      %v691 = vunpack.c.l.b16 %v657
      %v692 = vunpack.c.h.b16 %v657
      %v693 = vunpack.c.l.b16 %v658
      %v694 = vunpack.c.h.b16 %v658
      %v695 = vunpack.c.l.b16 %v659
      %v696 = vunpack.c.h.b16 %v659
      %v697 = vunpack.c.l.b16 %v660
      %v698 = vunpack.c.h.b16 %v660
      %v699 = vunpack.c.l.b16 %v661
      %v700 = vunpack.c.h.b16 %v661
      %v701 = vunpack.c.l.b16 %v662
      %v702 = vunpack.c.h.b16 %v662
      %v703 = vunpack.c.l.b16 %v663
      %v704 = vunpack.c.h.b16 %v663
      %v705 = vunpack.c.l.b16 %v664
      %v706 = vunpack.c.h.b16 %v664
      %v707 = vunpack.c.l.b16 %v665
      %v708 = vunpack.c.h.b16 %v665
      %v709 = vunpack.c.l.b16 %v666
      %v710 = vunpack.c.h.b16 %v666
      %v711 = vunpack.c.l.b16 %v667
      %v712 = vunpack.c.h.b16 %v667
      %v713 = vunpack.c.l.b16 %v668
      %v714 = vunpack.c.h.b16 %v668
      %v715 = vunpack.c.l.b16 %v669
      %v716 = vunpack.c.h.b16 %v669
      %v717 = vunpack.c.l.b16 %v670
      %v718 = vunpack.c.h.b16 %v670
      %v719 = vpack.c.b16 %v687, %v687
      %v720 = vpack.c.b16 %v688, %v688
      %v721 = vpack.c.b16 %v689, %v689
      %v722 = vpack.c.b16 %v690, %v690
      %v723 = vpack.c.b16 %v691, %v691
      %v724 = vpack.c.b16 %v692, %v692
      %v725 = vpack.c.b16 %v693, %v693
      %v726 = vpack.c.b16 %v694, %v694
      %v727 = vpack.c.b16 %v695, %v695
      %v728 = vpack.c.b16 %v696, %v696
      %v729 = vpack.c.b16 %v697, %v697
      %v730 = vpack.c.b16 %v698, %v698
      %v731 = vpack.c.b16 %v699, %v699
      %v732 = vpack.c.b16 %v700, %v700
      %v733 = vpack.c.b16 %v701, %v701
      %v734 = vpack.c.b16 %v702, %v702
      %v735 = vpack.c.b16 %v703, %v703
      %v736 = vpack.c.b16 %v704, %v704
      %v737 = vpack.c.b16 %v705, %v705
      %v738 = vpack.c.b16 %v706, %v706
      %v739 = vpack.c.b16 %v707, %v707
      %v740 = vpack.c.b16 %v708, %v708
      %v741 = vpack.c.b16 %v709, %v709
      %v742 = vpack.c.b16 %v710, %v710
      %v743 = vpack.c.b16 %v711, %v711
      %v744 = vpack.c.b16 %v712, %v712
      %v745 = vpack.c.b16 %v713, %v713
      %v746 = vpack.c.b16 %v714, %v714
      %v747 = vpack.c.b16 %v715, %v715
      %v748 = vpack.c.b16 %v716, %v716
      %v749 = vpack.c.b16 %v717, %v717
      %v750 = vpack.c.b16 %v718, %v718
      %783 = vst [vmem:[%s233] sm:$0xf] %v719
      %784 = vst [vmem:[%s233 + $0x4] sm:$0xf] %v720
      %785 = vst [vmem:[%s233 + $0x8] sm:$0xf] %v721
      %786 = vst [vmem:[%s233 + $0xc] sm:$0xf] %v722
      %787 = vst [vmem:[%s233 + $0x10] sm:$0xf] %v723
      %788 = vst [vmem:[%s233 + $0x14] sm:$0xf] %v724
      %789 = vst [vmem:[%s233 + $0x18] sm:$0xf] %v725
      %790 = vst [vmem:[%s233 + $0x1c] sm:$0xf] %v726
      %791 = vst [vmem:[%s233 + $0x20] sm:$0xf] %v727
      %792 = vst [vmem:[%s233 + $0x24] sm:$0xf] %v728
      %793 = vst [vmem:[%s233 + $0x28] sm:$0xf] %v729
      %794 = vst [vmem:[%s233 + $0x2c] sm:$0xf] %v730
      %795 = vst [vmem:[%s233 + $0x30] sm:$0xf] %v731
      %796 = vst [vmem:[%s233 + $0x34] sm:$0xf] %v732
      %797 = vst [vmem:[%s233 + $0x38] sm:$0xf] %v733
      %798 = vst [vmem:[%s233 + $0x3c] sm:$0xf] %v734
      %799 = vst [vmem:[%s233 + $0x40] sm:$0xf] %v735
      %800 = vst [vmem:[%s233 + $0x44] sm:$0xf] %v736
      %801 = vst [vmem:[%s233 + $0x48] sm:$0xf] %v737
      %802 = vst [vmem:[%s233 + $0x4c] sm:$0xf] %v738
      %803 = vst [vmem:[%s233 + $0x50] sm:$0xf] %v739
      %804 = vst [vmem:[%s233 + $0x54] sm:$0xf] %v740
      %805 = vst [vmem:[%s233 + $0x58] sm:$0xf] %v741
      %806 = vst [vmem:[%s233 + $0x5c] sm:$0xf] %v742
      %807 = vst [vmem:[%s233 + $0x60] sm:$0xf] %v743
      %808 = vst [vmem:[%s233 + $0x64] sm:$0xf] %v744
      %809 = vst [vmem:[%s233 + $0x68] sm:$0xf] %v745
      %810 = vst [vmem:[%s233 + $0x6c] sm:$0xf] %v746
      %811 = vst [vmem:[%s233 + $0x70] sm:$0xf] %v747
      %812 = vst [vmem:[%s233 + $0x74] sm:$0xf] %v748
      %813 = vst [vmem:[%s233 + $0x78] sm:$0xf] %v749
      %814 = vst [vmem:[%s233 + $0x7c] sm:$0xf] %v750
      %v815 = vadd.f32 %v529, %v532
      %v816 = vadd.f32 %v815, %v537
      %v817 = vadd.f32 %v816, %v540
      %v818 = vadd.f32 %v817, %v545
      %v819 = vadd.f32 %v818, %v548
      %v820 = vadd.f32 %v819, %v553
      %v821 = vadd.f32 %v820, %v556
      %v822 = vadd.f32 %v821, %v561
      %v823 = vadd.f32 %v822, %v564
      %v824 = vadd.f32 %v823, %v569
      %v825 = vadd.f32 %v824, %v572
      %v826 = vadd.f32 %v825, %v577
      %v827 = vadd.f32 %v826, %v580
      %v828 = vadd.f32 %v827, %v585
      %v829 = vadd.f32 %v828, %v588
      %v830 = vadd.f32 %v829, %v593
      %v831 = vadd.f32 %v830, %v596
      %v832 = vadd.f32 %v831, %v601
      %v833 = vadd.f32 %v832, %v604
      %v834 = vadd.f32 %v833, %v609
      %v835 = vadd.f32 %v834, %v612
      %v836 = vadd.f32 %v835, %v617
      %v837 = vadd.f32 %v836, %v620
      %v838 = vadd.f32 %v837, %v625
      %v839 = vadd.f32 %v838, %v628
      %v840 = vadd.f32 %v839, %v633
      %v841 = vadd.f32 %v840, %v636
      %v842 = vadd.f32 %v841, %v641
      %v843 = vadd.f32 %v842, %v644
      %v844 = vadd.f32 %v843, %v649
      %v845 = vadd.f32 %v844, %v652
      %v846 = vrot.slane %v845, 4
      %v847 = vadd.f32 %v845, %v846
      %v848 = vrot.slane %v847, 2
      %v849 = vadd.f32 %v847, %v848
      %v850 = vrot.slane %v849, 1
      %v851 = vadd.f32 %v849, %v850
      %852 = vst [vmem:[%s238] sm:$0x1] %v851
      %v853 = vmul.f32 %v529, %v529
      %v854 = vmul.f32 %v532, %v532
      %v855 = vmul.f32 %v537, %v537
      %v856 = vmul.f32 %v540, %v540
      %v857 = vmul.f32 %v545, %v545
      %v858 = vmul.f32 %v548, %v548
      %v859 = vmul.f32 %v553, %v553
      %v860 = vmul.f32 %v556, %v556
      %v861 = vmul.f32 %v561, %v561
      %v862 = vmul.f32 %v564, %v564
      %v863 = vmul.f32 %v569, %v569
      %v864 = vmul.f32 %v572, %v572
      %v865 = vmul.f32 %v577, %v577
      %v866 = vmul.f32 %v580, %v580
      %v867 = vmul.f32 %v585, %v585
      %v868 = vmul.f32 %v588, %v588
      %v869 = vmul.f32 %v593, %v593
      %v870 = vmul.f32 %v596, %v596
      %v871 = vmul.f32 %v601, %v601
      %v872 = vmul.f32 %v604, %v604
      %v873 = vmul.f32 %v609, %v609
      %v874 = vmul.f32 %v612, %v612
      %v875 = vmul.f32 %v617, %v617
      %v876 = vmul.f32 %v620, %v620
      %v877 = vmul.f32 %v625, %v625
      %v878 = vmul.f32 %v628, %v628
      %v879 = vmul.f32 %v633, %v633
      %v880 = vmul.f32 %v636, %v636
      %v881 = vmul.f32 %v641, %v641
      %v882 = vmul.f32 %v644, %v644
      %v883 = vmul.f32 %v649, %v649
      %v884 = vmul.f32 %v652, %v652
      %v885 = vadd.f32 %v853, %v854
      %v886 = vadd.f32 %v885, %v855
      %v887 = vadd.f32 %v886, %v856
      %v888 = vadd.f32 %v887, %v857
      %v889 = vadd.f32 %v888, %v858
      %v890 = vadd.f32 %v889, %v859
      %v891 = vadd.f32 %v890, %v860
      %v892 = vadd.f32 %v891, %v861
      %v893 = vadd.f32 %v892, %v862
      %v894 = vadd.f32 %v893, %v863
      %v895 = vadd.f32 %v894, %v864
      %v896 = vadd.f32 %v895, %v865
      %v897 = vadd.f32 %v896, %v866
      %v898 = vadd.f32 %v897, %v867
      %v899 = vadd.f32 %v898, %v868
      %v900 = vadd.f32 %v899, %v869
      %v901 = vadd.f32 %v900, %v870
      %v902 = vadd.f32 %v901, %v871
      %v903 = vadd.f32 %v902, %v872
      %v904 = vadd.f32 %v903, %v873
      %v905 = vadd.f32 %v904, %v874
      %v906 = vadd.f32 %v905, %v875
      %v907 = vadd.f32 %v906, %v876
      %v908 = vadd.f32 %v907, %v877
      %v909 = vadd.f32 %v908, %v878
      %v910 = vadd.f32 %v909, %v879
      %v911 = vadd.f32 %v910, %v880
      %v912 = vadd.f32 %v911, %v881
      %v913 = vadd.f32 %v912, %v882
      %v914 = vadd.f32 %v913, %v883
      %v915 = vadd.f32 %v914, %v884
      %v916 = vrot.slane %v915, 4
      %v917 = vadd.f32 %v915, %v916
      %v918 = vrot.slane %v917, 2
      %v919 = vadd.f32 %v917, %v918
      %v920 = vrot.slane %v919, 1
      %v921 = vadd.f32 %v919, %v920
      %922 = vst [vmem:[%s238 + $0x1] sm:$0x1] %v921
      %s923 = smul.u32 32, %s17
      %p924 = scmp.lt.s32.totalorder %s923, 63
      %s925 = scalar_select %p924, %s923, 63
      %s926 = smul.addr %s925, 4
      %s927 = scalar_lea.vmem %s4, %s926
      %p928 = scmp.lt.s32.totalorder %s17, 1
      %s929 = scalar_select %p928, %s17, 1
      %s930 = smul.addr %s929, 2
      %s931 = scalar_lea.vmem %s5, %s930
      // Predicated region
      $region37: #{residual_unit_pallas.6} parent=35 // pred_check
        %p932 = pneg %p124
      $region38: #{residual_unit_pallas.6} parent=35 // pred_check_branch
        %934 = sbr.rel (%p932) target = $region40
      $region39: #{residual_unit_pallas.6} parent=35 // pred_region
        %s935 = smul.u32 32, %s17
      $region40: #{residual_unit_pallas.6} parent=35 // pred_fallthru
        _
      // Predicated region
      $region41: #{residual_unit_pallas.6} parent=35 // pred_check
        %p936 = pneg %p150
      $region42: #{residual_unit_pallas.6} parent=35 // pred_check_branch
        %938 = sbr.rel (%p936) target = $region44
      $region43: #{residual_unit_pallas.6} parent=35 // pred_region
        _
      $region44: #{residual_unit_pallas.6} parent=35 // pred_fallthru
        _
    $region36: #{residual_unit_pallas.6} parent=5 // pred_fallthru
      _
    %p939 = scmp.le.s32.totalorder 2, %s12
    // Predicated region
    $region45: #{residual_unit_pallas.6} parent=5 // pred_check
      %p940 = pneg %p939
    $region46: #{residual_unit_pallas.6} parent=5 // pred_check_branch
      %942 = sbr.rel (%p940) target = $region48
    $region47: #{residual_unit_pallas.6} parent=5 // pred_region
      %s943 = ssub.s32 %s12, 2
      // Predicated region
      $region49: #{residual_unit_pallas.6} parent=47 // pred_check
        %p944 = pneg %p130
      $region50: #{residual_unit_pallas.6} parent=47 // pred_check_branch
        %946 = sbr.rel (%p944) target = $region52
      $region51: #{residual_unit_pallas.6} parent=47 // pred_region
        %s947 = smul.u32 32, %s18
        %p948 = scmp.lt.s32.totalorder %s947, 63
        %s949 = scalar_select %p948, %s947, 63
        %s950 = smul.addr %s949, 4
        %s951 = scalar_lea.vmem %s4, %s950
      $region52: #{residual_unit_pallas.6} parent=47 // pred_fallthru
        _
      // Predicated region
      $region53: #{residual_unit_pallas.6} parent=47 // pred_check
        %p952 = pneg %p156
      $region54: #{residual_unit_pallas.6} parent=47 // pred_check_branch
        %954 = sbr.rel (%p952) target = $region56
      $region55: #{residual_unit_pallas.6} parent=47 // pred_region
        %p955 = scmp.lt.s32.totalorder %s18, 1
        %s956 = scalar_select %p955, %s18, 1
        %s957 = smul.addr %s956, 2
        %s958 = scalar_lea.vmem %s5, %s957
      $region56: #{residual_unit_pallas.6} parent=47 // pred_fallthru
        _
    $region48: #{residual_unit_pallas.6} parent=5 // pred_fallthru
      _
  $region6: #{residual_unit_pallas.6} parent=0 // loop_footer
    %s16 = sadd.s32 1, %s12
  $region7: #{residual_unit_pallas.6} parent=0 // loop_footer_branch
    %11 = sbr.rel target = $region3
  $region8: #{residual_unit_pallas.6} parent=0 // loop_exit
    _

// kernel: residual_unit_pallas.4
$region0: #{residual_unit_pallas.4}
  #allocation0 [shape = 'u32[]', space=smem, size = 0x4, offset = 0x4, fixed_abs, tag = 'smem constant byte address 0x4 - core index']
  #allocation1 [shape = 'u32[144,128]{1,0:T(1,128)}', space=vmem, size = 0x12000, scoped, tag = 'internal scratch']
  %s0 = inlined_call_operand.vmem [shape: f32[512,8], index: 0, kind: input, shape index: {}]
  %s1 = inlined_call_operand.vmem [shape: bf16[8,256], index: 1, kind: input, shape index: {}]
  %s2 = inlined_call_operand.vmem [shape: bf16[512,128], index: 2, kind: output, shape index: {0}]
  %s3 = inlined_call_operand.vmem [shape: bf16[512,128], index: 3, kind: output, shape index: {1}]
  %s4 = inlined_call_operand.vmem [shape: f32[2,2,128], index: 4, kind: output, shape index: {2}]
  %s5 = inlined_call_operand.vmem [shape: f32[2,2,128], index: 5, kind: output, shape index: {3}]
  %6 = xla_tuple %s2, %s3, %s4, %s5
  %s7 = sld [smem:[#allocation0]]
  $region65: #{residual_unit_pallas.4} parent=0
    _
  %s9 = ssub.s32 1, %s7
  %s10 = scalar_select 0, %s9, %s7
  loop: start=0, step=1, limit=4
  $region2: #{residual_unit_pallas.4} parent=0 // loop_pre_header
    _
  $region3: #{residual_unit_pallas.4} parent=0 // loop_header
    %s12 = sphi 0, %s16
    %p13 = scmp.ge.s32.totalorder %s12, 4
    %s22 = sphi 0, %s24
    %s25 = sphi 0, %s22
    %s26 = sphi 0, %s25
    %s42 = sphi 0, %s26
    %s46 = sphi 0, %s46
    %s48 = sphi 0, %s46
    %s49 = sphi 0, %s48
    %s63 = sphi 0, %s49
    %s69 = sphi 0, %s71
    %s72 = sphi 0, %s69
    %s73 = sphi 0, %s72
    %s89 = sphi 0, %s73
    %s95 = sphi 0, %s97
    %s98 = sphi 0, %s95
    %s99 = sphi 0, %s98
    %s115 = sphi 0, %s99
    %s121 = sphi 0, %s123
    %s124 = sphi 0, %s121
    %s125 = sphi 0, %s124
    %s141 = sphi 0, %s125
    %s147 = sphi 0, %s149
    %s150 = sphi 0, %s147
    %s151 = sphi 0, %s150
    %s167 = sphi 0, %s151
  $region4: #{residual_unit_pallas.4} parent=0 // loop_header_branch
    %15 = sbr.rel (%p13) target = $region8
  $region5: #{residual_unit_pallas.4} parent=0 // loop_body
    %s17 = ssub.s32 %s12, 1
    %s18 = ssub.s32 %s12, 2
    %s19 = sadd.s32 %s12, 1
    %s20 = ssub.s32 %s12, %s19
    %p21 = scmp.eq.s32.totalorder %s20, 0
    %s23 = sadd.s32 %s22, 1
    %s24 = scalar_select %p21, %s22, %s23
    %p27 = pneg %p21
    %p28 = scmp.eq.s32.totalorder %s12, 1
    %p29 = por %p27, %p28
    %p30 = scmp.ne.s32.totalorder %s22, %s25
    %p31 = scmp.eq.s32.totalorder %s12, 0
    %p32 = por %p30, %p31
    %p33 = scmp.ne.s32.totalorder %s22, %s25
    %p34 = scmp.eq.s32.totalorder %s17, 1
    %p35 = por %p33, %p34
    %p36 = scmp.ne.s32.totalorder %s25, %s26
    %p37 = scmp.eq.s32.totalorder %s17, 0
    %p38 = por %p36, %p37
    %p39 = scmp.ne.s32.totalorder %s25, %s26
    %p40 = scmp.eq.s32.totalorder %s18, 1
    %p41 = por %p39, %p40
    %p43 = scmp.ne.s32.totalorder %s26, %s42
    %p44 = scmp.eq.s32.totalorder %s18, 0
    %p45 = por %p43, %p44
    %s47 = sadd.s32 %s46, 1
    %p50 = scmp.eq.s32.totalorder %s12, 1
    %p51 = scmp.ne.s32.totalorder %s46, %s48
    %p52 = scmp.eq.s32.totalorder %s12, 0
    %p53 = por %p51, %p52
    %p54 = scmp.ne.s32.totalorder %s46, %s48
    %p55 = scmp.eq.s32.totalorder %s17, 1
    %p56 = por %p54, %p55
    %p57 = scmp.ne.s32.totalorder %s48, %s49
    %p58 = scmp.eq.s32.totalorder %s17, 0
    %p59 = por %p57, %p58
    %p60 = scmp.ne.s32.totalorder %s48, %s49
    %p61 = scmp.eq.s32.totalorder %s18, 1
    %p62 = por %p60, %p61
    %p64 = scmp.ne.s32.totalorder %s49, %s63
    %p65 = scmp.eq.s32.totalorder %s18, 0
    %p66 = por %p64, %p65
    %s67 = ssub.s32 %s12, %s19
    %p68 = scmp.eq.s32.totalorder %s67, 0
    %s70 = sadd.s32 %s69, 1
    %s71 = scalar_select %p68, %s69, %s70
    %p74 = pneg %p68
    %p75 = scmp.eq.s32.totalorder %s12, 1
    %p76 = por %p74, %p75
    %p77 = scmp.ne.s32.totalorder %s69, %s72
    %p78 = scmp.eq.s32.totalorder %s12, 0
    %p79 = por %p77, %p78
    %p80 = scmp.ne.s32.totalorder %s69, %s72
    %p81 = scmp.eq.s32.totalorder %s17, 1
    %p82 = por %p80, %p81
    %p83 = scmp.ne.s32.totalorder %s72, %s73
    %p84 = scmp.eq.s32.totalorder %s17, 0
    %p85 = por %p83, %p84
    %p86 = scmp.ne.s32.totalorder %s72, %s73
    %p87 = scmp.eq.s32.totalorder %s18, 1
    %p88 = por %p86, %p87
    %p90 = scmp.ne.s32.totalorder %s73, %s89
    %p91 = scmp.eq.s32.totalorder %s18, 0
    %p92 = por %p90, %p91
    %s93 = ssub.s32 %s12, %s19
    %p94 = scmp.eq.s32.totalorder %s93, 0
    %s96 = sadd.s32 %s95, 1
    %s97 = scalar_select %p94, %s95, %s96
    %p100 = pneg %p94
    %p101 = scmp.eq.s32.totalorder %s12, 1
    %p102 = por %p100, %p101
    %p103 = scmp.ne.s32.totalorder %s95, %s98
    %p104 = scmp.eq.s32.totalorder %s12, 0
    %p105 = por %p103, %p104
    %p106 = scmp.ne.s32.totalorder %s95, %s98
    %p107 = scmp.eq.s32.totalorder %s17, 1
    %p108 = por %p106, %p107
    %p109 = scmp.ne.s32.totalorder %s98, %s99
    %p110 = scmp.eq.s32.totalorder %s17, 0
    %p111 = por %p109, %p110
    %p112 = scmp.ne.s32.totalorder %s98, %s99
    %p113 = scmp.eq.s32.totalorder %s18, 1
    %p114 = por %p112, %p113
    %p116 = scmp.ne.s32.totalorder %s99, %s115
    %p117 = scmp.eq.s32.totalorder %s18, 0
    %p118 = por %p116, %p117
    %s119 = ssub.s32 %s12, %s19
    %p120 = scmp.eq.s32.totalorder %s119, 0
    %s122 = sadd.s32 %s121, 1
    %s123 = scalar_select %p120, %s121, %s122
    %p126 = pneg %p120
    %p127 = scmp.eq.s32.totalorder %s12, 1
    %p128 = por %p126, %p127
    %p129 = scmp.ne.s32.totalorder %s121, %s124
    %p130 = scmp.eq.s32.totalorder %s12, 0
    %p131 = por %p129, %p130
    %p132 = scmp.ne.s32.totalorder %s121, %s124
    %p133 = scmp.eq.s32.totalorder %s17, 1
    %p134 = por %p132, %p133
    %p135 = scmp.ne.s32.totalorder %s124, %s125
    %p136 = scmp.eq.s32.totalorder %s17, 0
    %p137 = por %p135, %p136
    %p138 = scmp.ne.s32.totalorder %s124, %s125
    %p139 = scmp.eq.s32.totalorder %s18, 1
    %p140 = por %p138, %p139
    %p142 = scmp.ne.s32.totalorder %s125, %s141
    %p143 = scmp.eq.s32.totalorder %s18, 0
    %p144 = por %p142, %p143
    %s145 = ssub.s32 %s12, %s19
    %p146 = scmp.eq.s32.totalorder %s145, 0
    %s148 = sadd.s32 %s147, 1
    %s149 = scalar_select %p146, %s147, %s148
    %p152 = pneg %p146
    %p153 = scmp.eq.s32.totalorder %s12, 1
    %p154 = por %p152, %p153
    %p155 = scmp.ne.s32.totalorder %s147, %s150
    %p156 = scmp.eq.s32.totalorder %s12, 0
    %p157 = por %p155, %p156
    %p158 = scmp.ne.s32.totalorder %s147, %s150
    %p159 = scmp.eq.s32.totalorder %s17, 1
    %p160 = por %p158, %p159
    %p161 = scmp.ne.s32.totalorder %s150, %s151
    %p162 = scmp.eq.s32.totalorder %s17, 0
    %p163 = por %p161, %p162
    %p164 = scmp.ne.s32.totalorder %s150, %s151
    %p165 = scmp.eq.s32.totalorder %s18, 1
    %p166 = por %p164, %p165
    %p168 = scmp.ne.s32.totalorder %s151, %s167
    %p169 = scmp.eq.s32.totalorder %s18, 0
    %p170 = por %p168, %p169
    %p171 = scmp.le.s32.totalorder 1, %s12
    %p172 = scmp.lt.s32.totalorder %s12, 3
    %p173 = pnand %p171, %p172
    %p174 = pneg %p173
    // Predicated region
    $region9: #{residual_unit_pallas.4} parent=5 // pred_check
      _
    $region10: #{residual_unit_pallas.4} parent=5 // pred_check_branch
      %176 = sbr.rel (%p173) target = $region12
    $region11: #{residual_unit_pallas.4} parent=5 // pred_region
      %s177 = ssub.s32 %s12, 1
      // Predicated region
      $region13: #{residual_unit_pallas.4} parent=11 // pred_check
        %p178 = pneg %p59
      $region14: #{residual_unit_pallas.4} parent=11 // pred_check_branch
        %180 = sbr.rel (%p178) target = $region16
      $region15: #{residual_unit_pallas.4} parent=11 // pred_region
        _
      $region16: #{residual_unit_pallas.4} parent=11 // pred_fallthru
        _
    $region12: #{residual_unit_pallas.4} parent=5 // pred_fallthru
      _
    %p181 = scmp.lt.s32.totalorder %s12, 2
    // Predicated region
    $region17: #{residual_unit_pallas.4} parent=5 // pred_check
      %p182 = pneg %p181
    $region18: #{residual_unit_pallas.4} parent=5 // pred_check_branch
      %184 = sbr.rel (%p182) target = $region20
    $region19: #{residual_unit_pallas.4} parent=5 // pred_region
      // Predicated region
      $region21: #{residual_unit_pallas.4} parent=19 // pred_check
        %p185 = pneg %p32
      $region22: #{residual_unit_pallas.4} parent=19 // pred_check_branch
        %187 = sbr.rel (%p185) target = $region24
      $region23: #{residual_unit_pallas.4} parent=19 // pred_region
        %s188 = smul.u32 32, %s12
        %p189 = scmp.lt.s32.totalorder %s188, 63
        %s190 = scalar_select %p189, %s188, 63
        %s191 = smul.addr %s190, 8
        %s192 = scalar_lea.vmem %s0, %s191
        %s193 = smul.u32 32, %s12
      $region24: #{residual_unit_pallas.4} parent=19 // pred_fallthru
        _
    $region20: #{residual_unit_pallas.4} parent=5 // pred_fallthru
      _
    %p194 = scmp.le.s32.totalorder 1, %s12
    %p195 = scmp.lt.s32.totalorder %s12, 3
    %p196 = pnand %p194, %p195
    %p197 = pneg %p196
    // Predicated region
    $region25: #{residual_unit_pallas.4} parent=5 // pred_check
      _
    $region26: #{residual_unit_pallas.4} parent=5 // pred_check_branch
      %199 = sbr.rel (%p196) target = $region28
    $region27: #{residual_unit_pallas.4} parent=5 // pred_region
      %s200 = ssub.s32 %s12, 1
      %s201 = smul.u32 32, %s17
      %p202 = scmp.lt.s32.totalorder %s201, 63
      %s203 = scalar_select %p202, %s201, 63
      %s204 = smul.addr %s203, 8
      %s205 = scalar_lea.vmem %s0, %s204
      %p206 = pneg %p38
      %p207 = pneg %p35
      %p208 = pneg %p59
      %p209 = pneg %p56
      %p210 = pneg %p85
      %p211 = pneg %p82
      %s212 = smul.u32 32, %s17
      %p213 = scmp.lt.s32.totalorder %s212, 63
      %s214 = scalar_select %p213, %s212, 63
      %s215 = smul.addr %s214, 4
      %s216 = scalar_lea.vmem %s2, %s215
      %p217 = pneg %p111
      %p218 = pneg %p108
      %s219 = smul.u32 32, %s17
      %p220 = scmp.lt.s32.totalorder %s219, 63
      %s221 = scalar_select %p220, %s219, 63
      %s222 = smul.addr %s221, 4
      %s223 = scalar_lea.vmem %s3, %s222
      %p224 = pneg %p137
      %p225 = pneg %p134
      %p226 = scmp.lt.s32.totalorder %s17, 1
      %s227 = scalar_select %p226, %s17, 1
      %s228 = smul.addr %s227, 2
      %s229 = scalar_lea.vmem %s4, %s228
      %p230 = pneg %p163
      %p231 = pneg %p160
      %p232 = scmp.lt.s32.totalorder %s17, 1
      %s233 = scalar_select %p232, %s17, 1
      %s234 = smul.addr %s233, 2
      %s235 = scalar_lea.vmem %s5, %s234
      %s236 = smul.u32 32, %s17
      %p237 = scmp.lt.s32.totalorder %s236, 63
      %s238 = scalar_select %p237, %s236, 63
      %s239 = smul.addr %s238, 8
      %s240 = scalar_lea.vmem %s0, %s239
      %s241 = smul.u32 32, %s17
      %s242 = smul.u32 32, %s17
      %p243 = scmp.lt.s32.totalorder %s242, 63
      %s244 = scalar_select %p243, %s242, 63
      %s245 = smul.addr %s244, 4
      %s246 = scalar_lea.vmem %s2, %s245
      %s247 = smul.u32 32, %s17
      %s248 = smul.u32 32, %s17
      %p249 = scmp.lt.s32.totalorder %s248, 63
      %s250 = scalar_select %p249, %s248, 63
      %s251 = smul.addr %s250, 4
      %s252 = scalar_lea.vmem %s3, %s251
      %s253 = smul.u32 32, %s17
      %p254 = scmp.lt.s32.totalorder %s17, 1
      %s255 = scalar_select %p254, %s17, 1
      %s256 = smul.addr %s255, 2
      %s257 = scalar_lea.vmem %s4, %s256
      %p258 = scmp.lt.s32.totalorder %s17, 1
      %s259 = scalar_select %p258, %s17, 1
      %s260 = smul.addr %s259, 2
      %s261 = scalar_lea.vmem %s5, %s260
      %v263 = vld [vmem:[%s240] sm:$0xff]
      %v264 = vld [vmem:[%s240 + $0x8] sm:$0xff]
      %v265 = vld [vmem:[%s240 + $0x10] sm:$0xff]
      %v266 = vld [vmem:[%s240 + $0x18] sm:$0xff]
      %v267 = vld [vmem:[%s240 + $0x20] sm:$0xff]
      %v268 = vld [vmem:[%s240 + $0x28] sm:$0xff]
      %v269 = vld [vmem:[%s240 + $0x30] sm:$0xff]
      %v270 = vld [vmem:[%s240 + $0x38] sm:$0xff]
      %v271 = vld [vmem:[%s240 + $0x40] sm:$0xff]
      %v272 = vld [vmem:[%s240 + $0x48] sm:$0xff]
      %v273 = vld [vmem:[%s240 + $0x50] sm:$0xff]
      %v274 = vld [vmem:[%s240 + $0x58] sm:$0xff]
      %v275 = vld [vmem:[%s240 + $0x60] sm:$0xff]
      %v276 = vld [vmem:[%s240 + $0x68] sm:$0xff]
      %v277 = vld [vmem:[%s240 + $0x70] sm:$0xff]
      %v278 = vld [vmem:[%s240 + $0x78] sm:$0xff]
      %v279 = vld [vmem:[%s240 + $0x80] sm:$0xff]
      %v280 = vld [vmem:[%s240 + $0x88] sm:$0xff]
      %v281 = vld [vmem:[%s240 + $0x90] sm:$0xff]
      %v282 = vld [vmem:[%s240 + $0x98] sm:$0xff]
      %v283 = vld [vmem:[%s240 + $0xa0] sm:$0xff]
      %v284 = vld [vmem:[%s240 + $0xa8] sm:$0xff]
      %v285 = vld [vmem:[%s240 + $0xb0] sm:$0xff]
      %v286 = vld [vmem:[%s240 + $0xb8] sm:$0xff]
      %v287 = vld [vmem:[%s240 + $0xc0] sm:$0xff]
      %v288 = vld [vmem:[%s240 + $0xc8] sm:$0xff]
      %v289 = vld [vmem:[%s240 + $0xd0] sm:$0xff]
      %v290 = vld [vmem:[%s240 + $0xd8] sm:$0xff]
      %v291 = vld [vmem:[%s240 + $0xe0] sm:$0xff]
      %v292 = vld [vmem:[%s240 + $0xe8] sm:$0xff]
      %v293 = vld [vmem:[%s240 + $0xf0] sm:$0xff]
      %v294 = vld [vmem:[%s240 + $0xf8] sm:$0xff]
      %v295 = vpack.c.bf16 %v264, %v263
      %v296 = vpack.c.bf16 %v266, %v265
      %v297 = vpack.c.bf16 %v268, %v267
      %v298 = vpack.c.bf16 %v270, %v269
      %v299 = vpack.c.bf16 %v272, %v271
      %v300 = vpack.c.bf16 %v274, %v273
      %v301 = vpack.c.bf16 %v276, %v275
      %v302 = vpack.c.bf16 %v278, %v277
      %v303 = vpack.c.bf16 %v280, %v279
      %v304 = vpack.c.bf16 %v282, %v281
      %v305 = vpack.c.bf16 %v284, %v283
      %v306 = vpack.c.bf16 %v286, %v285
      %v307 = vpack.c.bf16 %v288, %v287
      %v308 = vpack.c.bf16 %v290, %v289
      %v309 = vpack.c.bf16 %v292, %v291
      %v310 = vpack.c.bf16 %v294, %v293
      %v311 = vld [vmem:[%s1] sm:$0xff]
      %v313 = vunpack.c.l.b16 %v311
      %v314 = vunpack.c.h.b16 %v311
      %v315 = vpack.c.b16 %v313, %v313
      %v316 = vpack.c.b16 %v314, %v314
      %vm317 = vcmask 64512
      %v319 = vsel %vm317, %v295, 0
      %v322 = vsel %vm317, %v296, 0
      %v325 = vsel %vm317, %v297, 0
      %v328 = vsel %vm317, %v298, 0
      %v331 = vsel %vm317, %v299, 0
      %v334 = vsel %vm317, %v300, 0
      %v337 = vsel %vm317, %v301, 0
      %v340 = vsel %vm317, %v302, 0
      %v343 = vsel %vm317, %v303, 0
      %v346 = vsel %vm317, %v304, 0
      %v349 = vsel %vm317, %v305, 0
      %v352 = vsel %vm317, %v306, 0
      %v355 = vsel %vm317, %v307, 0
      %v358 = vsel %vm317, %v308, 0
      %v361 = vsel %vm317, %v309, 0
      %v364 = vsel %vm317, %v310, 0
      %vm366 = vcmask 1043456
      %v368 = vsel %vm366, %v315, 0
      %v371 = vsel %vm366, %v316, 0
      %373 = vmatprep.subr.bf16.mxu0 %v371
      %374 = vmatpush1.bf16.msra.mxu0 %v368
      %375 = vmatprep.subr.bf16.mxu0 0
      %376 = vmatpush1.bf16.msra.mxu0 0
      %377 = vmatprep.subr.bf16.mxu0 0
      %378 = vmatpush1.bf16.msra.mxu0 0
      %379 = vmatprep.subr.bf16.mxu0 0
      %380 = vmatpush1.bf16.msra.mxu0 0
      %381 = vmatprep.subr.bf16.mxu0 0
      %382 = vmatpush1.bf16.msra.mxu0 0
      %383 = vmatprep.subr.bf16.mxu0 0
      %384 = vmatpush1.bf16.msra.mxu0 0
      %385 = vmatprep.subr.bf16.mxu0 0
      %386 = vmatpush1.bf16.msra.mxu0 0
      %387 = vmatprep.subr.bf16.mxu0 0
      %388 = vmatpush1.bf16.msra.mxu0 0
      %389 = vmatprep.subr.bf16.mxu0 0
      %390 = vmatpush1.bf16.msra.mxu0 0
      %391 = vmatprep.subr.bf16.mxu0 0
      %392 = vmatpush1.bf16.msra.mxu0 0
      %393 = vmatprep.subr.bf16.mxu0 0
      %394 = vmatpush1.bf16.msra.mxu0 0
      %395 = vmatprep.subr.bf16.mxu0 0
      %396 = vmatpush1.bf16.msra.mxu0 0
      %397 = vmatprep.subr.bf16.mxu0 0
      %398 = vmatpush1.bf16.msra.mxu0 0
      %399 = vmatprep.subr.bf16.mxu0 0
      %400 = vmatpush1.bf16.msra.mxu0 0
      %401 = vmatprep.subr.bf16.mxu0 0
      %402 = vmatpush1.bf16.msra.mxu0 0
      %403 = vmatprep.subr.bf16.mxu0 0
      %404 = vmatpush1.bf16.msra.mxu0 0
      %405 = vmatprep.mubr.bf16.mxu0 0
      %406 = vmatmul.mubr.bf16.gmra.mrb[0].mxu0 %v319
      %v407 = vpop.f32.mrb[0].mxu0
      %v408 = vadd.f32 0.0, %v407
      %v409 = vpop.f32.mrb[0].mxu0
      %v410 = vadd.f32 0.0, %v409
      %v411 = vpop.f32.mrb[0].mxu0
      %v412 = vadd.f32 0.0, %v411
      %v413 = vpop.f32.mrb[0].mxu0
      %v414 = vadd.f32 0.0, %v413
      %415 = vmatprep.mubr.bf16.mxu0 0
      %416 = vmatmul.mubr.bf16.gmra.mrb[0].mxu0 %v322
      %v417 = vpop.f32.mrb[0].mxu0
      %v418 = vadd.f32 0.0, %v417
      %v419 = vpop.f32.mrb[0].mxu0
      %v420 = vadd.f32 0.0, %v419
      %v421 = vpop.f32.mrb[0].mxu0
      %v422 = vadd.f32 0.0, %v421
      %v423 = vpop.f32.mrb[0].mxu0
      %v424 = vadd.f32 0.0, %v423
      %425 = vmatprep.mubr.bf16.mxu0 0
      %426 = vmatmul.mubr.bf16.gmra.mrb[0].mxu0 %v325
      %v427 = vpop.f32.mrb[0].mxu0
      %v428 = vadd.f32 0.0, %v427
      %v429 = vpop.f32.mrb[0].mxu0
      %v430 = vadd.f32 0.0, %v429
      %v431 = vpop.f32.mrb[0].mxu0
      %v432 = vadd.f32 0.0, %v431
      %v433 = vpop.f32.mrb[0].mxu0
      %v434 = vadd.f32 0.0, %v433
      %435 = vmatprep.mubr.bf16.mxu0 0
      %436 = vmatmul.mubr.bf16.gmra.mrb[0].mxu0 %v328
      %v437 = vpop.f32.mrb[0].mxu0
      %v438 = vadd.f32 0.0, %v437
      %v439 = vpop.f32.mrb[0].mxu0
      %v440 = vadd.f32 0.0, %v439
      %v441 = vpop.f32.mrb[0].mxu0
      %v442 = vadd.f32 0.0, %v441
      %v443 = vpop.f32.mrb[0].mxu0
      %v444 = vadd.f32 0.0, %v443
      %445 = vmatprep.mubr.bf16.mxu0 0
      %446 = vmatmul.mubr.bf16.gmra.mrb[0].mxu0 %v331
      %v447 = vpop.f32.mrb[0].mxu0
      %v448 = vadd.f32 0.0, %v447
      %v449 = vpop.f32.mrb[0].mxu0
      %v450 = vadd.f32 0.0, %v449
      %v451 = vpop.f32.mrb[0].mxu0
      %v452 = vadd.f32 0.0, %v451
      %v453 = vpop.f32.mrb[0].mxu0
      %v454 = vadd.f32 0.0, %v453
      %455 = vmatprep.mubr.bf16.mxu0 0
      %456 = vmatmul.mubr.bf16.gmra.mrb[0].mxu0 %v334
      %v457 = vpop.f32.mrb[0].mxu0
      %v458 = vadd.f32 0.0, %v457
      %v459 = vpop.f32.mrb[0].mxu0
      %v460 = vadd.f32 0.0, %v459
      %v461 = vpop.f32.mrb[0].mxu0
      %v462 = vadd.f32 0.0, %v461
      %v463 = vpop.f32.mrb[0].mxu0
      %v464 = vadd.f32 0.0, %v463
      %465 = vmatprep.mubr.bf16.mxu0 0
      %466 = vmatmul.mubr.bf16.gmra.mrb[0].mxu0 %v337
      %v467 = vpop.f32.mrb[0].mxu0
      %v468 = vadd.f32 0.0, %v467
      %v469 = vpop.f32.mrb[0].mxu0
      %v470 = vadd.f32 0.0, %v469
      %v471 = vpop.f32.mrb[0].mxu0
      %v472 = vadd.f32 0.0, %v471
      %v473 = vpop.f32.mrb[0].mxu0
      %v474 = vadd.f32 0.0, %v473
      %475 = vmatprep.mubr.bf16.mxu0 0
      %476 = vmatmul.mubr.bf16.gmra.mrb[0].mxu0 %v340
      %v477 = vpop.f32.mrb[0].mxu0
      %v478 = vadd.f32 0.0, %v477
      %v479 = vpop.f32.mrb[0].mxu0
      %v480 = vadd.f32 0.0, %v479
      %v481 = vpop.f32.mrb[0].mxu0
      %v482 = vadd.f32 0.0, %v481
      %v483 = vpop.f32.mrb[0].mxu0
      %v484 = vadd.f32 0.0, %v483
      %485 = vmatprep.mubr.bf16.mxu0 0
      %486 = vmatmul.mubr.bf16.gmra.mrb[0].mxu0 %v343
      %v487 = vpop.f32.mrb[0].mxu0
      %v488 = vadd.f32 0.0, %v487
      %v489 = vpop.f32.mrb[0].mxu0
      %v490 = vadd.f32 0.0, %v489
      %v491 = vpop.f32.mrb[0].mxu0
      %v492 = vadd.f32 0.0, %v491
      %v493 = vpop.f32.mrb[0].mxu0
      %v494 = vadd.f32 0.0, %v493
      %495 = vmatprep.mubr.bf16.mxu0 0
      %496 = vmatmul.mubr.bf16.gmra.mrb[0].mxu0 %v346
      %v497 = vpop.f32.mrb[0].mxu0
      %v498 = vadd.f32 0.0, %v497
      %v499 = vpop.f32.mrb[0].mxu0
      %v500 = vadd.f32 0.0, %v499
      %v501 = vpop.f32.mrb[0].mxu0
      %v502 = vadd.f32 0.0, %v501
      %v503 = vpop.f32.mrb[0].mxu0
      %v504 = vadd.f32 0.0, %v503
      %505 = vmatprep.mubr.bf16.mxu0 0
      %506 = vmatmul.mubr.bf16.gmra.mrb[0].mxu0 %v349
      %v507 = vpop.f32.mrb[0].mxu0
      %v508 = vadd.f32 0.0, %v507
      %v509 = vpop.f32.mrb[0].mxu0
      %v510 = vadd.f32 0.0, %v509
      %v511 = vpop.f32.mrb[0].mxu0
      %v512 = vadd.f32 0.0, %v511
      %v513 = vpop.f32.mrb[0].mxu0
      %v514 = vadd.f32 0.0, %v513
      %515 = vmatprep.mubr.bf16.mxu0 0
      %516 = vmatmul.mubr.bf16.gmra.mrb[0].mxu0 %v352
      %v517 = vpop.f32.mrb[0].mxu0
      %v518 = vadd.f32 0.0, %v517
      %v519 = vpop.f32.mrb[0].mxu0
      %v520 = vadd.f32 0.0, %v519
      %v521 = vpop.f32.mrb[0].mxu0
      %v522 = vadd.f32 0.0, %v521
      %v523 = vpop.f32.mrb[0].mxu0
      %v524 = vadd.f32 0.0, %v523
      %525 = vmatprep.mubr.bf16.mxu0 0
      %526 = vmatmul.mubr.bf16.gmra.mrb[0].mxu0 %v355
      %v527 = vpop.f32.mrb[0].mxu0
      %v528 = vadd.f32 0.0, %v527
      %v529 = vpop.f32.mrb[0].mxu0
      %v530 = vadd.f32 0.0, %v529
      %v531 = vpop.f32.mrb[0].mxu0
      %v532 = vadd.f32 0.0, %v531
      %v533 = vpop.f32.mrb[0].mxu0
      %v534 = vadd.f32 0.0, %v533
      %535 = vmatprep.mubr.bf16.mxu0 0
      %536 = vmatmul.mubr.bf16.gmra.mrb[0].mxu0 %v358
      %v537 = vpop.f32.mrb[0].mxu0
      %v538 = vadd.f32 0.0, %v537
      %v539 = vpop.f32.mrb[0].mxu0
      %v540 = vadd.f32 0.0, %v539
      %v541 = vpop.f32.mrb[0].mxu0
      %v542 = vadd.f32 0.0, %v541
      %v543 = vpop.f32.mrb[0].mxu0
      %v544 = vadd.f32 0.0, %v543
      %545 = vmatprep.mubr.bf16.mxu0 0
      %546 = vmatmul.mubr.bf16.gmra.mrb[0].mxu0 %v361
      %v547 = vpop.f32.mrb[0].mxu0
      %v548 = vadd.f32 0.0, %v547
      %v549 = vpop.f32.mrb[0].mxu0
      %v550 = vadd.f32 0.0, %v549
      %v551 = vpop.f32.mrb[0].mxu0
      %v552 = vadd.f32 0.0, %v551
      %v553 = vpop.f32.mrb[0].mxu0
      %v554 = vadd.f32 0.0, %v553
      %555 = vmatprep.mubr.bf16.mxu0 0
      %556 = vmatmul.mubr.bf16.gmra.mrb[0].mxu0 %v364
      %v557 = vpop.f32.mrb[0].mxu0
      %v558 = vadd.f32 0.0, %v557
      %v559 = vpop.f32.mrb[0].mxu0
      %v560 = vadd.f32 0.0, %v559
      %v561 = vpop.f32.mrb[0].mxu0
      %v562 = vadd.f32 0.0, %v561
      %v563 = vpop.f32.mrb[0].mxu0
      %v564 = vadd.f32 0.0, %v563
      %565 = vdwg.mxu0
      %v566 = vpack.c.bf16 %v412, %v408
      %v567 = vpack.c.bf16 %v422, %v418
      %v568 = vpack.c.bf16 %v432, %v428
      %v569 = vpack.c.bf16 %v442, %v438
      %v570 = vpack.c.bf16 %v452, %v448
      %v571 = vpack.c.bf16 %v462, %v458
      %v572 = vpack.c.bf16 %v472, %v468
      %v573 = vpack.c.bf16 %v482, %v478
      %v574 = vpack.c.bf16 %v492, %v488
      %v575 = vpack.c.bf16 %v502, %v498
      %v576 = vpack.c.bf16 %v512, %v508
      %v577 = vpack.c.bf16 %v522, %v518
      %v578 = vpack.c.bf16 %v532, %v528
      %v579 = vpack.c.bf16 %v542, %v538
      %v580 = vpack.c.bf16 %v552, %v548
      %v581 = vpack.c.bf16 %v562, %v558
      %v598 = vunpack.c.l.b16 %v566
      %v599 = vunpack.c.h.b16 %v566
      %v600 = vunpack.c.l.b16 %v567
      %v601 = vunpack.c.h.b16 %v567
      %v602 = vunpack.c.l.b16 %v568
      %v603 = vunpack.c.h.b16 %v568
      %v604 = vunpack.c.l.b16 %v569
      %v605 = vunpack.c.h.b16 %v569
      %v606 = vunpack.c.l.b16 %v570
      %v607 = vunpack.c.h.b16 %v570
      %v608 = vunpack.c.l.b16 %v571
      %v609 = vunpack.c.h.b16 %v571
      %v610 = vunpack.c.l.b16 %v572
      %v611 = vunpack.c.h.b16 %v572
      %v612 = vunpack.c.l.b16 %v573
      %v613 = vunpack.c.h.b16 %v573
      %v614 = vunpack.c.l.b16 %v574
      %v615 = vunpack.c.h.b16 %v574
      %v616 = vunpack.c.l.b16 %v575
      %v617 = vunpack.c.h.b16 %v575
      %v618 = vunpack.c.l.b16 %v576
      %v619 = vunpack.c.h.b16 %v576
      %v620 = vunpack.c.l.b16 %v577
      %v621 = vunpack.c.h.b16 %v577
      %v622 = vunpack.c.l.b16 %v578
      %v623 = vunpack.c.h.b16 %v578
      %v624 = vunpack.c.l.b16 %v579
      %v625 = vunpack.c.h.b16 %v579
      %v626 = vunpack.c.l.b16 %v580
      %v627 = vunpack.c.h.b16 %v580
      %v628 = vunpack.c.l.b16 %v581
      %v629 = vunpack.c.h.b16 %v581
      %v630 = vpack.c.b16 %v598, %v598
      %v631 = vpack.c.b16 %v599, %v599
      %v632 = vpack.c.b16 %v600, %v600
      %v633 = vpack.c.b16 %v601, %v601
      %v634 = vpack.c.b16 %v602, %v602
      %v635 = vpack.c.b16 %v603, %v603
      %v636 = vpack.c.b16 %v604, %v604
      %v637 = vpack.c.b16 %v605, %v605
      %v638 = vpack.c.b16 %v606, %v606
      %v639 = vpack.c.b16 %v607, %v607
      %v640 = vpack.c.b16 %v608, %v608
      %v641 = vpack.c.b16 %v609, %v609
      %v642 = vpack.c.b16 %v610, %v610
      %v643 = vpack.c.b16 %v611, %v611
      %v644 = vpack.c.b16 %v612, %v612
      %v645 = vpack.c.b16 %v613, %v613
      %v646 = vpack.c.b16 %v614, %v614
      %v647 = vpack.c.b16 %v615, %v615
      %v648 = vpack.c.b16 %v616, %v616
      %v649 = vpack.c.b16 %v617, %v617
      %v650 = vpack.c.b16 %v618, %v618
      %v651 = vpack.c.b16 %v619, %v619
      %v652 = vpack.c.b16 %v620, %v620
      %v653 = vpack.c.b16 %v621, %v621
      %v654 = vpack.c.b16 %v622, %v622
      %v655 = vpack.c.b16 %v623, %v623
      %v656 = vpack.c.b16 %v624, %v624
      %v657 = vpack.c.b16 %v625, %v625
      %v658 = vpack.c.b16 %v626, %v626
      %v659 = vpack.c.b16 %v627, %v627
      %v660 = vpack.c.b16 %v628, %v628
      %v661 = vpack.c.b16 %v629, %v629
      %694 = vst [vmem:[%s246] sm:$0xf] %v630
      %695 = vst [vmem:[%s246 + $0x4] sm:$0xf] %v631
      %696 = vst [vmem:[%s246 + $0x8] sm:$0xf] %v632
      %697 = vst [vmem:[%s246 + $0xc] sm:$0xf] %v633
      %698 = vst [vmem:[%s246 + $0x10] sm:$0xf] %v634
      %699 = vst [vmem:[%s246 + $0x14] sm:$0xf] %v635
      %700 = vst [vmem:[%s246 + $0x18] sm:$0xf] %v636
      %701 = vst [vmem:[%s246 + $0x1c] sm:$0xf] %v637
      %702 = vst [vmem:[%s246 + $0x20] sm:$0xf] %v638
      %703 = vst [vmem:[%s246 + $0x24] sm:$0xf] %v639
      %704 = vst [vmem:[%s246 + $0x28] sm:$0xf] %v640
      %705 = vst [vmem:[%s246 + $0x2c] sm:$0xf] %v641
      %706 = vst [vmem:[%s246 + $0x30] sm:$0xf] %v642
      %707 = vst [vmem:[%s246 + $0x34] sm:$0xf] %v643
      %708 = vst [vmem:[%s246 + $0x38] sm:$0xf] %v644
      %709 = vst [vmem:[%s246 + $0x3c] sm:$0xf] %v645
      %710 = vst [vmem:[%s246 + $0x40] sm:$0xf] %v646
      %711 = vst [vmem:[%s246 + $0x44] sm:$0xf] %v647
      %712 = vst [vmem:[%s246 + $0x48] sm:$0xf] %v648
      %713 = vst [vmem:[%s246 + $0x4c] sm:$0xf] %v649
      %714 = vst [vmem:[%s246 + $0x50] sm:$0xf] %v650
      %715 = vst [vmem:[%s246 + $0x54] sm:$0xf] %v651
      %716 = vst [vmem:[%s246 + $0x58] sm:$0xf] %v652
      %717 = vst [vmem:[%s246 + $0x5c] sm:$0xf] %v653
      %718 = vst [vmem:[%s246 + $0x60] sm:$0xf] %v654
      %719 = vst [vmem:[%s246 + $0x64] sm:$0xf] %v655
      %720 = vst [vmem:[%s246 + $0x68] sm:$0xf] %v656
      %721 = vst [vmem:[%s246 + $0x6c] sm:$0xf] %v657
      %722 = vst [vmem:[%s246 + $0x70] sm:$0xf] %v658
      %723 = vst [vmem:[%s246 + $0x74] sm:$0xf] %v659
      %724 = vst [vmem:[%s246 + $0x78] sm:$0xf] %v660
      %725 = vst [vmem:[%s246 + $0x7c] sm:$0xf] %v661
      %v726 = vpack.c.bf16 %v414, %v410
      %v727 = vpack.c.bf16 %v424, %v420
      %v728 = vpack.c.bf16 %v434, %v430
      %v729 = vpack.c.bf16 %v444, %v440
      %v730 = vpack.c.bf16 %v454, %v450
      %v731 = vpack.c.bf16 %v464, %v460
      %v732 = vpack.c.bf16 %v474, %v470
      %v733 = vpack.c.bf16 %v484, %v480
      %v734 = vpack.c.bf16 %v494, %v490
      %v735 = vpack.c.bf16 %v504, %v500
      %v736 = vpack.c.bf16 %v514, %v510
      %v737 = vpack.c.bf16 %v524, %v520
      %v738 = vpack.c.bf16 %v534, %v530
      %v739 = vpack.c.bf16 %v544, %v540
      %v740 = vpack.c.bf16 %v554, %v550
      %v741 = vpack.c.bf16 %v564, %v560
      %v758 = vunpack.c.l.b16 %v726
      %v759 = vunpack.c.h.b16 %v726
      %v760 = vunpack.c.l.b16 %v727
      %v761 = vunpack.c.h.b16 %v727
      %v762 = vunpack.c.l.b16 %v728
      %v763 = vunpack.c.h.b16 %v728
      %v764 = vunpack.c.l.b16 %v729
      %v765 = vunpack.c.h.b16 %v729
      %v766 = vunpack.c.l.b16 %v730
      %v767 = vunpack.c.h.b16 %v730
      %v768 = vunpack.c.l.b16 %v731
      %v769 = vunpack.c.h.b16 %v731
      %v770 = vunpack.c.l.b16 %v732
      %v771 = vunpack.c.h.b16 %v732
      %v772 = vunpack.c.l.b16 %v733
      %v773 = vunpack.c.h.b16 %v733
      %v774 = vunpack.c.l.b16 %v734
      %v775 = vunpack.c.h.b16 %v734
      %v776 = vunpack.c.l.b16 %v735
      %v777 = vunpack.c.h.b16 %v735
      %v778 = vunpack.c.l.b16 %v736
      %v779 = vunpack.c.h.b16 %v736
      %v780 = vunpack.c.l.b16 %v737
      %v781 = vunpack.c.h.b16 %v737
      %v782 = vunpack.c.l.b16 %v738
      %v783 = vunpack.c.h.b16 %v738
      %v784 = vunpack.c.l.b16 %v739
      %v785 = vunpack.c.h.b16 %v739
      %v786 = vunpack.c.l.b16 %v740
      %v787 = vunpack.c.h.b16 %v740
      %v788 = vunpack.c.l.b16 %v741
      %v789 = vunpack.c.h.b16 %v741
      %v790 = vpack.c.b16 %v758, %v758
      %v791 = vpack.c.b16 %v759, %v759
      %v792 = vpack.c.b16 %v760, %v760
      %v793 = vpack.c.b16 %v761, %v761
      %v794 = vpack.c.b16 %v762, %v762
      %v795 = vpack.c.b16 %v763, %v763
      %v796 = vpack.c.b16 %v764, %v764
      %v797 = vpack.c.b16 %v765, %v765
      %v798 = vpack.c.b16 %v766, %v766
      %v799 = vpack.c.b16 %v767, %v767
      %v800 = vpack.c.b16 %v768, %v768
      %v801 = vpack.c.b16 %v769, %v769
      %v802 = vpack.c.b16 %v770, %v770
      %v803 = vpack.c.b16 %v771, %v771
      %v804 = vpack.c.b16 %v772, %v772
      %v805 = vpack.c.b16 %v773, %v773
      %v806 = vpack.c.b16 %v774, %v774
      %v807 = vpack.c.b16 %v775, %v775
      %v808 = vpack.c.b16 %v776, %v776
      %v809 = vpack.c.b16 %v777, %v777
      %v810 = vpack.c.b16 %v778, %v778
      %v811 = vpack.c.b16 %v779, %v779
      %v812 = vpack.c.b16 %v780, %v780
      %v813 = vpack.c.b16 %v781, %v781
      %v814 = vpack.c.b16 %v782, %v782
      %v815 = vpack.c.b16 %v783, %v783
      %v816 = vpack.c.b16 %v784, %v784
      %v817 = vpack.c.b16 %v785, %v785
      %v818 = vpack.c.b16 %v786, %v786
      %v819 = vpack.c.b16 %v787, %v787
      %v820 = vpack.c.b16 %v788, %v788
      %v821 = vpack.c.b16 %v789, %v789
      %854 = vst [vmem:[%s252] sm:$0xf] %v790
      %855 = vst [vmem:[%s252 + $0x4] sm:$0xf] %v791
      %856 = vst [vmem:[%s252 + $0x8] sm:$0xf] %v792
      %857 = vst [vmem:[%s252 + $0xc] sm:$0xf] %v793
      %858 = vst [vmem:[%s252 + $0x10] sm:$0xf] %v794
      %859 = vst [vmem:[%s252 + $0x14] sm:$0xf] %v795
      %860 = vst [vmem:[%s252 + $0x18] sm:$0xf] %v796
      %861 = vst [vmem:[%s252 + $0x1c] sm:$0xf] %v797
      %862 = vst [vmem:[%s252 + $0x20] sm:$0xf] %v798
      %863 = vst [vmem:[%s252 + $0x24] sm:$0xf] %v799
      %864 = vst [vmem:[%s252 + $0x28] sm:$0xf] %v800
      %865 = vst [vmem:[%s252 + $0x2c] sm:$0xf] %v801
      %866 = vst [vmem:[%s252 + $0x30] sm:$0xf] %v802
      %867 = vst [vmem:[%s252 + $0x34] sm:$0xf] %v803
      %868 = vst [vmem:[%s252 + $0x38] sm:$0xf] %v804
      %869 = vst [vmem:[%s252 + $0x3c] sm:$0xf] %v805
      %870 = vst [vmem:[%s252 + $0x40] sm:$0xf] %v806
      %871 = vst [vmem:[%s252 + $0x44] sm:$0xf] %v807
      %872 = vst [vmem:[%s252 + $0x48] sm:$0xf] %v808
      %873 = vst [vmem:[%s252 + $0x4c] sm:$0xf] %v809
      %874 = vst [vmem:[%s252 + $0x50] sm:$0xf] %v810
      %875 = vst [vmem:[%s252 + $0x54] sm:$0xf] %v811
      %876 = vst [vmem:[%s252 + $0x58] sm:$0xf] %v812
      %877 = vst [vmem:[%s252 + $0x5c] sm:$0xf] %v813
      %878 = vst [vmem:[%s252 + $0x60] sm:$0xf] %v814
      %879 = vst [vmem:[%s252 + $0x64] sm:$0xf] %v815
      %880 = vst [vmem:[%s252 + $0x68] sm:$0xf] %v816
      %881 = vst [vmem:[%s252 + $0x6c] sm:$0xf] %v817
      %882 = vst [vmem:[%s252 + $0x70] sm:$0xf] %v818
      %883 = vst [vmem:[%s252 + $0x74] sm:$0xf] %v819
      %884 = vst [vmem:[%s252 + $0x78] sm:$0xf] %v820
      %885 = vst [vmem:[%s252 + $0x7c] sm:$0xf] %v821
      %v886 = vadd.f32 %v408, %v412
      %v887 = vadd.f32 %v886, %v418
      %v888 = vadd.f32 %v887, %v422
      %v889 = vadd.f32 %v888, %v428
      %v890 = vadd.f32 %v889, %v432
      %v891 = vadd.f32 %v890, %v438
      %v892 = vadd.f32 %v891, %v442
      %v893 = vadd.f32 %v892, %v448
      %v894 = vadd.f32 %v893, %v452
      %v895 = vadd.f32 %v894, %v458
      %v896 = vadd.f32 %v895, %v462
      %v897 = vadd.f32 %v896, %v468
      %v898 = vadd.f32 %v897, %v472
      %v899 = vadd.f32 %v898, %v478
      %v900 = vadd.f32 %v899, %v482
      %v901 = vadd.f32 %v900, %v488
      %v902 = vadd.f32 %v901, %v492
      %v903 = vadd.f32 %v902, %v498
      %v904 = vadd.f32 %v903, %v502
      %v905 = vadd.f32 %v904, %v508
      %v906 = vadd.f32 %v905, %v512
      %v907 = vadd.f32 %v906, %v518
      %v908 = vadd.f32 %v907, %v522
      %v909 = vadd.f32 %v908, %v528
      %v910 = vadd.f32 %v909, %v532
      %v911 = vadd.f32 %v910, %v538
      %v912 = vadd.f32 %v911, %v542
      %v913 = vadd.f32 %v912, %v548
      %v914 = vadd.f32 %v913, %v552
      %v915 = vadd.f32 %v914, %v558
      %v916 = vadd.f32 %v915, %v562
      %v917 = vrot.slane %v916, 4
      %v918 = vadd.f32 %v916, %v917
      %v919 = vrot.slane %v918, 2
      %v920 = vadd.f32 %v918, %v919
      %v921 = vrot.slane %v920, 1
      %v922 = vadd.f32 %v920, %v921
      %923 = vst [vmem:[%s257] sm:$0x1] %v922
      %v924 = vmul.f32 %v408, %v408
      %v925 = vmul.f32 %v412, %v412
      %v926 = vmul.f32 %v418, %v418
      %v927 = vmul.f32 %v422, %v422
      %v928 = vmul.f32 %v428, %v428
      %v929 = vmul.f32 %v432, %v432
      %v930 = vmul.f32 %v438, %v438
      %v931 = vmul.f32 %v442, %v442
      %v932 = vmul.f32 %v448, %v448
      %v933 = vmul.f32 %v452, %v452
      %v934 = vmul.f32 %v458, %v458
      %v935 = vmul.f32 %v462, %v462
      %v936 = vmul.f32 %v468, %v468
      %v937 = vmul.f32 %v472, %v472
      %v938 = vmul.f32 %v478, %v478
      %v939 = vmul.f32 %v482, %v482
      %v940 = vmul.f32 %v488, %v488
      %v941 = vmul.f32 %v492, %v492
      %v942 = vmul.f32 %v498, %v498
      %v943 = vmul.f32 %v502, %v502
      %v944 = vmul.f32 %v508, %v508
      %v945 = vmul.f32 %v512, %v512
      %v946 = vmul.f32 %v518, %v518
      %v947 = vmul.f32 %v522, %v522
      %v948 = vmul.f32 %v528, %v528
      %v949 = vmul.f32 %v532, %v532
      %v950 = vmul.f32 %v538, %v538
      %v951 = vmul.f32 %v542, %v542
      %v952 = vmul.f32 %v548, %v548
      %v953 = vmul.f32 %v552, %v552
      %v954 = vmul.f32 %v558, %v558
      %v955 = vmul.f32 %v562, %v562
      %v956 = vadd.f32 %v924, %v925
      %v957 = vadd.f32 %v956, %v926
      %v958 = vadd.f32 %v957, %v927
      %v959 = vadd.f32 %v958, %v928
      %v960 = vadd.f32 %v959, %v929
      %v961 = vadd.f32 %v960, %v930
      %v962 = vadd.f32 %v961, %v931
      %v963 = vadd.f32 %v962, %v932
      %v964 = vadd.f32 %v963, %v933
      %v965 = vadd.f32 %v964, %v934
      %v966 = vadd.f32 %v965, %v935
      %v967 = vadd.f32 %v966, %v936
      %v968 = vadd.f32 %v967, %v937
      %v969 = vadd.f32 %v968, %v938
      %v970 = vadd.f32 %v969, %v939
      %v971 = vadd.f32 %v970, %v940
      %v972 = vadd.f32 %v971, %v941
      %v973 = vadd.f32 %v972, %v942
      %v974 = vadd.f32 %v973, %v943
      %v975 = vadd.f32 %v974, %v944
      %v976 = vadd.f32 %v975, %v945
      %v977 = vadd.f32 %v976, %v946
      %v978 = vadd.f32 %v977, %v947
      %v979 = vadd.f32 %v978, %v948
      %v980 = vadd.f32 %v979, %v949
      %v981 = vadd.f32 %v980, %v950
      %v982 = vadd.f32 %v981, %v951
      %v983 = vadd.f32 %v982, %v952
      %v984 = vadd.f32 %v983, %v953
      %v985 = vadd.f32 %v984, %v954
      %v986 = vadd.f32 %v985, %v955
      %v987 = vrot.slane %v986, 4
      %v988 = vadd.f32 %v986, %v987
      %v989 = vrot.slane %v988, 2
      %v990 = vadd.f32 %v988, %v989
      %v991 = vrot.slane %v990, 1
      %v992 = vadd.f32 %v990, %v991
      %993 = vst [vmem:[%s257 + $0x1] sm:$0x1] %v992
      %v994 = vadd.f32 %v410, %v414
      %v995 = vadd.f32 %v994, %v420
      %v996 = vadd.f32 %v995, %v424
      %v997 = vadd.f32 %v996, %v430
      %v998 = vadd.f32 %v997, %v434
      %v999 = vadd.f32 %v998, %v440
      %v1000 = vadd.f32 %v999, %v444
      %v1001 = vadd.f32 %v1000, %v450
      %v1002 = vadd.f32 %v1001, %v454
      %v1003 = vadd.f32 %v1002, %v460
      %v1004 = vadd.f32 %v1003, %v464
      %v1005 = vadd.f32 %v1004, %v470
      %v1006 = vadd.f32 %v1005, %v474
      %v1007 = vadd.f32 %v1006, %v480
      %v1008 = vadd.f32 %v1007, %v484
      %v1009 = vadd.f32 %v1008, %v490
      %v1010 = vadd.f32 %v1009, %v494
      %v1011 = vadd.f32 %v1010, %v500
      %v1012 = vadd.f32 %v1011, %v504
      %v1013 = vadd.f32 %v1012, %v510
      %v1014 = vadd.f32 %v1013, %v514
      %v1015 = vadd.f32 %v1014, %v520
      %v1016 = vadd.f32 %v1015, %v524
      %v1017 = vadd.f32 %v1016, %v530
      %v1018 = vadd.f32 %v1017, %v534
      %v1019 = vadd.f32 %v1018, %v540
      %v1020 = vadd.f32 %v1019, %v544
      %v1021 = vadd.f32 %v1020, %v550
      %v1022 = vadd.f32 %v1021, %v554
      %v1023 = vadd.f32 %v1022, %v560
      %v1024 = vadd.f32 %v1023, %v564
      %v1025 = vrot.slane %v1024, 4
      %v1026 = vadd.f32 %v1024, %v1025
      %v1027 = vrot.slane %v1026, 2
      %v1028 = vadd.f32 %v1026, %v1027
      %v1029 = vrot.slane %v1028, 1
      %v1030 = vadd.f32 %v1028, %v1029
      %1031 = vst [vmem:[%s261] sm:$0x1] %v1030
      %v1032 = vmul.f32 %v410, %v410
      %v1033 = vmul.f32 %v414, %v414
      %v1034 = vmul.f32 %v420, %v420
      %v1035 = vmul.f32 %v424, %v424
      %v1036 = vmul.f32 %v430, %v430
      %v1037 = vmul.f32 %v434, %v434
      %v1038 = vmul.f32 %v440, %v440
      %v1039 = vmul.f32 %v444, %v444
      %v1040 = vmul.f32 %v450, %v450
      %v1041 = vmul.f32 %v454, %v454
      %v1042 = vmul.f32 %v460, %v460
      %v1043 = vmul.f32 %v464, %v464
      %v1044 = vmul.f32 %v470, %v470
      %v1045 = vmul.f32 %v474, %v474
      %v1046 = vmul.f32 %v480, %v480
      %v1047 = vmul.f32 %v484, %v484
      %v1048 = vmul.f32 %v490, %v490
      %v1049 = vmul.f32 %v494, %v494
      %v1050 = vmul.f32 %v500, %v500
      %v1051 = vmul.f32 %v504, %v504
      %v1052 = vmul.f32 %v510, %v510
      %v1053 = vmul.f32 %v514, %v514
      %v1054 = vmul.f32 %v520, %v520
      %v1055 = vmul.f32 %v524, %v524
      %v1056 = vmul.f32 %v530, %v530
      %v1057 = vmul.f32 %v534, %v534
      %v1058 = vmul.f32 %v540, %v540
      %v1059 = vmul.f32 %v544, %v544
      %v1060 = vmul.f32 %v550, %v550
      %v1061 = vmul.f32 %v554, %v554
      %v1062 = vmul.f32 %v560, %v560
      %v1063 = vmul.f32 %v564, %v564
      %v1064 = vadd.f32 %v1032, %v1033
      %v1065 = vadd.f32 %v1064, %v1034
      %v1066 = vadd.f32 %v1065, %v1035
      %v1067 = vadd.f32 %v1066, %v1036
      %v1068 = vadd.f32 %v1067, %v1037
      %v1069 = vadd.f32 %v1068, %v1038
      %v1070 = vadd.f32 %v1069, %v1039
      %v1071 = vadd.f32 %v1070, %v1040
      %v1072 = vadd.f32 %v1071, %v1041
      %v1073 = vadd.f32 %v1072, %v1042
      %v1074 = vadd.f32 %v1073, %v1043
      %v1075 = vadd.f32 %v1074, %v1044
      %v1076 = vadd.f32 %v1075, %v1045
      %v1077 = vadd.f32 %v1076, %v1046
      %v1078 = vadd.f32 %v1077, %v1047
      %v1079 = vadd.f32 %v1078, %v1048
      %v1080 = vadd.f32 %v1079, %v1049
      %v1081 = vadd.f32 %v1080, %v1050
      %v1082 = vadd.f32 %v1081, %v1051
      %v1083 = vadd.f32 %v1082, %v1052
      %v1084 = vadd.f32 %v1083, %v1053
      %v1085 = vadd.f32 %v1084, %v1054
      %v1086 = vadd.f32 %v1085, %v1055
      %v1087 = vadd.f32 %v1086, %v1056
      %v1088 = vadd.f32 %v1087, %v1057
      %v1089 = vadd.f32 %v1088, %v1058
      %v1090 = vadd.f32 %v1089, %v1059
      %v1091 = vadd.f32 %v1090, %v1060
      %v1092 = vadd.f32 %v1091, %v1061
      %v1093 = vadd.f32 %v1092, %v1062
      %v1094 = vadd.f32 %v1093, %v1063
      %v1095 = vrot.slane %v1094, 4
      %v1096 = vadd.f32 %v1094, %v1095
      %v1097 = vrot.slane %v1096, 2
      %v1098 = vadd.f32 %v1096, %v1097
      %v1099 = vrot.slane %v1098, 1
      %v1100 = vadd.f32 %v1098, %v1099
      %1101 = vst [vmem:[%s261 + $0x1] sm:$0x1] %v1100
      %s1102 = smul.u32 32, %s17
      %p1103 = scmp.lt.s32.totalorder %s1102, 63
      %s1104 = scalar_select %p1103, %s1102, 63
      %s1105 = smul.addr %s1104, 4
      %s1106 = scalar_lea.vmem %s2, %s1105
      %s1107 = smul.u32 32, %s17
      %p1108 = scmp.lt.s32.totalorder %s1107, 63
      %s1109 = scalar_select %p1108, %s1107, 63
      %s1110 = smul.addr %s1109, 4
      %s1111 = scalar_lea.vmem %s3, %s1110
      %p1112 = scmp.lt.s32.totalorder %s17, 1
      %s1113 = scalar_select %p1112, %s17, 1
      %s1114 = smul.addr %s1113, 2
      %s1115 = scalar_lea.vmem %s4, %s1114
      %p1116 = scmp.lt.s32.totalorder %s17, 1
      %s1117 = scalar_select %p1116, %s17, 1
      %s1118 = smul.addr %s1117, 2
      %s1119 = scalar_lea.vmem %s5, %s1118
      // Predicated region
      $region29: #{residual_unit_pallas.4} parent=27 // pred_check
        %p1120 = pneg %p82
      $region30: #{residual_unit_pallas.4} parent=27 // pred_check_branch
        %1122 = sbr.rel (%p1120) target = $region32
      $region31: #{residual_unit_pallas.4} parent=27 // pred_region
        %s1123 = smul.u32 32, %s17
      $region32: #{residual_unit_pallas.4} parent=27 // pred_fallthru
        _
      // Predicated region
      $region33: #{residual_unit_pallas.4} parent=27 // pred_check
        %p1124 = pneg %p108
      $region34: #{residual_unit_pallas.4} parent=27 // pred_check_branch
        %1126 = sbr.rel (%p1124) target = $region36
      $region35: #{residual_unit_pallas.4} parent=27 // pred_region
        %s1127 = smul.u32 32, %s17
      $region36: #{residual_unit_pallas.4} parent=27 // pred_fallthru
        _
      // Predicated region
      $region37: #{residual_unit_pallas.4} parent=27 // pred_check
        %p1128 = pneg %p134
      $region38: #{residual_unit_pallas.4} parent=27 // pred_check_branch
        %1130 = sbr.rel (%p1128) target = $region40
      $region39: #{residual_unit_pallas.4} parent=27 // pred_region
        _
      $region40: #{residual_unit_pallas.4} parent=27 // pred_fallthru
        _
      // Predicated region
      $region41: #{residual_unit_pallas.4} parent=27 // pred_check
        %p1131 = pneg %p160
      $region42: #{residual_unit_pallas.4} parent=27 // pred_check_branch
        %1133 = sbr.rel (%p1131) target = $region44
      $region43: #{residual_unit_pallas.4} parent=27 // pred_region
        _
      $region44: #{residual_unit_pallas.4} parent=27 // pred_fallthru
        _
    $region28: #{residual_unit_pallas.4} parent=5 // pred_fallthru
      _
    %p1134 = scmp.le.s32.totalorder 2, %s12
    // Predicated region
    $region45: #{residual_unit_pallas.4} parent=5 // pred_check
      %p1135 = pneg %p1134
    $region46: #{residual_unit_pallas.4} parent=5 // pred_check_branch
      %1137 = sbr.rel (%p1135) target = $region48
    $region47: #{residual_unit_pallas.4} parent=5 // pred_region
      %s1138 = ssub.s32 %s12, 2
      // Predicated region
      $region49: #{residual_unit_pallas.4} parent=47 // pred_check
        %p1139 = pneg %p88
      $region50: #{residual_unit_pallas.4} parent=47 // pred_check_branch
        %1141 = sbr.rel (%p1139) target = $region52
      $region51: #{residual_unit_pallas.4} parent=47 // pred_region
        %s1142 = smul.u32 32, %s18
        %p1143 = scmp.lt.s32.totalorder %s1142, 63
        %s1144 = scalar_select %p1143, %s1142, 63
        %s1145 = smul.addr %s1144, 4
        %s1146 = scalar_lea.vmem %s2, %s1145
      $region52: #{residual_unit_pallas.4} parent=47 // pred_fallthru
        _
      // Predicated region
      $region53: #{residual_unit_pallas.4} parent=47 // pred_check
        %p1147 = pneg %p114
      $region54: #{residual_unit_pallas.4} parent=47 // pred_check_branch
        %1149 = sbr.rel (%p1147) target = $region56
      $region55: #{residual_unit_pallas.4} parent=47 // pred_region
        %s1150 = smul.u32 32, %s18
        %p1151 = scmp.lt.s32.totalorder %s1150, 63
        %s1152 = scalar_select %p1151, %s1150, 63
        %s1153 = smul.addr %s1152, 4
        %s1154 = scalar_lea.vmem %s3, %s1153
      $region56: #{residual_unit_pallas.4} parent=47 // pred_fallthru
        _
      // Predicated region
      $region57: #{residual_unit_pallas.4} parent=47 // pred_check
        %p1155 = pneg %p140
      $region58: #{residual_unit_pallas.4} parent=47 // pred_check_branch
        %1157 = sbr.rel (%p1155) target = $region60
      $region59: #{residual_unit_pallas.4} parent=47 // pred_region
        %p1158 = scmp.lt.s32.totalorder %s18, 1
        %s1159 = scalar_select %p1158, %s18, 1
        %s1160 = smul.addr %s1159, 2
        %s1161 = scalar_lea.vmem %s4, %s1160
      $region60: #{residual_unit_pallas.4} parent=47 // pred_fallthru
        _
      // Predicated region
      $region61: #{residual_unit_pallas.4} parent=47 // pred_check
        %p1162 = pneg %p166
      $region62: #{residual_unit_pallas.4} parent=47 // pred_check_branch
        %1164 = sbr.rel (%p1162) target = $region64
      $region63: #{residual_unit_pallas.4} parent=47 // pred_region
        %p1165 = scmp.lt.s32.totalorder %s18, 1
        %s1166 = scalar_select %p1165, %s18, 1
        %s1167 = smul.addr %s1166, 2
        %s1168 = scalar_lea.vmem %s5, %s1167
      $region64: #{residual_unit_pallas.4} parent=47 // pred_fallthru
        _
    $region48: #{residual_unit_pallas.4} parent=5 // pred_fallthru
      _
  $region6: #{residual_unit_pallas.4} parent=0 // loop_footer
    %s16 = sadd.s32 1, %s12
  $region7: #{residual_unit_pallas.4} parent=0 // loop_footer_branch
    %11 = sbr.rel target = $region3
  $region8: #{residual_unit_pallas.4} parent=0 // loop_exit
    _

// kernel: residual_unit_pallas.5
$region0: #{residual_unit_pallas.5}
  #allocation0 [shape = 'u32[]', space=smem, size = 0x4, offset = 0x4, fixed_abs, tag = 'smem constant byte address 0x4 - core index']
  #allocation1 [shape = 'u32[144,128]{1,0:T(1,128)}', space=vmem, size = 0x12000, scoped, tag = 'internal scratch']
  #allocation2 [shape = 'bf16[456,128]{1,0:T(8,128)(2,1)}', space=vmem, size = 0x1c800, scoped, tag = 'scratch operand']
  %s0 = inlined_call_operand.vmem [shape: bf16[2,16,16,128], index: 0, kind: input, shape index: {}]
  %s1 = inlined_call_operand.vmem [shape: f32[1,128], index: 1, kind: input, shape index: {}]
  %s2 = inlined_call_operand.vmem [shape: f32[1,128], index: 2, kind: input, shape index: {}]
  %s3 = inlined_call_operand.vmem [shape: bf16[9,128,128], index: 3, kind: input, shape index: {}]
  %s4 = inlined_call_operand.vmem [shape: bf16[2,16,16,128], index: 4, kind: output, shape index: {0}]
  %s5 = inlined_call_operand.vmem [shape: f32[2,2,128], index: 5, kind: output, shape index: {1}]
  %6 = xla_tuple %s4, %s5
  %s7 = sld [smem:[#allocation0]]
  $region57: #{residual_unit_pallas.5} parent=0
    _
  %s9 = ssub.s32 1, %s7
  %s10 = scalar_select 0, %s9, %s7
  loop: start=0, step=1, limit=4
  $region2: #{residual_unit_pallas.5} parent=0 // loop_pre_header
    _
  $region3: #{residual_unit_pallas.5} parent=0 // loop_header
    %s12 = sphi 0, %s16
    %p13 = scmp.ge.s32.totalorder %s12, 4
    %s22 = sphi 0, %s24
    %s25 = sphi 0, %s22
    %s26 = sphi 0, %s25
    %s42 = sphi 0, %s26
    %s46 = sphi 0, %s46
    %s48 = sphi 0, %s46
    %s49 = sphi 0, %s48
    %s63 = sphi 0, %s49
    %s67 = sphi 0, %s67
    %s69 = sphi 0, %s67
    %s70 = sphi 0, %s69
    %s84 = sphi 0, %s70
    %s88 = sphi 0, %s88
    %s90 = sphi 0, %s88
    %s91 = sphi 0, %s90
    %s105 = sphi 0, %s91
    %s111 = sphi 0, %s113
    %s114 = sphi 0, %s111
    %s115 = sphi 0, %s114
    %s131 = sphi 0, %s115
    %s137 = sphi 0, %s139
    %s140 = sphi 0, %s137
    %s141 = sphi 0, %s140
    %s157 = sphi 0, %s141
  $region4: #{residual_unit_pallas.5} parent=0 // loop_header_branch
    %15 = sbr.rel (%p13) target = $region8
  $region5: #{residual_unit_pallas.5} parent=0 // loop_body
    %s17 = ssub.s32 %s12, 1
    %s18 = ssub.s32 %s12, 2
    %s19 = sadd.s32 %s12, 1
    %s20 = ssub.s32 %s12, %s19
    %p21 = scmp.eq.s32.totalorder %s20, 0
    %s23 = sadd.s32 %s22, 1
    %s24 = scalar_select %p21, %s22, %s23
    %p27 = pneg %p21
    %p28 = scmp.eq.s32.totalorder %s12, 1
    %p29 = por %p27, %p28
    %p30 = scmp.ne.s32.totalorder %s22, %s25
    %p31 = scmp.eq.s32.totalorder %s12, 0
    %p32 = por %p30, %p31
    %p33 = scmp.ne.s32.totalorder %s22, %s25
    %p34 = scmp.eq.s32.totalorder %s17, 1
    %p35 = por %p33, %p34
    %p36 = scmp.ne.s32.totalorder %s25, %s26
    %p37 = scmp.eq.s32.totalorder %s17, 0
    %p38 = por %p36, %p37
    %p39 = scmp.ne.s32.totalorder %s25, %s26
    %p40 = scmp.eq.s32.totalorder %s18, 1
    %p41 = por %p39, %p40
    %p43 = scmp.ne.s32.totalorder %s26, %s42
    %p44 = scmp.eq.s32.totalorder %s18, 0
    %p45 = por %p43, %p44
    %s47 = sadd.s32 %s46, 1
    %p50 = scmp.eq.s32.totalorder %s12, 1
    %p51 = scmp.ne.s32.totalorder %s46, %s48
    %p52 = scmp.eq.s32.totalorder %s12, 0
    %p53 = por %p51, %p52
    %p54 = scmp.ne.s32.totalorder %s46, %s48
    %p55 = scmp.eq.s32.totalorder %s17, 1
    %p56 = por %p54, %p55
    %p57 = scmp.ne.s32.totalorder %s48, %s49
    %p58 = scmp.eq.s32.totalorder %s17, 0
    %p59 = por %p57, %p58
    %p60 = scmp.ne.s32.totalorder %s48, %s49
    %p61 = scmp.eq.s32.totalorder %s18, 1
    %p62 = por %p60, %p61
    %p64 = scmp.ne.s32.totalorder %s49, %s63
    %p65 = scmp.eq.s32.totalorder %s18, 0
    %p66 = por %p64, %p65
    %s68 = sadd.s32 %s67, 1
    %p71 = scmp.eq.s32.totalorder %s12, 1
    %p72 = scmp.ne.s32.totalorder %s67, %s69
    %p73 = scmp.eq.s32.totalorder %s12, 0
    %p74 = por %p72, %p73
    %p75 = scmp.ne.s32.totalorder %s67, %s69
    %p76 = scmp.eq.s32.totalorder %s17, 1
    %p77 = por %p75, %p76
    %p78 = scmp.ne.s32.totalorder %s69, %s70
    %p79 = scmp.eq.s32.totalorder %s17, 0
    %p80 = por %p78, %p79
    %p81 = scmp.ne.s32.totalorder %s69, %s70
    %p82 = scmp.eq.s32.totalorder %s18, 1
    %p83 = por %p81, %p82
    %p85 = scmp.ne.s32.totalorder %s70, %s84
    %p86 = scmp.eq.s32.totalorder %s18, 0
    %p87 = por %p85, %p86
    %s89 = sadd.s32 %s88, 1
    %p92 = scmp.eq.s32.totalorder %s12, 1
    %p93 = scmp.ne.s32.totalorder %s88, %s90
    %p94 = scmp.eq.s32.totalorder %s12, 0
    %p95 = por %p93, %p94
    %p96 = scmp.ne.s32.totalorder %s88, %s90
    %p97 = scmp.eq.s32.totalorder %s17, 1
    %p98 = por %p96, %p97
    %p99 = scmp.ne.s32.totalorder %s90, %s91
    %p100 = scmp.eq.s32.totalorder %s17, 0
    %p101 = por %p99, %p100
    %p102 = scmp.ne.s32.totalorder %s90, %s91
    %p103 = scmp.eq.s32.totalorder %s18, 1
    %p104 = por %p102, %p103
    %p106 = scmp.ne.s32.totalorder %s91, %s105
    %p107 = scmp.eq.s32.totalorder %s18, 0
    %p108 = por %p106, %p107
    %s109 = ssub.s32 %s12, %s19
    %p110 = scmp.eq.s32.totalorder %s109, 0
    %s112 = sadd.s32 %s111, 1
    %s113 = scalar_select %p110, %s111, %s112
    %p116 = pneg %p110
    %p117 = scmp.eq.s32.totalorder %s12, 1
    %p118 = por %p116, %p117
    %p119 = scmp.ne.s32.totalorder %s111, %s114
    %p120 = scmp.eq.s32.totalorder %s12, 0
    %p121 = por %p119, %p120
    %p122 = scmp.ne.s32.totalorder %s111, %s114
    %p123 = scmp.eq.s32.totalorder %s17, 1
    %p124 = por %p122, %p123
    %p125 = scmp.ne.s32.totalorder %s114, %s115
    %p126 = scmp.eq.s32.totalorder %s17, 0
    %p127 = por %p125, %p126
    %p128 = scmp.ne.s32.totalorder %s114, %s115
    %p129 = scmp.eq.s32.totalorder %s18, 1
    %p130 = por %p128, %p129
    %p132 = scmp.ne.s32.totalorder %s115, %s131
    %p133 = scmp.eq.s32.totalorder %s18, 0
    %p134 = por %p132, %p133
    %s135 = ssub.s32 %s12, %s19
    %p136 = scmp.eq.s32.totalorder %s135, 0
    %s138 = sadd.s32 %s137, 1
    %s139 = scalar_select %p136, %s137, %s138
    %p142 = pneg %p136
    %p143 = scmp.eq.s32.totalorder %s12, 1
    %p144 = por %p142, %p143
    %p145 = scmp.ne.s32.totalorder %s137, %s140
    %p146 = scmp.eq.s32.totalorder %s12, 0
    %p147 = por %p145, %p146
    %p148 = scmp.ne.s32.totalorder %s137, %s140
    %p149 = scmp.eq.s32.totalorder %s17, 1
    %p150 = por %p148, %p149
    %p151 = scmp.ne.s32.totalorder %s140, %s141
    %p152 = scmp.eq.s32.totalorder %s17, 0
    %p153 = por %p151, %p152
    %p154 = scmp.ne.s32.totalorder %s140, %s141
    %p155 = scmp.eq.s32.totalorder %s18, 1
    %p156 = por %p154, %p155
    %p158 = scmp.ne.s32.totalorder %s141, %s157
    %p159 = scmp.eq.s32.totalorder %s18, 0
    %p160 = por %p158, %p159
    %p161 = scmp.le.s32.totalorder 1, %s12
    %p162 = scmp.lt.s32.totalorder %s12, 3
    %p163 = pnand %p161, %p162
    %p164 = pneg %p163
    // Predicated region
    $region9: #{residual_unit_pallas.5} parent=5 // pred_check
      _
    $region10: #{residual_unit_pallas.5} parent=5 // pred_check_branch
      %166 = sbr.rel (%p163) target = $region12
    $region11: #{residual_unit_pallas.5} parent=5 // pred_region
      %s167 = ssub.s32 %s12, 1
      // Predicated region
      $region13: #{residual_unit_pallas.5} parent=11 // pred_check
        %p168 = pneg %p59
      $region14: #{residual_unit_pallas.5} parent=11 // pred_check_branch
        %170 = sbr.rel (%p168) target = $region16
      $region15: #{residual_unit_pallas.5} parent=11 // pred_region
        _
      $region16: #{residual_unit_pallas.5} parent=11 // pred_fallthru
        _
      // Predicated region
      $region17: #{residual_unit_pallas.5} parent=11 // pred_check
        %p171 = pneg %p80
      $region18: #{residual_unit_pallas.5} parent=11 // pred_check_branch
        %173 = sbr.rel (%p171) target = $region20
      $region19: #{residual_unit_pallas.5} parent=11 // pred_region
        _
      $region20: #{residual_unit_pallas.5} parent=11 // pred_fallthru
        _
      // Predicated region
      $region21: #{residual_unit_pallas.5} parent=11 // pred_check
        %p174 = pneg %p101
      $region22: #{residual_unit_pallas.5} parent=11 // pred_check_branch
        %176 = sbr.rel (%p174) target = $region24
      $region23: #{residual_unit_pallas.5} parent=11 // pred_region
        _
      $region24: #{residual_unit_pallas.5} parent=11 // pred_fallthru
        _
    $region12: #{residual_unit_pallas.5} parent=5 // pred_fallthru
      _
    %p177 = scmp.lt.s32.totalorder %s12, 2
    // Predicated region
    $region25: #{residual_unit_pallas.5} parent=5 // pred_check
      %p178 = pneg %p177
    $region26: #{residual_unit_pallas.5} parent=5 // pred_check_branch
      %180 = sbr.rel (%p178) target = $region28
    $region27: #{residual_unit_pallas.5} parent=5 // pred_region
      // Predicated region
      $region29: #{residual_unit_pallas.5} parent=27 // pred_check
        %p181 = pneg %p32
      $region30: #{residual_unit_pallas.5} parent=27 // pred_check_branch
        %183 = sbr.rel (%p181) target = $region32
      $region31: #{residual_unit_pallas.5} parent=27 // pred_region
        %p184 = scmp.lt.s32.totalorder %s12, 1
        %s185 = scalar_select %p184, %s12, 1
        %s186 = smul.addr %s185, 32
        %s187 = smul.addr %s186, 4
        %s188 = scalar_lea.vmem %s0, %s187
      $region32: #{residual_unit_pallas.5} parent=27 // pred_fallthru
        _
    $region28: #{residual_unit_pallas.5} parent=5 // pred_fallthru
      _
    %p189 = scmp.le.s32.totalorder 1, %s12
    %p190 = scmp.lt.s32.totalorder %s12, 3
    %p191 = pnand %p189, %p190
    %p192 = pneg %p191
    // Predicated region
    $region33: #{residual_unit_pallas.5} parent=5 // pred_check
      _
    $region34: #{residual_unit_pallas.5} parent=5 // pred_check_branch
      %194 = sbr.rel (%p191) target = $region36
    $region35: #{residual_unit_pallas.5} parent=5 // pred_region
      %s195 = ssub.s32 %s12, 1
      %p196 = scmp.lt.s32.totalorder %s17, 1
      %s197 = scalar_select %p196, %s17, 1
      %s198 = smul.addr %s197, 32
      %s199 = smul.addr %s198, 4
      %s200 = scalar_lea.vmem %s0, %s199
      %p201 = pneg %p38
      %p202 = pneg %p35
      %p203 = pneg %p59
      %p204 = pneg %p56
      %p205 = pneg %p80
      %p206 = pneg %p77
      %p207 = pneg %p101
      %p208 = pneg %p98
      %p209 = pneg %p127
      %p210 = pneg %p124
      %p211 = scmp.lt.s32.totalorder %s17, 1
      %s212 = scalar_select %p211, %s17, 1
      %s213 = smul.addr %s212, 32
      %s214 = smul.addr %s213, 4
      %s215 = scalar_lea.vmem %s4, %s214
      %p216 = pneg %p153
      %p217 = pneg %p150
      %p218 = scmp.lt.s32.totalorder %s17, 1
      %s219 = scalar_select %p218, %s17, 1
      %s220 = smul.addr %s219, 2
      %s221 = scalar_lea.vmem %s5, %s220
      %p222 = scmp.lt.s32.totalorder %s17, 1
      %s223 = scalar_select %p222, %s17, 1
      %s224 = smul.addr %s223, 32
      %s225 = smul.addr %s224, 4
      %s226 = scalar_lea.vmem %s0, %s225
      %p227 = scmp.lt.s32.totalorder %s17, 1
      %s228 = scalar_select %p227, %s17, 1
      %s229 = smul.addr %s228, 32
      %s230 = smul.addr %s229, 4
      %s231 = scalar_lea.vmem %s4, %s230
      %p232 = scmp.lt.s32.totalorder %s17, 1
      %s233 = scalar_select %p232, %s17, 1
      %s234 = smul.addr %s233, 2
      %s235 = scalar_lea.vmem %s5, %s234
      %237 = vst [vmem:[#allocation2] sm:$0xf] 0
      %238 = vst [vmem:[#allocation2 + $0x4] sm:$0xf] 0
      %239 = vst [vmem:[#allocation2 + $0x8] sm:$0xf] 0
      %240 = vst [vmem:[#allocation2 + $0xcc] sm:$0xf] 0
      %241 = vst [vmem:[#allocation2 + $0xd0] sm:$0xf] 0
      %242 = vst [vmem:[#allocation2 + $0xd4] sm:$0xf] 0
      %243 = vst [vmem:[#allocation2 + $0xd8] sm:$0xf] 0
      %244 = vst [vmem:[#allocation2 + $0xdc] sm:$0xf] 0
      %245 = vst [vmem:[#allocation2 + $0xe0] sm:$0xf] 0
      %v246 = vld [vmem:[%s1] sm:$0x1]
      %v247 = vld [vmem:[%s2] sm:$0x1]
      %v248 = vld [vmem:[%s226] sm:$0xf]
      %v249 = vld [vmem:[%s226 + $0x4] sm:$0xf]
      %v250 = vld [vmem:[%s226 + $0x8] sm:$0xf]
      %v251 = vld [vmem:[%s226 + $0xc] sm:$0xf]
      %v252 = vld [vmem:[%s226 + $0x10] sm:$0xf]
      %v253 = vld [vmem:[%s226 + $0x14] sm:$0xf]
      %v254 = vld [vmem:[%s226 + $0x18] sm:$0xf]
      %v255 = vld [vmem:[%s226 + $0x1c] sm:$0xf]
      %v256 = vld [vmem:[%s226 + $0x20] sm:$0xf]
      %v257 = vld [vmem:[%s226 + $0x24] sm:$0xf]
      %v258 = vld [vmem:[%s226 + $0x28] sm:$0xf]
      %v259 = vld [vmem:[%s226 + $0x2c] sm:$0xf]
      %v260 = vld [vmem:[%s226 + $0x30] sm:$0xf]
      %v261 = vld [vmem:[%s226 + $0x34] sm:$0xf]
      %v262 = vld [vmem:[%s226 + $0x38] sm:$0xf]
      %v263 = vld [vmem:[%s226 + $0x3c] sm:$0xf]
      %v264 = vld [vmem:[%s226 + $0x40] sm:$0xf]
      %v265 = vld [vmem:[%s226 + $0x44] sm:$0xf]
      %v266 = vld [vmem:[%s226 + $0x48] sm:$0xf]
      %v267 = vld [vmem:[%s226 + $0x4c] sm:$0xf]
      %v268 = vld [vmem:[%s226 + $0x50] sm:$0xf]
      %v269 = vld [vmem:[%s226 + $0x54] sm:$0xf]
      %v270 = vld [vmem:[%s226 + $0x58] sm:$0xf]
      %v271 = vld [vmem:[%s226 + $0x5c] sm:$0xf]
      %v272 = vld [vmem:[%s226 + $0x60] sm:$0xf]
      %v273 = vld [vmem:[%s226 + $0x64] sm:$0xf]
      %v274 = vld [vmem:[%s226 + $0x68] sm:$0xf]
      %v275 = vld [vmem:[%s226 + $0x6c] sm:$0xf]
      %v276 = vld [vmem:[%s226 + $0x70] sm:$0xf]
      %v277 = vld [vmem:[%s226 + $0x74] sm:$0xf]
      %v278 = vld [vmem:[%s226 + $0x78] sm:$0xf]
      %v279 = vld [vmem:[%s226 + $0x7c] sm:$0xf]
      %v280 = vunpack.c.l.bf16 %v248
      %v281 = vunpack.c.l.bf16 %v249
      %v282 = vunpack.c.l.bf16 %v250
      %v283 = vunpack.c.l.bf16 %v251
      %v284 = vunpack.c.l.bf16 %v252
      %v285 = vunpack.c.l.bf16 %v253
      %v286 = vunpack.c.l.bf16 %v254
      %v287 = vunpack.c.l.bf16 %v255
      %v288 = vunpack.c.l.bf16 %v256
      %v289 = vunpack.c.l.bf16 %v257
      %v290 = vunpack.c.l.bf16 %v258
      %v291 = vunpack.c.l.bf16 %v259
      %v292 = vunpack.c.l.bf16 %v260
      %v293 = vunpack.c.l.bf16 %v261
      %v294 = vunpack.c.l.bf16 %v262
      %v295 = vunpack.c.l.bf16 %v263
      %v296 = vunpack.c.l.bf16 %v264
      %v297 = vunpack.c.l.bf16 %v265
      %v298 = vunpack.c.l.bf16 %v266
      %v299 = vunpack.c.l.bf16 %v267
      %v300 = vunpack.c.l.bf16 %v268
      %v301 = vunpack.c.l.bf16 %v269
      %v302 = vunpack.c.l.bf16 %v270
      %v303 = vunpack.c.l.bf16 %v271
      %v304 = vunpack.c.l.bf16 %v272
      %v305 = vunpack.c.l.bf16 %v273
      %v306 = vunpack.c.l.bf16 %v274
      %v307 = vunpack.c.l.bf16 %v275
      %v308 = vunpack.c.l.bf16 %v276
      %v309 = vunpack.c.l.bf16 %v277
      %v310 = vunpack.c.l.bf16 %v278
      %v311 = vunpack.c.l.bf16 %v279
      %v313 = vlaneseq
      %v314 = vshrl.u32 %v313, 7
      %v315 = vsub.s32 0, %v314
      %v316 = vrot.slane %v246, %v315
      %v318 = vmul.f32 %v280, %v316
      %v319 = vmul.f32 %v281, %v316
      %v320 = vmul.f32 %v282, %v316
      %v321 = vmul.f32 %v283, %v316
      %v322 = vmul.f32 %v284, %v316
      %v323 = vmul.f32 %v285, %v316
      %v324 = vmul.f32 %v286, %v316
      %v325 = vmul.f32 %v287, %v316
      %v326 = vmul.f32 %v288, %v316
      %v327 = vmul.f32 %v289, %v316
      %v328 = vmul.f32 %v290, %v316
      %v329 = vmul.f32 %v291, %v316
      %v330 = vmul.f32 %v292, %v316
      %v331 = vmul.f32 %v293, %v316
      %v332 = vmul.f32 %v294, %v316
      %v333 = vmul.f32 %v295, %v316
      %v334 = vmul.f32 %v296, %v316
      %v335 = vmul.f32 %v297, %v316
      %v336 = vmul.f32 %v298, %v316
      %v337 = vmul.f32 %v299, %v316
      %v338 = vmul.f32 %v300, %v316
      %v339 = vmul.f32 %v301, %v316
      %v340 = vmul.f32 %v302, %v316
      %v341 = vmul.f32 %v303, %v316
      %v342 = vmul.f32 %v304, %v316
      %v343 = vmul.f32 %v305, %v316
      %v344 = vmul.f32 %v306, %v316
      %v345 = vmul.f32 %v307, %v316
      %v346 = vmul.f32 %v308, %v316
      %v347 = vmul.f32 %v309, %v316
      %v348 = vmul.f32 %v310, %v316
      %v349 = vmul.f32 %v311, %v316
      %v351 = vlaneseq
      %v352 = vshrl.u32 %v351, 7
      %v353 = vsub.s32 0, %v352
      %v354 = vrot.slane %v247, %v353
      %v356 = vadd.f32 %v318, %v354
      %v357 = vadd.f32 %v319, %v354
      %v358 = vadd.f32 %v320, %v354
      %v359 = vadd.f32 %v321, %v354
      %v360 = vadd.f32 %v322, %v354
      %v361 = vadd.f32 %v323, %v354
      %v362 = vadd.f32 %v324, %v354
      %v363 = vadd.f32 %v325, %v354
      %v364 = vadd.f32 %v326, %v354
      %v365 = vadd.f32 %v327, %v354
      %v366 = vadd.f32 %v328, %v354
      %v367 = vadd.f32 %v329, %v354
      %v368 = vadd.f32 %v330, %v354
      %v369 = vadd.f32 %v331, %v354
      %v370 = vadd.f32 %v332, %v354
      %v371 = vadd.f32 %v333, %v354
      %v372 = vadd.f32 %v334, %v354
      %v373 = vadd.f32 %v335, %v354
      %v374 = vadd.f32 %v336, %v354
      %v375 = vadd.f32 %v337, %v354
      %v376 = vadd.f32 %v338, %v354
      %v377 = vadd.f32 %v339, %v354
      %v378 = vadd.f32 %v340, %v354
      %v379 = vadd.f32 %v341, %v354
      %v380 = vadd.f32 %v342, %v354
      %v381 = vadd.f32 %v343, %v354
      %v382 = vadd.f32 %v344, %v354
      %v383 = vadd.f32 %v345, %v354
      %v384 = vadd.f32 %v346, %v354
      %v385 = vadd.f32 %v347, %v354
      %v386 = vadd.f32 %v348, %v354
      %v387 = vadd.f32 %v349, %v354
      %v388 = vmax.f32 %v356, 0.0
      %v389 = vmax.f32 %v357, 0.0
      %v390 = vmax.f32 %v358, 0.0
      %v391 = vmax.f32 %v359, 0.0
      %v392 = vmax.f32 %v360, 0.0
      %v393 = vmax.f32 %v361, 0.0
      %v394 = vmax.f32 %v362, 0.0
      %v395 = vmax.f32 %v363, 0.0
      %v396 = vmax.f32 %v364, 0.0
      %v397 = vmax.f32 %v365, 0.0
      %v398 = vmax.f32 %v366, 0.0
      %v399 = vmax.f32 %v367, 0.0
      %v400 = vmax.f32 %v368, 0.0
      %v401 = vmax.f32 %v369, 0.0
      %v402 = vmax.f32 %v370, 0.0
      %v403 = vmax.f32 %v371, 0.0
      %v404 = vmax.f32 %v372, 0.0
      %v405 = vmax.f32 %v373, 0.0
      %v406 = vmax.f32 %v374, 0.0
      %v407 = vmax.f32 %v375, 0.0
      %v408 = vmax.f32 %v376, 0.0
      %v409 = vmax.f32 %v377, 0.0
      %v410 = vmax.f32 %v378, 0.0
      %v411 = vmax.f32 %v379, 0.0
      %v412 = vmax.f32 %v380, 0.0
      %v413 = vmax.f32 %v381, 0.0
      %v414 = vmax.f32 %v382, 0.0
      %v415 = vmax.f32 %v383, 0.0
      %v416 = vmax.f32 %v384, 0.0
      %v417 = vmax.f32 %v385, 0.0
      %v418 = vmax.f32 %v386, 0.0
      %v419 = vmax.f32 %v387, 0.0
      %vm452 = vcmask 1040384
      %v453 = vrot.slane %v388, 7
      %v454 = vrot.slane %v389, 7
      %v455 = vsel %vm452, %v453, %v454
      %v456 = vrot.slane %v390, 7
      %v457 = vrot.slane %v391, 7
      %v458 = vsel %vm452, %v456, %v457
      %v459 = vrot.slane %v392, 7
      %v460 = vrot.slane %v393, 7
      %v461 = vsel %vm452, %v459, %v460
      %v462 = vrot.slane %v394, 7
      %v463 = vrot.slane %v395, 7
      %v464 = vsel %vm452, %v462, %v463
      %v465 = vrot.slane %v396, 7
      %v466 = vrot.slane %v397, 7
      %v467 = vsel %vm452, %v465, %v466
      %v468 = vrot.slane %v398, 7
      %v469 = vrot.slane %v399, 7
      %v470 = vsel %vm452, %v468, %v469
      %v471 = vrot.slane %v400, 7
      %v472 = vrot.slane %v401, 7
      %v473 = vsel %vm452, %v471, %v472
      %v474 = vrot.slane %v402, 7
      %v475 = vrot.slane %v403, 7
      %v476 = vsel %vm452, %v474, %v475
      %v477 = vrot.slane %v404, 7
      %v478 = vrot.slane %v405, 7
      %v479 = vsel %vm452, %v477, %v478
      %v480 = vrot.slane %v406, 7
      %v481 = vrot.slane %v407, 7
      %v482 = vsel %vm452, %v480, %v481
      %v483 = vrot.slane %v408, 7
      %v484 = vrot.slane %v409, 7
      %v485 = vsel %vm452, %v483, %v484
      %v486 = vrot.slane %v410, 7
      %v487 = vrot.slane %v411, 7
      %v488 = vsel %vm452, %v486, %v487
      %v489 = vrot.slane %v412, 7
      %v490 = vrot.slane %v413, 7
      %v491 = vsel %vm452, %v489, %v490
      %v492 = vrot.slane %v414, 7
      %v493 = vrot.slane %v415, 7
      %v494 = vsel %vm452, %v492, %v493
      %v495 = vrot.slane %v416, 7
      %v496 = vrot.slane %v417, 7
      %v497 = vsel %vm452, %v495, %v496
      %v498 = vrot.slane %v418, 7
      %v499 = vrot.slane %v419, 7
      %v500 = vsel %vm452, %v498, %v499
      %v549 = vsel %vm452, 0.0, %v453
      %v550 = vsel %vm452, 0.0, %v456
      %v551 = vsel %vm452, 0.0, %v459
      %v552 = vsel %vm452, 0.0, %v462
      %v553 = vsel %vm452, 0.0, %v465
      %v554 = vsel %vm452, 0.0, %v468
      %v555 = vsel %vm452, 0.0, %v471
      %v556 = vsel %vm452, 0.0, %v474
      %v557 = vsel %vm452, 0.0, %v477
      %v558 = vsel %vm452, 0.0, %v480
      %v559 = vsel %vm452, 0.0, %v483
      %v560 = vsel %vm452, 0.0, %v486
      %v561 = vsel %vm452, 0.0, %v489
      %v562 = vsel %vm452, 0.0, %v492
      %v563 = vsel %vm452, 0.0, %v495
      %v564 = vsel %vm452, 0.0, %v498
      %v565 = vsel %vm452, %v454, 0.0
      %v566 = vsel %vm452, %v457, 0.0
      %v567 = vsel %vm452, %v460, 0.0
      %v568 = vsel %vm452, %v463, 0.0
      %v569 = vsel %vm452, %v466, 0.0
      %v570 = vsel %vm452, %v469, 0.0
      %v571 = vsel %vm452, %v472, 0.0
      %v572 = vsel %vm452, %v475, 0.0
      %v573 = vsel %vm452, %v478, 0.0
      %v574 = vsel %vm452, %v481, 0.0
      %v575 = vsel %vm452, %v484, 0.0
      %v576 = vsel %vm452, %v487, 0.0
      %v577 = vsel %vm452, %v490, 0.0
      %v578 = vsel %vm452, %v493, 0.0
      %v579 = vsel %vm452, %v496, 0.0
      %v580 = vsel %vm452, %v499, 0.0
      %v581 = vpack.c.bf16 %v455, %v549
      %v582 = vpack.c.bf16 %v550, %v565
      %v583 = vpack.c.bf16 %v566, %v458
      %v584 = vpack.c.bf16 %v461, %v551
      %v585 = vpack.c.bf16 %v552, %v567
      %v586 = vpack.c.bf16 %v568, %v464
      %v587 = vpack.c.bf16 %v467, %v553
      %v588 = vpack.c.bf16 %v554, %v569
      %v589 = vpack.c.bf16 %v570, %v470
      %v590 = vpack.c.bf16 %v473, %v555
      %v591 = vpack.c.bf16 %v556, %v571
      %v592 = vpack.c.bf16 %v572, %v476
      %v593 = vpack.c.bf16 %v479, %v557
      %v594 = vpack.c.bf16 %v558, %v573
      %v595 = vpack.c.bf16 %v574, %v482
      %v596 = vpack.c.bf16 %v485, %v559
      %v597 = vpack.c.bf16 %v560, %v575
      %v598 = vpack.c.bf16 %v576, %v488
      %v599 = vpack.c.bf16 %v491, %v561
      %v600 = vpack.c.bf16 %v562, %v577
      %v601 = vpack.c.bf16 %v578, %v494
      %v602 = vpack.c.bf16 %v497, %v563
      %v603 = vpack.c.bf16 %v564, %v579
      %v604 = vpack.c.bf16 %v580, %v500
      %v629 = vunpack.c.l.b16 %v581
      %v630 = vunpack.c.h.b16 %v581
      %v631 = vunpack.c.l.b16 %v582
      %v632 = vunpack.c.h.b16 %v582
      %v633 = vunpack.c.l.b16 %v583
      %v634 = vunpack.c.h.b16 %v583
      %v635 = vunpack.c.l.b16 %v584
      %v636 = vunpack.c.h.b16 %v584
      %v637 = vunpack.c.l.b16 %v585
      %v638 = vunpack.c.h.b16 %v585
      %v639 = vunpack.c.l.b16 %v586
      %v640 = vunpack.c.h.b16 %v586
      %v641 = vunpack.c.l.b16 %v587
      %v642 = vunpack.c.h.b16 %v587
      %v643 = vunpack.c.l.b16 %v588
      %v644 = vunpack.c.h.b16 %v588
      %v645 = vunpack.c.l.b16 %v589
      %v646 = vunpack.c.h.b16 %v589
      %v647 = vunpack.c.l.b16 %v590
      %v648 = vunpack.c.h.b16 %v590
      %v649 = vunpack.c.l.b16 %v591
      %v650 = vunpack.c.h.b16 %v591
      %v651 = vunpack.c.l.b16 %v592
      %v652 = vunpack.c.h.b16 %v592
      %v653 = vunpack.c.l.b16 %v593
      %v654 = vunpack.c.h.b16 %v593
      %v655 = vunpack.c.l.b16 %v594
      %v656 = vunpack.c.h.b16 %v594
      %v657 = vunpack.c.l.b16 %v595
      %v658 = vunpack.c.h.b16 %v595
      %v659 = vunpack.c.l.b16 %v596
      %v660 = vunpack.c.h.b16 %v596
      %v661 = vunpack.c.l.b16 %v597
      %v662 = vunpack.c.h.b16 %v597
      %v663 = vunpack.c.l.b16 %v598
      %v664 = vunpack.c.h.b16 %v598
      %v665 = vunpack.c.l.b16 %v599
      %v666 = vunpack.c.h.b16 %v599
      %v667 = vunpack.c.l.b16 %v600
      %v668 = vunpack.c.h.b16 %v600
      %v669 = vunpack.c.l.b16 %v601
      %v670 = vunpack.c.h.b16 %v601
      %v671 = vunpack.c.l.b16 %v602
      %v672 = vunpack.c.h.b16 %v602
      %v673 = vunpack.c.l.b16 %v603
      %v674 = vunpack.c.h.b16 %v603
      %v675 = vunpack.c.l.b16 %v604
      %v676 = vunpack.c.h.b16 %v604
      %v677 = vpack.c.b16 %v629, %v629
      %v678 = vpack.c.b16 %v630, %v630
      %v679 = vpack.c.b16 %v631, %v631
      %v680 = vpack.c.b16 %v632, %v632
      %v681 = vpack.c.b16 %v633, %v633
      %v682 = vpack.c.b16 %v634, %v634
      %v683 = vpack.c.b16 %v635, %v635
      %v684 = vpack.c.b16 %v636, %v636
      %v685 = vpack.c.b16 %v637, %v637
      %v686 = vpack.c.b16 %v638, %v638
      %v687 = vpack.c.b16 %v639, %v639
      %v688 = vpack.c.b16 %v640, %v640
      %v689 = vpack.c.b16 %v641, %v641
      %v690 = vpack.c.b16 %v642, %v642
      %v691 = vpack.c.b16 %v643, %v643
      %v692 = vpack.c.b16 %v644, %v644
      %v693 = vpack.c.b16 %v645, %v645
      %v694 = vpack.c.b16 %v646, %v646
      %v695 = vpack.c.b16 %v647, %v647
      %v696 = vpack.c.b16 %v648, %v648
      %v697 = vpack.c.b16 %v649, %v649
      %v698 = vpack.c.b16 %v650, %v650
      %v699 = vpack.c.b16 %v651, %v651
      %v700 = vpack.c.b16 %v652, %v652
      %v701 = vpack.c.b16 %v653, %v653
      %v702 = vpack.c.b16 %v654, %v654
      %v703 = vpack.c.b16 %v655, %v655
      %v704 = vpack.c.b16 %v656, %v656
      %v705 = vpack.c.b16 %v657, %v657
      %v706 = vpack.c.b16 %v658, %v658
      %v707 = vpack.c.b16 %v659, %v659
      %v708 = vpack.c.b16 %v660, %v660
      %v709 = vpack.c.b16 %v661, %v661
      %v710 = vpack.c.b16 %v662, %v662
      %v711 = vpack.c.b16 %v663, %v663
      %v712 = vpack.c.b16 %v664, %v664
      %v713 = vpack.c.b16 %v665, %v665
      %v714 = vpack.c.b16 %v666, %v666
      %v715 = vpack.c.b16 %v667, %v667
      %v716 = vpack.c.b16 %v668, %v668
      %v717 = vpack.c.b16 %v669, %v669
      %v718 = vpack.c.b16 %v670, %v670
      %v719 = vpack.c.b16 %v671, %v671
      %v720 = vpack.c.b16 %v672, %v672
      %v721 = vpack.c.b16 %v673, %v673
      %v722 = vpack.c.b16 %v674, %v674
      %v723 = vpack.c.b16 %v675, %v675
      %v724 = vpack.c.b16 %v676, %v676
      %773 = vst [vmem:[#allocation2 + $0xc] sm:$0xf] %v677
      %774 = vst [vmem:[#allocation2 + $0x10] sm:$0xf] %v678
      %775 = vst [vmem:[#allocation2 + $0x14] sm:$0xf] %v679
      %776 = vst [vmem:[#allocation2 + $0x18] sm:$0xf] %v680
      %777 = vst [vmem:[#allocation2 + $0x1c] sm:$0xf] %v681
      %778 = vst [vmem:[#allocation2 + $0x20] sm:$0xf] %v682
      %779 = vst [vmem:[#allocation2 + $0x24] sm:$0xf] %v683
      %780 = vst [vmem:[#allocation2 + $0x28] sm:$0xf] %v684
      %781 = vst [vmem:[#allocation2 + $0x2c] sm:$0xf] %v685
      %782 = vst [vmem:[#allocation2 + $0x30] sm:$0xf] %v686
      %783 = vst [vmem:[#allocation2 + $0x34] sm:$0xf] %v687
      %784 = vst [vmem:[#allocation2 + $0x38] sm:$0xf] %v688
      %785 = vst [vmem:[#allocation2 + $0x3c] sm:$0xf] %v689
      %786 = vst [vmem:[#allocation2 + $0x40] sm:$0xf] %v690
      %787 = vst [vmem:[#allocation2 + $0x44] sm:$0xf] %v691
      %788 = vst [vmem:[#allocation2 + $0x48] sm:$0xf] %v692
      %789 = vst [vmem:[#allocation2 + $0x4c] sm:$0xf] %v693
      %790 = vst [vmem:[#allocation2 + $0x50] sm:$0xf] %v694
      %791 = vst [vmem:[#allocation2 + $0x54] sm:$0xf] %v695
      %792 = vst [vmem:[#allocation2 + $0x58] sm:$0xf] %v696
      %793 = vst [vmem:[#allocation2 + $0x5c] sm:$0xf] %v697
      %794 = vst [vmem:[#allocation2 + $0x60] sm:$0xf] %v698
      %795 = vst [vmem:[#allocation2 + $0x64] sm:$0xf] %v699
      %796 = vst [vmem:[#allocation2 + $0x68] sm:$0xf] %v700
      %797 = vst [vmem:[#allocation2 + $0x6c] sm:$0xf] %v701
      %798 = vst [vmem:[#allocation2 + $0x70] sm:$0xf] %v702
      %799 = vst [vmem:[#allocation2 + $0x74] sm:$0xf] %v703
      %800 = vst [vmem:[#allocation2 + $0x78] sm:$0xf] %v704
      %801 = vst [vmem:[#allocation2 + $0x7c] sm:$0xf] %v705
      %802 = vst [vmem:[#allocation2 + $0x80] sm:$0xf] %v706
      %803 = vst [vmem:[#allocation2 + $0x84] sm:$0xf] %v707
      %804 = vst [vmem:[#allocation2 + $0x88] sm:$0xf] %v708
      %805 = vst [vmem:[#allocation2 + $0x8c] sm:$0xf] %v709
      %806 = vst [vmem:[#allocation2 + $0x90] sm:$0xf] %v710
      %807 = vst [vmem:[#allocation2 + $0x94] sm:$0xf] %v711
      %808 = vst [vmem:[#allocation2 + $0x98] sm:$0xf] %v712
      %809 = vst [vmem:[#allocation2 + $0x9c] sm:$0xf] %v713
      %810 = vst [vmem:[#allocation2 + $0xa0] sm:$0xf] %v714
      %811 = vst [vmem:[#allocation2 + $0xa4] sm:$0xf] %v715
      %812 = vst [vmem:[#allocation2 + $0xa8] sm:$0xf] %v716
      %813 = vst [vmem:[#allocation2 + $0xac] sm:$0xf] %v717
      %814 = vst [vmem:[#allocation2 + $0xb0] sm:$0xf] %v718
      %815 = vst [vmem:[#allocation2 + $0xb4] sm:$0xf] %v719
      %816 = vst [vmem:[#allocation2 + $0xb8] sm:$0xf] %v720
      %817 = vst [vmem:[#allocation2 + $0xbc] sm:$0xf] %v721
      %818 = vst [vmem:[#allocation2 + $0xc0] sm:$0xf] %v722
      %819 = vst [vmem:[#allocation2 + $0xc4] sm:$0xf] %v723
      %820 = vst [vmem:[#allocation2 + $0xc8] sm:$0xf] %v724
      %v821 = vld [vmem:[#allocation2] sm:$0xf]
      %v822 = vld [vmem:[#allocation2 + $0x4] sm:$0xf]
      %v823 = vld [vmem:[#allocation2 + $0x8] sm:$0xf]
      %v824 = vld [vmem:[#allocation2 + $0xc] sm:$0xf]
      %v825 = vld [vmem:[#allocation2 + $0x10] sm:$0xf]
      %v826 = vld [vmem:[#allocation2 + $0x14] sm:$0xf]
      %v827 = vld [vmem:[#allocation2 + $0x18] sm:$0xf]
      %v828 = vld [vmem:[#allocation2 + $0x1c] sm:$0xf]
      %v829 = vld [vmem:[#allocation2 + $0x20] sm:$0xf]
      %v830 = vld [vmem:[#allocation2 + $0x24] sm:$0xf]
      %v831 = vld [vmem:[#allocation2 + $0x28] sm:$0xf]
      %v832 = vld [vmem:[#allocation2 + $0x2c] sm:$0xf]
      %v833 = vld [vmem:[#allocation2 + $0x30] sm:$0xf]
      %v834 = vld [vmem:[#allocation2 + $0x34] sm:$0xf]
      %v835 = vld [vmem:[#allocation2 + $0x38] sm:$0xf]
      %v836 = vld [vmem:[#allocation2 + $0x3c] sm:$0xf]
      %v837 = vld [vmem:[#allocation2 + $0x40] sm:$0xf]
      %v838 = vld [vmem:[#allocation2 + $0x44] sm:$0xf]
      %v839 = vld [vmem:[#allocation2 + $0x48] sm:$0xf]
      %v840 = vld [vmem:[#allocation2 + $0x4c] sm:$0xf]
      %v841 = vld [vmem:[#allocation2 + $0x50] sm:$0xf]
      %v842 = vld [vmem:[#allocation2 + $0x54] sm:$0xf]
      %v843 = vld [vmem:[#allocation2 + $0x58] sm:$0xf]
      %v844 = vld [vmem:[#allocation2 + $0x5c] sm:$0xf]
      %v845 = vld [vmem:[#allocation2 + $0x60] sm:$0xf]
      %v846 = vld [vmem:[#allocation2 + $0x64] sm:$0xf]
      %v847 = vld [vmem:[#allocation2 + $0x68] sm:$0xf]
      %v848 = vld [vmem:[#allocation2 + $0x6c] sm:$0xf]
      %v849 = vld [vmem:[#allocation2 + $0x70] sm:$0xf]
      %v850 = vld [vmem:[#allocation2 + $0x74] sm:$0xf]
      %v851 = vld [vmem:[#allocation2 + $0x78] sm:$0xf]
      %v852 = vld [vmem:[#allocation2 + $0x7c] sm:$0xf]
      %v853 = vld [vmem:[#allocation2 + $0x80] sm:$0xf]
      %v854 = vld [vmem:[#allocation2 + $0x84] sm:$0xf]
      %v855 = vld [vmem:[#allocation2 + $0x88] sm:$0xf]
      %v856 = vld [vmem:[#allocation2 + $0x8c] sm:$0xf]
      %v857 = vld [vmem:[#allocation2 + $0x90] sm:$0xf]
      %v858 = vld [vmem:[#allocation2 + $0x94] sm:$0xf]
      %v859 = vld [vmem:[#allocation2 + $0x98] sm:$0xf]
      %v860 = vld [vmem:[#allocation2 + $0x9c] sm:$0xf]
      %v861 = vld [vmem:[#allocation2 + $0xa0] sm:$0xf]
      %v862 = vld [vmem:[#allocation2 + $0xa4] sm:$0xf]
      %v863 = vld [vmem:[#allocation2 + $0xa8] sm:$0xf]
      %v864 = vld [vmem:[#allocation2 + $0xac] sm:$0xf]
      %v865 = vld [vmem:[#allocation2 + $0xb0] sm:$0xf]
      %v866 = vld [vmem:[#allocation2 + $0xb4] sm:$0xf]
      %v867 = vld [vmem:[#allocation2 + $0xb8] sm:$0xf]
      %v868 = vld [vmem:[#allocation2 + $0xbc] sm:$0xf]
      %v869 = vld [vmem:[%s3] sm:$0xf]
      %v870 = vld [vmem:[%s3 + $0x4] sm:$0xf]
      %v871 = vld [vmem:[%s3 + $0x8] sm:$0xf]
      %v872 = vld [vmem:[%s3 + $0xc] sm:$0xf]
      %v873 = vld [vmem:[%s3 + $0x10] sm:$0xf]
      %v874 = vld [vmem:[%s3 + $0x14] sm:$0xf]
      %v875 = vld [vmem:[%s3 + $0x18] sm:$0xf]
      %v876 = vld [vmem:[%s3 + $0x1c] sm:$0xf]
      %v877 = vld [vmem:[%s3 + $0x20] sm:$0xf]
      %v878 = vld [vmem:[%s3 + $0x24] sm:$0xf]
      %v879 = vld [vmem:[%s3 + $0x28] sm:$0xf]
      %v880 = vld [vmem:[%s3 + $0x2c] sm:$0xf]
      %v881 = vld [vmem:[%s3 + $0x30] sm:$0xf]
      %v882 = vld [vmem:[%s3 + $0x34] sm:$0xf]
      %v883 = vld [vmem:[%s3 + $0x38] sm:$0xf]
      %v884 = vld [vmem:[%s3 + $0x3c] sm:$0xf]
      %v885 = vld [vmem:[#allocation2 + $0xc0] sm:$0x1]
      %s886 = scalar_lea.vmem %s3, 64
      %v887 = vld [vmem:[%s886] sm:$0xf]
      %v888 = vld [vmem:[%s886 + $0x4] sm:$0xf]
      %v889 = vld [vmem:[%s886 + $0x8] sm:$0xf]
      %v890 = vld [vmem:[%s886 + $0xc] sm:$0xf]
      %v891 = vld [vmem:[%s886 + $0x10] sm:$0xf]
      %v892 = vld [vmem:[%s886 + $0x14] sm:$0xf]
      %v893 = vld [vmem:[%s886 + $0x18] sm:$0xf]
      %v894 = vld [vmem:[%s886 + $0x1c] sm:$0xf]
      %v895 = vld [vmem:[%s886 + $0x20] sm:$0xf]
      %v896 = vld [vmem:[%s886 + $0x24] sm:$0xf]
      %v897 = vld [vmem:[%s886 + $0x28] sm:$0xf]
      %v898 = vld [vmem:[%s886 + $0x2c] sm:$0xf]
      %v899 = vld [vmem:[%s886 + $0x30] sm:$0xf]
      %v900 = vld [vmem:[%s886 + $0x34] sm:$0xf]
      %v901 = vld [vmem:[%s886 + $0x38] sm:$0xf]
      %v902 = vld [vmem:[%s886 + $0x3c] sm:$0xf]
      %v952 = vunpack.c.l.b16 %v821
      %v953 = vunpack.c.l.b16 %v822
      %v954 = vunpack.c.l.b16 %v823
      %v955 = vunpack.c.l.b16 %v824
      %v956 = vunpack.c.l.b16 %v825
      %v957 = vunpack.c.l.b16 %v826
      %v958 = vunpack.c.l.b16 %v827
      %v959 = vunpack.c.l.b16 %v828
      %v960 = vunpack.c.l.b16 %v829
      %v961 = vunpack.c.l.b16 %v830
      %v962 = vunpack.c.l.b16 %v831
      %v963 = vunpack.c.l.b16 %v832
      %v964 = vunpack.c.l.b16 %v833
      %v965 = vunpack.c.l.b16 %v834
      %v966 = vunpack.c.l.b16 %v835
      %v967 = vunpack.c.l.b16 %v836
      %v968 = vunpack.c.l.b16 %v837
      %v969 = vunpack.c.l.b16 %v838
      %v970 = vunpack.c.l.b16 %v839
      %v971 = vunpack.c.l.b16 %v840
      %v972 = vunpack.c.l.b16 %v841
      %v973 = vunpack.c.l.b16 %v842
      %v974 = vunpack.c.l.b16 %v843
      %v975 = vunpack.c.l.b16 %v844
      %v976 = vunpack.c.l.b16 %v845
      %v977 = vunpack.c.l.b16 %v846
      %v978 = vunpack.c.l.b16 %v847
      %v979 = vunpack.c.l.b16 %v848
      %v980 = vunpack.c.l.b16 %v849
      %v981 = vunpack.c.l.b16 %v850
      %v982 = vunpack.c.l.b16 %v851
      %v983 = vunpack.c.l.b16 %v852
      %v984 = vunpack.c.l.b16 %v853
      %v985 = vunpack.c.l.b16 %v854
      %v986 = vunpack.c.l.b16 %v855
      %v987 = vunpack.c.l.b16 %v856
      %v988 = vunpack.c.l.b16 %v857
      %v989 = vunpack.c.l.b16 %v858
      %v990 = vunpack.c.l.b16 %v859
      %v991 = vunpack.c.l.b16 %v860
      %v992 = vunpack.c.l.b16 %v861
      %v993 = vunpack.c.l.b16 %v862
      %v994 = vunpack.c.l.b16 %v863
      %v995 = vunpack.c.l.b16 %v864
      %v996 = vunpack.c.l.b16 %v865
      %v997 = vunpack.c.l.b16 %v866
      %v998 = vunpack.c.l.b16 %v867
      %v999 = vunpack.c.l.b16 %v868
      %v1000 = vunpack.c.l.b16 %v885
      %v1001 = vpack.c.b16 %v953, %v952
      %v1002 = vpack.c.b16 %v955, %v954
      %v1003 = vpack.c.b16 %v957, %v956
      %v1004 = vpack.c.b16 %v959, %v958
      %v1005 = vpack.c.b16 %v961, %v960
      %v1006 = vpack.c.b16 %v963, %v962
      %v1007 = vpack.c.b16 %v965, %v964
      %v1008 = vpack.c.b16 %v967, %v966
      %v1009 = vpack.c.b16 %v969, %v968
      %v1010 = vpack.c.b16 %v971, %v970
      %v1011 = vpack.c.b16 %v973, %v972
      %v1012 = vpack.c.b16 %v975, %v974
      %v1013 = vpack.c.b16 %v977, %v976
      %v1014 = vpack.c.b16 %v979, %v978
      %v1015 = vpack.c.b16 %v981, %v980
      %v1016 = vpack.c.b16 %v983, %v982
      %v1017 = vpack.c.b16 %v985, %v984
      %v1018 = vpack.c.b16 %v987, %v986
      %v1019 = vpack.c.b16 %v989, %v988
      %v1020 = vpack.c.b16 %v991, %v990
      %v1021 = vpack.c.b16 %v993, %v992
      %v1022 = vpack.c.b16 %v995, %v994
      %v1023 = vpack.c.b16 %v997, %v996
      %v1024 = vpack.c.b16 %v999, %v998
      %v1025 = vpack.c.b16 %v1000, %v1000
      %vm1026 = vsmask.f32 7424
      %v1028 = vshrl.u32 %v1001, 16
      %v1030 = vshll.u32 %v1001, 16
      %v1032 = vrot.slane %v1030, 1
      %v1033 = vor.u32 %v1028, %v1032
      %v1035 = vshll.u32 %v1002, 16
      %v1037 = vrot.slane %v1035, 1
      %v1038 = vsel %vm1026, %v1033, %v1037
      %v1039 = vshrl.u32 %v1002, 16
      %v1041 = vor.u32 %v1039, %v1037
      %v1043 = vshll.u32 %v1003, 16
      %v1045 = vrot.slane %v1043, 1
      %v1046 = vsel %vm1026, %v1041, %v1045
      %v1047 = vshrl.u32 %v1003, 16
      %v1049 = vor.u32 %v1047, %v1045
      %v1051 = vshll.u32 %v1004, 16
      %v1053 = vrot.slane %v1051, 1
      %v1054 = vsel %vm1026, %v1049, %v1053
      %v1055 = vshrl.u32 %v1004, 16
      %v1057 = vor.u32 %v1055, %v1053
      %v1059 = vshll.u32 %v1005, 16
      %v1061 = vrot.slane %v1059, 1
      %v1062 = vsel %vm1026, %v1057, %v1061
      %v1063 = vshrl.u32 %v1005, 16
      %v1065 = vor.u32 %v1063, %v1061
      %v1067 = vshll.u32 %v1006, 16
      %v1069 = vrot.slane %v1067, 1
      %v1070 = vsel %vm1026, %v1065, %v1069
      %v1071 = vshrl.u32 %v1006, 16
      %v1073 = vor.u32 %v1071, %v1069
      %v1075 = vshll.u32 %v1007, 16
      %v1077 = vrot.slane %v1075, 1
      %v1078 = vsel %vm1026, %v1073, %v1077
      %v1079 = vshrl.u32 %v1007, 16
      %v1081 = vor.u32 %v1079, %v1077
      %v1083 = vshll.u32 %v1008, 16
      %v1085 = vrot.slane %v1083, 1
      %v1086 = vsel %vm1026, %v1081, %v1085
      %v1087 = vshrl.u32 %v1008, 16
      %v1089 = vor.u32 %v1087, %v1085
      %v1091 = vshll.u32 %v1009, 16
      %v1093 = vrot.slane %v1091, 1
      %v1094 = vsel %vm1026, %v1089, %v1093
      %v1095 = vshrl.u32 %v1009, 16
      %v1097 = vor.u32 %v1095, %v1093
      %v1099 = vshll.u32 %v1010, 16
      %v1101 = vrot.slane %v1099, 1
      %v1102 = vsel %vm1026, %v1097, %v1101
      %v1103 = vshrl.u32 %v1010, 16
      %v1105 = vor.u32 %v1103, %v1101
      %v1107 = vshll.u32 %v1011, 16
      %v1109 = vrot.slane %v1107, 1
      %v1110 = vsel %vm1026, %v1105, %v1109
      %v1111 = vshrl.u32 %v1011, 16
      %v1113 = vor.u32 %v1111, %v1109
      %v1115 = vshll.u32 %v1012, 16
      %v1117 = vrot.slane %v1115, 1
      %v1118 = vsel %vm1026, %v1113, %v1117
      %v1119 = vshrl.u32 %v1012, 16
      %v1121 = vor.u32 %v1119, %v1117
      %v1123 = vshll.u32 %v1013, 16
      %v1125 = vrot.slane %v1123, 1
      %v1126 = vsel %vm1026, %v1121, %v1125
      %v1127 = vshrl.u32 %v1013, 16
      %v1129 = vor.u32 %v1127, %v1125
      %v1131 = vshll.u32 %v1014, 16
      %v1133 = vrot.slane %v1131, 1
      %v1134 = vsel %vm1026, %v1129, %v1133
      %v1135 = vshrl.u32 %v1014, 16
      %v1137 = vor.u32 %v1135, %v1133
      %v1139 = vshll.u32 %v1015, 16
      %v1141 = vrot.slane %v1139, 1
      %v1142 = vsel %vm1026, %v1137, %v1141
      %v1143 = vshrl.u32 %v1015, 16
      %v1145 = vor.u32 %v1143, %v1141
      %v1147 = vshll.u32 %v1016, 16
      %v1149 = vrot.slane %v1147, 1
      %v1150 = vsel %vm1026, %v1145, %v1149
      %v1151 = vshrl.u32 %v1016, 16
      %v1153 = vor.u32 %v1151, %v1149
      %v1155 = vshll.u32 %v1017, 16
      %v1157 = vrot.slane %v1155, 1
      %v1158 = vsel %vm1026, %v1153, %v1157
      %v1159 = vshrl.u32 %v1017, 16
      %v1161 = vor.u32 %v1159, %v1157
      %v1163 = vshll.u32 %v1018, 16
      %v1165 = vrot.slane %v1163, 1
      %v1166 = vsel %vm1026, %v1161, %v1165
      %v1167 = vshrl.u32 %v1018, 16
      %v1169 = vor.u32 %v1167, %v1165
      %v1171 = vshll.u32 %v1019, 16
      %v1173 = vrot.slane %v1171, 1
      %v1174 = vsel %vm1026, %v1169, %v1173
      %v1175 = vshrl.u32 %v1019, 16
      %v1177 = vor.u32 %v1175, %v1173
      %v1179 = vshll.u32 %v1020, 16
      %v1181 = vrot.slane %v1179, 1
      %v1182 = vsel %vm1026, %v1177, %v1181
      %v1183 = vshrl.u32 %v1020, 16
      %v1185 = vor.u32 %v1183, %v1181
      %v1187 = vshll.u32 %v1021, 16
      %v1189 = vrot.slane %v1187, 1
      %v1190 = vsel %vm1026, %v1185, %v1189
      %v1191 = vshrl.u32 %v1021, 16
      %v1193 = vor.u32 %v1191, %v1189
      %v1195 = vshll.u32 %v1022, 16
      %v1197 = vrot.slane %v1195, 1
      %v1198 = vsel %vm1026, %v1193, %v1197
      %v1199 = vshrl.u32 %v1022, 16
      %v1201 = vor.u32 %v1199, %v1197
      %v1203 = vshll.u32 %v1023, 16
      %v1205 = vrot.slane %v1203, 1
      %v1206 = vsel %vm1026, %v1201, %v1205
      %v1207 = vshrl.u32 %v1023, 16
      %v1209 = vor.u32 %v1207, %v1205
      %v1211 = vshll.u32 %v1024, 16
      %v1213 = vrot.slane %v1211, 1
      %v1214 = vsel %vm1026, %v1209, %v1213
      %v1215 = vshrl.u32 %v1024, 16
      %v1217 = vor.u32 %v1215, %v1213
      %v1219 = vshll.u32 %v1025, 16
      %v1221 = vrot.slane %v1219, 1
      %v1222 = vsel %vm1026, %v1217, %v1221
      %v1263 = vunpack.c.l.b16 %v887
      %v1264 = vunpack.c.l.b16 %v888
      %v1265 = vunpack.c.l.b16 %v889
      %v1266 = vunpack.c.l.b16 %v890
      %v1267 = vunpack.c.l.b16 %v891
      %v1268 = vunpack.c.l.b16 %v892
      %v1269 = vunpack.c.l.b16 %v893
      %v1270 = vunpack.c.l.b16 %v894
      %v1271 = vunpack.c.l.b16 %v895
      %v1272 = vunpack.c.l.b16 %v896
      %v1273 = vunpack.c.l.b16 %v897
      %v1274 = vunpack.c.l.b16 %v898
      %v1275 = vunpack.c.l.b16 %v899
      %v1276 = vunpack.c.l.b16 %v900
      %v1277 = vunpack.c.l.b16 %v901
      %v1278 = vunpack.c.l.b16 %v902
      %v1279 = vpack.c.b16 %v1264, %v1263
      %v1280 = vpack.c.b16 %v1266, %v1265
      %v1281 = vpack.c.b16 %v1268, %v1267
      %v1282 = vpack.c.b16 %v1270, %v1269
      %v1283 = vpack.c.b16 %v1272, %v1271
      %v1284 = vpack.c.b16 %v1274, %v1273
      %v1285 = vpack.c.b16 %v1276, %v1275
      %v1286 = vpack.c.b16 %v1278, %v1277
      %1295 = vmatprep.subr.bf16.mxu0 0
      %1296 = vmatpush1.bf16.msra.mxu0 %v1279
      %1297 = vmatprep.subr.bf16.mxu0 0
      %1298 = vmatpush1.bf16.msra.mxu0 %v1280
      %1299 = vmatprep.subr.bf16.mxu0 0
      %1300 = vmatpush1.bf16.msra.mxu0 %v1281
      %1301 = vmatprep.subr.bf16.mxu0 0
      %1302 = vmatpush1.bf16.msra.mxu0 %v1282
      %1303 = vmatprep.subr.bf16.mxu0 0
      %1304 = vmatpush1.bf16.msra.mxu0 %v1283
      %1305 = vmatprep.subr.bf16.mxu0 0
      %1306 = vmatpush1.bf16.msra.mxu0 %v1284
      %1307 = vmatprep.subr.bf16.mxu0 0
      %1308 = vmatpush1.bf16.msra.mxu0 %v1285
      %1309 = vmatprep.subr.bf16.mxu0 0
      %1310 = vmatpush1.bf16.msra.mxu0 %v1286
      %1311 = vmatprep.subr.bf16.mxu0 0
      %1312 = vmatpush1.bf16.msra.mxu0 0
      %1313 = vmatprep.subr.bf16.mxu0 0
      %1314 = vmatpush1.bf16.msra.mxu0 0
      %1315 = vmatprep.subr.bf16.mxu0 0
      %1316 = vmatpush1.bf16.msra.mxu0 0
      %1317 = vmatprep.subr.bf16.mxu0 0
      %1318 = vmatpush1.bf16.msra.mxu0 0
      %1319 = vmatprep.subr.bf16.mxu0 0
      %1320 = vmatpush1.bf16.msra.mxu0 0
      %1321 = vmatprep.subr.bf16.mxu0 0
      %1322 = vmatpush1.bf16.msra.mxu0 0
      %1323 = vmatprep.subr.bf16.mxu0 0
      %1324 = vmatpush1.bf16.msra.mxu0 0
      %1325 = vmatprep.subr.bf16.mxu0 0
      %1326 = vmatpush1.bf16.msra.mxu0 0
      %1327 = vmatprep.mubr.bf16.mxu0 0
      %1328 = vmatmul.mubr.bf16.gmra.mrb[0].mxu0 %v1038
      %v1329 = vpop.f32.mrb[0].mxu0
      %v1330 = vadd.f32 0.0, %v1329
      %v1331 = vpop.f32.mrb[0].mxu0
      %v1332 = vpop.f32.mrb[0].mxu0
      %v1333 = vadd.f32 0.0, %v1332
      %v1334 = vpop.f32.mrb[0].mxu0
      %1335 = vmatprep.mubr.bf16.mxu0 0
      %1336 = vmatmul.mubr.bf16.gmra.mrb[0].mxu0 %v1046
      %v1337 = vpop.f32.mrb[0].mxu0
      %v1338 = vpop.f32.mrb[0].mxu0
      %v1339 = vpop.f32.mrb[0].mxu0
      %v1340 = vadd.f32 0.0, %v1339
      %v1341 = vpop.f32.mrb[0].mxu0
      %1342 = vmatprep.mubr.bf16.mxu0 0
      %1343 = vmatmul.mubr.bf16.gmra.mrb[0].mxu0 %v1054
      %v1344 = vpop.f32.mrb[0].mxu0
      %v1345 = vadd.f32 0.0, %v1344
      %v1346 = vpop.f32.mrb[0].mxu0
      %v1347 = vpop.f32.mrb[0].mxu0
      %v1348 = vpop.f32.mrb[0].mxu0
      %1349 = vmatprep.mubr.bf16.mxu0 0
      %1350 = vmatmul.mubr.bf16.gmra.mrb[0].mxu0 %v1062
      %v1351 = vpop.f32.mrb[0].mxu0
      %v1352 = vadd.f32 0.0, %v1351
      %v1353 = vpop.f32.mrb[0].mxu0
      %v1354 = vpop.f32.mrb[0].mxu0
      %v1355 = vadd.f32 0.0, %v1354
      %v1356 = vpop.f32.mrb[0].mxu0
      %1357 = vmatprep.mubr.bf16.mxu0 0
      %1358 = vmatmul.mubr.bf16.gmra.mrb[0].mxu0 %v1070
      %v1359 = vpop.f32.mrb[0].mxu0
      %v1360 = vpop.f32.mrb[0].mxu0
      %v1361 = vpop.f32.mrb[0].mxu0
      %v1362 = vadd.f32 0.0, %v1361
      %v1363 = vpop.f32.mrb[0].mxu0
      %1364 = vmatprep.mubr.bf16.mxu0 0
      %1365 = vmatmul.mubr.bf16.gmra.mrb[0].mxu0 %v1078
      %v1366 = vpop.f32.mrb[0].mxu0
      %v1367 = vadd.f32 0.0, %v1366
      %v1368 = vpop.f32.mrb[0].mxu0
      %v1369 = vpop.f32.mrb[0].mxu0
      %v1370 = vpop.f32.mrb[0].mxu0
      %1371 = vmatprep.mubr.bf16.mxu0 0
      %1372 = vmatmul.mubr.bf16.gmra.mrb[0].mxu0 %v1086
      %v1373 = vpop.f32.mrb[0].mxu0
      %v1374 = vadd.f32 0.0, %v1373
      %v1375 = vpop.f32.mrb[0].mxu0
      %v1376 = vpop.f32.mrb[0].mxu0
      %v1377 = vadd.f32 0.0, %v1376
      %v1378 = vpop.f32.mrb[0].mxu0
      %1379 = vmatprep.mubr.bf16.mxu0 0
      %1380 = vmatmul.mubr.bf16.gmra.mrb[0].mxu0 %v1094
      %v1381 = vpop.f32.mrb[0].mxu0
      %v1382 = vpop.f32.mrb[0].mxu0
      %v1383 = vpop.f32.mrb[0].mxu0
      %v1384 = vadd.f32 0.0, %v1383
      %v1385 = vpop.f32.mrb[0].mxu0
      %1386 = vmatprep.mubr.bf16.mxu0 0
      %1387 = vmatmul.mubr.bf16.gmra.mrb[0].mxu0 %v1102
      %v1388 = vpop.f32.mrb[0].mxu0
      %v1389 = vadd.f32 0.0, %v1388
      %v1390 = vpop.f32.mrb[0].mxu0
      %v1391 = vpop.f32.mrb[0].mxu0
      %v1392 = vpop.f32.mrb[0].mxu0
      %1393 = vmatprep.mubr.bf16.mxu0 0
      %1394 = vmatmul.mubr.bf16.gmra.mrb[0].mxu0 %v1110
      %v1395 = vpop.f32.mrb[0].mxu0
      %v1396 = vadd.f32 0.0, %v1395
      %v1397 = vpop.f32.mrb[0].mxu0
      %v1398 = vpop.f32.mrb[0].mxu0
      %v1399 = vadd.f32 0.0, %v1398
      %v1400 = vpop.f32.mrb[0].mxu0
      %1401 = vmatprep.mubr.bf16.mxu0 0
      %1402 = vmatmul.mubr.bf16.gmra.mrb[0].mxu0 %v1118
      %v1403 = vpop.f32.mrb[0].mxu0
      %v1404 = vpop.f32.mrb[0].mxu0
      %v1405 = vpop.f32.mrb[0].mxu0
      %v1406 = vadd.f32 0.0, %v1405
      %v1407 = vpop.f32.mrb[0].mxu0
      %1408 = vmatprep.mubr.bf16.mxu0 0
      %1409 = vmatmul.mubr.bf16.gmra.mrb[0].mxu0 %v1126
      %v1410 = vpop.f32.mrb[0].mxu0
      %v1411 = vadd.f32 0.0, %v1410
      %v1412 = vpop.f32.mrb[0].mxu0
      %v1413 = vpop.f32.mrb[0].mxu0
      %v1414 = vpop.f32.mrb[0].mxu0
      %1415 = vmatprep.mubr.bf16.mxu0 0
      %1416 = vmatmul.mubr.bf16.gmra.mrb[0].mxu0 %v1134
      %v1417 = vpop.f32.mrb[0].mxu0
      %v1418 = vadd.f32 0.0, %v1417
      %v1419 = vpop.f32.mrb[0].mxu0
      %v1420 = vpop.f32.mrb[0].mxu0
      %v1421 = vadd.f32 0.0, %v1420
      %v1422 = vpop.f32.mrb[0].mxu0
      %1423 = vmatprep.mubr.bf16.mxu0 0
      %1424 = vmatmul.mubr.bf16.gmra.mrb[0].mxu0 %v1142
      %v1425 = vpop.f32.mrb[0].mxu0
      %v1426 = vpop.f32.mrb[0].mxu0
      %v1427 = vpop.f32.mrb[0].mxu0
      %v1428 = vadd.f32 0.0, %v1427
      %v1429 = vpop.f32.mrb[0].mxu0
      %1430 = vmatprep.mubr.bf16.mxu0 0
      %1431 = vmatmul.mubr.bf16.gmra.mrb[0].mxu0 %v1150
      %v1432 = vpop.f32.mrb[0].mxu0
      %v1433 = vadd.f32 0.0, %v1432
      %v1434 = vpop.f32.mrb[0].mxu0
      %v1435 = vpop.f32.mrb[0].mxu0
      %v1436 = vpop.f32.mrb[0].mxu0
      %1437 = vmatprep.mubr.bf16.mxu0 0
      %1438 = vmatmul.mubr.bf16.gmra.mrb[0].mxu0 %v1158
      %v1439 = vpop.f32.mrb[0].mxu0
      %v1440 = vadd.f32 0.0, %v1439
      %v1441 = vpop.f32.mrb[0].mxu0
      %v1442 = vpop.f32.mrb[0].mxu0
      %v1443 = vadd.f32 0.0, %v1442
      %v1444 = vpop.f32.mrb[0].mxu0
      %1445 = vmatprep.mubr.bf16.mxu0 0
      %1446 = vmatmul.mubr.bf16.gmra.mrb[0].mxu0 %v1166
      %v1447 = vpop.f32.mrb[0].mxu0
      %v1448 = vpop.f32.mrb[0].mxu0
      %v1449 = vpop.f32.mrb[0].mxu0
      %v1450 = vadd.f32 0.0, %v1449
      %v1451 = vpop.f32.mrb[0].mxu0
      %1452 = vmatprep.mubr.bf16.mxu0 0
      %1453 = vmatmul.mubr.bf16.gmra.mrb[0].mxu0 %v1174
      %v1454 = vpop.f32.mrb[0].mxu0
      %v1455 = vadd.f32 0.0, %v1454
      %v1456 = vpop.f32.mrb[0].mxu0
      %v1457 = vpop.f32.mrb[0].mxu0
      %v1458 = vpop.f32.mrb[0].mxu0
      %1459 = vmatprep.mubr.bf16.mxu0 0
      %1460 = vmatmul.mubr.bf16.gmra.mrb[0].mxu0 %v1182
      %v1461 = vpop.f32.mrb[0].mxu0
      %v1462 = vadd.f32 0.0, %v1461
      %v1463 = vpop.f32.mrb[0].mxu0
      %v1464 = vpop.f32.mrb[0].mxu0
      %v1465 = vadd.f32 0.0, %v1464
      %v1466 = vpop.f32.mrb[0].mxu0
      %1467 = vmatprep.mubr.bf16.mxu0 0
      %1468 = vmatmul.mubr.bf16.gmra.mrb[0].mxu0 %v1190
      %v1469 = vpop.f32.mrb[0].mxu0
      %v1470 = vpop.f32.mrb[0].mxu0
      %v1471 = vpop.f32.mrb[0].mxu0
      %v1472 = vadd.f32 0.0, %v1471
      %v1473 = vpop.f32.mrb[0].mxu0
      %1474 = vmatprep.mubr.bf16.mxu0 0
      %1475 = vmatmul.mubr.bf16.gmra.mrb[0].mxu0 %v1198
      %v1476 = vpop.f32.mrb[0].mxu0
      %v1477 = vadd.f32 0.0, %v1476
      %v1478 = vpop.f32.mrb[0].mxu0
      %v1479 = vpop.f32.mrb[0].mxu0
      %v1480 = vpop.f32.mrb[0].mxu0
      %1481 = vmatprep.mubr.bf16.mxu0 0
      %1482 = vmatmul.mubr.bf16.gmra.mrb[0].mxu0 %v1206
      %v1483 = vpop.f32.mrb[0].mxu0
      %v1484 = vadd.f32 0.0, %v1483
      %v1485 = vpop.f32.mrb[0].mxu0
      %v1486 = vpop.f32.mrb[0].mxu0
      %v1487 = vadd.f32 0.0, %v1486
      %v1488 = vpop.f32.mrb[0].mxu0
      %1489 = vmatprep.mubr.bf16.mxu0 0
      %1490 = vmatmul.mubr.bf16.gmra.mrb[0].mxu0 %v1214
      %v1491 = vpop.f32.mrb[0].mxu0
      %v1492 = vpop.f32.mrb[0].mxu0
      %v1493 = vpop.f32.mrb[0].mxu0
      %v1494 = vadd.f32 0.0, %v1493
      %v1495 = vpop.f32.mrb[0].mxu0
      %1496 = vmatprep.mubr.bf16.mxu0 0
      %1497 = vmatmul.mubr.bf16.gmra.mrb[0].mxu0 %v1222
      %v1498 = vpop.f32.mrb[0].mxu0
      %v1499 = vadd.f32 0.0, %v1498
      %v1500 = vpop.f32.mrb[0].mxu0
      %v1501 = vpop.f32.mrb[0].mxu0
      %v1502 = vpop.f32.mrb[0].mxu0
      %1503 = vdwg.mxu0
      %v1544 = vunpack.c.l.b16 %v869
      %v1545 = vunpack.c.l.b16 %v870
      %v1546 = vunpack.c.l.b16 %v871
      %v1547 = vunpack.c.l.b16 %v872
      %v1548 = vunpack.c.l.b16 %v873
      %v1549 = vunpack.c.l.b16 %v874
      %v1550 = vunpack.c.l.b16 %v875
      %v1551 = vunpack.c.l.b16 %v876
      %v1552 = vunpack.c.l.b16 %v877
      %v1553 = vunpack.c.l.b16 %v878
      %v1554 = vunpack.c.l.b16 %v879
      %v1555 = vunpack.c.l.b16 %v880
      %v1556 = vunpack.c.l.b16 %v881
      %v1557 = vunpack.c.l.b16 %v882
      %v1558 = vunpack.c.l.b16 %v883
      %v1559 = vunpack.c.l.b16 %v884
      %v1560 = vpack.c.b16 %v1545, %v1544
      %v1561 = vpack.c.b16 %v1547, %v1546
      %v1562 = vpack.c.b16 %v1549, %v1548
      %v1563 = vpack.c.b16 %v1551, %v1550
      %v1564 = vpack.c.b16 %v1553, %v1552
      %v1565 = vpack.c.b16 %v1555, %v1554
      %v1566 = vpack.c.b16 %v1557, %v1556
      %v1567 = vpack.c.b16 %v1559, %v1558
      %1576 = vmatprep.subr.bf16.mxu0 0
      %1577 = vmatpush1.bf16.msra.mxu0 %v1560
      %1578 = vmatprep.subr.bf16.mxu0 0
      %1579 = vmatpush1.bf16.msra.mxu0 %v1561
      %1580 = vmatprep.subr.bf16.mxu0 0
      %1581 = vmatpush1.bf16.msra.mxu0 %v1562
      %1582 = vmatprep.subr.bf16.mxu0 0
      %1583 = vmatpush1.bf16.msra.mxu0 %v1563
      %1584 = vmatprep.subr.bf16.mxu0 0
      %1585 = vmatpush1.bf16.msra.mxu0 %v1564
      %1586 = vmatprep.subr.bf16.mxu0 0
      %1587 = vmatpush1.bf16.msra.mxu0 %v1565
      %1588 = vmatprep.subr.bf16.mxu0 0
      %1589 = vmatpush1.bf16.msra.mxu0 %v1566
      %1590 = vmatprep.subr.bf16.mxu0 0
      %1591 = vmatpush1.bf16.msra.mxu0 %v1567
      %1592 = vmatprep.subr.bf16.mxu0 0
      %1593 = vmatpush1.bf16.msra.mxu0 0
      %1594 = vmatprep.subr.bf16.mxu0 0
      %1595 = vmatpush1.bf16.msra.mxu0 0
      %1596 = vmatprep.subr.bf16.mxu0 0
      %1597 = vmatpush1.bf16.msra.mxu0 0
      %1598 = vmatprep.subr.bf16.mxu0 0
      %1599 = vmatpush1.bf16.msra.mxu0 0
      %1600 = vmatprep.subr.bf16.mxu0 0
      %1601 = vmatpush1.bf16.msra.mxu0 0
      %1602 = vmatprep.subr.bf16.mxu0 0
      %1603 = vmatpush1.bf16.msra.mxu0 0
      %1604 = vmatprep.subr.bf16.mxu0 0
      %1605 = vmatpush1.bf16.msra.mxu0 0
      %1606 = vmatprep.subr.bf16.mxu0 0
      %1607 = vmatpush1.bf16.msra.mxu0 0
      %1608 = vmatprep.mubr.bf16.mxu0 0
      %1609 = vmatmul.mubr.bf16.gmra.mrb[0].mxu0 %v1001
      %v1610 = vpop.f32.mrb[0].mxu0
      %v1611 = vadd.f32 %v1330, %v1610
      %v1612 = vpop.f32.mrb[0].mxu0
      %v1613 = vpop.f32.mrb[0].mxu0
      %v1614 = vadd.f32 %v1333, %v1613
      %v1615 = vpop.f32.mrb[0].mxu0
      %1616 = vmatprep.mubr.bf16.mxu0 0
      %1617 = vmatmul.mubr.bf16.gmra.mrb[0].mxu0 %v1002
      %v1618 = vpop.f32.mrb[0].mxu0
      %v1619 = vpop.f32.mrb[0].mxu0
      %v1620 = vpop.f32.mrb[0].mxu0
      %v1621 = vadd.f32 %v1340, %v1620
      %v1622 = vpop.f32.mrb[0].mxu0
      %1623 = vmatprep.mubr.bf16.mxu0 0
      %1624 = vmatmul.mubr.bf16.gmra.mrb[0].mxu0 %v1003
      %v1625 = vpop.f32.mrb[0].mxu0
      %v1626 = vadd.f32 %v1345, %v1625
      %v1627 = vpop.f32.mrb[0].mxu0
      %v1628 = vpop.f32.mrb[0].mxu0
      %v1629 = vpop.f32.mrb[0].mxu0
      %1630 = vmatprep.mubr.bf16.mxu0 0
      %1631 = vmatmul.mubr.bf16.gmra.mrb[0].mxu0 %v1004
      %v1632 = vpop.f32.mrb[0].mxu0
      %v1633 = vadd.f32 %v1352, %v1632
      %v1634 = vpop.f32.mrb[0].mxu0
      %v1635 = vpop.f32.mrb[0].mxu0
      %v1636 = vadd.f32 %v1355, %v1635
      %v1637 = vpop.f32.mrb[0].mxu0
      %1638 = vmatprep.mubr.bf16.mxu0 0
      %1639 = vmatmul.mubr.bf16.gmra.mrb[0].mxu0 %v1005
      %v1640 = vpop.f32.mrb[0].mxu0
      %v1641 = vpop.f32.mrb[0].mxu0
      %v1642 = vpop.f32.mrb[0].mxu0
      %v1643 = vadd.f32 %v1362, %v1642
      %v1644 = vpop.f32.mrb[0].mxu0
      %1645 = vmatprep.mubr.bf16.mxu0 0
      %1646 = vmatmul.mubr.bf16.gmra.mrb[0].mxu0 %v1006
      %v1647 = vpop.f32.mrb[0].mxu0
      %v1648 = vadd.f32 %v1367, %v1647
      %v1649 = vpop.f32.mrb[0].mxu0
      %v1650 = vpop.f32.mrb[0].mxu0
      %v1651 = vpop.f32.mrb[0].mxu0
      %1652 = vmatprep.mubr.bf16.mxu0 0
      %1653 = vmatmul.mubr.bf16.gmra.mrb[0].mxu0 %v1007
      %v1654 = vpop.f32.mrb[0].mxu0
      %v1655 = vadd.f32 %v1374, %v1654
      %v1656 = vpop.f32.mrb[0].mxu0
      %v1657 = vpop.f32.mrb[0].mxu0
      %v1658 = vadd.f32 %v1377, %v1657
      %v1659 = vpop.f32.mrb[0].mxu0
      %1660 = vmatprep.mubr.bf16.mxu0 0
      %1661 = vmatmul.mubr.bf16.gmra.mrb[0].mxu0 %v1008
      %v1662 = vpop.f32.mrb[0].mxu0
      %v1663 = vpop.f32.mrb[0].mxu0
      %v1664 = vpop.f32.mrb[0].mxu0
      %v1665 = vadd.f32 %v1384, %v1664
      %v1666 = vpop.f32.mrb[0].mxu0
      %1667 = vmatprep.mubr.bf16.mxu0 0
      %1668 = vmatmul.mubr.bf16.gmra.mrb[0].mxu0 %v1009
      %v1669 = vpop.f32.mrb[0].mxu0
      %v1670 = vadd.f32 %v1389, %v1669
      %v1671 = vpop.f32.mrb[0].mxu0
      %v1672 = vpop.f32.mrb[0].mxu0
      %v1673 = vpop.f32.mrb[0].mxu0
      %1674 = vmatprep.mubr.bf16.mxu0 0
      %1675 = vmatmul.mubr.bf16.gmra.mrb[0].mxu0 %v1010
      %v1676 = vpop.f32.mrb[0].mxu0
      %v1677 = vadd.f32 %v1396, %v1676
      %v1678 = vpop.f32.mrb[0].mxu0
      %v1679 = vpop.f32.mrb[0].mxu0
      %v1680 = vadd.f32 %v1399, %v1679
      %v1681 = vpop.f32.mrb[0].mxu0
      %1682 = vmatprep.mubr.bf16.mxu0 0
      %1683 = vmatmul.mubr.bf16.gmra.mrb[0].mxu0 %v1011
      %v1684 = vpop.f32.mrb[0].mxu0
      %v1685 = vpop.f32.mrb[0].mxu0
      %v1686 = vpop.f32.mrb[0].mxu0
      %v1687 = vadd.f32 %v1406, %v1686
      %v1688 = vpop.f32.mrb[0].mxu0
      %1689 = vmatprep.mubr.bf16.mxu0 0
      %1690 = vmatmul.mubr.bf16.gmra.mrb[0].mxu0 %v1012
      %v1691 = vpop.f32.mrb[0].mxu0
      %v1692 = vadd.f32 %v1411, %v1691
      %v1693 = vpop.f32.mrb[0].mxu0
      %v1694 = vpop.f32.mrb[0].mxu0
      %v1695 = vpop.f32.mrb[0].mxu0
      %1696 = vmatprep.mubr.bf16.mxu0 0
      %1697 = vmatmul.mubr.bf16.gmra.mrb[0].mxu0 %v1013
      %v1698 = vpop.f32.mrb[0].mxu0
      %v1699 = vadd.f32 %v1418, %v1698
      %v1700 = vpop.f32.mrb[0].mxu0
      %v1701 = vpop.f32.mrb[0].mxu0
      %v1702 = vadd.f32 %v1421, %v1701
      %v1703 = vpop.f32.mrb[0].mxu0
      %1704 = vmatprep.mubr.bf16.mxu0 0
      %1705 = vmatmul.mubr.bf16.gmra.mrb[0].mxu0 %v1014
      %v1706 = vpop.f32.mrb[0].mxu0
      %v1707 = vpop.f32.mrb[0].mxu0
      %v1708 = vpop.f32.mrb[0].mxu0
      %v1709 = vadd.f32 %v1428, %v1708
      %v1710 = vpop.f32.mrb[0].mxu0
      %1711 = vmatprep.mubr.bf16.mxu0 0
      %1712 = vmatmul.mubr.bf16.gmra.mrb[0].mxu0 %v1015
      %v1713 = vpop.f32.mrb[0].mxu0
      %v1714 = vadd.f32 %v1433, %v1713
      %v1715 = vpop.f32.mrb[0].mxu0
      %v1716 = vpop.f32.mrb[0].mxu0
      %v1717 = vpop.f32.mrb[0].mxu0
      %1718 = vmatprep.mubr.bf16.mxu0 0
      %1719 = vmatmul.mubr.bf16.gmra.mrb[0].mxu0 %v1016
      %v1720 = vpop.f32.mrb[0].mxu0
      %v1721 = vadd.f32 %v1440, %v1720
      %v1722 = vpop.f32.mrb[0].mxu0
      %v1723 = vpop.f32.mrb[0].mxu0
      %v1724 = vadd.f32 %v1443, %v1723
      %v1725 = vpop.f32.mrb[0].mxu0
      %1726 = vmatprep.mubr.bf16.mxu0 0
      %1727 = vmatmul.mubr.bf16.gmra.mrb[0].mxu0 %v1017
      %v1728 = vpop.f32.mrb[0].mxu0
      %v1729 = vpop.f32.mrb[0].mxu0
      %v1730 = vpop.f32.mrb[0].mxu0
      %v1731 = vadd.f32 %v1450, %v1730
      %v1732 = vpop.f32.mrb[0].mxu0
      %1733 = vmatprep.mubr.bf16.mxu0 0
      %1734 = vmatmul.mubr.bf16.gmra.mrb[0].mxu0 %v1018
      %v1735 = vpop.f32.mrb[0].mxu0
      %v1736 = vadd.f32 %v1455, %v1735
      %v1737 = vpop.f32.mrb[0].mxu0
      %v1738 = vpop.f32.mrb[0].mxu0
      %v1739 = vpop.f32.mrb[0].mxu0
      %1740 = vmatprep.mubr.bf16.mxu0 0
      %1741 = vmatmul.mubr.bf16.gmra.mrb[0].mxu0 %v1019
      %v1742 = vpop.f32.mrb[0].mxu0
      %v1743 = vadd.f32 %v1462, %v1742
      %v1744 = vpop.f32.mrb[0].mxu0
      %v1745 = vpop.f32.mrb[0].mxu0
      %v1746 = vadd.f32 %v1465, %v1745
      %v1747 = vpop.f32.mrb[0].mxu0
      %1748 = vmatprep.mubr.bf16.mxu0 0
      %1749 = vmatmul.mubr.bf16.gmra.mrb[0].mxu0 %v1020
      %v1750 = vpop.f32.mrb[0].mxu0
      %v1751 = vpop.f32.mrb[0].mxu0
      %v1752 = vpop.f32.mrb[0].mxu0
      %v1753 = vadd.f32 %v1472, %v1752
      %v1754 = vpop.f32.mrb[0].mxu0
      %1755 = vmatprep.mubr.bf16.mxu0 0
      %1756 = vmatmul.mubr.bf16.gmra.mrb[0].mxu0 %v1021
      %v1757 = vpop.f32.mrb[0].mxu0
      %v1758 = vadd.f32 %v1477, %v1757
      %v1759 = vpop.f32.mrb[0].mxu0
      %v1760 = vpop.f32.mrb[0].mxu0
      %v1761 = vpop.f32.mrb[0].mxu0
      %1762 = vmatprep.mubr.bf16.mxu0 0
      %1763 = vmatmul.mubr.bf16.gmra.mrb[0].mxu0 %v1022
      %v1764 = vpop.f32.mrb[0].mxu0
      %v1765 = vadd.f32 %v1484, %v1764
      %v1766 = vpop.f32.mrb[0].mxu0
      %v1767 = vpop.f32.mrb[0].mxu0
      %v1768 = vadd.f32 %v1487, %v1767
      %v1769 = vpop.f32.mrb[0].mxu0
      %1770 = vmatprep.mubr.bf16.mxu0 0
      %1771 = vmatmul.mubr.bf16.gmra.mrb[0].mxu0 %v1023
      %v1772 = vpop.f32.mrb[0].mxu0
      %v1773 = vpop.f32.mrb[0].mxu0
      %v1774 = vpop.f32.mrb[0].mxu0
      %v1775 = vadd.f32 %v1494, %v1774
      %v1776 = vpop.f32.mrb[0].mxu0
      %1777 = vmatprep.mubr.bf16.mxu0 0
      %1778 = vmatmul.mubr.bf16.gmra.mrb[0].mxu0 %v1024
      %v1779 = vpop.f32.mrb[0].mxu0
      %v1780 = vadd.f32 %v1499, %v1779
      %v1781 = vpop.f32.mrb[0].mxu0
      %v1782 = vpop.f32.mrb[0].mxu0
      %v1783 = vpop.f32.mrb[0].mxu0
      %1784 = vdwg.mxu0
      %v1785 = vld [vmem:[#allocation2] sm:$0xe]
      %s1786 = scalar_lea.vmem %s3, 128
      %v1787 = vld [vmem:[%s1786] sm:$0xf]
      %v1788 = vld [vmem:[%s1786 + $0x4] sm:$0xf]
      %v1789 = vld [vmem:[%s1786 + $0x8] sm:$0xf]
      %v1790 = vld [vmem:[%s1786 + $0xc] sm:$0xf]
      %v1791 = vld [vmem:[%s1786 + $0x10] sm:$0xf]
      %v1792 = vld [vmem:[%s1786 + $0x14] sm:$0xf]
      %v1793 = vld [vmem:[%s1786 + $0x18] sm:$0xf]
      %v1794 = vld [vmem:[%s1786 + $0x1c] sm:$0xf]
      %v1795 = vld [vmem:[%s1786 + $0x20] sm:$0xf]
      %v1796 = vld [vmem:[%s1786 + $0x24] sm:$0xf]
      %v1797 = vld [vmem:[%s1786 + $0x28] sm:$0xf]
      %v1798 = vld [vmem:[%s1786 + $0x2c] sm:$0xf]
      %v1799 = vld [vmem:[%s1786 + $0x30] sm:$0xf]
      %v1800 = vld [vmem:[%s1786 + $0x34] sm:$0xf]
      %v1801 = vld [vmem:[%s1786 + $0x38] sm:$0xf]
      %v1802 = vld [vmem:[%s1786 + $0x3c] sm:$0xf]
      %v1804 = vunpack.c.l.b16 %v1785
      %v1805 = vpack.c.b16 %v953, %v1804
      %vm1806 = vcmask 1046528
      %v1807 = vrot.slane %v1805, 1
      %v1808 = vrot.slane %v1002, 1
      %v1809 = vsel %vm1806, %v1807, %v1808
      %v1810 = vrot.slane %v1003, 1
      %v1811 = vsel %vm1806, %v1808, %v1810
      %v1812 = vrot.slane %v1004, 1
      %v1813 = vsel %vm1806, %v1810, %v1812
      %v1814 = vrot.slane %v1005, 1
      %v1815 = vsel %vm1806, %v1812, %v1814
      %v1816 = vrot.slane %v1006, 1
      %v1817 = vsel %vm1806, %v1814, %v1816
      %v1818 = vrot.slane %v1007, 1
      %v1819 = vsel %vm1806, %v1816, %v1818
      %v1820 = vrot.slane %v1008, 1
      %v1821 = vsel %vm1806, %v1818, %v1820
      %v1822 = vrot.slane %v1009, 1
      %v1823 = vsel %vm1806, %v1820, %v1822
      %v1824 = vrot.slane %v1010, 1
      %v1825 = vsel %vm1806, %v1822, %v1824
      %v1826 = vrot.slane %v1011, 1
      %v1827 = vsel %vm1806, %v1824, %v1826
      %v1828 = vrot.slane %v1012, 1
      %v1829 = vsel %vm1806, %v1826, %v1828
      %v1830 = vrot.slane %v1013, 1
      %v1831 = vsel %vm1806, %v1828, %v1830
      %v1832 = vrot.slane %v1014, 1
      %v1833 = vsel %vm1806, %v1830, %v1832
      %v1834 = vrot.slane %v1015, 1
      %v1835 = vsel %vm1806, %v1832, %v1834
      %v1836 = vrot.slane %v1016, 1
      %v1837 = vsel %vm1806, %v1834, %v1836
      %v1838 = vrot.slane %v1017, 1
      %v1839 = vsel %vm1806, %v1836, %v1838
      %v1840 = vrot.slane %v1018, 1
      %v1841 = vsel %vm1806, %v1838, %v1840
      %v1842 = vrot.slane %v1019, 1
      %v1843 = vsel %vm1806, %v1840, %v1842
      %v1844 = vrot.slane %v1020, 1
      %v1845 = vsel %vm1806, %v1842, %v1844
      %v1846 = vrot.slane %v1021, 1
      %v1847 = vsel %vm1806, %v1844, %v1846
      %v1848 = vrot.slane %v1022, 1
      %v1849 = vsel %vm1806, %v1846, %v1848
      %v1850 = vrot.slane %v1023, 1
      %v1851 = vsel %vm1806, %v1848, %v1850
      %v1852 = vrot.slane %v1024, 1
      %v1853 = vsel %vm1806, %v1850, %v1852
      %v1854 = vrot.slane %v1025, 1
      %v1855 = vsel %vm1806, %v1852, %v1854
      %v1896 = vunpack.c.l.b16 %v1787
      %v1897 = vunpack.c.l.b16 %v1788
      %v1898 = vunpack.c.l.b16 %v1789
      %v1899 = vunpack.c.l.b16 %v1790
      %v1900 = vunpack.c.l.b16 %v1791
      %v1901 = vunpack.c.l.b16 %v1792
      %v1902 = vunpack.c.l.b16 %v1793
      %v1903 = vunpack.c.l.b16 %v1794
      %v1904 = vunpack.c.l.b16 %v1795
      %v1905 = vunpack.c.l.b16 %v1796
      %v1906 = vunpack.c.l.b16 %v1797
      %v1907 = vunpack.c.l.b16 %v1798
      %v1908 = vunpack.c.l.b16 %v1799
      %v1909 = vunpack.c.l.b16 %v1800
      %v1910 = vunpack.c.l.b16 %v1801
      %v1911 = vunpack.c.l.b16 %v1802
      %v1912 = vpack.c.b16 %v1897, %v1896
      %v1913 = vpack.c.b16 %v1899, %v1898
      %v1914 = vpack.c.b16 %v1901, %v1900
      %v1915 = vpack.c.b16 %v1903, %v1902
      %v1916 = vpack.c.b16 %v1905, %v1904
      %v1917 = vpack.c.b16 %v1907, %v1906
      %v1918 = vpack.c.b16 %v1909, %v1908
      %v1919 = vpack.c.b16 %v1911, %v1910
      %1928 = vmatprep.subr.bf16.mxu0 0
      %1929 = vmatpush1.bf16.msra.mxu0 %v1912
      %1930 = vmatprep.subr.bf16.mxu0 0
      %1931 = vmatpush1.bf16.msra.mxu0 %v1913
      %1932 = vmatprep.subr.bf16.mxu0 0
      %1933 = vmatpush1.bf16.msra.mxu0 %v1914
      %1934 = vmatprep.subr.bf16.mxu0 0
      %1935 = vmatpush1.bf16.msra.mxu0 %v1915
      %1936 = vmatprep.subr.bf16.mxu0 0
      %1937 = vmatpush1.bf16.msra.mxu0 %v1916
      %1938 = vmatprep.subr.bf16.mxu0 0
      %1939 = vmatpush1.bf16.msra.mxu0 %v1917
      %1940 = vmatprep.subr.bf16.mxu0 0
      %1941 = vmatpush1.bf16.msra.mxu0 %v1918
      %1942 = vmatprep.subr.bf16.mxu0 0
      %1943 = vmatpush1.bf16.msra.mxu0 %v1919
      %1944 = vmatprep.subr.bf16.mxu0 0
      %1945 = vmatpush1.bf16.msra.mxu0 0
      %1946 = vmatprep.subr.bf16.mxu0 0
      %1947 = vmatpush1.bf16.msra.mxu0 0
      %1948 = vmatprep.subr.bf16.mxu0 0
      %1949 = vmatpush1.bf16.msra.mxu0 0
      %1950 = vmatprep.subr.bf16.mxu0 0
      %1951 = vmatpush1.bf16.msra.mxu0 0
      %1952 = vmatprep.subr.bf16.mxu0 0
      %1953 = vmatpush1.bf16.msra.mxu0 0
      %1954 = vmatprep.subr.bf16.mxu0 0
      %1955 = vmatpush1.bf16.msra.mxu0 0
      %1956 = vmatprep.subr.bf16.mxu0 0
      %1957 = vmatpush1.bf16.msra.mxu0 0
      %1958 = vmatprep.subr.bf16.mxu0 0
      %1959 = vmatpush1.bf16.msra.mxu0 0
      %1960 = vmatprep.mubr.bf16.mxu0 0
      %1961 = vmatmul.mubr.bf16.gmra.mrb[0].mxu0 %v1809
      %v1962 = vpop.f32.mrb[0].mxu0
      %v1963 = vadd.f32 0.0, %v1962
      %v1964 = vpop.f32.mrb[0].mxu0
      %v1965 = vpop.f32.mrb[0].mxu0
      %v1966 = vadd.f32 0.0, %v1965
      %v1967 = vpop.f32.mrb[0].mxu0
      %1968 = vmatprep.mubr.bf16.mxu0 0
      %1969 = vmatmul.mubr.bf16.gmra.mrb[0].mxu0 %v1811
      %v1970 = vpop.f32.mrb[0].mxu0
      %v1971 = vpop.f32.mrb[0].mxu0
      %v1972 = vpop.f32.mrb[0].mxu0
      %v1973 = vadd.f32 0.0, %v1972
      %v1974 = vpop.f32.mrb[0].mxu0
      %1975 = vmatprep.mubr.bf16.mxu0 0
      %1976 = vmatmul.mubr.bf16.gmra.mrb[0].mxu0 %v1813
      %v1977 = vpop.f32.mrb[0].mxu0
      %v1978 = vadd.f32 0.0, %v1977
      %v1979 = vpop.f32.mrb[0].mxu0
      %v1980 = vpop.f32.mrb[0].mxu0
      %v1981 = vpop.f32.mrb[0].mxu0
      %1982 = vmatprep.mubr.bf16.mxu0 0
      %1983 = vmatmul.mubr.bf16.gmra.mrb[0].mxu0 %v1815
      %v1984 = vpop.f32.mrb[0].mxu0
      %v1985 = vadd.f32 0.0, %v1984
      %v1986 = vpop.f32.mrb[0].mxu0
      %v1987 = vpop.f32.mrb[0].mxu0
      %v1988 = vadd.f32 0.0, %v1987
      %v1989 = vpop.f32.mrb[0].mxu0
      %1990 = vmatprep.mubr.bf16.mxu0 0
      %1991 = vmatmul.mubr.bf16.gmra.mrb[0].mxu0 %v1817
      %v1992 = vpop.f32.mrb[0].mxu0
      %v1993 = vpop.f32.mrb[0].mxu0
      %v1994 = vpop.f32.mrb[0].mxu0
      %v1995 = vadd.f32 0.0, %v1994
      %v1996 = vpop.f32.mrb[0].mxu0
      %1997 = vmatprep.mubr.bf16.mxu0 0
      %1998 = vmatmul.mubr.bf16.gmra.mrb[0].mxu0 %v1819
      %v1999 = vpop.f32.mrb[0].mxu0
      %v2000 = vadd.f32 0.0, %v1999
      %v2001 = vpop.f32.mrb[0].mxu0
      %v2002 = vpop.f32.mrb[0].mxu0
      %v2003 = vpop.f32.mrb[0].mxu0
      %2004 = vmatprep.mubr.bf16.mxu0 0
      %2005 = vmatmul.mubr.bf16.gmra.mrb[0].mxu0 %v1821
      %v2006 = vpop.f32.mrb[0].mxu0
      %v2007 = vadd.f32 0.0, %v2006
      %v2008 = vpop.f32.mrb[0].mxu0
      %v2009 = vpop.f32.mrb[0].mxu0
      %v2010 = vadd.f32 0.0, %v2009
      %v2011 = vpop.f32.mrb[0].mxu0
      %2012 = vmatprep.mubr.bf16.mxu0 0
      %2013 = vmatmul.mubr.bf16.gmra.mrb[0].mxu0 %v1823
      %v2014 = vpop.f32.mrb[0].mxu0
      %v2015 = vpop.f32.mrb[0].mxu0
      %v2016 = vpop.f32.mrb[0].mxu0
      %v2017 = vadd.f32 0.0, %v2016
      %v2018 = vpop.f32.mrb[0].mxu0
      %2019 = vmatprep.mubr.bf16.mxu0 0
      %2020 = vmatmul.mubr.bf16.gmra.mrb[0].mxu0 %v1825
      %v2021 = vpop.f32.mrb[0].mxu0
      %v2022 = vadd.f32 0.0, %v2021
      %v2023 = vpop.f32.mrb[0].mxu0
      %v2024 = vpop.f32.mrb[0].mxu0
      %v2025 = vpop.f32.mrb[0].mxu0
      %2026 = vmatprep.mubr.bf16.mxu0 0
      %2027 = vmatmul.mubr.bf16.gmra.mrb[0].mxu0 %v1827
      %v2028 = vpop.f32.mrb[0].mxu0
      %v2029 = vadd.f32 0.0, %v2028
      %v2030 = vpop.f32.mrb[0].mxu0
      %v2031 = vpop.f32.mrb[0].mxu0
      %v2032 = vadd.f32 0.0, %v2031
      %v2033 = vpop.f32.mrb[0].mxu0
      %2034 = vmatprep.mubr.bf16.mxu0 0
      %2035 = vmatmul.mubr.bf16.gmra.mrb[0].mxu0 %v1829
      %v2036 = vpop.f32.mrb[0].mxu0
      %v2037 = vpop.f32.mrb[0].mxu0
      %v2038 = vpop.f32.mrb[0].mxu0
      %v2039 = vadd.f32 0.0, %v2038
      %v2040 = vpop.f32.mrb[0].mxu0
      %2041 = vmatprep.mubr.bf16.mxu0 0
      %2042 = vmatmul.mubr.bf16.gmra.mrb[0].mxu0 %v1831
      %v2043 = vpop.f32.mrb[0].mxu0
      %v2044 = vadd.f32 0.0, %v2043
      %v2045 = vpop.f32.mrb[0].mxu0
      %v2046 = vpop.f32.mrb[0].mxu0
      %v2047 = vpop.f32.mrb[0].mxu0
      %2048 = vmatprep.mubr.bf16.mxu0 0
      %2049 = vmatmul.mubr.bf16.gmra.mrb[0].mxu0 %v1833
      %v2050 = vpop.f32.mrb[0].mxu0
      %v2051 = vadd.f32 0.0, %v2050
      %v2052 = vpop.f32.mrb[0].mxu0
      %v2053 = vpop.f32.mrb[0].mxu0
      %v2054 = vadd.f32 0.0, %v2053
      %v2055 = vpop.f32.mrb[0].mxu0
      %2056 = vmatprep.mubr.bf16.mxu0 0
      %2057 = vmatmul.mubr.bf16.gmra.mrb[0].mxu0 %v1835
      %v2058 = vpop.f32.mrb[0].mxu0
      %v2059 = vpop.f32.mrb[0].mxu0
      %v2060 = vpop.f32.mrb[0].mxu0
      %v2061 = vadd.f32 0.0, %v2060
      %v2062 = vpop.f32.mrb[0].mxu0
      %2063 = vmatprep.mubr.bf16.mxu0 0
      %2064 = vmatmul.mubr.bf16.gmra.mrb[0].mxu0 %v1837
      %v2065 = vpop.f32.mrb[0].mxu0
      %v2066 = vadd.f32 0.0, %v2065
      %v2067 = vpop.f32.mrb[0].mxu0
      %v2068 = vpop.f32.mrb[0].mxu0
      %v2069 = vpop.f32.mrb[0].mxu0
      %2070 = vmatprep.mubr.bf16.mxu0 0
      %2071 = vmatmul.mubr.bf16.gmra.mrb[0].mxu0 %v1839
      %v2072 = vpop.f32.mrb[0].mxu0
      %v2073 = vadd.f32 0.0, %v2072
      %v2074 = vpop.f32.mrb[0].mxu0
      %v2075 = vpop.f32.mrb[0].mxu0
      %v2076 = vadd.f32 0.0, %v2075
      %v2077 = vpop.f32.mrb[0].mxu0
      %2078 = vmatprep.mubr.bf16.mxu0 0
      %2079 = vmatmul.mubr.bf16.gmra.mrb[0].mxu0 %v1841
      %v2080 = vpop.f32.mrb[0].mxu0
      %v2081 = vpop.f32.mrb[0].mxu0
      %v2082 = vpop.f32.mrb[0].mxu0
      %v2083 = vadd.f32 0.0, %v2082
      %v2084 = vpop.f32.mrb[0].mxu0
      %2085 = vmatprep.mubr.bf16.mxu0 0
      %2086 = vmatmul.mubr.bf16.gmra.mrb[0].mxu0 %v1843
      %v2087 = vpop.f32.mrb[0].mxu0
      %v2088 = vadd.f32 0.0, %v2087
      %v2089 = vpop.f32.mrb[0].mxu0
      %v2090 = vpop.f32.mrb[0].mxu0
      %v2091 = vpop.f32.mrb[0].mxu0
      %2092 = vmatprep.mubr.bf16.mxu0 0
      %2093 = vmatmul.mubr.bf16.gmra.mrb[0].mxu0 %v1845
      %v2094 = vpop.f32.mrb[0].mxu0
      %v2095 = vadd.f32 0.0, %v2094
      %v2096 = vpop.f32.mrb[0].mxu0
      %v2097 = vpop.f32.mrb[0].mxu0
      %v2098 = vadd.f32 0.0, %v2097
      %v2099 = vpop.f32.mrb[0].mxu0
      %2100 = vmatprep.mubr.bf16.mxu0 0
      %2101 = vmatmul.mubr.bf16.gmra.mrb[0].mxu0 %v1847
      %v2102 = vpop.f32.mrb[0].mxu0
      %v2103 = vpop.f32.mrb[0].mxu0
      %v2104 = vpop.f32.mrb[0].mxu0
      %v2105 = vadd.f32 0.0, %v2104
      %v2106 = vpop.f32.mrb[0].mxu0
      %2107 = vmatprep.mubr.bf16.mxu0 0
      %2108 = vmatmul.mubr.bf16.gmra.mrb[0].mxu0 %v1849
      %v2109 = vpop.f32.mrb[0].mxu0
      %v2110 = vadd.f32 0.0, %v2109
      %v2111 = vpop.f32.mrb[0].mxu0
      %v2112 = vpop.f32.mrb[0].mxu0
      %v2113 = vpop.f32.mrb[0].mxu0
      %2114 = vmatprep.mubr.bf16.mxu0 0
      %2115 = vmatmul.mubr.bf16.gmra.mrb[0].mxu0 %v1851
      %v2116 = vpop.f32.mrb[0].mxu0
      %v2117 = vadd.f32 0.0, %v2116
      %v2118 = vpop.f32.mrb[0].mxu0
      %v2119 = vpop.f32.mrb[0].mxu0
      %v2120 = vadd.f32 0.0, %v2119
      %v2121 = vpop.f32.mrb[0].mxu0
      %2122 = vmatprep.mubr.bf16.mxu0 0
      %2123 = vmatmul.mubr.bf16.gmra.mrb[0].mxu0 %v1853
      %v2124 = vpop.f32.mrb[0].mxu0
      %v2125 = vpop.f32.mrb[0].mxu0
      %v2126 = vpop.f32.mrb[0].mxu0
      %v2127 = vadd.f32 0.0, %v2126
      %v2128 = vpop.f32.mrb[0].mxu0
      %2129 = vmatprep.mubr.bf16.mxu0 0
      %2130 = vmatmul.mubr.bf16.gmra.mrb[0].mxu0 %v1855
      %v2131 = vpop.f32.mrb[0].mxu0
      %v2132 = vadd.f32 0.0, %v2131
      %v2133 = vpop.f32.mrb[0].mxu0
      %v2134 = vpop.f32.mrb[0].mxu0
      %v2135 = vpop.f32.mrb[0].mxu0
      %2136 = vdwg.mxu0
      %v2137 = vadd.f32 %v1611, %v1963
      %v2138 = vadd.f32 %v1614, %v1966
      %v2139 = vadd.f32 %v1621, %v1973
      %v2140 = vadd.f32 %v1626, %v1978
      %v2141 = vadd.f32 %v1633, %v1985
      %v2142 = vadd.f32 %v1636, %v1988
      %v2143 = vadd.f32 %v1643, %v1995
      %v2144 = vadd.f32 %v1648, %v2000
      %v2145 = vadd.f32 %v1655, %v2007
      %v2146 = vadd.f32 %v1658, %v2010
      %v2147 = vadd.f32 %v1665, %v2017
      %v2148 = vadd.f32 %v1670, %v2022
      %v2149 = vadd.f32 %v1677, %v2029
      %v2150 = vadd.f32 %v1680, %v2032
      %v2151 = vadd.f32 %v1687, %v2039
      %v2152 = vadd.f32 %v1692, %v2044
      %v2153 = vadd.f32 %v1699, %v2051
      %v2154 = vadd.f32 %v1702, %v2054
      %v2155 = vadd.f32 %v1709, %v2061
      %v2156 = vadd.f32 %v1714, %v2066
      %v2157 = vadd.f32 %v1721, %v2073
      %v2158 = vadd.f32 %v1724, %v2076
      %v2159 = vadd.f32 %v1731, %v2083
      %v2160 = vadd.f32 %v1736, %v2088
      %v2161 = vadd.f32 %v1743, %v2095
      %v2162 = vadd.f32 %v1746, %v2098
      %v2163 = vadd.f32 %v1753, %v2105
      %v2164 = vadd.f32 %v1758, %v2110
      %v2165 = vadd.f32 %v1765, %v2117
      %v2166 = vadd.f32 %v1768, %v2120
      %v2167 = vadd.f32 %v1775, %v2127
      %v2168 = vadd.f32 %v1780, %v2132
      %v2169 = vld [vmem:[#allocation2 + $0xc] sm:$0xf]
      %v2170 = vld [vmem:[#allocation2 + $0x10] sm:$0xf]
      %v2171 = vld [vmem:[#allocation2 + $0x14] sm:$0xf]
      %v2172 = vld [vmem:[#allocation2 + $0x18] sm:$0xf]
      %v2173 = vld [vmem:[#allocation2 + $0x1c] sm:$0xf]
      %v2174 = vld [vmem:[#allocation2 + $0x20] sm:$0xf]
      %v2175 = vld [vmem:[#allocation2 + $0x24] sm:$0xf]
      %v2176 = vld [vmem:[#allocation2 + $0x28] sm:$0xf]
      %v2177 = vld [vmem:[#allocation2 + $0x2c] sm:$0xf]
      %v2178 = vld [vmem:[#allocation2 + $0x30] sm:$0xf]
      %v2179 = vld [vmem:[#allocation2 + $0x34] sm:$0xf]
      %v2180 = vld [vmem:[#allocation2 + $0x38] sm:$0xf]
      %v2181 = vld [vmem:[#allocation2 + $0x3c] sm:$0xf]
      %v2182 = vld [vmem:[#allocation2 + $0x40] sm:$0xf]
      %v2183 = vld [vmem:[#allocation2 + $0x44] sm:$0xf]
      %v2184 = vld [vmem:[#allocation2 + $0x48] sm:$0xf]
      %v2185 = vld [vmem:[#allocation2 + $0x4c] sm:$0xf]
      %v2186 = vld [vmem:[#allocation2 + $0x50] sm:$0xf]
      %v2187 = vld [vmem:[#allocation2 + $0x54] sm:$0xf]
      %v2188 = vld [vmem:[#allocation2 + $0x58] sm:$0xf]
      %v2189 = vld [vmem:[#allocation2 + $0x5c] sm:$0xf]
      %v2190 = vld [vmem:[#allocation2 + $0x60] sm:$0xf]
      %v2191 = vld [vmem:[#allocation2 + $0x64] sm:$0xf]
      %v2192 = vld [vmem:[#allocation2 + $0x68] sm:$0xf]
      %v2193 = vld [vmem:[#allocation2 + $0x6c] sm:$0xf]
      %v2194 = vld [vmem:[#allocation2 + $0x70] sm:$0xf]
      %v2195 = vld [vmem:[#allocation2 + $0x74] sm:$0xf]
      %v2196 = vld [vmem:[#allocation2 + $0x78] sm:$0xf]
      %v2197 = vld [vmem:[#allocation2 + $0x7c] sm:$0xf]
      %v2198 = vld [vmem:[#allocation2 + $0x80] sm:$0xf]
      %v2199 = vld [vmem:[#allocation2 + $0x84] sm:$0xf]
      %v2200 = vld [vmem:[#allocation2 + $0x88] sm:$0xf]
      %v2201 = vld [vmem:[#allocation2 + $0x8c] sm:$0xf]
      %v2202 = vld [vmem:[#allocation2 + $0x90] sm:$0xf]
      %v2203 = vld [vmem:[#allocation2 + $0x94] sm:$0xf]
      %v2204 = vld [vmem:[#allocation2 + $0x98] sm:$0xf]
      %v2205 = vld [vmem:[#allocation2 + $0x9c] sm:$0xf]
      %v2206 = vld [vmem:[#allocation2 + $0xa0] sm:$0xf]
      %v2207 = vld [vmem:[#allocation2 + $0xa4] sm:$0xf]
      %v2208 = vld [vmem:[#allocation2 + $0xa8] sm:$0xf]
      %v2209 = vld [vmem:[#allocation2 + $0xac] sm:$0xf]
      %v2210 = vld [vmem:[#allocation2 + $0xb0] sm:$0xf]
      %v2211 = vld [vmem:[#allocation2 + $0xb4] sm:$0xf]
      %v2212 = vld [vmem:[#allocation2 + $0xb8] sm:$0xf]
      %v2213 = vld [vmem:[#allocation2 + $0xbc] sm:$0xf]
      %v2214 = vld [vmem:[#allocation2 + $0xc0] sm:$0xf]
      %v2215 = vld [vmem:[#allocation2 + $0xc4] sm:$0xf]
      %v2216 = vld [vmem:[#allocation2 + $0xc8] sm:$0xf]
      %s2217 = scalar_lea.vmem %s3, 192
      %v2218 = vld [vmem:[%s2217] sm:$0xf]
      %v2219 = vld [vmem:[%s2217 + $0x4] sm:$0xf]
      %v2220 = vld [vmem:[%s2217 + $0x8] sm:$0xf]
      %v2221 = vld [vmem:[%s2217 + $0xc] sm:$0xf]
      %v2222 = vld [vmem:[%s2217 + $0x10] sm:$0xf]
      %v2223 = vld [vmem:[%s2217 + $0x14] sm:$0xf]
      %v2224 = vld [vmem:[%s2217 + $0x18] sm:$0xf]
      %v2225 = vld [vmem:[%s2217 + $0x1c] sm:$0xf]
      %v2226 = vld [vmem:[%s2217 + $0x20] sm:$0xf]
      %v2227 = vld [vmem:[%s2217 + $0x24] sm:$0xf]
      %v2228 = vld [vmem:[%s2217 + $0x28] sm:$0xf]
      %v2229 = vld [vmem:[%s2217 + $0x2c] sm:$0xf]
      %v2230 = vld [vmem:[%s2217 + $0x30] sm:$0xf]
      %v2231 = vld [vmem:[%s2217 + $0x34] sm:$0xf]
      %v2232 = vld [vmem:[%s2217 + $0x38] sm:$0xf]
      %v2233 = vld [vmem:[%s2217 + $0x3c] sm:$0xf]
      %v2282 = vunpack.c.l.b16 %v2169
      %v2283 = vunpack.c.l.b16 %v2170
      %v2284 = vunpack.c.l.b16 %v2171
      %v2285 = vunpack.c.l.b16 %v2172
      %v2286 = vunpack.c.l.b16 %v2173
      %v2287 = vunpack.c.l.b16 %v2174
      %v2288 = vunpack.c.l.b16 %v2175
      %v2289 = vunpack.c.l.b16 %v2176
      %v2290 = vunpack.c.l.b16 %v2177
      %v2291 = vunpack.c.l.b16 %v2178
      %v2292 = vunpack.c.l.b16 %v2179
      %v2293 = vunpack.c.l.b16 %v2180
      %v2294 = vunpack.c.l.b16 %v2181
      %v2295 = vunpack.c.l.b16 %v2182
      %v2296 = vunpack.c.l.b16 %v2183
      %v2297 = vunpack.c.l.b16 %v2184
      %v2298 = vunpack.c.l.b16 %v2185
      %v2299 = vunpack.c.l.b16 %v2186
      %v2300 = vunpack.c.l.b16 %v2187
      %v2301 = vunpack.c.l.b16 %v2188
      %v2302 = vunpack.c.l.b16 %v2189
      %v2303 = vunpack.c.l.b16 %v2190
      %v2304 = vunpack.c.l.b16 %v2191
      %v2305 = vunpack.c.l.b16 %v2192
      %v2306 = vunpack.c.l.b16 %v2193
      %v2307 = vunpack.c.l.b16 %v2194
      %v2308 = vunpack.c.l.b16 %v2195
      %v2309 = vunpack.c.l.b16 %v2196
      %v2310 = vunpack.c.l.b16 %v2197
      %v2311 = vunpack.c.l.b16 %v2198
      %v2312 = vunpack.c.l.b16 %v2199
      %v2313 = vunpack.c.l.b16 %v2200
      %v2314 = vunpack.c.l.b16 %v2201
      %v2315 = vunpack.c.l.b16 %v2202
      %v2316 = vunpack.c.l.b16 %v2203
      %v2317 = vunpack.c.l.b16 %v2204
      %v2318 = vunpack.c.l.b16 %v2205
      %v2319 = vunpack.c.l.b16 %v2206
      %v2320 = vunpack.c.l.b16 %v2207
      %v2321 = vunpack.c.l.b16 %v2208
      %v2322 = vunpack.c.l.b16 %v2209
      %v2323 = vunpack.c.l.b16 %v2210
      %v2324 = vunpack.c.l.b16 %v2211
      %v2325 = vunpack.c.l.b16 %v2212
      %v2326 = vunpack.c.l.b16 %v2213
      %v2327 = vunpack.c.l.b16 %v2214
      %v2328 = vunpack.c.l.b16 %v2215
      %v2329 = vunpack.c.l.b16 %v2216
      %v2330 = vpack.c.b16 %v2283, %v2282
      %v2331 = vpack.c.b16 %v2285, %v2284
      %v2332 = vpack.c.b16 %v2287, %v2286
      %v2333 = vpack.c.b16 %v2289, %v2288
      %v2334 = vpack.c.b16 %v2291, %v2290
      %v2335 = vpack.c.b16 %v2293, %v2292
      %v2336 = vpack.c.b16 %v2295, %v2294
      %v2337 = vpack.c.b16 %v2297, %v2296
      %v2338 = vpack.c.b16 %v2299, %v2298
      %v2339 = vpack.c.b16 %v2301, %v2300
      %v2340 = vpack.c.b16 %v2303, %v2302
      %v2341 = vpack.c.b16 %v2305, %v2304
      %v2342 = vpack.c.b16 %v2307, %v2306
      %v2343 = vpack.c.b16 %v2309, %v2308
      %v2344 = vpack.c.b16 %v2311, %v2310
      %v2345 = vpack.c.b16 %v2313, %v2312
      %v2346 = vpack.c.b16 %v2315, %v2314
      %v2347 = vpack.c.b16 %v2317, %v2316
      %v2348 = vpack.c.b16 %v2319, %v2318
      %v2349 = vpack.c.b16 %v2321, %v2320
      %v2350 = vpack.c.b16 %v2323, %v2322
      %v2351 = vpack.c.b16 %v2325, %v2324
      %v2352 = vpack.c.b16 %v2327, %v2326
      %v2353 = vpack.c.b16 %v2329, %v2328
      %v2394 = vunpack.c.l.b16 %v2218
      %v2395 = vunpack.c.l.b16 %v2219
      %v2396 = vunpack.c.l.b16 %v2220
      %v2397 = vunpack.c.l.b16 %v2221
      %v2398 = vunpack.c.l.b16 %v2222
      %v2399 = vunpack.c.l.b16 %v2223
      %v2400 = vunpack.c.l.b16 %v2224
      %v2401 = vunpack.c.l.b16 %v2225
      %v2402 = vunpack.c.l.b16 %v2226
      %v2403 = vunpack.c.l.b16 %v2227
      %v2404 = vunpack.c.l.b16 %v2228
      %v2405 = vunpack.c.l.b16 %v2229
      %v2406 = vunpack.c.l.b16 %v2230
      %v2407 = vunpack.c.l.b16 %v2231
      %v2408 = vunpack.c.l.b16 %v2232
      %v2409 = vunpack.c.l.b16 %v2233
      %v2410 = vpack.c.b16 %v2395, %v2394
      %v2411 = vpack.c.b16 %v2397, %v2396
      %v2412 = vpack.c.b16 %v2399, %v2398
      %v2413 = vpack.c.b16 %v2401, %v2400
      %v2414 = vpack.c.b16 %v2403, %v2402
      %v2415 = vpack.c.b16 %v2405, %v2404
      %v2416 = vpack.c.b16 %v2407, %v2406
      %v2417 = vpack.c.b16 %v2409, %v2408
      %2426 = vmatprep.subr.bf16.mxu0 0
      %2427 = vmatpush1.bf16.msra.mxu0 %v2410
      %2428 = vmatprep.subr.bf16.mxu0 0
      %2429 = vmatpush1.bf16.msra.mxu0 %v2411
      %2430 = vmatprep.subr.bf16.mxu0 0
      %2431 = vmatpush1.bf16.msra.mxu0 %v2412
      %2432 = vmatprep.subr.bf16.mxu0 0
      %2433 = vmatpush1.bf16.msra.mxu0 %v2413
      %2434 = vmatprep.subr.bf16.mxu0 0
      %2435 = vmatpush1.bf16.msra.mxu0 %v2414
      %2436 = vmatprep.subr.bf16.mxu0 0
      %2437 = vmatpush1.bf16.msra.mxu0 %v2415
      %2438 = vmatprep.subr.bf16.mxu0 0
      %2439 = vmatpush1.bf16.msra.mxu0 %v2416
      %2440 = vmatprep.subr.bf16.mxu0 0
      %2441 = vmatpush1.bf16.msra.mxu0 %v2417
      %2442 = vmatprep.subr.bf16.mxu0 0
      %2443 = vmatpush1.bf16.msra.mxu0 0
      %2444 = vmatprep.subr.bf16.mxu0 0
      %2445 = vmatpush1.bf16.msra.mxu0 0
      %2446 = vmatprep.subr.bf16.mxu0 0
      %2447 = vmatpush1.bf16.msra.mxu0 0
      %2448 = vmatprep.subr.bf16.mxu0 0
      %2449 = vmatpush1.bf16.msra.mxu0 0
      %2450 = vmatprep.subr.bf16.mxu0 0
      %2451 = vmatpush1.bf16.msra.mxu0 0
      %2452 = vmatprep.subr.bf16.mxu0 0
      %2453 = vmatpush1.bf16.msra.mxu0 0
      %2454 = vmatprep.subr.bf16.mxu0 0
      %2455 = vmatpush1.bf16.msra.mxu0 0
      %2456 = vmatprep.subr.bf16.mxu0 0
      %2457 = vmatpush1.bf16.msra.mxu0 0
      %2458 = vmatprep.mubr.bf16.mxu0 0
      %2459 = vmatmul.mubr.bf16.gmra.mrb[0].mxu0 %v2330
      %v2460 = vpop.f32.mrb[0].mxu0
      %v2461 = vadd.f32 0.0, %v2460
      %v2462 = vpop.f32.mrb[0].mxu0
      %v2463 = vpop.f32.mrb[0].mxu0
      %v2464 = vadd.f32 0.0, %v2463
      %v2465 = vpop.f32.mrb[0].mxu0
      %2466 = vmatprep.mubr.bf16.mxu0 0
      %2467 = vmatmul.mubr.bf16.gmra.mrb[0].mxu0 %v2331
      %v2468 = vpop.f32.mrb[0].mxu0
      %v2469 = vpop.f32.mrb[0].mxu0
      %v2470 = vpop.f32.mrb[0].mxu0
      %v2471 = vadd.f32 0.0, %v2470
      %v2472 = vpop.f32.mrb[0].mxu0
      %2473 = vmatprep.mubr.bf16.mxu0 0
      %2474 = vmatmul.mubr.bf16.gmra.mrb[0].mxu0 %v2332
      %v2475 = vpop.f32.mrb[0].mxu0
      %v2476 = vadd.f32 0.0, %v2475
      %v2477 = vpop.f32.mrb[0].mxu0
      %v2478 = vpop.f32.mrb[0].mxu0
      %v2479 = vpop.f32.mrb[0].mxu0
      %2480 = vmatprep.mubr.bf16.mxu0 0
      %2481 = vmatmul.mubr.bf16.gmra.mrb[0].mxu0 %v2333
      %v2482 = vpop.f32.mrb[0].mxu0
      %v2483 = vadd.f32 0.0, %v2482
      %v2484 = vpop.f32.mrb[0].mxu0
      %v2485 = vpop.f32.mrb[0].mxu0
      %v2486 = vadd.f32 0.0, %v2485
      %v2487 = vpop.f32.mrb[0].mxu0
      %2488 = vmatprep.mubr.bf16.mxu0 0
      %2489 = vmatmul.mubr.bf16.gmra.mrb[0].mxu0 %v2334
      %v2490 = vpop.f32.mrb[0].mxu0
      %v2491 = vpop.f32.mrb[0].mxu0
      %v2492 = vpop.f32.mrb[0].mxu0
      %v2493 = vadd.f32 0.0, %v2492
      %v2494 = vpop.f32.mrb[0].mxu0
      %2495 = vmatprep.mubr.bf16.mxu0 0
      %2496 = vmatmul.mubr.bf16.gmra.mrb[0].mxu0 %v2335
      %v2497 = vpop.f32.mrb[0].mxu0
      %v2498 = vadd.f32 0.0, %v2497
      %v2499 = vpop.f32.mrb[0].mxu0
      %v2500 = vpop.f32.mrb[0].mxu0
      %v2501 = vpop.f32.mrb[0].mxu0
      %2502 = vmatprep.mubr.bf16.mxu0 0
      %2503 = vmatmul.mubr.bf16.gmra.mrb[0].mxu0 %v2336
      %v2504 = vpop.f32.mrb[0].mxu0
      %v2505 = vadd.f32 0.0, %v2504
      %v2506 = vpop.f32.mrb[0].mxu0
      %v2507 = vpop.f32.mrb[0].mxu0
      %v2508 = vadd.f32 0.0, %v2507
      %v2509 = vpop.f32.mrb[0].mxu0
      %2510 = vmatprep.mubr.bf16.mxu0 0
      %2511 = vmatmul.mubr.bf16.gmra.mrb[0].mxu0 %v2337
      %v2512 = vpop.f32.mrb[0].mxu0
      %v2513 = vpop.f32.mrb[0].mxu0
      %v2514 = vpop.f32.mrb[0].mxu0
      %v2515 = vadd.f32 0.0, %v2514
      %v2516 = vpop.f32.mrb[0].mxu0
      %2517 = vmatprep.mubr.bf16.mxu0 0
      %2518 = vmatmul.mubr.bf16.gmra.mrb[0].mxu0 %v2338
      %v2519 = vpop.f32.mrb[0].mxu0
      %v2520 = vadd.f32 0.0, %v2519
      %v2521 = vpop.f32.mrb[0].mxu0
      %v2522 = vpop.f32.mrb[0].mxu0
      %v2523 = vpop.f32.mrb[0].mxu0
      %2524 = vmatprep.mubr.bf16.mxu0 0
      %2525 = vmatmul.mubr.bf16.gmra.mrb[0].mxu0 %v2339
      %v2526 = vpop.f32.mrb[0].mxu0
      %v2527 = vadd.f32 0.0, %v2526
      %v2528 = vpop.f32.mrb[0].mxu0
      %v2529 = vpop.f32.mrb[0].mxu0
      %v2530 = vadd.f32 0.0, %v2529
      %v2531 = vpop.f32.mrb[0].mxu0
      %2532 = vmatprep.mubr.bf16.mxu0 0
      %2533 = vmatmul.mubr.bf16.gmra.mrb[0].mxu0 %v2340
      %v2534 = vpop.f32.mrb[0].mxu0
      %v2535 = vpop.f32.mrb[0].mxu0
      %v2536 = vpop.f32.mrb[0].mxu0
      %v2537 = vadd.f32 0.0, %v2536
      %v2538 = vpop.f32.mrb[0].mxu0
      %2539 = vmatprep.mubr.bf16.mxu0 0
      %2540 = vmatmul.mubr.bf16.gmra.mrb[0].mxu0 %v2341
      %v2541 = vpop.f32.mrb[0].mxu0
      %v2542 = vadd.f32 0.0, %v2541
      %v2543 = vpop.f32.mrb[0].mxu0
      %v2544 = vpop.f32.mrb[0].mxu0
      %v2545 = vpop.f32.mrb[0].mxu0
      %2546 = vmatprep.mubr.bf16.mxu0 0
      %2547 = vmatmul.mubr.bf16.gmra.mrb[0].mxu0 %v2342
      %v2548 = vpop.f32.mrb[0].mxu0
      %v2549 = vadd.f32 0.0, %v2548
      %v2550 = vpop.f32.mrb[0].mxu0
      %v2551 = vpop.f32.mrb[0].mxu0
      %v2552 = vadd.f32 0.0, %v2551
      %v2553 = vpop.f32.mrb[0].mxu0
      %2554 = vmatprep.mubr.bf16.mxu0 0
      %2555 = vmatmul.mubr.bf16.gmra.mrb[0].mxu0 %v2343
      %v2556 = vpop.f32.mrb[0].mxu0
      %v2557 = vpop.f32.mrb[0].mxu0
      %v2558 = vpop.f32.mrb[0].mxu0
      %v2559 = vadd.f32 0.0, %v2558
      %v2560 = vpop.f32.mrb[0].mxu0
      %2561 = vmatprep.mubr.bf16.mxu0 0
      %2562 = vmatmul.mubr.bf16.gmra.mrb[0].mxu0 %v2344
      %v2563 = vpop.f32.mrb[0].mxu0
      %v2564 = vadd.f32 0.0, %v2563
      %v2565 = vpop.f32.mrb[0].mxu0
      %v2566 = vpop.f32.mrb[0].mxu0
      %v2567 = vpop.f32.mrb[0].mxu0
      %2568 = vmatprep.mubr.bf16.mxu0 0
      %2569 = vmatmul.mubr.bf16.gmra.mrb[0].mxu0 %v2345
      %v2570 = vpop.f32.mrb[0].mxu0
      %v2571 = vadd.f32 0.0, %v2570
      %v2572 = vpop.f32.mrb[0].mxu0
      %v2573 = vpop.f32.mrb[0].mxu0
      %v2574 = vadd.f32 0.0, %v2573
      %v2575 = vpop.f32.mrb[0].mxu0
      %2576 = vmatprep.mubr.bf16.mxu0 0
      %2577 = vmatmul.mubr.bf16.gmra.mrb[0].mxu0 %v2346
      %v2578 = vpop.f32.mrb[0].mxu0
      %v2579 = vpop.f32.mrb[0].mxu0
      %v2580 = vpop.f32.mrb[0].mxu0
      %v2581 = vadd.f32 0.0, %v2580
      %v2582 = vpop.f32.mrb[0].mxu0
      %2583 = vmatprep.mubr.bf16.mxu0 0
      %2584 = vmatmul.mubr.bf16.gmra.mrb[0].mxu0 %v2347
      %v2585 = vpop.f32.mrb[0].mxu0
      %v2586 = vadd.f32 0.0, %v2585
      %v2587 = vpop.f32.mrb[0].mxu0
      %v2588 = vpop.f32.mrb[0].mxu0
      %v2589 = vpop.f32.mrb[0].mxu0
      %2590 = vmatprep.mubr.bf16.mxu0 0
      %2591 = vmatmul.mubr.bf16.gmra.mrb[0].mxu0 %v2348
      %v2592 = vpop.f32.mrb[0].mxu0
      %v2593 = vadd.f32 0.0, %v2592
      %v2594 = vpop.f32.mrb[0].mxu0
      %v2595 = vpop.f32.mrb[0].mxu0
      %v2596 = vadd.f32 0.0, %v2595
      %v2597 = vpop.f32.mrb[0].mxu0
      %2598 = vmatprep.mubr.bf16.mxu0 0
      %2599 = vmatmul.mubr.bf16.gmra.mrb[0].mxu0 %v2349
      %v2600 = vpop.f32.mrb[0].mxu0
      %v2601 = vpop.f32.mrb[0].mxu0
      %v2602 = vpop.f32.mrb[0].mxu0
      %v2603 = vadd.f32 0.0, %v2602
      %v2604 = vpop.f32.mrb[0].mxu0
      %2605 = vmatprep.mubr.bf16.mxu0 0
      %2606 = vmatmul.mubr.bf16.gmra.mrb[0].mxu0 %v2350
      %v2607 = vpop.f32.mrb[0].mxu0
      %v2608 = vadd.f32 0.0, %v2607
      %v2609 = vpop.f32.mrb[0].mxu0
      %v2610 = vpop.f32.mrb[0].mxu0
      %v2611 = vpop.f32.mrb[0].mxu0
      %2612 = vmatprep.mubr.bf16.mxu0 0
      %2613 = vmatmul.mubr.bf16.gmra.mrb[0].mxu0 %v2351
      %v2614 = vpop.f32.mrb[0].mxu0
      %v2615 = vadd.f32 0.0, %v2614
      %v2616 = vpop.f32.mrb[0].mxu0
      %v2617 = vpop.f32.mrb[0].mxu0
      %v2618 = vadd.f32 0.0, %v2617
      %v2619 = vpop.f32.mrb[0].mxu0
      %2620 = vmatprep.mubr.bf16.mxu0 0
      %2621 = vmatmul.mubr.bf16.gmra.mrb[0].mxu0 %v2352
      %v2622 = vpop.f32.mrb[0].mxu0
      %v2623 = vpop.f32.mrb[0].mxu0
      %v2624 = vpop.f32.mrb[0].mxu0
      %v2625 = vadd.f32 0.0, %v2624
      %v2626 = vpop.f32.mrb[0].mxu0
      %2627 = vmatprep.mubr.bf16.mxu0 0
      %2628 = vmatmul.mubr.bf16.gmra.mrb[0].mxu0 %v2353
      %v2629 = vpop.f32.mrb[0].mxu0
      %v2630 = vadd.f32 0.0, %v2629
      %v2631 = vpop.f32.mrb[0].mxu0
      %v2632 = vpop.f32.mrb[0].mxu0
      %v2633 = vpop.f32.mrb[0].mxu0
      %2634 = vdwg.mxu0
      %v2635 = vadd.f32 %v2137, %v2461
      %v2636 = vadd.f32 %v2138, %v2464
      %v2637 = vadd.f32 %v2139, %v2471
      %v2638 = vadd.f32 %v2140, %v2476
      %v2639 = vadd.f32 %v2141, %v2483
      %v2640 = vadd.f32 %v2142, %v2486
      %v2641 = vadd.f32 %v2143, %v2493
      %v2642 = vadd.f32 %v2144, %v2498
      %v2643 = vadd.f32 %v2145, %v2505
      %v2644 = vadd.f32 %v2146, %v2508
      %v2645 = vadd.f32 %v2147, %v2515
      %v2646 = vadd.f32 %v2148, %v2520
      %v2647 = vadd.f32 %v2149, %v2527
      %v2648 = vadd.f32 %v2150, %v2530
      %v2649 = vadd.f32 %v2151, %v2537
      %v2650 = vadd.f32 %v2152, %v2542
      %v2651 = vadd.f32 %v2153, %v2549
      %v2652 = vadd.f32 %v2154, %v2552
      %v2653 = vadd.f32 %v2155, %v2559
      %v2654 = vadd.f32 %v2156, %v2564
      %v2655 = vadd.f32 %v2157, %v2571
      %v2656 = vadd.f32 %v2158, %v2574
      %v2657 = vadd.f32 %v2159, %v2581
      %v2658 = vadd.f32 %v2160, %v2586
      %v2659 = vadd.f32 %v2161, %v2593
      %v2660 = vadd.f32 %v2162, %v2596
      %v2661 = vadd.f32 %v2163, %v2603
      %v2662 = vadd.f32 %v2164, %v2608
      %v2663 = vadd.f32 %v2165, %v2615
      %v2664 = vadd.f32 %v2166, %v2618
      %v2665 = vadd.f32 %v2167, %v2625
      %v2666 = vadd.f32 %v2168, %v2630
      %v2667 = vld [vmem:[#allocation2 + $0xc] sm:$0xf]
      %v2668 = vld [vmem:[#allocation2 + $0x10] sm:$0xf]
      %v2669 = vld [vmem:[#allocation2 + $0x14] sm:$0xf]
      %v2670 = vld [vmem:[#allocation2 + $0x18] sm:$0xf]
      %v2671 = vld [vmem:[#allocation2 + $0x1c] sm:$0xf]
      %v2672 = vld [vmem:[#allocation2 + $0x20] sm:$0xf]
      %v2673 = vld [vmem:[#allocation2 + $0x24] sm:$0xf]
      %v2674 = vld [vmem:[#allocation2 + $0x28] sm:$0xf]
      %v2675 = vld [vmem:[#allocation2 + $0x2c] sm:$0xf]
      %v2676 = vld [vmem:[#allocation2 + $0x30] sm:$0xf]
      %v2677 = vld [vmem:[#allocation2 + $0x34] sm:$0xf]
      %v2678 = vld [vmem:[#allocation2 + $0x38] sm:$0xf]
      %v2679 = vld [vmem:[#allocation2 + $0x3c] sm:$0xf]
      %v2680 = vld [vmem:[#allocation2 + $0x40] sm:$0xf]
      %v2681 = vld [vmem:[#allocation2 + $0x44] sm:$0xf]
      %v2682 = vld [vmem:[#allocation2 + $0x48] sm:$0xf]
      %v2683 = vld [vmem:[#allocation2 + $0x4c] sm:$0xf]
      %v2684 = vld [vmem:[#allocation2 + $0x50] sm:$0xf]
      %v2685 = vld [vmem:[#allocation2 + $0x54] sm:$0xf]
      %v2686 = vld [vmem:[#allocation2 + $0x58] sm:$0xf]
      %v2687 = vld [vmem:[#allocation2 + $0x5c] sm:$0xf]
      %v2688 = vld [vmem:[#allocation2 + $0x60] sm:$0xf]
      %v2689 = vld [vmem:[#allocation2 + $0x64] sm:$0xf]
      %v2690 = vld [vmem:[#allocation2 + $0x68] sm:$0xf]
      %v2691 = vld [vmem:[#allocation2 + $0x6c] sm:$0xf]
      %v2692 = vld [vmem:[#allocation2 + $0x70] sm:$0xf]
      %v2693 = vld [vmem:[#allocation2 + $0x74] sm:$0xf]
      %v2694 = vld [vmem:[#allocation2 + $0x78] sm:$0xf]
      %v2695 = vld [vmem:[#allocation2 + $0x7c] sm:$0xf]
      %v2696 = vld [vmem:[#allocation2 + $0x80] sm:$0xf]
      %v2697 = vld [vmem:[#allocation2 + $0x84] sm:$0xf]
      %v2698 = vld [vmem:[#allocation2 + $0x88] sm:$0xf]
      %v2699 = vld [vmem:[#allocation2 + $0x8c] sm:$0xf]
      %v2700 = vld [vmem:[#allocation2 + $0x90] sm:$0xf]
      %v2701 = vld [vmem:[#allocation2 + $0x94] sm:$0xf]
      %v2702 = vld [vmem:[#allocation2 + $0x98] sm:$0xf]
      %v2703 = vld [vmem:[#allocation2 + $0x9c] sm:$0xf]
      %v2704 = vld [vmem:[#allocation2 + $0xa0] sm:$0xf]
      %v2705 = vld [vmem:[#allocation2 + $0xa4] sm:$0xf]
      %v2706 = vld [vmem:[#allocation2 + $0xa8] sm:$0xf]
      %v2707 = vld [vmem:[#allocation2 + $0xac] sm:$0xf]
      %v2708 = vld [vmem:[#allocation2 + $0xb0] sm:$0xf]
      %v2709 = vld [vmem:[#allocation2 + $0xb4] sm:$0xf]
      %v2710 = vld [vmem:[#allocation2 + $0xb8] sm:$0xf]
      %v2711 = vld [vmem:[#allocation2 + $0xbc] sm:$0xf]
      %v2712 = vld [vmem:[#allocation2 + $0xc0] sm:$0xf]
      %v2713 = vld [vmem:[#allocation2 + $0xc4] sm:$0xf]
      %v2714 = vld [vmem:[#allocation2 + $0xc8] sm:$0xf]
      %v2715 = vld [vmem:[#allocation2 + $0xcc] sm:$0x1]
      %s2716 = scalar_lea.vmem %s3, 256
      %v2717 = vld [vmem:[%s2716] sm:$0xf]
      %v2718 = vld [vmem:[%s2716 + $0x4] sm:$0xf]
      %v2719 = vld [vmem:[%s2716 + $0x8] sm:$0xf]
      %v2720 = vld [vmem:[%s2716 + $0xc] sm:$0xf]
      %v2721 = vld [vmem:[%s2716 + $0x10] sm:$0xf]
      %v2722 = vld [vmem:[%s2716 + $0x14] sm:$0xf]
      %v2723 = vld [vmem:[%s2716 + $0x18] sm:$0xf]
      %v2724 = vld [vmem:[%s2716 + $0x1c] sm:$0xf]
      %v2725 = vld [vmem:[%s2716 + $0x20] sm:$0xf]
      %v2726 = vld [vmem:[%s2716 + $0x24] sm:$0xf]
      %v2727 = vld [vmem:[%s2716 + $0x28] sm:$0xf]
      %v2728 = vld [vmem:[%s2716 + $0x2c] sm:$0xf]
      %v2729 = vld [vmem:[%s2716 + $0x30] sm:$0xf]
      %v2730 = vld [vmem:[%s2716 + $0x34] sm:$0xf]
      %v2731 = vld [vmem:[%s2716 + $0x38] sm:$0xf]
      %v2732 = vld [vmem:[%s2716 + $0x3c] sm:$0xf]
      %v2782 = vunpack.c.l.b16 %v2667
      %v2783 = vunpack.c.l.b16 %v2668
      %v2784 = vunpack.c.l.b16 %v2669
      %v2785 = vunpack.c.l.b16 %v2670
      %v2786 = vunpack.c.l.b16 %v2671
      %v2787 = vunpack.c.l.b16 %v2672
      %v2788 = vunpack.c.l.b16 %v2673
      %v2789 = vunpack.c.l.b16 %v2674
      %v2790 = vunpack.c.l.b16 %v2675
      %v2791 = vunpack.c.l.b16 %v2676
      %v2792 = vunpack.c.l.b16 %v2677
      %v2793 = vunpack.c.l.b16 %v2678
      %v2794 = vunpack.c.l.b16 %v2679
      %v2795 = vunpack.c.l.b16 %v2680
      %v2796 = vunpack.c.l.b16 %v2681
      %v2797 = vunpack.c.l.b16 %v2682
      %v2798 = vunpack.c.l.b16 %v2683
      %v2799 = vunpack.c.l.b16 %v2684
      %v2800 = vunpack.c.l.b16 %v2685
      %v2801 = vunpack.c.l.b16 %v2686
      %v2802 = vunpack.c.l.b16 %v2687
      %v2803 = vunpack.c.l.b16 %v2688
      %v2804 = vunpack.c.l.b16 %v2689
      %v2805 = vunpack.c.l.b16 %v2690
      %v2806 = vunpack.c.l.b16 %v2691
      %v2807 = vunpack.c.l.b16 %v2692
      %v2808 = vunpack.c.l.b16 %v2693
      %v2809 = vunpack.c.l.b16 %v2694
      %v2810 = vunpack.c.l.b16 %v2695
      %v2811 = vunpack.c.l.b16 %v2696
      %v2812 = vunpack.c.l.b16 %v2697
      %v2813 = vunpack.c.l.b16 %v2698
      %v2814 = vunpack.c.l.b16 %v2699
      %v2815 = vunpack.c.l.b16 %v2700
      %v2816 = vunpack.c.l.b16 %v2701
      %v2817 = vunpack.c.l.b16 %v2702
      %v2818 = vunpack.c.l.b16 %v2703
      %v2819 = vunpack.c.l.b16 %v2704
      %v2820 = vunpack.c.l.b16 %v2705
      %v2821 = vunpack.c.l.b16 %v2706
      %v2822 = vunpack.c.l.b16 %v2707
      %v2823 = vunpack.c.l.b16 %v2708
      %v2824 = vunpack.c.l.b16 %v2709
      %v2825 = vunpack.c.l.b16 %v2710
      %v2826 = vunpack.c.l.b16 %v2711
      %v2827 = vunpack.c.l.b16 %v2712
      %v2828 = vunpack.c.l.b16 %v2713
      %v2829 = vunpack.c.l.b16 %v2714
      %v2830 = vunpack.c.l.b16 %v2715
      %v2831 = vpack.c.b16 %v2783, %v2782
      %v2832 = vpack.c.b16 %v2785, %v2784
      %v2833 = vpack.c.b16 %v2787, %v2786
      %v2834 = vpack.c.b16 %v2789, %v2788
      %v2835 = vpack.c.b16 %v2791, %v2790
      %v2836 = vpack.c.b16 %v2793, %v2792
      %v2837 = vpack.c.b16 %v2795, %v2794
      %v2838 = vpack.c.b16 %v2797, %v2796
      %v2839 = vpack.c.b16 %v2799, %v2798
      %v2840 = vpack.c.b16 %v2801, %v2800
      %v2841 = vpack.c.b16 %v2803, %v2802
      %v2842 = vpack.c.b16 %v2805, %v2804
      %v2843 = vpack.c.b16 %v2807, %v2806
      %v2844 = vpack.c.b16 %v2809, %v2808
      %v2845 = vpack.c.b16 %v2811, %v2810
      %v2846 = vpack.c.b16 %v2813, %v2812
      %v2847 = vpack.c.b16 %v2815, %v2814
      %v2848 = vpack.c.b16 %v2817, %v2816
      %v2849 = vpack.c.b16 %v2819, %v2818
      %v2850 = vpack.c.b16 %v2821, %v2820
      %v2851 = vpack.c.b16 %v2823, %v2822
      %v2852 = vpack.c.b16 %v2825, %v2824
      %v2853 = vpack.c.b16 %v2827, %v2826
      %v2854 = vpack.c.b16 %v2829, %v2828
      %v2855 = vpack.c.b16 %v2830, %v2830
      %v2857 = vshrl.u32 %v2831, 16
      %v2859 = vshll.u32 %v2831, 16
      %v2861 = vrot.slane %v2859, 1
      %v2862 = vor.u32 %v2857, %v2861
      %v2864 = vshll.u32 %v2832, 16
      %v2866 = vrot.slane %v2864, 1
      %v2867 = vsel %vm1026, %v2862, %v2866
      %v2868 = vshrl.u32 %v2832, 16
      %v2870 = vor.u32 %v2868, %v2866
      %v2872 = vshll.u32 %v2833, 16
      %v2874 = vrot.slane %v2872, 1
      %v2875 = vsel %vm1026, %v2870, %v2874
      %v2876 = vshrl.u32 %v2833, 16
      %v2878 = vor.u32 %v2876, %v2874
      %v2880 = vshll.u32 %v2834, 16
      %v2882 = vrot.slane %v2880, 1
      %v2883 = vsel %vm1026, %v2878, %v2882
      %v2884 = vshrl.u32 %v2834, 16
      %v2886 = vor.u32 %v2884, %v2882
      %v2888 = vshll.u32 %v2835, 16
      %v2890 = vrot.slane %v2888, 1
      %v2891 = vsel %vm1026, %v2886, %v2890
      %v2892 = vshrl.u32 %v2835, 16
      %v2894 = vor.u32 %v2892, %v2890
      %v2896 = vshll.u32 %v2836, 16
      %v2898 = vrot.slane %v2896, 1
      %v2899 = vsel %vm1026, %v2894, %v2898
      %v2900 = vshrl.u32 %v2836, 16
      %v2902 = vor.u32 %v2900, %v2898
      %v2904 = vshll.u32 %v2837, 16
      %v2906 = vrot.slane %v2904, 1
      %v2907 = vsel %vm1026, %v2902, %v2906
      %v2908 = vshrl.u32 %v2837, 16
      %v2910 = vor.u32 %v2908, %v2906
      %v2912 = vshll.u32 %v2838, 16
      %v2914 = vrot.slane %v2912, 1
      %v2915 = vsel %vm1026, %v2910, %v2914
      %v2916 = vshrl.u32 %v2838, 16
      %v2918 = vor.u32 %v2916, %v2914
      %v2920 = vshll.u32 %v2839, 16
      %v2922 = vrot.slane %v2920, 1
      %v2923 = vsel %vm1026, %v2918, %v2922
      %v2924 = vshrl.u32 %v2839, 16
      %v2926 = vor.u32 %v2924, %v2922
      %v2928 = vshll.u32 %v2840, 16
      %v2930 = vrot.slane %v2928, 1
      %v2931 = vsel %vm1026, %v2926, %v2930
      %v2932 = vshrl.u32 %v2840, 16
      %v2934 = vor.u32 %v2932, %v2930
      %v2936 = vshll.u32 %v2841, 16
      %v2938 = vrot.slane %v2936, 1
      %v2939 = vsel %vm1026, %v2934, %v2938
      %v2940 = vshrl.u32 %v2841, 16
      %v2942 = vor.u32 %v2940, %v2938
      %v2944 = vshll.u32 %v2842, 16
      %v2946 = vrot.slane %v2944, 1
      %v2947 = vsel %vm1026, %v2942, %v2946
      %v2948 = vshrl.u32 %v2842, 16
      %v2950 = vor.u32 %v2948, %v2946
      %v2952 = vshll.u32 %v2843, 16
      %v2954 = vrot.slane %v2952, 1
      %v2955 = vsel %vm1026, %v2950, %v2954
      %v2956 = vshrl.u32 %v2843, 16
      %v2958 = vor.u32 %v2956, %v2954
      %v2960 = vshll.u32 %v2844, 16
      %v2962 = vrot.slane %v2960, 1
      %v2963 = vsel %vm1026, %v2958, %v2962
      %v2964 = vshrl.u32 %v2844, 16
      %v2966 = vor.u32 %v2964, %v2962
      %v2968 = vshll.u32 %v2845, 16
      %v2970 = vrot.slane %v2968, 1
      %v2971 = vsel %vm1026, %v2966, %v2970
      %v2972 = vshrl.u32 %v2845, 16
      %v2974 = vor.u32 %v2972, %v2970
      %v2976 = vshll.u32 %v2846, 16
      %v2978 = vrot.slane %v2976, 1
      %v2979 = vsel %vm1026, %v2974, %v2978
      %v2980 = vshrl.u32 %v2846, 16
      %v2982 = vor.u32 %v2980, %v2978
      %v2984 = vshll.u32 %v2847, 16
      %v2986 = vrot.slane %v2984, 1
      %v2987 = vsel %vm1026, %v2982, %v2986
      %v2988 = vshrl.u32 %v2847, 16
      %v2990 = vor.u32 %v2988, %v2986
      %v2992 = vshll.u32 %v2848, 16
      %v2994 = vrot.slane %v2992, 1
      %v2995 = vsel %vm1026, %v2990, %v2994
      %v2996 = vshrl.u32 %v2848, 16
      %v2998 = vor.u32 %v2996, %v2994
      %v3000 = vshll.u32 %v2849, 16
      %v3002 = vrot.slane %v3000, 1
      %v3003 = vsel %vm1026, %v2998, %v3002
      %v3004 = vshrl.u32 %v2849, 16
      %v3006 = vor.u32 %v3004, %v3002
      %v3008 = vshll.u32 %v2850, 16
      %v3010 = vrot.slane %v3008, 1
      %v3011 = vsel %vm1026, %v3006, %v3010
      %v3012 = vshrl.u32 %v2850, 16
      %v3014 = vor.u32 %v3012, %v3010
      %v3016 = vshll.u32 %v2851, 16
      %v3018 = vrot.slane %v3016, 1
      %v3019 = vsel %vm1026, %v3014, %v3018
      %v3020 = vshrl.u32 %v2851, 16
      %v3022 = vor.u32 %v3020, %v3018
      %v3024 = vshll.u32 %v2852, 16
      %v3026 = vrot.slane %v3024, 1
      %v3027 = vsel %vm1026, %v3022, %v3026
      %v3028 = vshrl.u32 %v2852, 16
      %v3030 = vor.u32 %v3028, %v3026
      %v3032 = vshll.u32 %v2853, 16
      %v3034 = vrot.slane %v3032, 1
      %v3035 = vsel %vm1026, %v3030, %v3034
      %v3036 = vshrl.u32 %v2853, 16
      %v3038 = vor.u32 %v3036, %v3034
      %v3040 = vshll.u32 %v2854, 16
      %v3042 = vrot.slane %v3040, 1
      %v3043 = vsel %vm1026, %v3038, %v3042
      %v3044 = vshrl.u32 %v2854, 16
      %v3046 = vor.u32 %v3044, %v3042
      %v3048 = vshll.u32 %v2855, 16
      %v3050 = vrot.slane %v3048, 1
      %v3051 = vsel %vm1026, %v3046, %v3050
      %v3092 = vunpack.c.l.b16 %v2717
      %v3093 = vunpack.c.l.b16 %v2718
      %v3094 = vunpack.c.l.b16 %v2719
      %v3095 = vunpack.c.l.b16 %v2720
      %v3096 = vunpack.c.l.b16 %v2721
      %v3097 = vunpack.c.l.b16 %v2722
      %v3098 = vunpack.c.l.b16 %v2723
      %v3099 = vunpack.c.l.b16 %v2724
      %v3100 = vunpack.c.l.b16 %v2725
      %v3101 = vunpack.c.l.b16 %v2726
      %v3102 = vunpack.c.l.b16 %v2727
      %v3103 = vunpack.c.l.b16 %v2728
      %v3104 = vunpack.c.l.b16 %v2729
      %v3105 = vunpack.c.l.b16 %v2730
      %v3106 = vunpack.c.l.b16 %v2731
      %v3107 = vunpack.c.l.b16 %v2732
      %v3108 = vpack.c.b16 %v3093, %v3092
      %v3109 = vpack.c.b16 %v3095, %v3094
      %v3110 = vpack.c.b16 %v3097, %v3096
      %v3111 = vpack.c.b16 %v3099, %v3098
      %v3112 = vpack.c.b16 %v3101, %v3100
      %v3113 = vpack.c.b16 %v3103, %v3102
      %v3114 = vpack.c.b16 %v3105, %v3104
      %v3115 = vpack.c.b16 %v3107, %v3106
      %3124 = vmatprep.subr.bf16.mxu0 0
      %3125 = vmatpush1.bf16.msra.mxu0 %v3108
      %3126 = vmatprep.subr.bf16.mxu0 0
      %3127 = vmatpush1.bf16.msra.mxu0 %v3109
      %3128 = vmatprep.subr.bf16.mxu0 0
      %3129 = vmatpush1.bf16.msra.mxu0 %v3110
      %3130 = vmatprep.subr.bf16.mxu0 0
      %3131 = vmatpush1.bf16.msra.mxu0 %v3111
      %3132 = vmatprep.subr.bf16.mxu0 0
      %3133 = vmatpush1.bf16.msra.mxu0 %v3112
      %3134 = vmatprep.subr.bf16.mxu0 0
      %3135 = vmatpush1.bf16.msra.mxu0 %v3113
      %3136 = vmatprep.subr.bf16.mxu0 0
      %3137 = vmatpush1.bf16.msra.mxu0 %v3114
      %3138 = vmatprep.subr.bf16.mxu0 0
      %3139 = vmatpush1.bf16.msra.mxu0 %v3115
      %3140 = vmatprep.subr.bf16.mxu0 0
      %3141 = vmatpush1.bf16.msra.mxu0 0
      %3142 = vmatprep.subr.bf16.mxu0 0
      %3143 = vmatpush1.bf16.msra.mxu0 0
      %3144 = vmatprep.subr.bf16.mxu0 0
      %3145 = vmatpush1.bf16.msra.mxu0 0
      %3146 = vmatprep.subr.bf16.mxu0 0
      %3147 = vmatpush1.bf16.msra.mxu0 0
      %3148 = vmatprep.subr.bf16.mxu0 0
      %3149 = vmatpush1.bf16.msra.mxu0 0
      %3150 = vmatprep.subr.bf16.mxu0 0
      %3151 = vmatpush1.bf16.msra.mxu0 0
      %3152 = vmatprep.subr.bf16.mxu0 0
      %3153 = vmatpush1.bf16.msra.mxu0 0
      %3154 = vmatprep.subr.bf16.mxu0 0
      %3155 = vmatpush1.bf16.msra.mxu0 0
      %3156 = vmatprep.mubr.bf16.mxu0 0
      %3157 = vmatmul.mubr.bf16.gmra.mrb[0].mxu0 %v2867
      %v3158 = vpop.f32.mrb[0].mxu0
      %v3159 = vadd.f32 0.0, %v3158
      %v3160 = vpop.f32.mrb[0].mxu0
      %v3161 = vpop.f32.mrb[0].mxu0
      %v3162 = vadd.f32 0.0, %v3161
      %v3163 = vpop.f32.mrb[0].mxu0
      %3164 = vmatprep.mubr.bf16.mxu0 0
      %3165 = vmatmul.mubr.bf16.gmra.mrb[0].mxu0 %v2875
      %v3166 = vpop.f32.mrb[0].mxu0
      %v3167 = vpop.f32.mrb[0].mxu0
      %v3168 = vpop.f32.mrb[0].mxu0
      %v3169 = vadd.f32 0.0, %v3168
      %v3170 = vpop.f32.mrb[0].mxu0
      %3171 = vmatprep.mubr.bf16.mxu0 0
      %3172 = vmatmul.mubr.bf16.gmra.mrb[0].mxu0 %v2883
      %v3173 = vpop.f32.mrb[0].mxu0
      %v3174 = vadd.f32 0.0, %v3173
      %v3175 = vpop.f32.mrb[0].mxu0
      %v3176 = vpop.f32.mrb[0].mxu0
      %v3177 = vpop.f32.mrb[0].mxu0
      %3178 = vmatprep.mubr.bf16.mxu0 0
      %3179 = vmatmul.mubr.bf16.gmra.mrb[0].mxu0 %v2891
      %v3180 = vpop.f32.mrb[0].mxu0
      %v3181 = vadd.f32 0.0, %v3180
      %v3182 = vpop.f32.mrb[0].mxu0
      %v3183 = vpop.f32.mrb[0].mxu0
      %v3184 = vadd.f32 0.0, %v3183
      %v3185 = vpop.f32.mrb[0].mxu0
      %3186 = vmatprep.mubr.bf16.mxu0 0
      %3187 = vmatmul.mubr.bf16.gmra.mrb[0].mxu0 %v2899
      %v3188 = vpop.f32.mrb[0].mxu0
      %v3189 = vpop.f32.mrb[0].mxu0
      %v3190 = vpop.f32.mrb[0].mxu0
      %v3191 = vadd.f32 0.0, %v3190
      %v3192 = vpop.f32.mrb[0].mxu0
      %3193 = vmatprep.mubr.bf16.mxu0 0
      %3194 = vmatmul.mubr.bf16.gmra.mrb[0].mxu0 %v2907
      %v3195 = vpop.f32.mrb[0].mxu0
      %v3196 = vadd.f32 0.0, %v3195
      %v3197 = vpop.f32.mrb[0].mxu0
      %v3198 = vpop.f32.mrb[0].mxu0
      %v3199 = vpop.f32.mrb[0].mxu0
      %3200 = vmatprep.mubr.bf16.mxu0 0
      %3201 = vmatmul.mubr.bf16.gmra.mrb[0].mxu0 %v2915
      %v3202 = vpop.f32.mrb[0].mxu0
      %v3203 = vadd.f32 0.0, %v3202
      %v3204 = vpop.f32.mrb[0].mxu0
      %v3205 = vpop.f32.mrb[0].mxu0
      %v3206 = vadd.f32 0.0, %v3205
      %v3207 = vpop.f32.mrb[0].mxu0
      %3208 = vmatprep.mubr.bf16.mxu0 0
      %3209 = vmatmul.mubr.bf16.gmra.mrb[0].mxu0 %v2923
      %v3210 = vpop.f32.mrb[0].mxu0
      %v3211 = vpop.f32.mrb[0].mxu0
      %v3212 = vpop.f32.mrb[0].mxu0
      %v3213 = vadd.f32 0.0, %v3212
      %v3214 = vpop.f32.mrb[0].mxu0
      %3215 = vmatprep.mubr.bf16.mxu0 0
      %3216 = vmatmul.mubr.bf16.gmra.mrb[0].mxu0 %v2931
      %v3217 = vpop.f32.mrb[0].mxu0
      %v3218 = vadd.f32 0.0, %v3217
      %v3219 = vpop.f32.mrb[0].mxu0
      %v3220 = vpop.f32.mrb[0].mxu0
      %v3221 = vpop.f32.mrb[0].mxu0
      %3222 = vmatprep.mubr.bf16.mxu0 0
      %3223 = vmatmul.mubr.bf16.gmra.mrb[0].mxu0 %v2939
      %v3224 = vpop.f32.mrb[0].mxu0
      %v3225 = vadd.f32 0.0, %v3224
      %v3226 = vpop.f32.mrb[0].mxu0
      %v3227 = vpop.f32.mrb[0].mxu0
      %v3228 = vadd.f32 0.0, %v3227
      %v3229 = vpop.f32.mrb[0].mxu0
      %3230 = vmatprep.mubr.bf16.mxu0 0
      %3231 = vmatmul.mubr.bf16.gmra.mrb[0].mxu0 %v2947
      %v3232 = vpop.f32.mrb[0].mxu0
      %v3233 = vpop.f32.mrb[0].mxu0
      %v3234 = vpop.f32.mrb[0].mxu0
      %v3235 = vadd.f32 0.0, %v3234
      %v3236 = vpop.f32.mrb[0].mxu0
      %3237 = vmatprep.mubr.bf16.mxu0 0
      %3238 = vmatmul.mubr.bf16.gmra.mrb[0].mxu0 %v2955
      %v3239 = vpop.f32.mrb[0].mxu0
      %v3240 = vadd.f32 0.0, %v3239
      %v3241 = vpop.f32.mrb[0].mxu0
      %v3242 = vpop.f32.mrb[0].mxu0
      %v3243 = vpop.f32.mrb[0].mxu0
      %3244 = vmatprep.mubr.bf16.mxu0 0
      %3245 = vmatmul.mubr.bf16.gmra.mrb[0].mxu0 %v2963
      %v3246 = vpop.f32.mrb[0].mxu0
      %v3247 = vadd.f32 0.0, %v3246
      %v3248 = vpop.f32.mrb[0].mxu0
      %v3249 = vpop.f32.mrb[0].mxu0
      %v3250 = vadd.f32 0.0, %v3249
      %v3251 = vpop.f32.mrb[0].mxu0
      %3252 = vmatprep.mubr.bf16.mxu0 0
      %3253 = vmatmul.mubr.bf16.gmra.mrb[0].mxu0 %v2971
      %v3254 = vpop.f32.mrb[0].mxu0
      %v3255 = vpop.f32.mrb[0].mxu0
      %v3256 = vpop.f32.mrb[0].mxu0
      %v3257 = vadd.f32 0.0, %v3256
      %v3258 = vpop.f32.mrb[0].mxu0
      %3259 = vmatprep.mubr.bf16.mxu0 0
      %3260 = vmatmul.mubr.bf16.gmra.mrb[0].mxu0 %v2979
      %v3261 = vpop.f32.mrb[0].mxu0
      %v3262 = vadd.f32 0.0, %v3261
      %v3263 = vpop.f32.mrb[0].mxu0
      %v3264 = vpop.f32.mrb[0].mxu0
      %v3265 = vpop.f32.mrb[0].mxu0
      %3266 = vmatprep.mubr.bf16.mxu0 0
      %3267 = vmatmul.mubr.bf16.gmra.mrb[0].mxu0 %v2987
      %v3268 = vpop.f32.mrb[0].mxu0
      %v3269 = vadd.f32 0.0, %v3268
      %v3270 = vpop.f32.mrb[0].mxu0
      %v3271 = vpop.f32.mrb[0].mxu0
      %v3272 = vadd.f32 0.0, %v3271
      %v3273 = vpop.f32.mrb[0].mxu0
      %3274 = vmatprep.mubr.bf16.mxu0 0
      %3275 = vmatmul.mubr.bf16.gmra.mrb[0].mxu0 %v2995
      %v3276 = vpop.f32.mrb[0].mxu0
      %v3277 = vpop.f32.mrb[0].mxu0
      %v3278 = vpop.f32.mrb[0].mxu0
      %v3279 = vadd.f32 0.0, %v3278
      %v3280 = vpop.f32.mrb[0].mxu0
      %3281 = vmatprep.mubr.bf16.mxu0 0
      %3282 = vmatmul.mubr.bf16.gmra.mrb[0].mxu0 %v3003
      %v3283 = vpop.f32.mrb[0].mxu0
      %v3284 = vadd.f32 0.0, %v3283
      %v3285 = vpop.f32.mrb[0].mxu0
      %v3286 = vpop.f32.mrb[0].mxu0
      %v3287 = vpop.f32.mrb[0].mxu0
      %3288 = vmatprep.mubr.bf16.mxu0 0
      %3289 = vmatmul.mubr.bf16.gmra.mrb[0].mxu0 %v3011
      %v3290 = vpop.f32.mrb[0].mxu0
      %v3291 = vadd.f32 0.0, %v3290
      %v3292 = vpop.f32.mrb[0].mxu0
      %v3293 = vpop.f32.mrb[0].mxu0
      %v3294 = vadd.f32 0.0, %v3293
      %v3295 = vpop.f32.mrb[0].mxu0
      %3296 = vmatprep.mubr.bf16.mxu0 0
      %3297 = vmatmul.mubr.bf16.gmra.mrb[0].mxu0 %v3019
      %v3298 = vpop.f32.mrb[0].mxu0
      %v3299 = vpop.f32.mrb[0].mxu0
      %v3300 = vpop.f32.mrb[0].mxu0
      %v3301 = vadd.f32 0.0, %v3300
      %v3302 = vpop.f32.mrb[0].mxu0
      %3303 = vmatprep.mubr.bf16.mxu0 0
      %3304 = vmatmul.mubr.bf16.gmra.mrb[0].mxu0 %v3027
      %v3305 = vpop.f32.mrb[0].mxu0
      %v3306 = vadd.f32 0.0, %v3305
      %v3307 = vpop.f32.mrb[0].mxu0
      %v3308 = vpop.f32.mrb[0].mxu0
      %v3309 = vpop.f32.mrb[0].mxu0
      %3310 = vmatprep.mubr.bf16.mxu0 0
      %3311 = vmatmul.mubr.bf16.gmra.mrb[0].mxu0 %v3035
      %v3312 = vpop.f32.mrb[0].mxu0
      %v3313 = vadd.f32 0.0, %v3312
      %v3314 = vpop.f32.mrb[0].mxu0
      %v3315 = vpop.f32.mrb[0].mxu0
      %v3316 = vadd.f32 0.0, %v3315
      %v3317 = vpop.f32.mrb[0].mxu0
      %3318 = vmatprep.mubr.bf16.mxu0 0
      %3319 = vmatmul.mubr.bf16.gmra.mrb[0].mxu0 %v3043
      %v3320 = vpop.f32.mrb[0].mxu0
      %v3321 = vpop.f32.mrb[0].mxu0
      %v3322 = vpop.f32.mrb[0].mxu0
      %v3323 = vadd.f32 0.0, %v3322
      %v3324 = vpop.f32.mrb[0].mxu0
      %3325 = vmatprep.mubr.bf16.mxu0 0
      %3326 = vmatmul.mubr.bf16.gmra.mrb[0].mxu0 %v3051
      %v3327 = vpop.f32.mrb[0].mxu0
      %v3328 = vadd.f32 0.0, %v3327
      %v3329 = vpop.f32.mrb[0].mxu0
      %v3330 = vpop.f32.mrb[0].mxu0
      %v3331 = vpop.f32.mrb[0].mxu0
      %3332 = vdwg.mxu0
      %v3333 = vadd.f32 %v2635, %v3159
      %v3334 = vadd.f32 %v2636, %v3162
      %v3335 = vadd.f32 %v2637, %v3169
      %v3336 = vadd.f32 %v2638, %v3174
      %v3337 = vadd.f32 %v2639, %v3181
      %v3338 = vadd.f32 %v2640, %v3184
      %v3339 = vadd.f32 %v2641, %v3191
      %v3340 = vadd.f32 %v2642, %v3196
      %v3341 = vadd.f32 %v2643, %v3203
      %v3342 = vadd.f32 %v2644, %v3206
      %v3343 = vadd.f32 %v2645, %v3213
      %v3344 = vadd.f32 %v2646, %v3218
      %v3345 = vadd.f32 %v2647, %v3225
      %v3346 = vadd.f32 %v2648, %v3228
      %v3347 = vadd.f32 %v2649, %v3235
      %v3348 = vadd.f32 %v2650, %v3240
      %v3349 = vadd.f32 %v2651, %v3247
      %v3350 = vadd.f32 %v2652, %v3250
      %v3351 = vadd.f32 %v2653, %v3257
      %v3352 = vadd.f32 %v2654, %v3262
      %v3353 = vadd.f32 %v2655, %v3269
      %v3354 = vadd.f32 %v2656, %v3272
      %v3355 = vadd.f32 %v2657, %v3279
      %v3356 = vadd.f32 %v2658, %v3284
      %v3357 = vadd.f32 %v2659, %v3291
      %v3358 = vadd.f32 %v2660, %v3294
      %v3359 = vadd.f32 %v2661, %v3301
      %v3360 = vadd.f32 %v2662, %v3306
      %v3361 = vadd.f32 %v2663, %v3313
      %v3362 = vadd.f32 %v2664, %v3316
      %v3363 = vadd.f32 %v2665, %v3323
      %v3364 = vadd.f32 %v2666, %v3328
      %v3365 = vld [vmem:[#allocation2 + $0xc] sm:$0xe]
      %s3366 = scalar_lea.vmem %s3, 320
      %v3367 = vld [vmem:[%s3366] sm:$0xf]
      %v3368 = vld [vmem:[%s3366 + $0x4] sm:$0xf]
      %v3369 = vld [vmem:[%s3366 + $0x8] sm:$0xf]
      %v3370 = vld [vmem:[%s3366 + $0xc] sm:$0xf]
      %v3371 = vld [vmem:[%s3366 + $0x10] sm:$0xf]
      %v3372 = vld [vmem:[%s3366 + $0x14] sm:$0xf]
      %v3373 = vld [vmem:[%s3366 + $0x18] sm:$0xf]
      %v3374 = vld [vmem:[%s3366 + $0x1c] sm:$0xf]
      %v3375 = vld [vmem:[%s3366 + $0x20] sm:$0xf]
      %v3376 = vld [vmem:[%s3366 + $0x24] sm:$0xf]
      %v3377 = vld [vmem:[%s3366 + $0x28] sm:$0xf]
      %v3378 = vld [vmem:[%s3366 + $0x2c] sm:$0xf]
      %v3379 = vld [vmem:[%s3366 + $0x30] sm:$0xf]
      %v3380 = vld [vmem:[%s3366 + $0x34] sm:$0xf]
      %v3381 = vld [vmem:[%s3366 + $0x38] sm:$0xf]
      %v3382 = vld [vmem:[%s3366 + $0x3c] sm:$0xf]
      %v3384 = vunpack.c.l.b16 %v3365
      %v3385 = vpack.c.b16 %v2783, %v3384
      %v3386 = vrot.slane %v3385, 1
      %v3387 = vrot.slane %v2832, 1
      %v3388 = vsel %vm1806, %v3386, %v3387
      %v3389 = vrot.slane %v2833, 1
      %v3390 = vsel %vm1806, %v3387, %v3389
      %v3391 = vrot.slane %v2834, 1
      %v3392 = vsel %vm1806, %v3389, %v3391
      %v3393 = vrot.slane %v2835, 1
      %v3394 = vsel %vm1806, %v3391, %v3393
      %v3395 = vrot.slane %v2836, 1
      %v3396 = vsel %vm1806, %v3393, %v3395
      %v3397 = vrot.slane %v2837, 1
      %v3398 = vsel %vm1806, %v3395, %v3397
      %v3399 = vrot.slane %v2838, 1
      %v3400 = vsel %vm1806, %v3397, %v3399
      %v3401 = vrot.slane %v2839, 1
      %v3402 = vsel %vm1806, %v3399, %v3401
      %v3403 = vrot.slane %v2840, 1
      %v3404 = vsel %vm1806, %v3401, %v3403
      %v3405 = vrot.slane %v2841, 1
      %v3406 = vsel %vm1806, %v3403, %v3405
      %v3407 = vrot.slane %v2842, 1
      %v3408 = vsel %vm1806, %v3405, %v3407
      %v3409 = vrot.slane %v2843, 1
      %v3410 = vsel %vm1806, %v3407, %v3409
      %v3411 = vrot.slane %v2844, 1
      %v3412 = vsel %vm1806, %v3409, %v3411
      %v3413 = vrot.slane %v2845, 1
      %v3414 = vsel %vm1806, %v3411, %v3413
      %v3415 = vrot.slane %v2846, 1
      %v3416 = vsel %vm1806, %v3413, %v3415
      %v3417 = vrot.slane %v2847, 1
      %v3418 = vsel %vm1806, %v3415, %v3417
      %v3419 = vrot.slane %v2848, 1
      %v3420 = vsel %vm1806, %v3417, %v3419
      %v3421 = vrot.slane %v2849, 1
      %v3422 = vsel %vm1806, %v3419, %v3421
      %v3423 = vrot.slane %v2850, 1
      %v3424 = vsel %vm1806, %v3421, %v3423
      %v3425 = vrot.slane %v2851, 1
      %v3426 = vsel %vm1806, %v3423, %v3425
      %v3427 = vrot.slane %v2852, 1
      %v3428 = vsel %vm1806, %v3425, %v3427
      %v3429 = vrot.slane %v2853, 1
      %v3430 = vsel %vm1806, %v3427, %v3429
      %v3431 = vrot.slane %v2854, 1
      %v3432 = vsel %vm1806, %v3429, %v3431
      %v3433 = vrot.slane %v2855, 1
      %v3434 = vsel %vm1806, %v3431, %v3433
      %v3475 = vunpack.c.l.b16 %v3367
      %v3476 = vunpack.c.l.b16 %v3368
      %v3477 = vunpack.c.l.b16 %v3369
      %v3478 = vunpack.c.l.b16 %v3370
      %v3479 = vunpack.c.l.b16 %v3371
      %v3480 = vunpack.c.l.b16 %v3372
      %v3481 = vunpack.c.l.b16 %v3373
      %v3482 = vunpack.c.l.b16 %v3374
      %v3483 = vunpack.c.l.b16 %v3375
      %v3484 = vunpack.c.l.b16 %v3376
      %v3485 = vunpack.c.l.b16 %v3377
      %v3486 = vunpack.c.l.b16 %v3378
      %v3487 = vunpack.c.l.b16 %v3379
      %v3488 = vunpack.c.l.b16 %v3380
      %v3489 = vunpack.c.l.b16 %v3381
      %v3490 = vunpack.c.l.b16 %v3382
      %v3491 = vpack.c.b16 %v3476, %v3475
      %v3492 = vpack.c.b16 %v3478, %v3477
      %v3493 = vpack.c.b16 %v3480, %v3479
      %v3494 = vpack.c.b16 %v3482, %v3481
      %v3495 = vpack.c.b16 %v3484, %v3483
      %v3496 = vpack.c.b16 %v3486, %v3485
      %v3497 = vpack.c.b16 %v3488, %v3487
      %v3498 = vpack.c.b16 %v3490, %v3489
      %3507 = vmatprep.subr.bf16.mxu0 0
      %3508 = vmatpush1.bf16.msra.mxu0 %v3491
      %3509 = vmatprep.subr.bf16.mxu0 0
      %3510 = vmatpush1.bf16.msra.mxu0 %v3492
      %3511 = vmatprep.subr.bf16.mxu0 0
      %3512 = vmatpush1.bf16.msra.mxu0 %v3493
      %3513 = vmatprep.subr.bf16.mxu0 0
      %3514 = vmatpush1.bf16.msra.mxu0 %v3494
      %3515 = vmatprep.subr.bf16.mxu0 0
      %3516 = vmatpush1.bf16.msra.mxu0 %v3495
      %3517 = vmatprep.subr.bf16.mxu0 0
      %3518 = vmatpush1.bf16.msra.mxu0 %v3496
      %3519 = vmatprep.subr.bf16.mxu0 0
      %3520 = vmatpush1.bf16.msra.mxu0 %v3497
      %3521 = vmatprep.subr.bf16.mxu0 0
      %3522 = vmatpush1.bf16.msra.mxu0 %v3498
      %3523 = vmatprep.subr.bf16.mxu0 0
      %3524 = vmatpush1.bf16.msra.mxu0 0
      %3525 = vmatprep.subr.bf16.mxu0 0
      %3526 = vmatpush1.bf16.msra.mxu0 0
      %3527 = vmatprep.subr.bf16.mxu0 0
      %3528 = vmatpush1.bf16.msra.mxu0 0
      %3529 = vmatprep.subr.bf16.mxu0 0
      %3530 = vmatpush1.bf16.msra.mxu0 0
      %3531 = vmatprep.subr.bf16.mxu0 0
      %3532 = vmatpush1.bf16.msra.mxu0 0
      %3533 = vmatprep.subr.bf16.mxu0 0
      %3534 = vmatpush1.bf16.msra.mxu0 0
      %3535 = vmatprep.subr.bf16.mxu0 0
      %3536 = vmatpush1.bf16.msra.mxu0 0
      %3537 = vmatprep.subr.bf16.mxu0 0
      %3538 = vmatpush1.bf16.msra.mxu0 0
      %3539 = vmatprep.mubr.bf16.mxu0 0
      %3540 = vmatmul.mubr.bf16.gmra.mrb[0].mxu0 %v3388
      %v3541 = vpop.f32.mrb[0].mxu0
      %v3542 = vadd.f32 0.0, %v3541
      %v3543 = vpop.f32.mrb[0].mxu0
      %v3544 = vpop.f32.mrb[0].mxu0
      %v3545 = vadd.f32 0.0, %v3544
      %v3546 = vpop.f32.mrb[0].mxu0
      %3547 = vmatprep.mubr.bf16.mxu0 0
      %3548 = vmatmul.mubr.bf16.gmra.mrb[0].mxu0 %v3390
      %v3549 = vpop.f32.mrb[0].mxu0
      %v3550 = vpop.f32.mrb[0].mxu0
      %v3551 = vpop.f32.mrb[0].mxu0
      %v3552 = vadd.f32 0.0, %v3551
      %v3553 = vpop.f32.mrb[0].mxu0
      %3554 = vmatprep.mubr.bf16.mxu0 0
      %3555 = vmatmul.mubr.bf16.gmra.mrb[0].mxu0 %v3392
      %v3556 = vpop.f32.mrb[0].mxu0
      %v3557 = vadd.f32 0.0, %v3556
      %v3558 = vpop.f32.mrb[0].mxu0
      %v3559 = vpop.f32.mrb[0].mxu0
      %v3560 = vpop.f32.mrb[0].mxu0
      %3561 = vmatprep.mubr.bf16.mxu0 0
      %3562 = vmatmul.mubr.bf16.gmra.mrb[0].mxu0 %v3394
      %v3563 = vpop.f32.mrb[0].mxu0
      %v3564 = vadd.f32 0.0, %v3563
      %v3565 = vpop.f32.mrb[0].mxu0
      %v3566 = vpop.f32.mrb[0].mxu0
      %v3567 = vadd.f32 0.0, %v3566
      %v3568 = vpop.f32.mrb[0].mxu0
      %3569 = vmatprep.mubr.bf16.mxu0 0
      %3570 = vmatmul.mubr.bf16.gmra.mrb[0].mxu0 %v3396
      %v3571 = vpop.f32.mrb[0].mxu0
      %v3572 = vpop.f32.mrb[0].mxu0
      %v3573 = vpop.f32.mrb[0].mxu0
      %v3574 = vadd.f32 0.0, %v3573
      %v3575 = vpop.f32.mrb[0].mxu0
      %3576 = vmatprep.mubr.bf16.mxu0 0
      %3577 = vmatmul.mubr.bf16.gmra.mrb[0].mxu0 %v3398
      %v3578 = vpop.f32.mrb[0].mxu0
      %v3579 = vadd.f32 0.0, %v3578
      %v3580 = vpop.f32.mrb[0].mxu0
      %v3581 = vpop.f32.mrb[0].mxu0
      %v3582 = vpop.f32.mrb[0].mxu0
      %3583 = vmatprep.mubr.bf16.mxu0 0
      %3584 = vmatmul.mubr.bf16.gmra.mrb[0].mxu0 %v3400
      %v3585 = vpop.f32.mrb[0].mxu0
      %v3586 = vadd.f32 0.0, %v3585
      %v3587 = vpop.f32.mrb[0].mxu0
      %v3588 = vpop.f32.mrb[0].mxu0
      %v3589 = vadd.f32 0.0, %v3588
      %v3590 = vpop.f32.mrb[0].mxu0
      %3591 = vmatprep.mubr.bf16.mxu0 0
      %3592 = vmatmul.mubr.bf16.gmra.mrb[0].mxu0 %v3402
      %v3593 = vpop.f32.mrb[0].mxu0
      %v3594 = vpop.f32.mrb[0].mxu0
      %v3595 = vpop.f32.mrb[0].mxu0
      %v3596 = vadd.f32 0.0, %v3595
      %v3597 = vpop.f32.mrb[0].mxu0
      %3598 = vmatprep.mubr.bf16.mxu0 0
      %3599 = vmatmul.mubr.bf16.gmra.mrb[0].mxu0 %v3404
      %v3600 = vpop.f32.mrb[0].mxu0
      %v3601 = vadd.f32 0.0, %v3600
      %v3602 = vpop.f32.mrb[0].mxu0
      %v3603 = vpop.f32.mrb[0].mxu0
      %v3604 = vpop.f32.mrb[0].mxu0
      %3605 = vmatprep.mubr.bf16.mxu0 0
      %3606 = vmatmul.mubr.bf16.gmra.mrb[0].mxu0 %v3406
      %v3607 = vpop.f32.mrb[0].mxu0
      %v3608 = vadd.f32 0.0, %v3607
      %v3609 = vpop.f32.mrb[0].mxu0
      %v3610 = vpop.f32.mrb[0].mxu0
      %v3611 = vadd.f32 0.0, %v3610
      %v3612 = vpop.f32.mrb[0].mxu0
      %3613 = vmatprep.mubr.bf16.mxu0 0
      %3614 = vmatmul.mubr.bf16.gmra.mrb[0].mxu0 %v3408
      %v3615 = vpop.f32.mrb[0].mxu0
      %v3616 = vpop.f32.mrb[0].mxu0
      %v3617 = vpop.f32.mrb[0].mxu0
      %v3618 = vadd.f32 0.0, %v3617
      %v3619 = vpop.f32.mrb[0].mxu0
      %3620 = vmatprep.mubr.bf16.mxu0 0
      %3621 = vmatmul.mubr.bf16.gmra.mrb[0].mxu0 %v3410
      %v3622 = vpop.f32.mrb[0].mxu0
      %v3623 = vadd.f32 0.0, %v3622
      %v3624 = vpop.f32.mrb[0].mxu0
      %v3625 = vpop.f32.mrb[0].mxu0
      %v3626 = vpop.f32.mrb[0].mxu0
      %3627 = vmatprep.mubr.bf16.mxu0 0
      %3628 = vmatmul.mubr.bf16.gmra.mrb[0].mxu0 %v3412
      %v3629 = vpop.f32.mrb[0].mxu0
      %v3630 = vadd.f32 0.0, %v3629
      %v3631 = vpop.f32.mrb[0].mxu0
      %v3632 = vpop.f32.mrb[0].mxu0
      %v3633 = vadd.f32 0.0, %v3632
      %v3634 = vpop.f32.mrb[0].mxu0
      %3635 = vmatprep.mubr.bf16.mxu0 0
      %3636 = vmatmul.mubr.bf16.gmra.mrb[0].mxu0 %v3414
      %v3637 = vpop.f32.mrb[0].mxu0
      %v3638 = vpop.f32.mrb[0].mxu0
      %v3639 = vpop.f32.mrb[0].mxu0
      %v3640 = vadd.f32 0.0, %v3639
      %v3641 = vpop.f32.mrb[0].mxu0
      %3642 = vmatprep.mubr.bf16.mxu0 0
      %3643 = vmatmul.mubr.bf16.gmra.mrb[0].mxu0 %v3416
      %v3644 = vpop.f32.mrb[0].mxu0
      %v3645 = vadd.f32 0.0, %v3644
      %v3646 = vpop.f32.mrb[0].mxu0
      %v3647 = vpop.f32.mrb[0].mxu0
      %v3648 = vpop.f32.mrb[0].mxu0
      %3649 = vmatprep.mubr.bf16.mxu0 0
      %3650 = vmatmul.mubr.bf16.gmra.mrb[0].mxu0 %v3418
      %v3651 = vpop.f32.mrb[0].mxu0
      %v3652 = vadd.f32 0.0, %v3651
      %v3653 = vpop.f32.mrb[0].mxu0
      %v3654 = vpop.f32.mrb[0].mxu0
      %v3655 = vadd.f32 0.0, %v3654
      %v3656 = vpop.f32.mrb[0].mxu0
      %3657 = vmatprep.mubr.bf16.mxu0 0
      %3658 = vmatmul.mubr.bf16.gmra.mrb[0].mxu0 %v3420
      %v3659 = vpop.f32.mrb[0].mxu0
      %v3660 = vpop.f32.mrb[0].mxu0
      %v3661 = vpop.f32.mrb[0].mxu0
      %v3662 = vadd.f32 0.0, %v3661
      %v3663 = vpop.f32.mrb[0].mxu0
      %3664 = vmatprep.mubr.bf16.mxu0 0
      %3665 = vmatmul.mubr.bf16.gmra.mrb[0].mxu0 %v3422
      %v3666 = vpop.f32.mrb[0].mxu0
      %v3667 = vadd.f32 0.0, %v3666
      %v3668 = vpop.f32.mrb[0].mxu0
      %v3669 = vpop.f32.mrb[0].mxu0
      %v3670 = vpop.f32.mrb[0].mxu0
      %3671 = vmatprep.mubr.bf16.mxu0 0
      %3672 = vmatmul.mubr.bf16.gmra.mrb[0].mxu0 %v3424
      %v3673 = vpop.f32.mrb[0].mxu0
      %v3674 = vadd.f32 0.0, %v3673
      %v3675 = vpop.f32.mrb[0].mxu0
      %v3676 = vpop.f32.mrb[0].mxu0
      %v3677 = vadd.f32 0.0, %v3676
      %v3678 = vpop.f32.mrb[0].mxu0
      %3679 = vmatprep.mubr.bf16.mxu0 0
      %3680 = vmatmul.mubr.bf16.gmra.mrb[0].mxu0 %v3426
      %v3681 = vpop.f32.mrb[0].mxu0
      %v3682 = vpop.f32.mrb[0].mxu0
      %v3683 = vpop.f32.mrb[0].mxu0
      %v3684 = vadd.f32 0.0, %v3683
      %v3685 = vpop.f32.mrb[0].mxu0
      %3686 = vmatprep.mubr.bf16.mxu0 0
      %3687 = vmatmul.mubr.bf16.gmra.mrb[0].mxu0 %v3428
      %v3688 = vpop.f32.mrb[0].mxu0
      %v3689 = vadd.f32 0.0, %v3688
      %v3690 = vpop.f32.mrb[0].mxu0
      %v3691 = vpop.f32.mrb[0].mxu0
      %v3692 = vpop.f32.mrb[0].mxu0
      %3693 = vmatprep.mubr.bf16.mxu0 0
      %3694 = vmatmul.mubr.bf16.gmra.mrb[0].mxu0 %v3430
      %v3695 = vpop.f32.mrb[0].mxu0
      %v3696 = vadd.f32 0.0, %v3695
      %v3697 = vpop.f32.mrb[0].mxu0
      %v3698 = vpop.f32.mrb[0].mxu0
      %v3699 = vadd.f32 0.0, %v3698
      %v3700 = vpop.f32.mrb[0].mxu0
      %3701 = vmatprep.mubr.bf16.mxu0 0
      %3702 = vmatmul.mubr.bf16.gmra.mrb[0].mxu0 %v3432
      %v3703 = vpop.f32.mrb[0].mxu0
      %v3704 = vpop.f32.mrb[0].mxu0
      %v3705 = vpop.f32.mrb[0].mxu0
      %v3706 = vadd.f32 0.0, %v3705
      %v3707 = vpop.f32.mrb[0].mxu0
      %3708 = vmatprep.mubr.bf16.mxu0 0
      %3709 = vmatmul.mubr.bf16.gmra.mrb[0].mxu0 %v3434
      %v3710 = vpop.f32.mrb[0].mxu0
      %v3711 = vadd.f32 0.0, %v3710
      %v3712 = vpop.f32.mrb[0].mxu0
      %v3713 = vpop.f32.mrb[0].mxu0
      %v3714 = vpop.f32.mrb[0].mxu0
      %3715 = vdwg.mxu0
      %v3716 = vadd.f32 %v3333, %v3542
      %v3717 = vadd.f32 %v3334, %v3545
      %v3718 = vadd.f32 %v3335, %v3552
      %v3719 = vadd.f32 %v3336, %v3557
      %v3720 = vadd.f32 %v3337, %v3564
      %v3721 = vadd.f32 %v3338, %v3567
      %v3722 = vadd.f32 %v3339, %v3574
      %v3723 = vadd.f32 %v3340, %v3579
      %v3724 = vadd.f32 %v3341, %v3586
      %v3725 = vadd.f32 %v3342, %v3589
      %v3726 = vadd.f32 %v3343, %v3596
      %v3727 = vadd.f32 %v3344, %v3601
      %v3728 = vadd.f32 %v3345, %v3608
      %v3729 = vadd.f32 %v3346, %v3611
      %v3730 = vadd.f32 %v3347, %v3618
      %v3731 = vadd.f32 %v3348, %v3623
      %v3732 = vadd.f32 %v3349, %v3630
      %v3733 = vadd.f32 %v3350, %v3633
      %v3734 = vadd.f32 %v3351, %v3640
      %v3735 = vadd.f32 %v3352, %v3645
      %v3736 = vadd.f32 %v3353, %v3652
      %v3737 = vadd.f32 %v3354, %v3655
      %v3738 = vadd.f32 %v3355, %v3662
      %v3739 = vadd.f32 %v3356, %v3667
      %v3740 = vadd.f32 %v3357, %v3674
      %v3741 = vadd.f32 %v3358, %v3677
      %v3742 = vadd.f32 %v3359, %v3684
      %v3743 = vadd.f32 %v3360, %v3689
      %v3744 = vadd.f32 %v3361, %v3696
      %v3745 = vadd.f32 %v3362, %v3699
      %v3746 = vadd.f32 %v3363, %v3706
      %v3747 = vadd.f32 %v3364, %v3711
      %v3748 = vld [vmem:[#allocation2 + $0x18] sm:$0xf]
      %v3749 = vld [vmem:[#allocation2 + $0x1c] sm:$0xf]
      %v3750 = vld [vmem:[#allocation2 + $0x20] sm:$0xf]
      %v3751 = vld [vmem:[#allocation2 + $0x24] sm:$0xf]
      %v3752 = vld [vmem:[#allocation2 + $0x28] sm:$0xf]
      %v3753 = vld [vmem:[#allocation2 + $0x2c] sm:$0xf]
      %v3754 = vld [vmem:[#allocation2 + $0x30] sm:$0xf]
      %v3755 = vld [vmem:[#allocation2 + $0x34] sm:$0xf]
      %v3756 = vld [vmem:[#allocation2 + $0x38] sm:$0xf]
      %v3757 = vld [vmem:[#allocation2 + $0x3c] sm:$0xf]
      %v3758 = vld [vmem:[#allocation2 + $0x40] sm:$0xf]
      %v3759 = vld [vmem:[#allocation2 + $0x44] sm:$0xf]
      %v3760 = vld [vmem:[#allocation2 + $0x48] sm:$0xf]
      %v3761 = vld [vmem:[#allocation2 + $0x4c] sm:$0xf]
      %v3762 = vld [vmem:[#allocation2 + $0x50] sm:$0xf]
      %v3763 = vld [vmem:[#allocation2 + $0x54] sm:$0xf]
      %v3764 = vld [vmem:[#allocation2 + $0x58] sm:$0xf]
      %v3765 = vld [vmem:[#allocation2 + $0x5c] sm:$0xf]
      %v3766 = vld [vmem:[#allocation2 + $0x60] sm:$0xf]
      %v3767 = vld [vmem:[#allocation2 + $0x64] sm:$0xf]
      %v3768 = vld [vmem:[#allocation2 + $0x68] sm:$0xf]
      %v3769 = vld [vmem:[#allocation2 + $0x6c] sm:$0xf]
      %v3770 = vld [vmem:[#allocation2 + $0x70] sm:$0xf]
      %v3771 = vld [vmem:[#allocation2 + $0x74] sm:$0xf]
      %v3772 = vld [vmem:[#allocation2 + $0x78] sm:$0xf]
      %v3773 = vld [vmem:[#allocation2 + $0x7c] sm:$0xf]
      %v3774 = vld [vmem:[#allocation2 + $0x80] sm:$0xf]
      %v3775 = vld [vmem:[#allocation2 + $0x84] sm:$0xf]
      %v3776 = vld [vmem:[#allocation2 + $0x88] sm:$0xf]
      %v3777 = vld [vmem:[#allocation2 + $0x8c] sm:$0xf]
      %v3778 = vld [vmem:[#allocation2 + $0x90] sm:$0xf]
      %v3779 = vld [vmem:[#allocation2 + $0x94] sm:$0xf]
      %v3780 = vld [vmem:[#allocation2 + $0x98] sm:$0xf]
      %v3781 = vld [vmem:[#allocation2 + $0x9c] sm:$0xf]
      %v3782 = vld [vmem:[#allocation2 + $0xa0] sm:$0xf]
      %v3783 = vld [vmem:[#allocation2 + $0xa4] sm:$0xf]
      %v3784 = vld [vmem:[#allocation2 + $0xa8] sm:$0xf]
      %v3785 = vld [vmem:[#allocation2 + $0xac] sm:$0xf]
      %v3786 = vld [vmem:[#allocation2 + $0xb0] sm:$0xf]
      %v3787 = vld [vmem:[#allocation2 + $0xb4] sm:$0xf]
      %v3788 = vld [vmem:[#allocation2 + $0xb8] sm:$0xf]
      %v3789 = vld [vmem:[#allocation2 + $0xbc] sm:$0xf]
      %v3790 = vld [vmem:[#allocation2 + $0xc0] sm:$0xf]
      %v3791 = vld [vmem:[#allocation2 + $0xc4] sm:$0xf]
      %v3792 = vld [vmem:[#allocation2 + $0xc8] sm:$0xf]
      %v3793 = vld [vmem:[#allocation2 + $0xcc] sm:$0xf]
      %v3794 = vld [vmem:[#allocation2 + $0xd0] sm:$0xf]
      %v3795 = vld [vmem:[#allocation2 + $0xd4] sm:$0xf]
      %s3796 = scalar_lea.vmem %s3, 384
      %v3797 = vld [vmem:[%s3796] sm:$0xf]
      %v3798 = vld [vmem:[%s3796 + $0x4] sm:$0xf]
      %v3799 = vld [vmem:[%s3796 + $0x8] sm:$0xf]
      %v3800 = vld [vmem:[%s3796 + $0xc] sm:$0xf]
      %v3801 = vld [vmem:[%s3796 + $0x10] sm:$0xf]
      %v3802 = vld [vmem:[%s3796 + $0x14] sm:$0xf]
      %v3803 = vld [vmem:[%s3796 + $0x18] sm:$0xf]
      %v3804 = vld [vmem:[%s3796 + $0x1c] sm:$0xf]
      %v3805 = vld [vmem:[%s3796 + $0x20] sm:$0xf]
      %v3806 = vld [vmem:[%s3796 + $0x24] sm:$0xf]
      %v3807 = vld [vmem:[%s3796 + $0x28] sm:$0xf]
      %v3808 = vld [vmem:[%s3796 + $0x2c] sm:$0xf]
      %v3809 = vld [vmem:[%s3796 + $0x30] sm:$0xf]
      %v3810 = vld [vmem:[%s3796 + $0x34] sm:$0xf]
      %v3811 = vld [vmem:[%s3796 + $0x38] sm:$0xf]
      %v3812 = vld [vmem:[%s3796 + $0x3c] sm:$0xf]
      %v3861 = vunpack.c.l.b16 %v3748
      %v3862 = vunpack.c.l.b16 %v3749
      %v3863 = vunpack.c.l.b16 %v3750
      %v3864 = vunpack.c.l.b16 %v3751
      %v3865 = vunpack.c.l.b16 %v3752
      %v3866 = vunpack.c.l.b16 %v3753
      %v3867 = vunpack.c.l.b16 %v3754
      %v3868 = vunpack.c.l.b16 %v3755
      %v3869 = vunpack.c.l.b16 %v3756
      %v3870 = vunpack.c.l.b16 %v3757
      %v3871 = vunpack.c.l.b16 %v3758
      %v3872 = vunpack.c.l.b16 %v3759
      %v3873 = vunpack.c.l.b16 %v3760
      %v3874 = vunpack.c.l.b16 %v3761
      %v3875 = vunpack.c.l.b16 %v3762
      %v3876 = vunpack.c.l.b16 %v3763
      %v3877 = vunpack.c.l.b16 %v3764
      %v3878 = vunpack.c.l.b16 %v3765
      %v3879 = vunpack.c.l.b16 %v3766
      %v3880 = vunpack.c.l.b16 %v3767
      %v3881 = vunpack.c.l.b16 %v3768
      %v3882 = vunpack.c.l.b16 %v3769
      %v3883 = vunpack.c.l.b16 %v3770
      %v3884 = vunpack.c.l.b16 %v3771
      %v3885 = vunpack.c.l.b16 %v3772
      %v3886 = vunpack.c.l.b16 %v3773
      %v3887 = vunpack.c.l.b16 %v3774
      %v3888 = vunpack.c.l.b16 %v3775
      %v3889 = vunpack.c.l.b16 %v3776
      %v3890 = vunpack.c.l.b16 %v3777
      %v3891 = vunpack.c.l.b16 %v3778
      %v3892 = vunpack.c.l.b16 %v3779
      %v3893 = vunpack.c.l.b16 %v3780
      %v3894 = vunpack.c.l.b16 %v3781
      %v3895 = vunpack.c.l.b16 %v3782
      %v3896 = vunpack.c.l.b16 %v3783
      %v3897 = vunpack.c.l.b16 %v3784
      %v3898 = vunpack.c.l.b16 %v3785
      %v3899 = vunpack.c.l.b16 %v3786
      %v3900 = vunpack.c.l.b16 %v3787
      %v3901 = vunpack.c.l.b16 %v3788
      %v3902 = vunpack.c.l.b16 %v3789
      %v3903 = vunpack.c.l.b16 %v3790
      %v3904 = vunpack.c.l.b16 %v3791
      %v3905 = vunpack.c.l.b16 %v3792
      %v3906 = vunpack.c.l.b16 %v3793
      %v3907 = vunpack.c.l.b16 %v3794
      %v3908 = vunpack.c.l.b16 %v3795
      %v3909 = vpack.c.b16 %v3862, %v3861
      %v3910 = vpack.c.b16 %v3864, %v3863
      %v3911 = vpack.c.b16 %v3866, %v3865
      %v3912 = vpack.c.b16 %v3868, %v3867
      %v3913 = vpack.c.b16 %v3870, %v3869
      %v3914 = vpack.c.b16 %v3872, %v3871
      %v3915 = vpack.c.b16 %v3874, %v3873
      %v3916 = vpack.c.b16 %v3876, %v3875
      %v3917 = vpack.c.b16 %v3878, %v3877
      %v3918 = vpack.c.b16 %v3880, %v3879
      %v3919 = vpack.c.b16 %v3882, %v3881
      %v3920 = vpack.c.b16 %v3884, %v3883
      %v3921 = vpack.c.b16 %v3886, %v3885
      %v3922 = vpack.c.b16 %v3888, %v3887
      %v3923 = vpack.c.b16 %v3890, %v3889
      %v3924 = vpack.c.b16 %v3892, %v3891
      %v3925 = vpack.c.b16 %v3894, %v3893
      %v3926 = vpack.c.b16 %v3896, %v3895
      %v3927 = vpack.c.b16 %v3898, %v3897
      %v3928 = vpack.c.b16 %v3900, %v3899
      %v3929 = vpack.c.b16 %v3902, %v3901
      %v3930 = vpack.c.b16 %v3904, %v3903
      %v3931 = vpack.c.b16 %v3906, %v3905
      %v3932 = vpack.c.b16 %v3908, %v3907
      %v3973 = vunpack.c.l.b16 %v3797
      %v3974 = vunpack.c.l.b16 %v3798
      %v3975 = vunpack.c.l.b16 %v3799
      %v3976 = vunpack.c.l.b16 %v3800
      %v3977 = vunpack.c.l.b16 %v3801
      %v3978 = vunpack.c.l.b16 %v3802
      %v3979 = vunpack.c.l.b16 %v3803
      %v3980 = vunpack.c.l.b16 %v3804
      %v3981 = vunpack.c.l.b16 %v3805
      %v3982 = vunpack.c.l.b16 %v3806
      %v3983 = vunpack.c.l.b16 %v3807
      %v3984 = vunpack.c.l.b16 %v3808
      %v3985 = vunpack.c.l.b16 %v3809
      %v3986 = vunpack.c.l.b16 %v3810
      %v3987 = vunpack.c.l.b16 %v3811
      %v3988 = vunpack.c.l.b16 %v3812
      %v3989 = vpack.c.b16 %v3974, %v3973
      %v3990 = vpack.c.b16 %v3976, %v3975
      %v3991 = vpack.c.b16 %v3978, %v3977
      %v3992 = vpack.c.b16 %v3980, %v3979
      %v3993 = vpack.c.b16 %v3982, %v3981
      %v3994 = vpack.c.b16 %v3984, %v3983
      %v3995 = vpack.c.b16 %v3986, %v3985
      %v3996 = vpack.c.b16 %v3988, %v3987
      %4005 = vmatprep.subr.bf16.mxu0 0
      %4006 = vmatpush1.bf16.msra.mxu0 %v3989
      %4007 = vmatprep.subr.bf16.mxu0 0
      %4008 = vmatpush1.bf16.msra.mxu0 %v3990
      %4009 = vmatprep.subr.bf16.mxu0 0
      %4010 = vmatpush1.bf16.msra.mxu0 %v3991
      %4011 = vmatprep.subr.bf16.mxu0 0
      %4012 = vmatpush1.bf16.msra.mxu0 %v3992
      %4013 = vmatprep.subr.bf16.mxu0 0
      %4014 = vmatpush1.bf16.msra.mxu0 %v3993
      %4015 = vmatprep.subr.bf16.mxu0 0
      %4016 = vmatpush1.bf16.msra.mxu0 %v3994
      %4017 = vmatprep.subr.bf16.mxu0 0
      %4018 = vmatpush1.bf16.msra.mxu0 %v3995
      %4019 = vmatprep.subr.bf16.mxu0 0
      %4020 = vmatpush1.bf16.msra.mxu0 %v3996
      %4021 = vmatprep.subr.bf16.mxu0 0
      %4022 = vmatpush1.bf16.msra.mxu0 0
      %4023 = vmatprep.subr.bf16.mxu0 0
      %4024 = vmatpush1.bf16.msra.mxu0 0
      %4025 = vmatprep.subr.bf16.mxu0 0
      %4026 = vmatpush1.bf16.msra.mxu0 0
      %4027 = vmatprep.subr.bf16.mxu0 0
      %4028 = vmatpush1.bf16.msra.mxu0 0
      %4029 = vmatprep.subr.bf16.mxu0 0
      %4030 = vmatpush1.bf16.msra.mxu0 0
      %4031 = vmatprep.subr.bf16.mxu0 0
      %4032 = vmatpush1.bf16.msra.mxu0 0
      %4033 = vmatprep.subr.bf16.mxu0 0
      %4034 = vmatpush1.bf16.msra.mxu0 0
      %4035 = vmatprep.subr.bf16.mxu0 0
      %4036 = vmatpush1.bf16.msra.mxu0 0
      %4037 = vmatprep.mubr.bf16.mxu0 0
      %4038 = vmatmul.mubr.bf16.gmra.mrb[0].mxu0 %v3909
      %v4039 = vpop.f32.mrb[0].mxu0
      %v4040 = vadd.f32 0.0, %v4039
      %v4041 = vpop.f32.mrb[0].mxu0
      %v4042 = vpop.f32.mrb[0].mxu0
      %v4043 = vadd.f32 0.0, %v4042
      %v4044 = vpop.f32.mrb[0].mxu0
      %4045 = vmatprep.mubr.bf16.mxu0 0
      %4046 = vmatmul.mubr.bf16.gmra.mrb[0].mxu0 %v3910
      %v4047 = vpop.f32.mrb[0].mxu0
      %v4048 = vpop.f32.mrb[0].mxu0
      %v4049 = vpop.f32.mrb[0].mxu0
      %v4050 = vadd.f32 0.0, %v4049
      %v4051 = vpop.f32.mrb[0].mxu0
      %4052 = vmatprep.mubr.bf16.mxu0 0
      %4053 = vmatmul.mubr.bf16.gmra.mrb[0].mxu0 %v3911
      %v4054 = vpop.f32.mrb[0].mxu0
      %v4055 = vadd.f32 0.0, %v4054
      %v4056 = vpop.f32.mrb[0].mxu0
      %v4057 = vpop.f32.mrb[0].mxu0
      %v4058 = vpop.f32.mrb[0].mxu0
      %4059 = vmatprep.mubr.bf16.mxu0 0
      %4060 = vmatmul.mubr.bf16.gmra.mrb[0].mxu0 %v3912
      %v4061 = vpop.f32.mrb[0].mxu0
      %v4062 = vadd.f32 0.0, %v4061
      %v4063 = vpop.f32.mrb[0].mxu0
      %v4064 = vpop.f32.mrb[0].mxu0
      %v4065 = vadd.f32 0.0, %v4064
      %v4066 = vpop.f32.mrb[0].mxu0
      %4067 = vmatprep.mubr.bf16.mxu0 0
      %4068 = vmatmul.mubr.bf16.gmra.mrb[0].mxu0 %v3913
      %v4069 = vpop.f32.mrb[0].mxu0
      %v4070 = vpop.f32.mrb[0].mxu0
      %v4071 = vpop.f32.mrb[0].mxu0
      %v4072 = vadd.f32 0.0, %v4071
      %v4073 = vpop.f32.mrb[0].mxu0
      %4074 = vmatprep.mubr.bf16.mxu0 0
      %4075 = vmatmul.mubr.bf16.gmra.mrb[0].mxu0 %v3914
      %v4076 = vpop.f32.mrb[0].mxu0
      %v4077 = vadd.f32 0.0, %v4076
      %v4078 = vpop.f32.mrb[0].mxu0
      %v4079 = vpop.f32.mrb[0].mxu0
      %v4080 = vpop.f32.mrb[0].mxu0
      %4081 = vmatprep.mubr.bf16.mxu0 0
      %4082 = vmatmul.mubr.bf16.gmra.mrb[0].mxu0 %v3915
      %v4083 = vpop.f32.mrb[0].mxu0
      %v4084 = vadd.f32 0.0, %v4083
      %v4085 = vpop.f32.mrb[0].mxu0
      %v4086 = vpop.f32.mrb[0].mxu0
      %v4087 = vadd.f32 0.0, %v4086
      %v4088 = vpop.f32.mrb[0].mxu0
      %4089 = vmatprep.mubr.bf16.mxu0 0
      %4090 = vmatmul.mubr.bf16.gmra.mrb[0].mxu0 %v3916
      %v4091 = vpop.f32.mrb[0].mxu0
      %v4092 = vpop.f32.mrb[0].mxu0
      %v4093 = vpop.f32.mrb[0].mxu0
      %v4094 = vadd.f32 0.0, %v4093
      %v4095 = vpop.f32.mrb[0].mxu0
      %4096 = vmatprep.mubr.bf16.mxu0 0
      %4097 = vmatmul.mubr.bf16.gmra.mrb[0].mxu0 %v3917
      %v4098 = vpop.f32.mrb[0].mxu0
      %v4099 = vadd.f32 0.0, %v4098
      %v4100 = vpop.f32.mrb[0].mxu0
      %v4101 = vpop.f32.mrb[0].mxu0
      %v4102 = vpop.f32.mrb[0].mxu0
      %4103 = vmatprep.mubr.bf16.mxu0 0
      %4104 = vmatmul.mubr.bf16.gmra.mrb[0].mxu0 %v3918
      %v4105 = vpop.f32.mrb[0].mxu0
      %v4106 = vadd.f32 0.0, %v4105
      %v4107 = vpop.f32.mrb[0].mxu0
      %v4108 = vpop.f32.mrb[0].mxu0
      %v4109 = vadd.f32 0.0, %v4108
      %v4110 = vpop.f32.mrb[0].mxu0
      %4111 = vmatprep.mubr.bf16.mxu0 0
      %4112 = vmatmul.mubr.bf16.gmra.mrb[0].mxu0 %v3919
      %v4113 = vpop.f32.mrb[0].mxu0
      %v4114 = vpop.f32.mrb[0].mxu0
      %v4115 = vpop.f32.mrb[0].mxu0
      %v4116 = vadd.f32 0.0, %v4115
      %v4117 = vpop.f32.mrb[0].mxu0
      %4118 = vmatprep.mubr.bf16.mxu0 0
      %4119 = vmatmul.mubr.bf16.gmra.mrb[0].mxu0 %v3920
      %v4120 = vpop.f32.mrb[0].mxu0
      %v4121 = vadd.f32 0.0, %v4120
      %v4122 = vpop.f32.mrb[0].mxu0
      %v4123 = vpop.f32.mrb[0].mxu0
      %v4124 = vpop.f32.mrb[0].mxu0
      %4125 = vmatprep.mubr.bf16.mxu0 0
      %4126 = vmatmul.mubr.bf16.gmra.mrb[0].mxu0 %v3921
      %v4127 = vpop.f32.mrb[0].mxu0
      %v4128 = vadd.f32 0.0, %v4127
      %v4129 = vpop.f32.mrb[0].mxu0
      %v4130 = vpop.f32.mrb[0].mxu0
      %v4131 = vadd.f32 0.0, %v4130
      %v4132 = vpop.f32.mrb[0].mxu0
      %4133 = vmatprep.mubr.bf16.mxu0 0
      %4134 = vmatmul.mubr.bf16.gmra.mrb[0].mxu0 %v3922
      %v4135 = vpop.f32.mrb[0].mxu0
      %v4136 = vpop.f32.mrb[0].mxu0
      %v4137 = vpop.f32.mrb[0].mxu0
      %v4138 = vadd.f32 0.0, %v4137
      %v4139 = vpop.f32.mrb[0].mxu0
      %4140 = vmatprep.mubr.bf16.mxu0 0
      %4141 = vmatmul.mubr.bf16.gmra.mrb[0].mxu0 %v3923
      %v4142 = vpop.f32.mrb[0].mxu0
      %v4143 = vadd.f32 0.0, %v4142
      %v4144 = vpop.f32.mrb[0].mxu0
      %v4145 = vpop.f32.mrb[0].mxu0
      %v4146 = vpop.f32.mrb[0].mxu0
      %4147 = vmatprep.mubr.bf16.mxu0 0
      %4148 = vmatmul.mubr.bf16.gmra.mrb[0].mxu0 %v3924
      %v4149 = vpop.f32.mrb[0].mxu0
      %v4150 = vadd.f32 0.0, %v4149
      %v4151 = vpop.f32.mrb[0].mxu0
      %v4152 = vpop.f32.mrb[0].mxu0
      %v4153 = vadd.f32 0.0, %v4152
      %v4154 = vpop.f32.mrb[0].mxu0
      %4155 = vmatprep.mubr.bf16.mxu0 0
      %4156 = vmatmul.mubr.bf16.gmra.mrb[0].mxu0 %v3925
      %v4157 = vpop.f32.mrb[0].mxu0
      %v4158 = vpop.f32.mrb[0].mxu0
      %v4159 = vpop.f32.mrb[0].mxu0
      %v4160 = vadd.f32 0.0, %v4159
      %v4161 = vpop.f32.mrb[0].mxu0
      %4162 = vmatprep.mubr.bf16.mxu0 0
      %4163 = vmatmul.mubr.bf16.gmra.mrb[0].mxu0 %v3926
      %v4164 = vpop.f32.mrb[0].mxu0
      %v4165 = vadd.f32 0.0, %v4164
      %v4166 = vpop.f32.mrb[0].mxu0
      %v4167 = vpop.f32.mrb[0].mxu0
      %v4168 = vpop.f32.mrb[0].mxu0
      %4169 = vmatprep.mubr.bf16.mxu0 0
      %4170 = vmatmul.mubr.bf16.gmra.mrb[0].mxu0 %v3927
      %v4171 = vpop.f32.mrb[0].mxu0
      %v4172 = vadd.f32 0.0, %v4171
      %v4173 = vpop.f32.mrb[0].mxu0
      %v4174 = vpop.f32.mrb[0].mxu0
      %v4175 = vadd.f32 0.0, %v4174
      %v4176 = vpop.f32.mrb[0].mxu0
      %4177 = vmatprep.mubr.bf16.mxu0 0
      %4178 = vmatmul.mubr.bf16.gmra.mrb[0].mxu0 %v3928
      %v4179 = vpop.f32.mrb[0].mxu0
      %v4180 = vpop.f32.mrb[0].mxu0
      %v4181 = vpop.f32.mrb[0].mxu0
      %v4182 = vadd.f32 0.0, %v4181
      %v4183 = vpop.f32.mrb[0].mxu0
      %4184 = vmatprep.mubr.bf16.mxu0 0
      %4185 = vmatmul.mubr.bf16.gmra.mrb[0].mxu0 %v3929
      %v4186 = vpop.f32.mrb[0].mxu0
      %v4187 = vadd.f32 0.0, %v4186
      %v4188 = vpop.f32.mrb[0].mxu0
      %v4189 = vpop.f32.mrb[0].mxu0
      %v4190 = vpop.f32.mrb[0].mxu0
      %4191 = vmatprep.mubr.bf16.mxu0 0
      %4192 = vmatmul.mubr.bf16.gmra.mrb[0].mxu0 %v3930
      %v4193 = vpop.f32.mrb[0].mxu0
      %v4194 = vadd.f32 0.0, %v4193
      %v4195 = vpop.f32.mrb[0].mxu0
      %v4196 = vpop.f32.mrb[0].mxu0
      %v4197 = vadd.f32 0.0, %v4196
      %v4198 = vpop.f32.mrb[0].mxu0
      %4199 = vmatprep.mubr.bf16.mxu0 0
      %4200 = vmatmul.mubr.bf16.gmra.mrb[0].mxu0 %v3931
      %v4201 = vpop.f32.mrb[0].mxu0
      %v4202 = vpop.f32.mrb[0].mxu0
      %v4203 = vpop.f32.mrb[0].mxu0
      %v4204 = vadd.f32 0.0, %v4203
      %v4205 = vpop.f32.mrb[0].mxu0
      %4206 = vmatprep.mubr.bf16.mxu0 0
      %4207 = vmatmul.mubr.bf16.gmra.mrb[0].mxu0 %v3932
      %v4208 = vpop.f32.mrb[0].mxu0
      %v4209 = vadd.f32 0.0, %v4208
      %v4210 = vpop.f32.mrb[0].mxu0
      %v4211 = vpop.f32.mrb[0].mxu0
      %v4212 = vpop.f32.mrb[0].mxu0
      %4213 = vdwg.mxu0
      %v4214 = vadd.f32 %v3716, %v4040
      %v4215 = vadd.f32 %v3717, %v4043
      %v4216 = vadd.f32 %v3718, %v4050
      %v4217 = vadd.f32 %v3719, %v4055
      %v4218 = vadd.f32 %v3720, %v4062
      %v4219 = vadd.f32 %v3721, %v4065
      %v4220 = vadd.f32 %v3722, %v4072
      %v4221 = vadd.f32 %v3723, %v4077
      %v4222 = vadd.f32 %v3724, %v4084
      %v4223 = vadd.f32 %v3725, %v4087
      %v4224 = vadd.f32 %v3726, %v4094
      %v4225 = vadd.f32 %v3727, %v4099
      %v4226 = vadd.f32 %v3728, %v4106
      %v4227 = vadd.f32 %v3729, %v4109
      %v4228 = vadd.f32 %v3730, %v4116
      %v4229 = vadd.f32 %v3731, %v4121
      %v4230 = vadd.f32 %v3732, %v4128
      %v4231 = vadd.f32 %v3733, %v4131
      %v4232 = vadd.f32 %v3734, %v4138
      %v4233 = vadd.f32 %v3735, %v4143
      %v4234 = vadd.f32 %v3736, %v4150
      %v4235 = vadd.f32 %v3737, %v4153
      %v4236 = vadd.f32 %v3738, %v4160
      %v4237 = vadd.f32 %v3739, %v4165
      %v4238 = vadd.f32 %v3740, %v4172
      %v4239 = vadd.f32 %v3741, %v4175
      %v4240 = vadd.f32 %v3742, %v4182
      %v4241 = vadd.f32 %v3743, %v4187
      %v4242 = vadd.f32 %v3744, %v4194
      %v4243 = vadd.f32 %v3745, %v4197
      %v4244 = vadd.f32 %v3746, %v4204
      %v4245 = vadd.f32 %v3747, %v4209
      %v4246 = vld [vmem:[#allocation2 + $0x18] sm:$0xf]
      %v4247 = vld [vmem:[#allocation2 + $0x1c] sm:$0xf]
      %v4248 = vld [vmem:[#allocation2 + $0x20] sm:$0xf]
      %v4249 = vld [vmem:[#allocation2 + $0x24] sm:$0xf]
      %v4250 = vld [vmem:[#allocation2 + $0x28] sm:$0xf]
      %v4251 = vld [vmem:[#allocation2 + $0x2c] sm:$0xf]
      %v4252 = vld [vmem:[#allocation2 + $0x30] sm:$0xf]
      %v4253 = vld [vmem:[#allocation2 + $0x34] sm:$0xf]
      %v4254 = vld [vmem:[#allocation2 + $0x38] sm:$0xf]
      %v4255 = vld [vmem:[#allocation2 + $0x3c] sm:$0xf]
      %v4256 = vld [vmem:[#allocation2 + $0x40] sm:$0xf]
      %v4257 = vld [vmem:[#allocation2 + $0x44] sm:$0xf]
      %v4258 = vld [vmem:[#allocation2 + $0x48] sm:$0xf]
      %v4259 = vld [vmem:[#allocation2 + $0x4c] sm:$0xf]
      %v4260 = vld [vmem:[#allocation2 + $0x50] sm:$0xf]
      %v4261 = vld [vmem:[#allocation2 + $0x54] sm:$0xf]
      %v4262 = vld [vmem:[#allocation2 + $0x58] sm:$0xf]
      %v4263 = vld [vmem:[#allocation2 + $0x5c] sm:$0xf]
      %v4264 = vld [vmem:[#allocation2 + $0x60] sm:$0xf]
      %v4265 = vld [vmem:[#allocation2 + $0x64] sm:$0xf]
      %v4266 = vld [vmem:[#allocation2 + $0x68] sm:$0xf]
      %v4267 = vld [vmem:[#allocation2 + $0x6c] sm:$0xf]
      %v4268 = vld [vmem:[#allocation2 + $0x70] sm:$0xf]
      %v4269 = vld [vmem:[#allocation2 + $0x74] sm:$0xf]
      %v4270 = vld [vmem:[#allocation2 + $0x78] sm:$0xf]
      %v4271 = vld [vmem:[#allocation2 + $0x7c] sm:$0xf]
      %v4272 = vld [vmem:[#allocation2 + $0x80] sm:$0xf]
      %v4273 = vld [vmem:[#allocation2 + $0x84] sm:$0xf]
      %v4274 = vld [vmem:[#allocation2 + $0x88] sm:$0xf]
      %v4275 = vld [vmem:[#allocation2 + $0x8c] sm:$0xf]
      %v4276 = vld [vmem:[#allocation2 + $0x90] sm:$0xf]
      %v4277 = vld [vmem:[#allocation2 + $0x94] sm:$0xf]
      %v4278 = vld [vmem:[#allocation2 + $0x98] sm:$0xf]
      %v4279 = vld [vmem:[#allocation2 + $0x9c] sm:$0xf]
      %v4280 = vld [vmem:[#allocation2 + $0xa0] sm:$0xf]
      %v4281 = vld [vmem:[#allocation2 + $0xa4] sm:$0xf]
      %v4282 = vld [vmem:[#allocation2 + $0xa8] sm:$0xf]
      %v4283 = vld [vmem:[#allocation2 + $0xac] sm:$0xf]
      %v4284 = vld [vmem:[#allocation2 + $0xb0] sm:$0xf]
      %v4285 = vld [vmem:[#allocation2 + $0xb4] sm:$0xf]
      %v4286 = vld [vmem:[#allocation2 + $0xb8] sm:$0xf]
      %v4287 = vld [vmem:[#allocation2 + $0xbc] sm:$0xf]
      %v4288 = vld [vmem:[#allocation2 + $0xc0] sm:$0xf]
      %v4289 = vld [vmem:[#allocation2 + $0xc4] sm:$0xf]
      %v4290 = vld [vmem:[#allocation2 + $0xc8] sm:$0xf]
      %v4291 = vld [vmem:[#allocation2 + $0xcc] sm:$0xf]
      %v4292 = vld [vmem:[#allocation2 + $0xd0] sm:$0xf]
      %v4293 = vld [vmem:[#allocation2 + $0xd4] sm:$0xf]
      %v4294 = vld [vmem:[#allocation2 + $0xd8] sm:$0x1]
      %s4295 = scalar_lea.vmem %s3, 448
      %v4296 = vld [vmem:[%s4295] sm:$0xf]
      %v4297 = vld [vmem:[%s4295 + $0x4] sm:$0xf]
      %v4298 = vld [vmem:[%s4295 + $0x8] sm:$0xf]
      %v4299 = vld [vmem:[%s4295 + $0xc] sm:$0xf]
      %v4300 = vld [vmem:[%s4295 + $0x10] sm:$0xf]
      %v4301 = vld [vmem:[%s4295 + $0x14] sm:$0xf]
      %v4302 = vld [vmem:[%s4295 + $0x18] sm:$0xf]
      %v4303 = vld [vmem:[%s4295 + $0x1c] sm:$0xf]
      %v4304 = vld [vmem:[%s4295 + $0x20] sm:$0xf]
      %v4305 = vld [vmem:[%s4295 + $0x24] sm:$0xf]
      %v4306 = vld [vmem:[%s4295 + $0x28] sm:$0xf]
      %v4307 = vld [vmem:[%s4295 + $0x2c] sm:$0xf]
      %v4308 = vld [vmem:[%s4295 + $0x30] sm:$0xf]
      %v4309 = vld [vmem:[%s4295 + $0x34] sm:$0xf]
      %v4310 = vld [vmem:[%s4295 + $0x38] sm:$0xf]
      %v4311 = vld [vmem:[%s4295 + $0x3c] sm:$0xf]
      %v4361 = vunpack.c.l.b16 %v4246
      %v4362 = vunpack.c.l.b16 %v4247
      %v4363 = vunpack.c.l.b16 %v4248
      %v4364 = vunpack.c.l.b16 %v4249
      %v4365 = vunpack.c.l.b16 %v4250
      %v4366 = vunpack.c.l.b16 %v4251
      %v4367 = vunpack.c.l.b16 %v4252
      %v4368 = vunpack.c.l.b16 %v4253
      %v4369 = vunpack.c.l.b16 %v4254
      %v4370 = vunpack.c.l.b16 %v4255
      %v4371 = vunpack.c.l.b16 %v4256
      %v4372 = vunpack.c.l.b16 %v4257
      %v4373 = vunpack.c.l.b16 %v4258
      %v4374 = vunpack.c.l.b16 %v4259
      %v4375 = vunpack.c.l.b16 %v4260
      %v4376 = vunpack.c.l.b16 %v4261
      %v4377 = vunpack.c.l.b16 %v4262
      %v4378 = vunpack.c.l.b16 %v4263
      %v4379 = vunpack.c.l.b16 %v4264
      %v4380 = vunpack.c.l.b16 %v4265
      %v4381 = vunpack.c.l.b16 %v4266
      %v4382 = vunpack.c.l.b16 %v4267
      %v4383 = vunpack.c.l.b16 %v4268
      %v4384 = vunpack.c.l.b16 %v4269
      %v4385 = vunpack.c.l.b16 %v4270
      %v4386 = vunpack.c.l.b16 %v4271
      %v4387 = vunpack.c.l.b16 %v4272
      %v4388 = vunpack.c.l.b16 %v4273
      %v4389 = vunpack.c.l.b16 %v4274
      %v4390 = vunpack.c.l.b16 %v4275
      %v4391 = vunpack.c.l.b16 %v4276
      %v4392 = vunpack.c.l.b16 %v4277
      %v4393 = vunpack.c.l.b16 %v4278
      %v4394 = vunpack.c.l.b16 %v4279
      %v4395 = vunpack.c.l.b16 %v4280
      %v4396 = vunpack.c.l.b16 %v4281
      %v4397 = vunpack.c.l.b16 %v4282
      %v4398 = vunpack.c.l.b16 %v4283
      %v4399 = vunpack.c.l.b16 %v4284
      %v4400 = vunpack.c.l.b16 %v4285
      %v4401 = vunpack.c.l.b16 %v4286
      %v4402 = vunpack.c.l.b16 %v4287
      %v4403 = vunpack.c.l.b16 %v4288
      %v4404 = vunpack.c.l.b16 %v4289
      %v4405 = vunpack.c.l.b16 %v4290
      %v4406 = vunpack.c.l.b16 %v4291
      %v4407 = vunpack.c.l.b16 %v4292
      %v4408 = vunpack.c.l.b16 %v4293
      %v4409 = vunpack.c.l.b16 %v4294
      %v4410 = vpack.c.b16 %v4362, %v4361
      %v4411 = vpack.c.b16 %v4364, %v4363
      %v4412 = vpack.c.b16 %v4366, %v4365
      %v4413 = vpack.c.b16 %v4368, %v4367
      %v4414 = vpack.c.b16 %v4370, %v4369
      %v4415 = vpack.c.b16 %v4372, %v4371
      %v4416 = vpack.c.b16 %v4374, %v4373
      %v4417 = vpack.c.b16 %v4376, %v4375
      %v4418 = vpack.c.b16 %v4378, %v4377
      %v4419 = vpack.c.b16 %v4380, %v4379
      %v4420 = vpack.c.b16 %v4382, %v4381
      %v4421 = vpack.c.b16 %v4384, %v4383
      %v4422 = vpack.c.b16 %v4386, %v4385
      %v4423 = vpack.c.b16 %v4388, %v4387
      %v4424 = vpack.c.b16 %v4390, %v4389
      %v4425 = vpack.c.b16 %v4392, %v4391
      %v4426 = vpack.c.b16 %v4394, %v4393
      %v4427 = vpack.c.b16 %v4396, %v4395
      %v4428 = vpack.c.b16 %v4398, %v4397
      %v4429 = vpack.c.b16 %v4400, %v4399
      %v4430 = vpack.c.b16 %v4402, %v4401
      %v4431 = vpack.c.b16 %v4404, %v4403
      %v4432 = vpack.c.b16 %v4406, %v4405
      %v4433 = vpack.c.b16 %v4408, %v4407
      %v4434 = vpack.c.b16 %v4409, %v4409
      %v4436 = vshrl.u32 %v4410, 16
      %v4438 = vshll.u32 %v4410, 16
      %v4440 = vrot.slane %v4438, 1
      %v4441 = vor.u32 %v4436, %v4440
      %v4443 = vshll.u32 %v4411, 16
      %v4445 = vrot.slane %v4443, 1
      %v4446 = vsel %vm1026, %v4441, %v4445
      %v4447 = vshrl.u32 %v4411, 16
      %v4449 = vor.u32 %v4447, %v4445
      %v4451 = vshll.u32 %v4412, 16
      %v4453 = vrot.slane %v4451, 1
      %v4454 = vsel %vm1026, %v4449, %v4453
      %v4455 = vshrl.u32 %v4412, 16
      %v4457 = vor.u32 %v4455, %v4453
      %v4459 = vshll.u32 %v4413, 16
      %v4461 = vrot.slane %v4459, 1
      %v4462 = vsel %vm1026, %v4457, %v4461
      %v4463 = vshrl.u32 %v4413, 16
      %v4465 = vor.u32 %v4463, %v4461
      %v4467 = vshll.u32 %v4414, 16
      %v4469 = vrot.slane %v4467, 1
      %v4470 = vsel %vm1026, %v4465, %v4469
      %v4471 = vshrl.u32 %v4414, 16
      %v4473 = vor.u32 %v4471, %v4469
      %v4475 = vshll.u32 %v4415, 16
      %v4477 = vrot.slane %v4475, 1
      %v4478 = vsel %vm1026, %v4473, %v4477
      %v4479 = vshrl.u32 %v4415, 16
      %v4481 = vor.u32 %v4479, %v4477
      %v4483 = vshll.u32 %v4416, 16
      %v4485 = vrot.slane %v4483, 1
      %v4486 = vsel %vm1026, %v4481, %v4485
      %v4487 = vshrl.u32 %v4416, 16
      %v4489 = vor.u32 %v4487, %v4485
      %v4491 = vshll.u32 %v4417, 16
      %v4493 = vrot.slane %v4491, 1
      %v4494 = vsel %vm1026, %v4489, %v4493
      %v4495 = vshrl.u32 %v4417, 16
      %v4497 = vor.u32 %v4495, %v4493
      %v4499 = vshll.u32 %v4418, 16
      %v4501 = vrot.slane %v4499, 1
      %v4502 = vsel %vm1026, %v4497, %v4501
      %v4503 = vshrl.u32 %v4418, 16
      %v4505 = vor.u32 %v4503, %v4501
      %v4507 = vshll.u32 %v4419, 16
      %v4509 = vrot.slane %v4507, 1
      %v4510 = vsel %vm1026, %v4505, %v4509
      %v4511 = vshrl.u32 %v4419, 16
      %v4513 = vor.u32 %v4511, %v4509
      %v4515 = vshll.u32 %v4420, 16
      %v4517 = vrot.slane %v4515, 1
      %v4518 = vsel %vm1026, %v4513, %v4517
      %v4519 = vshrl.u32 %v4420, 16
      %v4521 = vor.u32 %v4519, %v4517
      %v4523 = vshll.u32 %v4421, 16
      %v4525 = vrot.slane %v4523, 1
      %v4526 = vsel %vm1026, %v4521, %v4525
      %v4527 = vshrl.u32 %v4421, 16
      %v4529 = vor.u32 %v4527, %v4525
      %v4531 = vshll.u32 %v4422, 16
      %v4533 = vrot.slane %v4531, 1
      %v4534 = vsel %vm1026, %v4529, %v4533
      %v4535 = vshrl.u32 %v4422, 16
      %v4537 = vor.u32 %v4535, %v4533
      %v4539 = vshll.u32 %v4423, 16
      %v4541 = vrot.slane %v4539, 1
      %v4542 = vsel %vm1026, %v4537, %v4541
      %v4543 = vshrl.u32 %v4423, 16
      %v4545 = vor.u32 %v4543, %v4541
      %v4547 = vshll.u32 %v4424, 16
      %v4549 = vrot.slane %v4547, 1
      %v4550 = vsel %vm1026, %v4545, %v4549
      %v4551 = vshrl.u32 %v4424, 16
      %v4553 = vor.u32 %v4551, %v4549
      %v4555 = vshll.u32 %v4425, 16
      %v4557 = vrot.slane %v4555, 1
      %v4558 = vsel %vm1026, %v4553, %v4557
      %v4559 = vshrl.u32 %v4425, 16
      %v4561 = vor.u32 %v4559, %v4557
      %v4563 = vshll.u32 %v4426, 16
      %v4565 = vrot.slane %v4563, 1
      %v4566 = vsel %vm1026, %v4561, %v4565
      %v4567 = vshrl.u32 %v4426, 16
      %v4569 = vor.u32 %v4567, %v4565
      %v4571 = vshll.u32 %v4427, 16
      %v4573 = vrot.slane %v4571, 1
      %v4574 = vsel %vm1026, %v4569, %v4573
      %v4575 = vshrl.u32 %v4427, 16
      %v4577 = vor.u32 %v4575, %v4573
      %v4579 = vshll.u32 %v4428, 16
      %v4581 = vrot.slane %v4579, 1
      %v4582 = vsel %vm1026, %v4577, %v4581
      %v4583 = vshrl.u32 %v4428, 16
      %v4585 = vor.u32 %v4583, %v4581
      %v4587 = vshll.u32 %v4429, 16
      %v4589 = vrot.slane %v4587, 1
      %v4590 = vsel %vm1026, %v4585, %v4589
      %v4591 = vshrl.u32 %v4429, 16
      %v4593 = vor.u32 %v4591, %v4589
      %v4595 = vshll.u32 %v4430, 16
      %v4597 = vrot.slane %v4595, 1
      %v4598 = vsel %vm1026, %v4593, %v4597
      %v4599 = vshrl.u32 %v4430, 16
      %v4601 = vor.u32 %v4599, %v4597
      %v4603 = vshll.u32 %v4431, 16
      %v4605 = vrot.slane %v4603, 1
      %v4606 = vsel %vm1026, %v4601, %v4605
      %v4607 = vshrl.u32 %v4431, 16
      %v4609 = vor.u32 %v4607, %v4605
      %v4611 = vshll.u32 %v4432, 16
      %v4613 = vrot.slane %v4611, 1
      %v4614 = vsel %vm1026, %v4609, %v4613
      %v4615 = vshrl.u32 %v4432, 16
      %v4617 = vor.u32 %v4615, %v4613
      %v4619 = vshll.u32 %v4433, 16
      %v4621 = vrot.slane %v4619, 1
      %v4622 = vsel %vm1026, %v4617, %v4621
      %v4623 = vshrl.u32 %v4433, 16
      %v4625 = vor.u32 %v4623, %v4621
      %v4627 = vshll.u32 %v4434, 16
      %v4629 = vrot.slane %v4627, 1
      %v4630 = vsel %vm1026, %v4625, %v4629
      %v4671 = vunpack.c.l.b16 %v4296
      %v4672 = vunpack.c.l.b16 %v4297
      %v4673 = vunpack.c.l.b16 %v4298
      %v4674 = vunpack.c.l.b16 %v4299
      %v4675 = vunpack.c.l.b16 %v4300
      %v4676 = vunpack.c.l.b16 %v4301
      %v4677 = vunpack.c.l.b16 %v4302
      %v4678 = vunpack.c.l.b16 %v4303
      %v4679 = vunpack.c.l.b16 %v4304
      %v4680 = vunpack.c.l.b16 %v4305
      %v4681 = vunpack.c.l.b16 %v4306
      %v4682 = vunpack.c.l.b16 %v4307
      %v4683 = vunpack.c.l.b16 %v4308
      %v4684 = vunpack.c.l.b16 %v4309
      %v4685 = vunpack.c.l.b16 %v4310
      %v4686 = vunpack.c.l.b16 %v4311
      %v4687 = vpack.c.b16 %v4672, %v4671
      %v4688 = vpack.c.b16 %v4674, %v4673
      %v4689 = vpack.c.b16 %v4676, %v4675
      %v4690 = vpack.c.b16 %v4678, %v4677
      %v4691 = vpack.c.b16 %v4680, %v4679
      %v4692 = vpack.c.b16 %v4682, %v4681
      %v4693 = vpack.c.b16 %v4684, %v4683
      %v4694 = vpack.c.b16 %v4686, %v4685
      %4703 = vmatprep.subr.bf16.mxu0 0
      %4704 = vmatpush1.bf16.msra.mxu0 %v4687
      %4705 = vmatprep.subr.bf16.mxu0 0
      %4706 = vmatpush1.bf16.msra.mxu0 %v4688
      %4707 = vmatprep.subr.bf16.mxu0 0
      %4708 = vmatpush1.bf16.msra.mxu0 %v4689
      %4709 = vmatprep.subr.bf16.mxu0 0
      %4710 = vmatpush1.bf16.msra.mxu0 %v4690
      %4711 = vmatprep.subr.bf16.mxu0 0
      %4712 = vmatpush1.bf16.msra.mxu0 %v4691
      %4713 = vmatprep.subr.bf16.mxu0 0
      %4714 = vmatpush1.bf16.msra.mxu0 %v4692
      %4715 = vmatprep.subr.bf16.mxu0 0
      %4716 = vmatpush1.bf16.msra.mxu0 %v4693
      %4717 = vmatprep.subr.bf16.mxu0 0
      %4718 = vmatpush1.bf16.msra.mxu0 %v4694
      %4719 = vmatprep.subr.bf16.mxu0 0
      %4720 = vmatpush1.bf16.msra.mxu0 0
      %4721 = vmatprep.subr.bf16.mxu0 0
      %4722 = vmatpush1.bf16.msra.mxu0 0
      %4723 = vmatprep.subr.bf16.mxu0 0
      %4724 = vmatpush1.bf16.msra.mxu0 0
      %4725 = vmatprep.subr.bf16.mxu0 0
      %4726 = vmatpush1.bf16.msra.mxu0 0
      %4727 = vmatprep.subr.bf16.mxu0 0
      %4728 = vmatpush1.bf16.msra.mxu0 0
      %4729 = vmatprep.subr.bf16.mxu0 0
      %4730 = vmatpush1.bf16.msra.mxu0 0
      %4731 = vmatprep.subr.bf16.mxu0 0
      %4732 = vmatpush1.bf16.msra.mxu0 0
      %4733 = vmatprep.subr.bf16.mxu0 0
      %4734 = vmatpush1.bf16.msra.mxu0 0
      %4735 = vmatprep.mubr.bf16.mxu0 0
      %4736 = vmatmul.mubr.bf16.gmra.mrb[0].mxu0 %v4446
      %v4737 = vpop.f32.mrb[0].mxu0
      %v4738 = vadd.f32 0.0, %v4737
      %v4739 = vpop.f32.mrb[0].mxu0
      %v4740 = vpop.f32.mrb[0].mxu0
      %v4741 = vadd.f32 0.0, %v4740
      %v4742 = vpop.f32.mrb[0].mxu0
      %4743 = vmatprep.mubr.bf16.mxu0 0
      %4744 = vmatmul.mubr.bf16.gmra.mrb[0].mxu0 %v4454
      %v4745 = vpop.f32.mrb[0].mxu0
      %v4746 = vpop.f32.mrb[0].mxu0
      %v4747 = vpop.f32.mrb[0].mxu0
      %v4748 = vadd.f32 0.0, %v4747
      %v4749 = vpop.f32.mrb[0].mxu0
      %4750 = vmatprep.mubr.bf16.mxu0 0
      %4751 = vmatmul.mubr.bf16.gmra.mrb[0].mxu0 %v4462
      %v4752 = vpop.f32.mrb[0].mxu0
      %v4753 = vadd.f32 0.0, %v4752
      %v4754 = vpop.f32.mrb[0].mxu0
      %v4755 = vpop.f32.mrb[0].mxu0
      %v4756 = vpop.f32.mrb[0].mxu0
      %4757 = vmatprep.mubr.bf16.mxu0 0
      %4758 = vmatmul.mubr.bf16.gmra.mrb[0].mxu0 %v4470
      %v4759 = vpop.f32.mrb[0].mxu0
      %v4760 = vadd.f32 0.0, %v4759
      %v4761 = vpop.f32.mrb[0].mxu0
      %v4762 = vpop.f32.mrb[0].mxu0
      %v4763 = vadd.f32 0.0, %v4762
      %v4764 = vpop.f32.mrb[0].mxu0
      %4765 = vmatprep.mubr.bf16.mxu0 0
      %4766 = vmatmul.mubr.bf16.gmra.mrb[0].mxu0 %v4478
      %v4767 = vpop.f32.mrb[0].mxu0
      %v4768 = vpop.f32.mrb[0].mxu0
      %v4769 = vpop.f32.mrb[0].mxu0
      %v4770 = vadd.f32 0.0, %v4769
      %v4771 = vpop.f32.mrb[0].mxu0
      %4772 = vmatprep.mubr.bf16.mxu0 0
      %4773 = vmatmul.mubr.bf16.gmra.mrb[0].mxu0 %v4486
      %v4774 = vpop.f32.mrb[0].mxu0
      %v4775 = vadd.f32 0.0, %v4774
      %v4776 = vpop.f32.mrb[0].mxu0
      %v4777 = vpop.f32.mrb[0].mxu0
      %v4778 = vpop.f32.mrb[0].mxu0
      %4779 = vmatprep.mubr.bf16.mxu0 0
      %4780 = vmatmul.mubr.bf16.gmra.mrb[0].mxu0 %v4494
      %v4781 = vpop.f32.mrb[0].mxu0
      %v4782 = vadd.f32 0.0, %v4781
      %v4783 = vpop.f32.mrb[0].mxu0
      %v4784 = vpop.f32.mrb[0].mxu0
      %v4785 = vadd.f32 0.0, %v4784
      %v4786 = vpop.f32.mrb[0].mxu0
      %4787 = vmatprep.mubr.bf16.mxu0 0
      %4788 = vmatmul.mubr.bf16.gmra.mrb[0].mxu0 %v4502
      %v4789 = vpop.f32.mrb[0].mxu0
      %v4790 = vpop.f32.mrb[0].mxu0
      %v4791 = vpop.f32.mrb[0].mxu0
      %v4792 = vadd.f32 0.0, %v4791
      %v4793 = vpop.f32.mrb[0].mxu0
      %4794 = vmatprep.mubr.bf16.mxu0 0
      %4795 = vmatmul.mubr.bf16.gmra.mrb[0].mxu0 %v4510
      %v4796 = vpop.f32.mrb[0].mxu0
      %v4797 = vadd.f32 0.0, %v4796
      %v4798 = vpop.f32.mrb[0].mxu0
      %v4799 = vpop.f32.mrb[0].mxu0
      %v4800 = vpop.f32.mrb[0].mxu0
      %4801 = vmatprep.mubr.bf16.mxu0 0
      %4802 = vmatmul.mubr.bf16.gmra.mrb[0].mxu0 %v4518
      %v4803 = vpop.f32.mrb[0].mxu0
      %v4804 = vadd.f32 0.0, %v4803
      %v4805 = vpop.f32.mrb[0].mxu0
      %v4806 = vpop.f32.mrb[0].mxu0
      %v4807 = vadd.f32 0.0, %v4806
      %v4808 = vpop.f32.mrb[0].mxu0
      %4809 = vmatprep.mubr.bf16.mxu0 0
      %4810 = vmatmul.mubr.bf16.gmra.mrb[0].mxu0 %v4526
      %v4811 = vpop.f32.mrb[0].mxu0
      %v4812 = vpop.f32.mrb[0].mxu0
      %v4813 = vpop.f32.mrb[0].mxu0
      %v4814 = vadd.f32 0.0, %v4813
      %v4815 = vpop.f32.mrb[0].mxu0
      %4816 = vmatprep.mubr.bf16.mxu0 0
      %4817 = vmatmul.mubr.bf16.gmra.mrb[0].mxu0 %v4534
      %v4818 = vpop.f32.mrb[0].mxu0
      %v4819 = vadd.f32 0.0, %v4818
      %v4820 = vpop.f32.mrb[0].mxu0
      %v4821 = vpop.f32.mrb[0].mxu0
      %v4822 = vpop.f32.mrb[0].mxu0
      %4823 = vmatprep.mubr.bf16.mxu0 0
      %4824 = vmatmul.mubr.bf16.gmra.mrb[0].mxu0 %v4542
      %v4825 = vpop.f32.mrb[0].mxu0
      %v4826 = vadd.f32 0.0, %v4825
      %v4827 = vpop.f32.mrb[0].mxu0
      %v4828 = vpop.f32.mrb[0].mxu0
      %v4829 = vadd.f32 0.0, %v4828
      %v4830 = vpop.f32.mrb[0].mxu0
      %4831 = vmatprep.mubr.bf16.mxu0 0
      %4832 = vmatmul.mubr.bf16.gmra.mrb[0].mxu0 %v4550
      %v4833 = vpop.f32.mrb[0].mxu0
      %v4834 = vpop.f32.mrb[0].mxu0
      %v4835 = vpop.f32.mrb[0].mxu0
      %v4836 = vadd.f32 0.0, %v4835
      %v4837 = vpop.f32.mrb[0].mxu0
      %4838 = vmatprep.mubr.bf16.mxu0 0
      %4839 = vmatmul.mubr.bf16.gmra.mrb[0].mxu0 %v4558
      %v4840 = vpop.f32.mrb[0].mxu0
      %v4841 = vadd.f32 0.0, %v4840
      %v4842 = vpop.f32.mrb[0].mxu0
      %v4843 = vpop.f32.mrb[0].mxu0
      %v4844 = vpop.f32.mrb[0].mxu0
      %4845 = vmatprep.mubr.bf16.mxu0 0
      %4846 = vmatmul.mubr.bf16.gmra.mrb[0].mxu0 %v4566
      %v4847 = vpop.f32.mrb[0].mxu0
      %v4848 = vadd.f32 0.0, %v4847
      %v4849 = vpop.f32.mrb[0].mxu0
      %v4850 = vpop.f32.mrb[0].mxu0
      %v4851 = vadd.f32 0.0, %v4850
      %v4852 = vpop.f32.mrb[0].mxu0
      %4853 = vmatprep.mubr.bf16.mxu0 0
      %4854 = vmatmul.mubr.bf16.gmra.mrb[0].mxu0 %v4574
      %v4855 = vpop.f32.mrb[0].mxu0
      %v4856 = vpop.f32.mrb[0].mxu0
      %v4857 = vpop.f32.mrb[0].mxu0
      %v4858 = vadd.f32 0.0, %v4857
      %v4859 = vpop.f32.mrb[0].mxu0
      %4860 = vmatprep.mubr.bf16.mxu0 0
      %4861 = vmatmul.mubr.bf16.gmra.mrb[0].mxu0 %v4582
      %v4862 = vpop.f32.mrb[0].mxu0
      %v4863 = vadd.f32 0.0, %v4862
      %v4864 = vpop.f32.mrb[0].mxu0
      %v4865 = vpop.f32.mrb[0].mxu0
      %v4866 = vpop.f32.mrb[0].mxu0
      %4867 = vmatprep.mubr.bf16.mxu0 0
      %4868 = vmatmul.mubr.bf16.gmra.mrb[0].mxu0 %v4590
      %v4869 = vpop.f32.mrb[0].mxu0
      %v4870 = vadd.f32 0.0, %v4869
      %v4871 = vpop.f32.mrb[0].mxu0
      %v4872 = vpop.f32.mrb[0].mxu0
      %v4873 = vadd.f32 0.0, %v4872
      %v4874 = vpop.f32.mrb[0].mxu0
      %4875 = vmatprep.mubr.bf16.mxu0 0
      %4876 = vmatmul.mubr.bf16.gmra.mrb[0].mxu0 %v4598
      %v4877 = vpop.f32.mrb[0].mxu0
      %v4878 = vpop.f32.mrb[0].mxu0
      %v4879 = vpop.f32.mrb[0].mxu0
      %v4880 = vadd.f32 0.0, %v4879
      %v4881 = vpop.f32.mrb[0].mxu0
      %4882 = vmatprep.mubr.bf16.mxu0 0
      %4883 = vmatmul.mubr.bf16.gmra.mrb[0].mxu0 %v4606
      %v4884 = vpop.f32.mrb[0].mxu0
      %v4885 = vadd.f32 0.0, %v4884
      %v4886 = vpop.f32.mrb[0].mxu0
      %v4887 = vpop.f32.mrb[0].mxu0
      %v4888 = vpop.f32.mrb[0].mxu0
      %4889 = vmatprep.mubr.bf16.mxu0 0
      %4890 = vmatmul.mubr.bf16.gmra.mrb[0].mxu0 %v4614
      %v4891 = vpop.f32.mrb[0].mxu0
      %v4892 = vadd.f32 0.0, %v4891
      %v4893 = vpop.f32.mrb[0].mxu0
      %v4894 = vpop.f32.mrb[0].mxu0
      %v4895 = vadd.f32 0.0, %v4894
      %v4896 = vpop.f32.mrb[0].mxu0
      %4897 = vmatprep.mubr.bf16.mxu0 0
      %4898 = vmatmul.mubr.bf16.gmra.mrb[0].mxu0 %v4622
      %v4899 = vpop.f32.mrb[0].mxu0
      %v4900 = vpop.f32.mrb[0].mxu0
      %v4901 = vpop.f32.mrb[0].mxu0
      %v4902 = vadd.f32 0.0, %v4901
      %v4903 = vpop.f32.mrb[0].mxu0
      %4904 = vmatprep.mubr.bf16.mxu0 0
      %4905 = vmatmul.mubr.bf16.gmra.mrb[0].mxu0 %v4630
      %v4906 = vpop.f32.mrb[0].mxu0
      %v4907 = vadd.f32 0.0, %v4906
      %v4908 = vpop.f32.mrb[0].mxu0
      %v4909 = vpop.f32.mrb[0].mxu0
      %v4910 = vpop.f32.mrb[0].mxu0
      %4911 = vdwg.mxu0
      %v4912 = vadd.f32 %v4214, %v4738
      %v4913 = vadd.f32 %v4215, %v4741
      %v4914 = vadd.f32 %v4216, %v4748
      %v4915 = vadd.f32 %v4217, %v4753
      %v4916 = vadd.f32 %v4218, %v4760
      %v4917 = vadd.f32 %v4219, %v4763
      %v4918 = vadd.f32 %v4220, %v4770
      %v4919 = vadd.f32 %v4221, %v4775
      %v4920 = vadd.f32 %v4222, %v4782
      %v4921 = vadd.f32 %v4223, %v4785
      %v4922 = vadd.f32 %v4224, %v4792
      %v4923 = vadd.f32 %v4225, %v4797
      %v4924 = vadd.f32 %v4226, %v4804
      %v4925 = vadd.f32 %v4227, %v4807
      %v4926 = vadd.f32 %v4228, %v4814
      %v4927 = vadd.f32 %v4229, %v4819
      %v4928 = vadd.f32 %v4230, %v4826
      %v4929 = vadd.f32 %v4231, %v4829
      %v4930 = vadd.f32 %v4232, %v4836
      %v4931 = vadd.f32 %v4233, %v4841
      %v4932 = vadd.f32 %v4234, %v4848
      %v4933 = vadd.f32 %v4235, %v4851
      %v4934 = vadd.f32 %v4236, %v4858
      %v4935 = vadd.f32 %v4237, %v4863
      %v4936 = vadd.f32 %v4238, %v4870
      %v4937 = vadd.f32 %v4239, %v4873
      %v4938 = vadd.f32 %v4240, %v4880
      %v4939 = vadd.f32 %v4241, %v4885
      %v4940 = vadd.f32 %v4242, %v4892
      %v4941 = vadd.f32 %v4243, %v4895
      %v4942 = vadd.f32 %v4244, %v4902
      %v4943 = vadd.f32 %v4245, %v4907
      %v4944 = vld [vmem:[#allocation2 + $0x18] sm:$0xe]
      %s4945 = scalar_lea.vmem %s3, 512
      %v4946 = vld [vmem:[%s4945] sm:$0xf]
      %v4947 = vld [vmem:[%s4945 + $0x4] sm:$0xf]
      %v4948 = vld [vmem:[%s4945 + $0x8] sm:$0xf]
      %v4949 = vld [vmem:[%s4945 + $0xc] sm:$0xf]
      %v4950 = vld [vmem:[%s4945 + $0x10] sm:$0xf]
      %v4951 = vld [vmem:[%s4945 + $0x14] sm:$0xf]
      %v4952 = vld [vmem:[%s4945 + $0x18] sm:$0xf]
      %v4953 = vld [vmem:[%s4945 + $0x1c] sm:$0xf]
      %v4954 = vld [vmem:[%s4945 + $0x20] sm:$0xf]
      %v4955 = vld [vmem:[%s4945 + $0x24] sm:$0xf]
      %v4956 = vld [vmem:[%s4945 + $0x28] sm:$0xf]
      %v4957 = vld [vmem:[%s4945 + $0x2c] sm:$0xf]
      %v4958 = vld [vmem:[%s4945 + $0x30] sm:$0xf]
      %v4959 = vld [vmem:[%s4945 + $0x34] sm:$0xf]
      %v4960 = vld [vmem:[%s4945 + $0x38] sm:$0xf]
      %v4961 = vld [vmem:[%s4945 + $0x3c] sm:$0xf]
      %v4963 = vunpack.c.l.b16 %v4944
      %v4964 = vpack.c.b16 %v4362, %v4963
      %v4965 = vrot.slane %v4964, 1
      %v4966 = vrot.slane %v4411, 1
      %v4967 = vsel %vm1806, %v4965, %v4966
      %v4968 = vrot.slane %v4412, 1
      %v4969 = vsel %vm1806, %v4966, %v4968
      %v4970 = vrot.slane %v4413, 1
      %v4971 = vsel %vm1806, %v4968, %v4970
      %v4972 = vrot.slane %v4414, 1
      %v4973 = vsel %vm1806, %v4970, %v4972
      %v4974 = vrot.slane %v4415, 1
      %v4975 = vsel %vm1806, %v4972, %v4974
      %v4976 = vrot.slane %v4416, 1
      %v4977 = vsel %vm1806, %v4974, %v4976
      %v4978 = vrot.slane %v4417, 1
      %v4979 = vsel %vm1806, %v4976, %v4978
      %v4980 = vrot.slane %v4418, 1
      %v4981 = vsel %vm1806, %v4978, %v4980
      %v4982 = vrot.slane %v4419, 1
      %v4983 = vsel %vm1806, %v4980, %v4982
      %v4984 = vrot.slane %v4420, 1
      %v4985 = vsel %vm1806, %v4982, %v4984
      %v4986 = vrot.slane %v4421, 1
      %v4987 = vsel %vm1806, %v4984, %v4986
      %v4988 = vrot.slane %v4422, 1
      %v4989 = vsel %vm1806, %v4986, %v4988
      %v4990 = vrot.slane %v4423, 1
      %v4991 = vsel %vm1806, %v4988, %v4990
      %v4992 = vrot.slane %v4424, 1
      %v4993 = vsel %vm1806, %v4990, %v4992
      %v4994 = vrot.slane %v4425, 1
      %v4995 = vsel %vm1806, %v4992, %v4994
      %v4996 = vrot.slane %v4426, 1
      %v4997 = vsel %vm1806, %v4994, %v4996
      %v4998 = vrot.slane %v4427, 1
      %v4999 = vsel %vm1806, %v4996, %v4998
      %v5000 = vrot.slane %v4428, 1
      %v5001 = vsel %vm1806, %v4998, %v5000
      %v5002 = vrot.slane %v4429, 1
      %v5003 = vsel %vm1806, %v5000, %v5002
      %v5004 = vrot.slane %v4430, 1
      %v5005 = vsel %vm1806, %v5002, %v5004
      %v5006 = vrot.slane %v4431, 1
      %v5007 = vsel %vm1806, %v5004, %v5006
      %v5008 = vrot.slane %v4432, 1
      %v5009 = vsel %vm1806, %v5006, %v5008
      %v5010 = vrot.slane %v4433, 1
      %v5011 = vsel %vm1806, %v5008, %v5010
      %v5012 = vrot.slane %v4434, 1
      %v5013 = vsel %vm1806, %v5010, %v5012
      %v5054 = vunpack.c.l.b16 %v4946
      %v5055 = vunpack.c.l.b16 %v4947
      %v5056 = vunpack.c.l.b16 %v4948
      %v5057 = vunpack.c.l.b16 %v4949
      %v5058 = vunpack.c.l.b16 %v4950
      %v5059 = vunpack.c.l.b16 %v4951
      %v5060 = vunpack.c.l.b16 %v4952
      %v5061 = vunpack.c.l.b16 %v4953
      %v5062 = vunpack.c.l.b16 %v4954
      %v5063 = vunpack.c.l.b16 %v4955
      %v5064 = vunpack.c.l.b16 %v4956
      %v5065 = vunpack.c.l.b16 %v4957
      %v5066 = vunpack.c.l.b16 %v4958
      %v5067 = vunpack.c.l.b16 %v4959
      %v5068 = vunpack.c.l.b16 %v4960
      %v5069 = vunpack.c.l.b16 %v4961
      %v5070 = vpack.c.b16 %v5055, %v5054
      %v5071 = vpack.c.b16 %v5057, %v5056
      %v5072 = vpack.c.b16 %v5059, %v5058
      %v5073 = vpack.c.b16 %v5061, %v5060
      %v5074 = vpack.c.b16 %v5063, %v5062
      %v5075 = vpack.c.b16 %v5065, %v5064
      %v5076 = vpack.c.b16 %v5067, %v5066
      %v5077 = vpack.c.b16 %v5069, %v5068
      %5086 = vmatprep.subr.bf16.mxu0 0
      %5087 = vmatpush1.bf16.msra.mxu0 %v5070
      %5088 = vmatprep.subr.bf16.mxu0 0
      %5089 = vmatpush1.bf16.msra.mxu0 %v5071
      %5090 = vmatprep.subr.bf16.mxu0 0
      %5091 = vmatpush1.bf16.msra.mxu0 %v5072
      %5092 = vmatprep.subr.bf16.mxu0 0
      %5093 = vmatpush1.bf16.msra.mxu0 %v5073
      %5094 = vmatprep.subr.bf16.mxu0 0
      %5095 = vmatpush1.bf16.msra.mxu0 %v5074
      %5096 = vmatprep.subr.bf16.mxu0 0
      %5097 = vmatpush1.bf16.msra.mxu0 %v5075
      %5098 = vmatprep.subr.bf16.mxu0 0
      %5099 = vmatpush1.bf16.msra.mxu0 %v5076
      %5100 = vmatprep.subr.bf16.mxu0 0
      %5101 = vmatpush1.bf16.msra.mxu0 %v5077
      %5102 = vmatprep.subr.bf16.mxu0 0
      %5103 = vmatpush1.bf16.msra.mxu0 0
      %5104 = vmatprep.subr.bf16.mxu0 0
      %5105 = vmatpush1.bf16.msra.mxu0 0
      %5106 = vmatprep.subr.bf16.mxu0 0
      %5107 = vmatpush1.bf16.msra.mxu0 0
      %5108 = vmatprep.subr.bf16.mxu0 0
      %5109 = vmatpush1.bf16.msra.mxu0 0
      %5110 = vmatprep.subr.bf16.mxu0 0
      %5111 = vmatpush1.bf16.msra.mxu0 0
      %5112 = vmatprep.subr.bf16.mxu0 0
      %5113 = vmatpush1.bf16.msra.mxu0 0
      %5114 = vmatprep.subr.bf16.mxu0 0
      %5115 = vmatpush1.bf16.msra.mxu0 0
      %5116 = vmatprep.subr.bf16.mxu0 0
      %5117 = vmatpush1.bf16.msra.mxu0 0
      %5118 = vmatprep.mubr.bf16.mxu0 0
      %5119 = vmatmul.mubr.bf16.gmra.mrb[0].mxu0 %v4967
      %v5120 = vpop.f32.mrb[0].mxu0
      %v5121 = vadd.f32 0.0, %v5120
      %v5122 = vpop.f32.mrb[0].mxu0
      %v5123 = vpop.f32.mrb[0].mxu0
      %v5124 = vadd.f32 0.0, %v5123
      %v5125 = vpop.f32.mrb[0].mxu0
      %5126 = vmatprep.mubr.bf16.mxu0 0
      %5127 = vmatmul.mubr.bf16.gmra.mrb[0].mxu0 %v4969
      %v5128 = vpop.f32.mrb[0].mxu0
      %v5129 = vpop.f32.mrb[0].mxu0
      %v5130 = vpop.f32.mrb[0].mxu0
      %v5131 = vadd.f32 0.0, %v5130
      %v5132 = vpop.f32.mrb[0].mxu0
      %5133 = vmatprep.mubr.bf16.mxu0 0
      %5134 = vmatmul.mubr.bf16.gmra.mrb[0].mxu0 %v4971
      %v5135 = vpop.f32.mrb[0].mxu0
      %v5136 = vadd.f32 0.0, %v5135
      %v5137 = vpop.f32.mrb[0].mxu0
      %v5138 = vpop.f32.mrb[0].mxu0
      %v5139 = vpop.f32.mrb[0].mxu0
      %5140 = vmatprep.mubr.bf16.mxu0 0
      %5141 = vmatmul.mubr.bf16.gmra.mrb[0].mxu0 %v4973
      %v5142 = vpop.f32.mrb[0].mxu0
      %v5143 = vadd.f32 0.0, %v5142
      %v5144 = vpop.f32.mrb[0].mxu0
      %v5145 = vpop.f32.mrb[0].mxu0
      %v5146 = vadd.f32 0.0, %v5145
      %v5147 = vpop.f32.mrb[0].mxu0
      %5148 = vmatprep.mubr.bf16.mxu0 0
      %5149 = vmatmul.mubr.bf16.gmra.mrb[0].mxu0 %v4975
      %v5150 = vpop.f32.mrb[0].mxu0
      %v5151 = vpop.f32.mrb[0].mxu0
      %v5152 = vpop.f32.mrb[0].mxu0
      %v5153 = vadd.f32 0.0, %v5152
      %v5154 = vpop.f32.mrb[0].mxu0
      %5155 = vmatprep.mubr.bf16.mxu0 0
      %5156 = vmatmul.mubr.bf16.gmra.mrb[0].mxu0 %v4977
      %v5157 = vpop.f32.mrb[0].mxu0
      %v5158 = vadd.f32 0.0, %v5157
      %v5159 = vpop.f32.mrb[0].mxu0
      %v5160 = vpop.f32.mrb[0].mxu0
      %v5161 = vpop.f32.mrb[0].mxu0
      %5162 = vmatprep.mubr.bf16.mxu0 0
      %5163 = vmatmul.mubr.bf16.gmra.mrb[0].mxu0 %v4979
      %v5164 = vpop.f32.mrb[0].mxu0
      %v5165 = vadd.f32 0.0, %v5164
      %v5166 = vpop.f32.mrb[0].mxu0
      %v5167 = vpop.f32.mrb[0].mxu0
      %v5168 = vadd.f32 0.0, %v5167
      %v5169 = vpop.f32.mrb[0].mxu0
      %5170 = vmatprep.mubr.bf16.mxu0 0
      %5171 = vmatmul.mubr.bf16.gmra.mrb[0].mxu0 %v4981
      %v5172 = vpop.f32.mrb[0].mxu0
      %v5173 = vpop.f32.mrb[0].mxu0
      %v5174 = vpop.f32.mrb[0].mxu0
      %v5175 = vadd.f32 0.0, %v5174
      %v5176 = vpop.f32.mrb[0].mxu0
      %5177 = vmatprep.mubr.bf16.mxu0 0
      %5178 = vmatmul.mubr.bf16.gmra.mrb[0].mxu0 %v4983
      %v5179 = vpop.f32.mrb[0].mxu0
      %v5180 = vadd.f32 0.0, %v5179
      %v5181 = vpop.f32.mrb[0].mxu0
      %v5182 = vpop.f32.mrb[0].mxu0
      %v5183 = vpop.f32.mrb[0].mxu0
      %5184 = vmatprep.mubr.bf16.mxu0 0
      %5185 = vmatmul.mubr.bf16.gmra.mrb[0].mxu0 %v4985
      %v5186 = vpop.f32.mrb[0].mxu0
      %v5187 = vadd.f32 0.0, %v5186
      %v5188 = vpop.f32.mrb[0].mxu0
      %v5189 = vpop.f32.mrb[0].mxu0
      %v5190 = vadd.f32 0.0, %v5189
      %v5191 = vpop.f32.mrb[0].mxu0
      %5192 = vmatprep.mubr.bf16.mxu0 0
      %5193 = vmatmul.mubr.bf16.gmra.mrb[0].mxu0 %v4987
      %v5194 = vpop.f32.mrb[0].mxu0
      %v5195 = vpop.f32.mrb[0].mxu0
      %v5196 = vpop.f32.mrb[0].mxu0
      %v5197 = vadd.f32 0.0, %v5196
      %v5198 = vpop.f32.mrb[0].mxu0
      %5199 = vmatprep.mubr.bf16.mxu0 0
      %5200 = vmatmul.mubr.bf16.gmra.mrb[0].mxu0 %v4989
      %v5201 = vpop.f32.mrb[0].mxu0
      %v5202 = vadd.f32 0.0, %v5201
      %v5203 = vpop.f32.mrb[0].mxu0
      %v5204 = vpop.f32.mrb[0].mxu0
      %v5205 = vpop.f32.mrb[0].mxu0
      %5206 = vmatprep.mubr.bf16.mxu0 0
      %5207 = vmatmul.mubr.bf16.gmra.mrb[0].mxu0 %v4991
      %v5208 = vpop.f32.mrb[0].mxu0
      %v5209 = vadd.f32 0.0, %v5208
      %v5210 = vpop.f32.mrb[0].mxu0
      %v5211 = vpop.f32.mrb[0].mxu0
      %v5212 = vadd.f32 0.0, %v5211
      %v5213 = vpop.f32.mrb[0].mxu0
      %5214 = vmatprep.mubr.bf16.mxu0 0
      %5215 = vmatmul.mubr.bf16.gmra.mrb[0].mxu0 %v4993
      %v5216 = vpop.f32.mrb[0].mxu0
      %v5217 = vpop.f32.mrb[0].mxu0
      %v5218 = vpop.f32.mrb[0].mxu0
      %v5219 = vadd.f32 0.0, %v5218
      %v5220 = vpop.f32.mrb[0].mxu0
      %5221 = vmatprep.mubr.bf16.mxu0 0
      %5222 = vmatmul.mubr.bf16.gmra.mrb[0].mxu0 %v4995
      %v5223 = vpop.f32.mrb[0].mxu0
      %v5224 = vadd.f32 0.0, %v5223
      %v5225 = vpop.f32.mrb[0].mxu0
      %v5226 = vpop.f32.mrb[0].mxu0
      %v5227 = vpop.f32.mrb[0].mxu0
      %5228 = vmatprep.mubr.bf16.mxu0 0
      %5229 = vmatmul.mubr.bf16.gmra.mrb[0].mxu0 %v4997
      %v5230 = vpop.f32.mrb[0].mxu0
      %v5231 = vadd.f32 0.0, %v5230
      %v5232 = vpop.f32.mrb[0].mxu0
      %v5233 = vpop.f32.mrb[0].mxu0
      %v5234 = vadd.f32 0.0, %v5233
      %v5235 = vpop.f32.mrb[0].mxu0
      %5236 = vmatprep.mubr.bf16.mxu0 0
      %5237 = vmatmul.mubr.bf16.gmra.mrb[0].mxu0 %v4999
      %v5238 = vpop.f32.mrb[0].mxu0
      %v5239 = vpop.f32.mrb[0].mxu0
      %v5240 = vpop.f32.mrb[0].mxu0
      %v5241 = vadd.f32 0.0, %v5240
      %v5242 = vpop.f32.mrb[0].mxu0
      %5243 = vmatprep.mubr.bf16.mxu0 0
      %5244 = vmatmul.mubr.bf16.gmra.mrb[0].mxu0 %v5001
      %v5245 = vpop.f32.mrb[0].mxu0
      %v5246 = vadd.f32 0.0, %v5245
      %v5247 = vpop.f32.mrb[0].mxu0
      %v5248 = vpop.f32.mrb[0].mxu0
      %v5249 = vpop.f32.mrb[0].mxu0
      %5250 = vmatprep.mubr.bf16.mxu0 0
      %5251 = vmatmul.mubr.bf16.gmra.mrb[0].mxu0 %v5003
      %v5252 = vpop.f32.mrb[0].mxu0
      %v5253 = vadd.f32 0.0, %v5252
      %v5254 = vpop.f32.mrb[0].mxu0
      %v5255 = vpop.f32.mrb[0].mxu0
      %v5256 = vadd.f32 0.0, %v5255
      %v5257 = vpop.f32.mrb[0].mxu0
      %5258 = vmatprep.mubr.bf16.mxu0 0
      %5259 = vmatmul.mubr.bf16.gmra.mrb[0].mxu0 %v5005
      %v5260 = vpop.f32.mrb[0].mxu0
      %v5261 = vpop.f32.mrb[0].mxu0
      %v5262 = vpop.f32.mrb[0].mxu0
      %v5263 = vadd.f32 0.0, %v5262
      %v5264 = vpop.f32.mrb[0].mxu0
      %5265 = vmatprep.mubr.bf16.mxu0 0
      %5266 = vmatmul.mubr.bf16.gmra.mrb[0].mxu0 %v5007
      %v5267 = vpop.f32.mrb[0].mxu0
      %v5268 = vadd.f32 0.0, %v5267
      %v5269 = vpop.f32.mrb[0].mxu0
      %v5270 = vpop.f32.mrb[0].mxu0
      %v5271 = vpop.f32.mrb[0].mxu0
      %5272 = vmatprep.mubr.bf16.mxu0 0
      %5273 = vmatmul.mubr.bf16.gmra.mrb[0].mxu0 %v5009
      %v5274 = vpop.f32.mrb[0].mxu0
      %v5275 = vadd.f32 0.0, %v5274
      %v5276 = vpop.f32.mrb[0].mxu0
      %v5277 = vpop.f32.mrb[0].mxu0
      %v5278 = vadd.f32 0.0, %v5277
      %v5279 = vpop.f32.mrb[0].mxu0
      %5280 = vmatprep.mubr.bf16.mxu0 0
      %5281 = vmatmul.mubr.bf16.gmra.mrb[0].mxu0 %v5011
      %v5282 = vpop.f32.mrb[0].mxu0
      %v5283 = vpop.f32.mrb[0].mxu0
      %v5284 = vpop.f32.mrb[0].mxu0
      %v5285 = vadd.f32 0.0, %v5284
      %v5286 = vpop.f32.mrb[0].mxu0
      %5287 = vmatprep.mubr.bf16.mxu0 0
      %5288 = vmatmul.mubr.bf16.gmra.mrb[0].mxu0 %v5013
      %v5289 = vpop.f32.mrb[0].mxu0
      %v5290 = vadd.f32 0.0, %v5289
      %v5291 = vpop.f32.mrb[0].mxu0
      %v5292 = vpop.f32.mrb[0].mxu0
      %v5293 = vpop.f32.mrb[0].mxu0
      %5294 = vdwg.mxu0
      %v5295 = vadd.f32 %v4912, %v5121
      %v5296 = vadd.f32 %v4913, %v5124
      %v5297 = vadd.f32 %v4914, %v5131
      %v5298 = vadd.f32 %v4915, %v5136
      %v5299 = vadd.f32 %v4916, %v5143
      %v5300 = vadd.f32 %v4917, %v5146
      %v5301 = vadd.f32 %v4918, %v5153
      %v5302 = vadd.f32 %v4919, %v5158
      %v5303 = vadd.f32 %v4920, %v5165
      %v5304 = vadd.f32 %v4921, %v5168
      %v5305 = vadd.f32 %v4922, %v5175
      %v5306 = vadd.f32 %v4923, %v5180
      %v5307 = vadd.f32 %v4924, %v5187
      %v5308 = vadd.f32 %v4925, %v5190
      %v5309 = vadd.f32 %v4926, %v5197
      %v5310 = vadd.f32 %v4927, %v5202
      %v5311 = vadd.f32 %v4928, %v5209
      %v5312 = vadd.f32 %v4929, %v5212
      %v5313 = vadd.f32 %v4930, %v5219
      %v5314 = vadd.f32 %v4931, %v5224
      %v5315 = vadd.f32 %v4932, %v5231
      %v5316 = vadd.f32 %v4933, %v5234
      %v5317 = vadd.f32 %v4934, %v5241
      %v5318 = vadd.f32 %v4935, %v5246
      %v5319 = vadd.f32 %v4936, %v5253
      %v5320 = vadd.f32 %v4937, %v5256
      %v5321 = vadd.f32 %v4938, %v5263
      %v5322 = vadd.f32 %v4939, %v5268
      %v5323 = vadd.f32 %v4940, %v5275
      %v5324 = vadd.f32 %v4941, %v5278
      %v5325 = vadd.f32 %v4942, %v5285
      %v5326 = vadd.f32 %v4943, %v5290
      %v5327 = vpack.c.bf16 %v5296, %v5295
      %v5328 = vpack.c.bf16 %v5298, %v5297
      %v5329 = vpack.c.bf16 %v5300, %v5299
      %v5330 = vpack.c.bf16 %v5302, %v5301
      %v5331 = vpack.c.bf16 %v5304, %v5303
      %v5332 = vpack.c.bf16 %v5306, %v5305
      %v5333 = vpack.c.bf16 %v5308, %v5307
      %v5334 = vpack.c.bf16 %v5310, %v5309
      %v5335 = vpack.c.bf16 %v5312, %v5311
      %v5336 = vpack.c.bf16 %v5314, %v5313
      %v5337 = vpack.c.bf16 %v5316, %v5315
      %v5338 = vpack.c.bf16 %v5318, %v5317
      %v5339 = vpack.c.bf16 %v5320, %v5319
      %v5340 = vpack.c.bf16 %v5322, %v5321
      %v5341 = vpack.c.bf16 %v5324, %v5323
      %v5342 = vpack.c.bf16 %v5326, %v5325
      %v5359 = vunpack.c.l.b16 %v5327
      %v5360 = vunpack.c.h.b16 %v5327
      %v5361 = vunpack.c.l.b16 %v5328
      %v5362 = vunpack.c.h.b16 %v5328
      %v5363 = vunpack.c.l.b16 %v5329
      %v5364 = vunpack.c.h.b16 %v5329
      %v5365 = vunpack.c.l.b16 %v5330
      %v5366 = vunpack.c.h.b16 %v5330
      %v5367 = vunpack.c.l.b16 %v5331
      %v5368 = vunpack.c.h.b16 %v5331
      %v5369 = vunpack.c.l.b16 %v5332
      %v5370 = vunpack.c.h.b16 %v5332
      %v5371 = vunpack.c.l.b16 %v5333
      %v5372 = vunpack.c.h.b16 %v5333
      %v5373 = vunpack.c.l.b16 %v5334
      %v5374 = vunpack.c.h.b16 %v5334
      %v5375 = vunpack.c.l.b16 %v5335
      %v5376 = vunpack.c.h.b16 %v5335
      %v5377 = vunpack.c.l.b16 %v5336
      %v5378 = vunpack.c.h.b16 %v5336
      %v5379 = vunpack.c.l.b16 %v5337
      %v5380 = vunpack.c.h.b16 %v5337
      %v5381 = vunpack.c.l.b16 %v5338
      %v5382 = vunpack.c.h.b16 %v5338
      %v5383 = vunpack.c.l.b16 %v5339
      %v5384 = vunpack.c.h.b16 %v5339
      %v5385 = vunpack.c.l.b16 %v5340
      %v5386 = vunpack.c.h.b16 %v5340
      %v5387 = vunpack.c.l.b16 %v5341
      %v5388 = vunpack.c.h.b16 %v5341
      %v5389 = vunpack.c.l.b16 %v5342
      %v5390 = vunpack.c.h.b16 %v5342
      %v5391 = vpack.c.b16 %v5359, %v5359
      %v5392 = vpack.c.b16 %v5360, %v5360
      %v5393 = vpack.c.b16 %v5361, %v5361
      %v5394 = vpack.c.b16 %v5362, %v5362
      %v5395 = vpack.c.b16 %v5363, %v5363
      %v5396 = vpack.c.b16 %v5364, %v5364
      %v5397 = vpack.c.b16 %v5365, %v5365
      %v5398 = vpack.c.b16 %v5366, %v5366
      %v5399 = vpack.c.b16 %v5367, %v5367
      %v5400 = vpack.c.b16 %v5368, %v5368
      %v5401 = vpack.c.b16 %v5369, %v5369
      %v5402 = vpack.c.b16 %v5370, %v5370
      %v5403 = vpack.c.b16 %v5371, %v5371
      %v5404 = vpack.c.b16 %v5372, %v5372
      %v5405 = vpack.c.b16 %v5373, %v5373
      %v5406 = vpack.c.b16 %v5374, %v5374
      %v5407 = vpack.c.b16 %v5375, %v5375
      %v5408 = vpack.c.b16 %v5376, %v5376
      %v5409 = vpack.c.b16 %v5377, %v5377
      %v5410 = vpack.c.b16 %v5378, %v5378
      %v5411 = vpack.c.b16 %v5379, %v5379
      %v5412 = vpack.c.b16 %v5380, %v5380
      %v5413 = vpack.c.b16 %v5381, %v5381
      %v5414 = vpack.c.b16 %v5382, %v5382
      %v5415 = vpack.c.b16 %v5383, %v5383
      %v5416 = vpack.c.b16 %v5384, %v5384
      %v5417 = vpack.c.b16 %v5385, %v5385
      %v5418 = vpack.c.b16 %v5386, %v5386
      %v5419 = vpack.c.b16 %v5387, %v5387
      %v5420 = vpack.c.b16 %v5388, %v5388
      %v5421 = vpack.c.b16 %v5389, %v5389
      %v5422 = vpack.c.b16 %v5390, %v5390
      %5455 = vst [vmem:[%s231] sm:$0xf] %v5391
      %5456 = vst [vmem:[%s231 + $0x4] sm:$0xf] %v5392
      %5457 = vst [vmem:[%s231 + $0x8] sm:$0xf] %v5393
      %5458 = vst [vmem:[%s231 + $0xc] sm:$0xf] %v5394
      %5459 = vst [vmem:[%s231 + $0x10] sm:$0xf] %v5395
      %5460 = vst [vmem:[%s231 + $0x14] sm:$0xf] %v5396
      %5461 = vst [vmem:[%s231 + $0x18] sm:$0xf] %v5397
      %5462 = vst [vmem:[%s231 + $0x1c] sm:$0xf] %v5398
      %5463 = vst [vmem:[%s231 + $0x20] sm:$0xf] %v5399
      %5464 = vst [vmem:[%s231 + $0x24] sm:$0xf] %v5400
      %5465 = vst [vmem:[%s231 + $0x28] sm:$0xf] %v5401
      %5466 = vst [vmem:[%s231 + $0x2c] sm:$0xf] %v5402
      %5467 = vst [vmem:[%s231 + $0x30] sm:$0xf] %v5403
      %5468 = vst [vmem:[%s231 + $0x34] sm:$0xf] %v5404
      %5469 = vst [vmem:[%s231 + $0x38] sm:$0xf] %v5405
      %5470 = vst [vmem:[%s231 + $0x3c] sm:$0xf] %v5406
      %5471 = vst [vmem:[%s231 + $0x40] sm:$0xf] %v5407
      %5472 = vst [vmem:[%s231 + $0x44] sm:$0xf] %v5408
      %5473 = vst [vmem:[%s231 + $0x48] sm:$0xf] %v5409
      %5474 = vst [vmem:[%s231 + $0x4c] sm:$0xf] %v5410
      %5475 = vst [vmem:[%s231 + $0x50] sm:$0xf] %v5411
      %5476 = vst [vmem:[%s231 + $0x54] sm:$0xf] %v5412
      %5477 = vst [vmem:[%s231 + $0x58] sm:$0xf] %v5413
      %5478 = vst [vmem:[%s231 + $0x5c] sm:$0xf] %v5414
      %5479 = vst [vmem:[%s231 + $0x60] sm:$0xf] %v5415
      %5480 = vst [vmem:[%s231 + $0x64] sm:$0xf] %v5416
      %5481 = vst [vmem:[%s231 + $0x68] sm:$0xf] %v5417
      %5482 = vst [vmem:[%s231 + $0x6c] sm:$0xf] %v5418
      %5483 = vst [vmem:[%s231 + $0x70] sm:$0xf] %v5419
      %5484 = vst [vmem:[%s231 + $0x74] sm:$0xf] %v5420
      %5485 = vst [vmem:[%s231 + $0x78] sm:$0xf] %v5421
      %5486 = vst [vmem:[%s231 + $0x7c] sm:$0xf] %v5422
      %v5487 = vadd.f32 %v5295, %v5296
      %v5488 = vadd.f32 %v5487, %v5297
      %v5489 = vadd.f32 %v5488, %v5298
      %v5490 = vadd.f32 %v5489, %v5299
      %v5491 = vadd.f32 %v5490, %v5300
      %v5492 = vadd.f32 %v5491, %v5301
      %v5493 = vadd.f32 %v5492, %v5302
      %v5494 = vadd.f32 %v5493, %v5303
      %v5495 = vadd.f32 %v5494, %v5304
      %v5496 = vadd.f32 %v5495, %v5305
      %v5497 = vadd.f32 %v5496, %v5306
      %v5498 = vadd.f32 %v5497, %v5307
      %v5499 = vadd.f32 %v5498, %v5308
      %v5500 = vadd.f32 %v5499, %v5309
      %v5501 = vadd.f32 %v5500, %v5310
      %v5502 = vadd.f32 %v5501, %v5311
      %v5503 = vadd.f32 %v5502, %v5312
      %v5504 = vadd.f32 %v5503, %v5313
      %v5505 = vadd.f32 %v5504, %v5314
      %v5506 = vadd.f32 %v5505, %v5315
      %v5507 = vadd.f32 %v5506, %v5316
      %v5508 = vadd.f32 %v5507, %v5317
      %v5509 = vadd.f32 %v5508, %v5318
      %v5510 = vadd.f32 %v5509, %v5319
      %v5511 = vadd.f32 %v5510, %v5320
      %v5512 = vadd.f32 %v5511, %v5321
      %v5513 = vadd.f32 %v5512, %v5322
      %v5514 = vadd.f32 %v5513, %v5323
      %v5515 = vadd.f32 %v5514, %v5324
      %v5516 = vadd.f32 %v5515, %v5325
      %v5517 = vadd.f32 %v5516, %v5326
      %v5518 = vrot.slane %v5517, 4
      %v5519 = vadd.f32 %v5517, %v5518
      %v5520 = vrot.slane %v5519, 2
      %v5521 = vadd.f32 %v5519, %v5520
      %v5522 = vrot.slane %v5521, 1
      %v5523 = vadd.f32 %v5521, %v5522
      %5524 = vst [vmem:[%s235] sm:$0x1] %v5523
      %v5525 = vmul.f32 %v5295, %v5295
      %v5526 = vmul.f32 %v5296, %v5296
      %v5527 = vmul.f32 %v5297, %v5297
      %v5528 = vmul.f32 %v5298, %v5298
      %v5529 = vmul.f32 %v5299, %v5299
      %v5530 = vmul.f32 %v5300, %v5300
      %v5531 = vmul.f32 %v5301, %v5301
      %v5532 = vmul.f32 %v5302, %v5302
      %v5533 = vmul.f32 %v5303, %v5303
      %v5534 = vmul.f32 %v5304, %v5304
      %v5535 = vmul.f32 %v5305, %v5305
      %v5536 = vmul.f32 %v5306, %v5306
      %v5537 = vmul.f32 %v5307, %v5307
      %v5538 = vmul.f32 %v5308, %v5308
      %v5539 = vmul.f32 %v5309, %v5309
      %v5540 = vmul.f32 %v5310, %v5310
      %v5541 = vmul.f32 %v5311, %v5311
      %v5542 = vmul.f32 %v5312, %v5312
      %v5543 = vmul.f32 %v5313, %v5313
      %v5544 = vmul.f32 %v5314, %v5314
      %v5545 = vmul.f32 %v5315, %v5315
      %v5546 = vmul.f32 %v5316, %v5316
      %v5547 = vmul.f32 %v5317, %v5317
      %v5548 = vmul.f32 %v5318, %v5318
      %v5549 = vmul.f32 %v5319, %v5319
      %v5550 = vmul.f32 %v5320, %v5320
      %v5551 = vmul.f32 %v5321, %v5321
      %v5552 = vmul.f32 %v5322, %v5322
      %v5553 = vmul.f32 %v5323, %v5323
      %v5554 = vmul.f32 %v5324, %v5324
      %v5555 = vmul.f32 %v5325, %v5325
      %v5556 = vmul.f32 %v5326, %v5326
      %v5557 = vadd.f32 %v5525, %v5526
      %v5558 = vadd.f32 %v5557, %v5527
      %v5559 = vadd.f32 %v5558, %v5528
      %v5560 = vadd.f32 %v5559, %v5529
      %v5561 = vadd.f32 %v5560, %v5530
      %v5562 = vadd.f32 %v5561, %v5531
      %v5563 = vadd.f32 %v5562, %v5532
      %v5564 = vadd.f32 %v5563, %v5533
      %v5565 = vadd.f32 %v5564, %v5534
      %v5566 = vadd.f32 %v5565, %v5535
      %v5567 = vadd.f32 %v5566, %v5536
      %v5568 = vadd.f32 %v5567, %v5537
      %v5569 = vadd.f32 %v5568, %v5538
      %v5570 = vadd.f32 %v5569, %v5539
      %v5571 = vadd.f32 %v5570, %v5540
      %v5572 = vadd.f32 %v5571, %v5541
      %v5573 = vadd.f32 %v5572, %v5542
      %v5574 = vadd.f32 %v5573, %v5543
      %v5575 = vadd.f32 %v5574, %v5544
      %v5576 = vadd.f32 %v5575, %v5545
      %v5577 = vadd.f32 %v5576, %v5546
      %v5578 = vadd.f32 %v5577, %v5547
      %v5579 = vadd.f32 %v5578, %v5548
      %v5580 = vadd.f32 %v5579, %v5549
      %v5581 = vadd.f32 %v5580, %v5550
      %v5582 = vadd.f32 %v5581, %v5551
      %v5583 = vadd.f32 %v5582, %v5552
      %v5584 = vadd.f32 %v5583, %v5553
      %v5585 = vadd.f32 %v5584, %v5554
      %v5586 = vadd.f32 %v5585, %v5555
      %v5587 = vadd.f32 %v5586, %v5556
      %v5588 = vrot.slane %v5587, 4
      %v5589 = vadd.f32 %v5587, %v5588
      %v5590 = vrot.slane %v5589, 2
      %v5591 = vadd.f32 %v5589, %v5590
      %v5592 = vrot.slane %v5591, 1
      %v5593 = vadd.f32 %v5591, %v5592
      %5594 = vst [vmem:[%s235 + $0x1] sm:$0x1] %v5593
      %p5595 = scmp.lt.s32.totalorder %s17, 1
      %s5596 = scalar_select %p5595, %s17, 1
      %s5597 = smul.addr %s5596, 32
      %s5598 = smul.addr %s5597, 4
      %s5599 = scalar_lea.vmem %s4, %s5598
      %p5600 = scmp.lt.s32.totalorder %s17, 1
      %s5601 = scalar_select %p5600, %s17, 1
      %s5602 = smul.addr %s5601, 2
      %s5603 = scalar_lea.vmem %s5, %s5602
      // Predicated region
      $region37: #{residual_unit_pallas.5} parent=35 // pred_check
        %p5604 = pneg %p124
      $region38: #{residual_unit_pallas.5} parent=35 // pred_check_branch
        %5606 = sbr.rel (%p5604) target = $region40
      $region39: #{residual_unit_pallas.5} parent=35 // pred_region
        _
      $region40: #{residual_unit_pallas.5} parent=35 // pred_fallthru
        _
      // Predicated region
      $region41: #{residual_unit_pallas.5} parent=35 // pred_check
        %p5607 = pneg %p150
      $region42: #{residual_unit_pallas.5} parent=35 // pred_check_branch
        %5609 = sbr.rel (%p5607) target = $region44
      $region43: #{residual_unit_pallas.5} parent=35 // pred_region
        _
      $region44: #{residual_unit_pallas.5} parent=35 // pred_fallthru
        _
    $region36: #{residual_unit_pallas.5} parent=5 // pred_fallthru
      _
    %p5610 = scmp.le.s32.totalorder 2, %s12
    // Predicated region
    $region45: #{residual_unit_pallas.5} parent=5 // pred_check
      %p5611 = pneg %p5610
    $region46: #{residual_unit_pallas.5} parent=5 // pred_check_branch
      %5613 = sbr.rel (%p5611) target = $region48
    $region47: #{residual_unit_pallas.5} parent=5 // pred_region
      %s5614 = ssub.s32 %s12, 2
      // Predicated region
      $region49: #{residual_unit_pallas.5} parent=47 // pred_check
        %p5615 = pneg %p130
      $region50: #{residual_unit_pallas.5} parent=47 // pred_check_branch
        %5617 = sbr.rel (%p5615) target = $region52
      $region51: #{residual_unit_pallas.5} parent=47 // pred_region
        %p5618 = scmp.lt.s32.totalorder %s18, 1
        %s5619 = scalar_select %p5618, %s18, 1
        %s5620 = smul.addr %s5619, 32
        %s5621 = smul.addr %s5620, 4
        %s5622 = scalar_lea.vmem %s4, %s5621
      $region52: #{residual_unit_pallas.5} parent=47 // pred_fallthru
        _
      // Predicated region
      $region53: #{residual_unit_pallas.5} parent=47 // pred_check
        %p5623 = pneg %p156
      $region54: #{residual_unit_pallas.5} parent=47 // pred_check_branch
        %5625 = sbr.rel (%p5623) target = $region56
      $region55: #{residual_unit_pallas.5} parent=47 // pred_region
        %p5626 = scmp.lt.s32.totalorder %s18, 1
        %s5627 = scalar_select %p5626, %s18, 1
        %s5628 = smul.addr %s5627, 2
        %s5629 = scalar_lea.vmem %s5, %s5628
      $region56: #{residual_unit_pallas.5} parent=47 // pred_fallthru
        _
    $region48: #{residual_unit_pallas.5} parent=5 // pred_fallthru
      _
  $region6: #{residual_unit_pallas.5} parent=0 // loop_footer
    %s16 = sadd.s32 1, %s12
  $region7: #{residual_unit_pallas.5} parent=0 // loop_footer_branch
    %11 = sbr.rel target = $region3
  $region8: #{residual_unit_pallas.5} parent=0 // loop_exit
    _

</llo_original>
